<compile_context>
chip_gen: v5e
topology: v5e:2x2
jax: 0.10.0
libtpu: 0.0.40
codegen_flags: <defaults>
</compile_context>

<pallas_src>
import functools

import jax
import jax.numpy as jnp
import numpy as np
from jax.experimental import pallas as pl
from jax.experimental.pallas import tpu as pltpu

EPS = 1e-5


def _physical_vmem_bytes():
    """Best-effort physical VMEM size of the local chip (fallback: 64 MiB)."""
    try:
        return int(pltpu.get_tpu_info().vmem_capacity_bytes)
    except Exception:
        return 64 * 1024 * 1024


def _na_conv_kernel(*refs, H, W, Cin, Cout, mxu_dtype, nb,
                    with_sc, with_res, with_moments, use_slab):
    """Fused (BN-apply + ReLU) -> 3x3 conv (+1x1 shortcut, +residual, +moments).

    Processes `nb` images per grid step.  The conv is either 9 accumulating
    MXU dots from the padded scratch (small Cout) or one big-K slab matmul
    (large Cout).  Optionally emits per-channel sum / sum-of-squares of the
    f32 conv output so the next BatchNorm's batch statistics need no extra
    HBM pass over the activation.
    """
    it = iter(refs)
    x_ref = next(it)
    scale_ref = next(it)
    shift_ref = next(it)
    w_ref = next(it)
    wsc_ref = next(it) if with_sc else None
    res_ref = next(it) if with_res else None
    out_ref = next(it)
    sc_out_ref = next(it) if with_sc else None
    m1_ref = next(it) if with_moments else None
    m2_ref = next(it) if with_moments else None
    pad_ref = next(it)
    slab_ref = next(it) if use_slab else None

    HW = H * W
    scale = scale_ref[...]                                  # (1, Cin) f32
    shift = shift_ref[...]                                  # (1, Cin) f32

    # Zero only the 1-pixel halo of the padded scratch, once per grid step
    # (interior writes below never touch the halo).
    zrow = jnp.zeros((1, W + 2, Cin), mxu_dtype)
    zcol = jnp.zeros((H, 1, Cin), mxu_dtype)
    pad_ref[0:1, :, :] = zrow
    pad_ref[H + 1:H + 2, :, :] = zrow
    pad_ref[1:H + 1, 0:1, :] = zcol
    pad_ref[1:H + 1, W + 1:W + 2, :] = zcol

    if with_moments:
        s1 = jnp.zeros((1, Cout), jnp.float32)
        s2 = jnp.zeros((1, Cout), jnp.float32)

    for n in range(nb):
        # ---- BatchNorm apply (precomputed scale/shift) + ReLU, f32 FMA ----
        x = x_ref[n].astype(jnp.float32)                    # (HW, Cin)
        o = jnp.maximum(x * scale + shift, 0.0)
        o_m = o.astype(mxu_dtype)                           # single cast, reused
        pad_ref[1:H + 1, 1:W + 1, :] = o_m.reshape(H, W, Cin)

        if use_slab:
            # Large Cout: one big-K (HW, 9*Cin) @ (9*Cin, Cout) MXU matmul.
            for k in range(9):
                dy, dx = divmod(k, 3)
                slab_ref[:, k * Cin:(k + 1) * Cin] = (
                    pad_ref[dy:dy + H, dx:dx + W, :].reshape(HW, Cin))
            acc = jnp.dot(slab_ref[...], w_ref[...],
                          preferred_element_type=jnp.float32)
        else:
            # Small Cout: 9 accumulating dots straight from the padded scratch
            # (no slab stores -> no vector-store-slot saturation).
            acc = None
            for k in range(9):
                dy, dx = divmod(k, 3)
                tap = pad_ref[dy:dy + H, dx:dx + W, :].reshape(HW, Cin)
                d = jnp.dot(tap, w_ref[k], preferred_element_type=jnp.float32)
                acc = d if acc is None else acc + d

        if with_moments:
            # Per-channel moments of the (pre-residual) f32 conv output.
            s1 = s1 + jnp.sum(acc, axis=0, keepdims=True)
            s2 = s2 + jnp.sum(acc * acc, axis=0, keepdims=True)

        if with_res:
            acc = acc + res_ref[n].astype(jnp.float32)      # residual add, f32
        out_ref[n] = acc.astype(out_ref.dtype)

        if with_sc:
            # 1x1 shortcut reuses the already-cast pre-activation.
            sc_out_ref[n] = jnp.dot(o_m, wsc_ref[...],
                                    preferred_element_type=jnp.float32
                                    ).astype(sc_out_ref.dtype)

    if with_moments:
        m1_ref[...] = s1.reshape(1, 1, Cout)
        m2_ref[...] = s2.reshape(1, 1, Cout)


def _call_na_conv(x2d, scale, shift, w9, wsc=None, res2d=None, *,
                  H, W, Cin, Cout, mxu_dtype, out_dtype, with_moments=False):
    """pallas_call wrapper for one NormAct+conv stage, tiled over the batch."""
    N, HW, _ = x2d.shape
    with_sc = wsc is not None
    with_res = res2d is not None
    use_slab = Cout >= 128

    def bs(dt):
        return int(np.dtype(dt).itemsize)

    phys = _physical_vmem_bytes()

    # ---- pick images-per-step from a VMEM budget (double-buffered blocks) ----
    per_img = HW * (Cin * bs(x2d.dtype) + Cout * bs(out_dtype))
    if with_sc:
        per_img += HW * Cout * bs(out_dtype)
    if with_res:
        per_img += HW * Cout * bs(res2d.dtype)
    nb_cap = max(1, (phys // 6) // max(1, 2 * per_img))
    nb = 1
    for d in range(1, N + 1):
        if N % d == 0 and d <= min(nb_cap, 8):
            nb = d
    grid = (N // nb,)

    # ---- weights: (9, Cin, Cout) for the 9-dot path, flat for the slab path ----
    if use_slab:
        w_in = w9.reshape(9 * Cin, Cout).astype(mxu_dtype)
        w_spec = pl.BlockSpec((9 * Cin, Cout), lambda n: (0, 0))
    else:
        w_in = w9.astype(mxu_dtype)
        w_spec = pl.BlockSpec((9, Cin, Cout), lambda n: (0, 0, 0))

    inputs = [x2d,
              scale.reshape(1, Cin).astype(jnp.float32),
              shift.reshape(1, Cin).astype(jnp.float32),
              w_in]
    in_specs = [pl.BlockSpec((nb, HW, Cin), lambda n: (n, 0, 0)),
                pl.BlockSpec((1, Cin), lambda n: (0, 0)),
                pl.BlockSpec((1, Cin), lambda n: (0, 0)),
                w_spec]
    if with_sc:
        inputs.append(wsc.astype(mxu_dtype))
        in_specs.append(pl.BlockSpec((Cin, Cout), lambda n: (0, 0)))
    if with_res:
        inputs.append(res2d)
        in_specs.append(pl.BlockSpec((nb, HW, Cout), lambda n: (n, 0, 0)))

    # TODO(synk): for tiny Cout (<128) the output lane dim is narrow (masked
    # vst); folding W*Cout into the lane dim would help those shapes further.
    out_shapes = [jax.ShapeDtypeStruct((N, HW, Cout), out_dtype)]
    out_specs = [pl.BlockSpec((nb, HW, Cout), lambda n: (n, 0, 0))]
    if with_sc:
        out_shapes.append(jax.ShapeDtypeStruct((N, HW, Cout), out_dtype))
        out_specs.append(pl.BlockSpec((nb, HW, Cout), lambda n: (n, 0, 0)))
    if with_moments:
        for _ in range(2):
            out_shapes.append(jax.ShapeDtypeStruct((grid[0], 1, Cout),
                                                   jnp.float32))
            out_specs.append(pl.BlockSpec((1, 1, Cout), lambda n: (n, 0, 0)))

    scratch = [pltpu.VMEM((H + 2, W + 2, Cin), mxu_dtype)]   # padded pre-act
    if use_slab:
        scratch.append(pltpu.VMEM((HW, 9 * Cin), mxu_dtype))  # im2col slab

    # ---- VMEM limit from the actual footprint, clamped to 75% of physical ----
    blk_bytes = (nb * HW * Cin * bs(x2d.dtype) + 2 * Cin * 4
                 + int(w_in.size) * bs(mxu_dtype)
                 + nb * HW * Cout * bs(out_dtype))
    if with_sc:
        blk_bytes += Cin * Cout * bs(mxu_dtype) + nb * HW * Cout * bs(out_dtype)
    if with_res:
        blk_bytes += nb * HW * Cout * bs(res2d.dtype)
    if with_moments:
        blk_bytes += 2 * Cout * 4
    scratch_bytes = (H + 2) * (W + 2) * Cin * bs(mxu_dtype)
    if use_slab:
        scratch_bytes += HW * 9 * Cin * bs(mxu_dtype)
    need = 2 * blk_bytes + scratch_bytes + (2 << 20)
    vmem_limit = int(min(max(32 << 20, need), (phys * 3) // 4))

    kernel = functools.partial(
        _na_conv_kernel, H=H, W=W, Cin=Cin, Cout=Cout, mxu_dtype=mxu_dtype,
        nb=nb, with_sc=with_sc, with_res=with_res, with_moments=with_moments,
        use_slab=use_slab)

    return pl.pallas_call(
        kernel,
        out_shape=tuple(out_shapes),
        grid=grid,
        in_specs=in_specs,
        out_specs=tuple(out_specs),
        scratch_shapes=scratch,
        compiler_params=pltpu.CompilerParams(
            dimension_semantics=("parallel",),
            vmem_limit_bytes=vmem_limit),
    )(*inputs)


def preact_block_nhwc(x, g1, b1, w1_hwio, g2, b2, w2_hwio, wsc_io=None,
                      stride=1, mxu_dtype=jnp.bfloat16):
    """NHWC PreActBlock forward. Weights (3,3,Cin,Cout); shortcut (Cin,Cout).

    Call this directly (activations NHWC end-to-end) to avoid the per-block
    NCHW<->NHWC transposes of the PyTorch-layout entry point below.
    """
    N, H, W, Cin = x.shape
    Cout = w1_hwio.shape[-1]
    has_sc = (stride != 1) or (Cin != Cout)
    if has_sc:
        assert wsc_io is not None
    act_dtype = jnp.bfloat16 if mxu_dtype == jnp.bfloat16 else jnp.float32

    # ---- BN1 batch statistics: tiny per-channel XLA reductions over N,H,W ----
    xf = x.astype(jnp.float32)
    mean1 = jnp.mean(xf, axis=(0, 1, 2))
    var1 = jnp.maximum(jnp.mean(xf * xf, axis=(0, 1, 2)) - mean1 * mean1, 0.0)
    scale1 = g1 * jax.lax.rsqrt(var1 + EPS)
    shift1 = b1 - mean1 * scale1

    # ---- stage 1: BN1-apply + ReLU + conv1 (+1x1 shortcut, + fused BN2 moments)
    w1_k = w1_hwio.reshape(9, Cin, Cout)
    outs1 = _call_na_conv(
        x.reshape(N, H * W, Cin), scale1, shift1, w1_k,
        wsc=(wsc_io if has_sc else None), res2d=None,
        H=H, W=W, Cin=Cin, Cout=Cout, mxu_dtype=mxu_dtype,
        out_dtype=act_dtype, with_moments=(stride == 1))
    c1_2d = outs1[0]
    i = 1
    sc_2d = None
    if has_sc:
        sc_2d = outs1[i]
        i += 1

    if stride == 1:
        Hout, Wout = H, W
        m1, m2 = outs1[i], outs1[i + 1]
        cnt = jnp.float32(N * Hout * Wout)
        mean2 = jnp.sum(m1, axis=(0, 1)) / cnt
        ex2 = jnp.sum(m2, axis=(0, 1)) / cnt
        var2 = jnp.maximum(ex2 - mean2 * mean2, 0.0)
        if not has_sc:
            sc_2d = x.reshape(N, H * W, Cin)          # identity (Cin == Cout)
    else:
        # TODO(synk): compute only the strided output rows/cols in-kernel to
        # avoid the stride^2 wasted conv work + writeback on downsample blocks.
        c1_4d = c1_2d.reshape(N, H, W, Cout)[:, ::stride, ::stride, :]
        Hout, Wout = c1_4d.shape[1], c1_4d.shape[2]
        if has_sc:
            sc_4d = sc_2d.reshape(N, H, W, Cout)[:, ::stride, ::stride, :]
            sc_2d = sc_4d.reshape(N, Hout * Wout, Cout)
        else:
            sc_2d = x[:, ::stride, ::stride, :].reshape(N, Hout * Wout, Cin)
        c1f = c1_4d.astype(jnp.float32)
        mean2 = jnp.mean(c1f, axis=(0, 1, 2))
        var2 = jnp.maximum(jnp.mean(c1f * c1f, axis=(0, 1, 2)) - mean2 * mean2,
                           0.0)
        c1_2d = c1_4d.reshape(N, Hout * Wout, Cout)

    scale2 = g2 * jax.lax.rsqrt(var2 + EPS)
    shift2 = b2 - mean2 * scale2

    # ---- stage 2: BN2-apply + ReLU + conv2 + residual add (f32 output) ----
    w2_k = w2_hwio.reshape(9, Cout, Cout)
    out = _call_na_conv(
        c1_2d, scale2, shift2, w2_k, wsc=None, res2d=sc_2d,
        H=Hout, W=Wout, Cin=Cout, Cout=Cout, mxu_dtype=mxu_dtype,
        out_dtype=jnp.float32, with_moments=False)[0]
    return out.reshape(N, Hout, Wout, Cout)


@functools.partial(jax.jit, static_argnames=("stride", "mxu_dtype"))
def preact_block(x, g1, b1, w1, g2, b2, w2, wsc=None, stride=1,
                 mxu_dtype=jnp.bfloat16):
    """NCHW / OIHW (PyTorch-layout) entry point.

    TODO(synk): in a full network keep activations NHWC end-to-end (call
    preact_block_nhwc directly) and drop these per-block layout transposes.
    """
    x_nhwc = jnp.transpose(x, (0, 2, 3, 1))
    w1_k = jnp.transpose(w1, (2, 3, 1, 0))                    # (3,3,Cin,Cout)
    w2_k = jnp.transpose(w2, (2, 3, 1, 0))                    # (3,3,Cout,Cout)
    wsc_k = None if wsc is None else jnp.transpose(wsc[:, :, 0, 0], (1, 0))
    out = preact_block_nhwc(x_nhwc, g1, b1, w1_k, g2, b2, w2_k, wsc_k,
                            stride=stride, mxu_dtype=mxu_dtype)
    return jnp.transpose(out, (0, 3, 1, 2))                   # back to NCHW


def ref_preact_block(x, g1, b1, w1, g2, b2, w2, wsc, stride):
    """Pure-JAX NCHW reference (mirrors the PyTorch forward)."""
    def bn_relu(t, g, b):
        mean = jnp.mean(t, axis=(0, 2, 3), keepdims=True)
        var = jnp.mean((t - mean) ** 2, axis=(0, 2, 3), keepdims=True)
        y = g.reshape(1, -1, 1, 1) * (t - mean) * jax.lax.rsqrt(var + EPS) \
            + b.reshape(1, -1, 1, 1)
        return jnp.maximum(y, 0.0)

    def conv(t, w, s, p):
        return jax.lax.conv_general_dilated(
            t, w, (s, s), [(p, p), (p, p)],
            dimension_numbers=("NCHW", "OIHW", "NCHW"),
            precision=jax.lax.Precision.HIGHEST)

    o1 = bn_relu(x, g1, b1)
    sc = conv(o1, wsc, stride, 0) if wsc is not None else x
    c1 = conv(o1, w1, stride, 1)
    o2 = bn_relu(c1, g2, b2)
    c2 = conv(o2, w2, 1, 1)
    return c2 + sc


if __name__ == "__main__":
    key = jax.random.PRNGKey(0)

    def init_params(k, cin, cout, has_shortcut):
        ks = jax.random.split(k, 7)
        p = dict(
            g1=1.0 + 0.1 * jax.random.normal(ks[0], (cin,), jnp.float32),
            b1=0.1 * jax.random.normal(ks[1], (cin,), jnp.float32),
            w1=jax.random.normal(ks[2], (cout, cin, 3, 3), jnp.float32) / np.sqrt(9 * cin),
            g2=1.0 + 0.1 * jax.random.normal(ks[3], (cout,), jnp.float32),
            b2=0.1 * jax.random.normal(ks[4], (cout,), jnp.float32),
            w2=jax.random.normal(ks[5], (cout, cout, 3, 3), jnp.float32) / np.sqrt(9 * cout),
        )
        p["wsc"] = (jax.random.normal(ks[6], (cout, cin, 1, 1), jnp.float32) / np.sqrt(cin)
                    if has_shortcut else None)
        return p

    # (N, Cin, H, W, Cout, stride, mxu operand dtype, tolerance)
    configs = [
        (2, 4, 16, 16, 4, 1, jnp.float32, 2e-2),    # identity shortcut, f32 MXU
        (2, 4, 16, 16, 8, 1, jnp.bfloat16, 1e-1),   # 1x1 shortcut, bf16 (default)
        (2, 4, 16, 16, 8, 2, jnp.float32, 2e-2),    # strided downsampling block
        (2, 8, 8, 8, 128, 1, jnp.bfloat16, 1e-1),   # large-Cout big-K slab path
    ]
    keys = jax.random.split(key, 2 * len(configs))
    for idx, (n, cin, h, w, cout, s, mdt, tol) in enumerate(configs):
        kx, kp = keys[2 * idx], keys[2 * idx + 1]
        x = jax.random.normal(kx, (n, cin, h, w), jnp.float32)  # NCHW
        has_sc = (s != 1) or (cin != cout)
        p = init_params(kp, cin, cout, has_sc)
        out = preact_block(x, p["g1"], p["b1"], p["w1"], p["g2"], p["b2"],
                           p["w2"], wsc=p["wsc"], stride=s, mxu_dtype=mdt)
        out = jax.block_until_ready(out)
        ref = ref_preact_block(x, p["g1"], p["b1"], p["w1"], p["g2"], p["b2"],
                               p["w2"], p["wsc"], s)
        np.testing.assert_allclose(np.asarray(out), np.asarray(ref),
                                   rtol=tol, atol=tol)

    print("KERNEL_OK")
</pallas_src>

<mosaic_0001>
module attributes {stable_mosaic.version = 11 : i64} {
  func.func @_na_conv_kernel(%arg0: i32, %arg1: memref<2x256x4xf32, #tpu.memory_space<vmem>>, %arg2: memref<1x4xf32, #tpu.memory_space<vmem>>, %arg3: memref<1x4xf32, #tpu.memory_space<vmem>>, %arg4: memref<9x4x4xf32, #tpu.memory_space<vmem>>, %arg5: memref<2x256x4xf32, #tpu.memory_space<vmem>>, %arg6: memref<1x1x4xf32, #tpu.memory_space<vmem>>, %arg7: memref<1x1x4xf32, #tpu.memory_space<vmem>>, %arg8: memref<18x18x4xf32, #tpu.memory_space<vmem>>) attributes {dimension_semantics = [#tpu.dimension_semantics<parallel>], iteration_bounds = array<i64: 1>, scalar_prefetch = 0 : i64, scratch_operands = 1 : i64, tpu.core_type = #tpu.core_type<tc>, window_params = [{transform_indices = @transform_0, window_bounds = array<i64: 2, 256, 4>}, {pipeline_mode = #tpu.pipeline_mode<synchronous>, transform_indices = @transform_1, window_bounds = array<i64: 1, 4>}, {pipeline_mode = #tpu.pipeline_mode<synchronous>, transform_indices = @transform_2, window_bounds = array<i64: 1, 4>}, {pipeline_mode = #tpu.pipeline_mode<synchronous>, transform_indices = @transform_3, window_bounds = array<i64: 9, 4, 4>}, {transform_indices = @transform_4, window_bounds = array<i64: 2, 256, 4>}, {transform_indices = @transform_5, window_bounds = array<i64: 1, 1, 4>}, {transform_indices = @transform_6, window_bounds = array<i64: 1, 1, 4>}]} {
    %c0 = arith.constant 0 : index
    %c0_0 = arith.constant 0 : index
    %0 = vector.load %arg2[%c0, %c0_0] : memref<1x4xf32, #tpu.memory_space<vmem>>, vector<1x4xf32>
    %c0_1 = arith.constant 0 : index
    %c0_2 = arith.constant 0 : index
    %1 = vector.load %arg3[%c0_1, %c0_2] : memref<1x4xf32, #tpu.memory_space<vmem>>, vector<1x4xf32>
    %cst = arith.constant 0.000000e+00 : f32
    %2 = vector.broadcast %cst : f32 to vector<1x18x4xf32>
    %cst_3 = arith.constant 0.000000e+00 : f32
    %3 = vector.broadcast %cst_3 : f32 to vector<16x1x4xf32>
    %c0_4 = arith.constant 0 : index
    %c0_5 = arith.constant 0 : index
    %c0_6 = arith.constant 0 : index
    %4 = vector.load %arg8[%c0_4, %c0_5, %c0_6] : memref<18x18x4xf32, #tpu.memory_space<vmem>>, vector<1x18x4xf32>
    tpu.vector_store %arg8[%c0_4, %c0_5, %c0_6], %2 {strides = array<i32>} : memref<18x18x4xf32, #tpu.memory_space<vmem>>, vector<1x18x4xf32>,
    %c17 = arith.constant 17 : index
    %c0_7 = arith.constant 0 : index
    %c0_8 = arith.constant 0 : index
    %5 = vector.load %arg8[%c17, %c0_7, %c0_8] : memref<18x18x4xf32, #tpu.memory_space<vmem>>, vector<1x18x4xf32>
    tpu.vector_store %arg8[%c17, %c0_7, %c0_8], %2 {strides = array<i32>} : memref<18x18x4xf32, #tpu.memory_space<vmem>>, vector<1x18x4xf32>,
    %c1 = arith.constant 1 : index
    %c0_9 = arith.constant 0 : index
    %c0_10 = arith.constant 0 : index
    %6 = vector.load %arg8[%c1, %c0_9, %c0_10] : memref<18x18x4xf32, #tpu.memory_space<vmem>>, vector<16x1x4xf32>
    tpu.vector_store %arg8[%c1, %c0_9, %c0_10], %3 {strides = array<i32>} : memref<18x18x4xf32, #tpu.memory_space<vmem>>, vector<16x1x4xf32>,
    %c1_11 = arith.constant 1 : index
    %c17_12 = arith.constant 17 : index
    %c0_13 = arith.constant 0 : index
    %7 = vector.load %arg8[%c1_11, %c17_12, %c0_13] : memref<18x18x4xf32, #tpu.memory_space<vmem>>, vector<16x1x4xf32>
    tpu.vector_store %arg8[%c1_11, %c17_12, %c0_13], %3 {strides = array<i32>} : memref<18x18x4xf32, #tpu.memory_space<vmem>>, vector<16x1x4xf32>,
    %cst_14 = arith.constant 0.000000e+00 : f32
    %8 = vector.broadcast %cst_14 : f32 to vector<1x4xf32>
    %cst_15 = arith.constant 0.000000e+00 : f32
    %9 = vector.broadcast %cst_15 : f32 to vector<1x4xf32>
    %c0_16 = arith.constant 0 : index
    %c0_17 = arith.constant 0 : index
    %c0_18 = arith.constant 0 : index
    %10 = vector.load %arg1[%c0_16, %c0_17, %c0_18] : memref<2x256x4xf32, #tpu.memory_space<vmem>>, vector<1x256x4xf32>
    %11 = vector.shape_cast %10 : vector<1x256x4xf32> to vector<256x4xf32>
    %12 = vector.broadcast %0 : vector<1x4xf32> to vector<256x4xf32>
    %13 = arith.mulf %11, %12 : vector<256x4xf32>
    %14 = vector.broadcast %1 : vector<1x4xf32> to vector<256x4xf32>
    %15 = arith.addf %13, %14 : vector<256x4xf32>
    %cst_19 = arith.constant 0.000000e+00 : f32
    %16 = vector.broadcast %cst_19 : f32 to vector<256x4xf32>
    %17 = arith.maximumf %15, %16 : vector<256x4xf32>
    %18 = vector.shape_cast %17 : vector<256x4xf32> to vector<16x16x4xf32>
    %c1_20 = arith.constant 1 : index
    %c1_21 = arith.constant 1 : index
    %c0_22 = arith.constant 0 : index
    %19 = vector.load %arg8[%c1_20, %c1_21, %c0_22] : memref<18x18x4xf32, #tpu.memory_space<vmem>>, vector<16x16x4xf32>
    tpu.vector_store %arg8[%c1_20, %c1_21, %c0_22], %18 {strides = array<i32>} : memref<18x18x4xf32, #tpu.memory_space<vmem>>, vector<16x16x4xf32>,
    %c0_23 = arith.constant 0 : index
    %c0_24 = arith.constant 0 : index
    %c0_25 = arith.constant 0 : index
    %20 = vector.load %arg8[%c0_23, %c0_24, %c0_25] : memref<18x18x4xf32, #tpu.memory_space<vmem>>, vector<16x16x4xf32>
    %21 = vector.shape_cast %20 : vector<16x16x4xf32> to vector<256x4xf32>
    %c0_26 = arith.constant 0 : index
    %c0_27 = arith.constant 0 : index
    %c0_28 = arith.constant 0 : index
    %22 = vector.load %arg4[%c0_26, %c0_27, %c0_28] : memref<9x4x4xf32, #tpu.memory_space<vmem>>, vector<1x4x4xf32>
    %23 = vector.shape_cast %22 : vector<1x4x4xf32> to vector<4x4xf32>
    %cst_29 = arith.constant dense<0.000000e+00> : vector<256x4xf32>
    %24 = tpu.matmul %21, %23, %cst_29 {dimension_numbers = #tpu.dot_dimension_numbers<[1], [0], [0], [1], [0, 0, 1, 1], [], []>} : vector<256x4xf32>, vector<4x4xf32>, vector<256x4xf32> -> vector<256x4xf32>
    %c0_30 = arith.constant 0 : index
    %c1_31 = arith.constant 1 : index
    %c0_32 = arith.constant 0 : index
    %25 = vector.load %arg8[%c0_30, %c1_31, %c0_32] : memref<18x18x4xf32, #tpu.memory_space<vmem>>, vector<16x16x4xf32>
    %26 = vector.shape_cast %25 : vector<16x16x4xf32> to vector<256x4xf32>
    %c1_33 = arith.constant 1 : index
    %c0_34 = arith.constant 0 : index
    %c0_35 = arith.constant 0 : index
    %27 = vector.load %arg4[%c1_33, %c0_34, %c0_35] : memref<9x4x4xf32, #tpu.memory_space<vmem>>, vector<1x4x4xf32>
    %28 = vector.shape_cast %27 : vector<1x4x4xf32> to vector<4x4xf32>
    %cst_36 = arith.constant dense<0.000000e+00> : vector<256x4xf32>
    %29 = tpu.matmul %26, %28, %cst_36 {dimension_numbers = #tpu.dot_dimension_numbers<[1], [0], [0], [1], [0, 0, 1, 1], [], []>} : vector<256x4xf32>, vector<4x4xf32>, vector<256x4xf32> -> vector<256x4xf32>
    %30 = arith.addf %24, %29 : vector<256x4xf32>
    %c0_37 = arith.constant 0 : index
    %c2 = arith.constant 2 : index
    %c0_38 = arith.constant 0 : index
    %31 = vector.load %arg8[%c0_37, %c2, %c0_38] : memref<18x18x4xf32, #tpu.memory_space<vmem>>, vector<16x16x4xf32>
    %32 = vector.shape_cast %31 : vector<16x16x4xf32> to vector<256x4xf32>
    %c2_39 = arith.constant 2 : index
    %c0_40 = arith.constant 0 : index
    %c0_41 = arith.constant 0 : index
    %33 = vector.load %arg4[%c2_39, %c0_40, %c0_41] : memref<9x4x4xf32, #tpu.memory_space<vmem>>, vector<1x4x4xf32>
    %34 = vector.shape_cast %33 : vector<1x4x4xf32> to vector<4x4xf32>
    %cst_42 = arith.constant dense<0.000000e+00> : vector<256x4xf32>
    %35 = tpu.matmul %32, %34, %cst_42 {dimension_numbers = #tpu.dot_dimension_numbers<[1], [0], [0], [1], [0, 0, 1, 1], [], []>} : vector<256x4xf32>, vector<4x4xf32>, vector<256x4xf32> -> vector<256x4xf32>
    %36 = arith.addf %30, %35 : vector<256x4xf32>
    %c1_43 = arith.constant 1 : index
    %c0_44 = arith.constant 0 : index
    %c0_45 = arith.constant 0 : index
    %37 = vector.load %arg8[%c1_43, %c0_44, %c0_45] : memref<18x18x4xf32, #tpu.memory_space<vmem>>, vector<16x16x4xf32>
    %38 = vector.shape_cast %37 : vector<16x16x4xf32> to vector<256x4xf32>
    %c3 = arith.constant 3 : index
    %c0_46 = arith.constant 0 : index
    %c0_47 = arith.constant 0 : index
    %39 = vector.load %arg4[%c3, %c0_46, %c0_47] : memref<9x4x4xf32, #tpu.memory_space<vmem>>, vector<1x4x4xf32>
    %40 = vector.shape_cast %39 : vector<1x4x4xf32> to vector<4x4xf32>
    %cst_48 = arith.constant dense<0.000000e+00> : vector<256x4xf32>
    %41 = tpu.matmul %38, %40, %cst_48 {dimension_numbers = #tpu.dot_dimension_numbers<[1], [0], [0], [1], [0, 0, 1, 1], [], []>} : vector<256x4xf32>, vector<4x4xf32>, vector<256x4xf32> -> vector<256x4xf32>
    %42 = arith.addf %36, %41 : vector<256x4xf32>
    %c1_49 = arith.constant 1 : index
    %c1_50 = arith.constant 1 : index
    %c0_51 = arith.constant 0 : index
    %43 = vector.load %arg8[%c1_49, %c1_50, %c0_51] : memref<18x18x4xf32, #tpu.memory_space<vmem>>, vector<16x16x4xf32>
    %44 = vector.shape_cast %43 : vector<16x16x4xf32> to vector<256x4xf32>
    %c4 = arith.constant 4 : index
    %c0_52 = arith.constant 0 : index
    %c0_53 = arith.constant 0 : index
    %45 = vector.load %arg4[%c4, %c0_52, %c0_53] : memref<9x4x4xf32, #tpu.memory_space<vmem>>, vector<1x4x4xf32>
    %46 = vector.shape_cast %45 : vector<1x4x4xf32> to vector<4x4xf32>
    %cst_54 = arith.constant dense<0.000000e+00> : vector<256x4xf32>
    %47 = tpu.matmul %44, %46, %cst_54 {dimension_numbers = #tpu.dot_dimension_numbers<[1], [0], [0], [1], [0, 0, 1, 1], [], []>} : vector<256x4xf32>, vector<4x4xf32>, vector<256x4xf32> -> vector<256x4xf32>
    %48 = arith.addf %42, %47 : vector<256x4xf32>
    %c1_55 = arith.constant 1 : index
    %c2_56 = arith.constant 2 : index
    %c0_57 = arith.constant 0 : index
    %49 = vector.load %arg8[%c1_55, %c2_56, %c0_57] : memref<18x18x4xf32, #tpu.memory_space<vmem>>, vector<16x16x4xf32>
    %50 = vector.shape_cast %49 : vector<16x16x4xf32> to vector<256x4xf32>
    %c5 = arith.constant 5 : index
    %c0_58 = arith.constant 0 : index
    %c0_59 = arith.constant 0 : index
    %51 = vector.load %arg4[%c5, %c0_58, %c0_59] : memref<9x4x4xf32, #tpu.memory_space<vmem>>, vector<1x4x4xf32>
    %52 = vector.shape_cast %51 : vector<1x4x4xf32> to vector<4x4xf32>
    %cst_60 = arith.constant dense<0.000000e+00> : vector<256x4xf32>
    %53 = tpu.matmul %50, %52, %cst_60 {dimension_numbers = #tpu.dot_dimension_numbers<[1], [0], [0], [1], [0, 0, 1, 1], [], []>} : vector<256x4xf32>, vector<4x4xf32>, vector<256x4xf32> -> vector<256x4xf32>
    %54 = arith.addf %48, %53 : vector<256x4xf32>
    %c2_61 = arith.constant 2 : index
    %c0_62 = arith.constant 0 : index
    %c0_63 = arith.constant 0 : index
    %55 = vector.load %arg8[%c2_61, %c0_62, %c0_63] : memref<18x18x4xf32, #tpu.memory_space<vmem>>, vector<16x16x4xf32>
    %56 = vector.shape_cast %55 : vector<16x16x4xf32> to vector<256x4xf32>
    %c6 = arith.constant 6 : index
    %c0_64 = arith.constant 0 : index
    %c0_65 = arith.constant 0 : index
    %57 = vector.load %arg4[%c6, %c0_64, %c0_65] : memref<9x4x4xf32, #tpu.memory_space<vmem>>, vector<1x4x4xf32>
    %58 = vector.shape_cast %57 : vector<1x4x4xf32> to vector<4x4xf32>
    %cst_66 = arith.constant dense<0.000000e+00> : vector<256x4xf32>
    %59 = tpu.matmul %56, %58, %cst_66 {dimension_numbers = #tpu.dot_dimension_numbers<[1], [0], [0], [1], [0, 0, 1, 1], [], []>} : vector<256x4xf32>, vector<4x4xf32>, vector<256x4xf32> -> vector<256x4xf32>
    %60 = arith.addf %54, %59 : vector<256x4xf32>
    %c2_67 = arith.constant 2 : index
    %c1_68 = arith.constant 1 : index
    %c0_69 = arith.constant 0 : index
    %61 = vector.load %arg8[%c2_67, %c1_68, %c0_69] : memref<18x18x4xf32, #tpu.memory_space<vmem>>, vector<16x16x4xf32>
    %62 = vector.shape_cast %61 : vector<16x16x4xf32> to vector<256x4xf32>
    %c7 = arith.constant 7 : index
    %c0_70 = arith.constant 0 : index
    %c0_71 = arith.constant 0 : index
    %63 = vector.load %arg4[%c7, %c0_70, %c0_71] : memref<9x4x4xf32, #tpu.memory_space<vmem>>, vector<1x4x4xf32>
    %64 = vector.shape_cast %63 : vector<1x4x4xf32> to vector<4x4xf32>
    %cst_72 = arith.constant dense<0.000000e+00> : vector<256x4xf32>
    %65 = tpu.matmul %62, %64, %cst_72 {dimension_numbers = #tpu.dot_dimension_numbers<[1], [0], [0], [1], [0, 0, 1, 1], [], []>} : vector<256x4xf32>, vector<4x4xf32>, vector<256x4xf32> -> vector<256x4xf32>
    %66 = arith.addf %60, %65 : vector<256x4xf32>
    %c2_73 = arith.constant 2 : index
    %c2_74 = arith.constant 2 : index
    %c0_75 = arith.constant 0 : index
    %67 = vector.load %arg8[%c2_73, %c2_74, %c0_75] : memref<18x18x4xf32, #tpu.memory_space<vmem>>, vector<16x16x4xf32>
    %68 = vector.shape_cast %67 : vector<16x16x4xf32> to vector<256x4xf32>
    %c8 = arith.constant 8 : index
    %c0_76 = arith.constant 0 : index
    %c0_77 = arith.constant 0 : index
    %69 = vector.load %arg4[%c8, %c0_76, %c0_77] : memref<9x4x4xf32, #tpu.memory_space<vmem>>, vector<1x4x4xf32>
    %70 = vector.shape_cast %69 : vector<1x4x4xf32> to vector<4x4xf32>
    %cst_78 = arith.constant dense<0.000000e+00> : vector<256x4xf32>
    %71 = tpu.matmul %68, %70, %cst_78 {dimension_numbers = #tpu.dot_dimension_numbers<[1], [0], [0], [1], [0, 0, 1, 1], [], []>} : vector<256x4xf32>, vector<4x4xf32>, vector<256x4xf32> -> vector<256x4xf32>
    %72 = arith.addf %66, %71 : vector<256x4xf32>
    %cst_79 = arith.constant dense<0.000000e+00> : vector<4xf32>
    %73 = vector.multi_reduction <add>, %72, %cst_79 [0] : vector<256x4xf32> to vector<4xf32>
    %74 = vector.shape_cast %73 : vector<4xf32> to vector<1x4xf32>
    %75 = arith.addf %8, %74 : vector<1x4xf32>
    %76 = arith.mulf %72, %72 : vector<256x4xf32>
    %cst_80 = arith.constant dense<0.000000e+00> : vector<4xf32>
    %77 = vector.multi_reduction <add>, %76, %cst_80 [0] : vector<256x4xf32> to vector<4xf32>
    %78 = vector.shape_cast %77 : vector<4xf32> to vector<1x4xf32>
    %79 = arith.addf %9, %78 : vector<1x4xf32>
    %c0_81 = arith.constant 0 : index
    %c0_82 = arith.constant 0 : index
    %c0_83 = arith.constant 0 : index
    %80 = vector.load %arg5[%c0_81, %c0_82, %c0_83] : memref<2x256x4xf32, #tpu.memory_space<vmem>>, vector<1x256x4xf32>
    %81 = vector.shape_cast %80 : vector<1x256x4xf32> to vector<256x4xf32>
    %82 = vector.shape_cast %72 : vector<256x4xf32> to vector<1x256x4xf32>
    tpu.vector_store %arg5[%c0_81, %c0_82, %c0_83], %82 {strides = array<i32>} : memref<2x256x4xf32, #tpu.memory_space<vmem>>, vector<1x256x4xf32>,
    %c1_84 = arith.constant 1 : index
    %c0_85 = arith.constant 0 : index
    %c0_86 = arith.constant 0 : index
    %83 = vector.load %arg1[%c1_84, %c0_85, %c0_86] : memref<2x256x4xf32, #tpu.memory_space<vmem>>, vector<1x256x4xf32>
    %84 = vector.shape_cast %83 : vector<1x256x4xf32> to vector<256x4xf32>
    %85 = vector.broadcast %0 : vector<1x4xf32> to vector<256x4xf32>
    %86 = arith.mulf %84, %85 : vector<256x4xf32>
    %87 = vector.broadcast %1 : vector<1x4xf32> to vector<256x4xf32>
    %88 = arith.addf %86, %87 : vector<256x4xf32>
    %cst_87 = arith.constant 0.000000e+00 : f32
    %89 = vector.broadcast %cst_87 : f32 to vector<256x4xf32>
    %90 = arith.maximumf %88, %89 : vector<256x4xf32>
    %91 = vector.shape_cast %90 : vector<256x4xf32> to vector<16x16x4xf32>
    %c1_88 = arith.constant 1 : index
    %c1_89 = arith.constant 1 : index
    %c0_90 = arith.constant 0 : index
    %92 = vector.load %arg8[%c1_88, %c1_89, %c0_90] : memref<18x18x4xf32, #tpu.memory_space<vmem>>, vector<16x16x4xf32>
    tpu.vector_store %arg8[%c1_88, %c1_89, %c0_90], %91 {strides = array<i32>} : memref<18x18x4xf32, #tpu.memory_space<vmem>>, vector<16x16x4xf32>,
    %c0_91 = arith.constant 0 : index
    %c0_92 = arith.constant 0 : index
    %c0_93 = arith.constant 0 : index
    %93 = vector.load %arg8[%c0_91, %c0_92, %c0_93] : memref<18x18x4xf32, #tpu.memory_space<vmem>>, vector<16x16x4xf32>
    %94 = vector.shape_cast %93 : vector<16x16x4xf32> to vector<256x4xf32>
    %c0_94 = arith.constant 0 : index
    %c0_95 = arith.constant 0 : index
    %c0_96 = arith.constant 0 : index
    %95 = vector.load %arg4[%c0_94, %c0_95, %c0_96] : memref<9x4x4xf32, #tpu.memory_space<vmem>>, vector<1x4x4xf32>
    %96 = vector.shape_cast %95 : vector<1x4x4xf32> to vector<4x4xf32>
    %cst_97 = arith.constant dense<0.000000e+00> : vector<256x4xf32>
    %97 = tpu.matmul %94, %96, %cst_97 {dimension_numbers = #tpu.dot_dimension_numbers<[1], [0], [0], [1], [0, 0, 1, 1], [], []>} : vector<256x4xf32>, vector<4x4xf32>, vector<256x4xf32> -> vector<256x4xf32>
    %c0_98 = arith.constant 0 : index
    %c1_99 = arith.constant 1 : index
    %c0_100 = arith.constant 0 : index
    %98 = vector.load %arg8[%c0_98, %c1_99, %c0_100] : memref<18x18x4xf32, #tpu.memory_space<vmem>>, vector<16x16x4xf32>
    %99 = vector.shape_cast %98 : vector<16x16x4xf32> to vector<256x4xf32>
    %c1_101 = arith.constant 1 : index
    %c0_102 = arith.constant 0 : index
    %c0_103 = arith.constant 0 : index
    %100 = vector.load %arg4[%c1_101, %c0_102, %c0_103] : memref<9x4x4xf32, #tpu.memory_space<vmem>>, vector<1x4x4xf32>
    %101 = vector.shape_cast %100 : vector<1x4x4xf32> to vector<4x4xf32>
    %cst_104 = arith.constant dense<0.000000e+00> : vector<256x4xf32>
    %102 = tpu.matmul %99, %101, %cst_104 {dimension_numbers = #tpu.dot_dimension_numbers<[1], [0], [0], [1], [0, 0, 1, 1], [], []>} : vector<256x4xf32>, vector<4x4xf32>, vector<256x4xf32> -> vector<256x4xf32>
    %103 = arith.addf %97, %102 : vector<256x4xf32>
    %c0_105 = arith.constant 0 : index
    %c2_106 = arith.constant 2 : index
    %c0_107 = arith.constant 0 : index
    %104 = vector.load %arg8[%c0_105, %c2_106, %c0_107] : memref<18x18x4xf32, #tpu.memory_space<vmem>>, vector<16x16x4xf32>
    %105 = vector.shape_cast %104 : vector<16x16x4xf32> to vector<256x4xf32>
    %c2_108 = arith.constant 2 : index
    %c0_109 = arith.constant 0 : index
    %c0_110 = arith.constant 0 : index
    %106 = vector.load %arg4[%c2_108, %c0_109, %c0_110] : memref<9x4x4xf32, #tpu.memory_space<vmem>>, vector<1x4x4xf32>
    %107 = vector.shape_cast %106 : vector<1x4x4xf32> to vector<4x4xf32>
    %cst_111 = arith.constant dense<0.000000e+00> : vector<256x4xf32>
    %108 = tpu.matmul %105, %107, %cst_111 {dimension_numbers = #tpu.dot_dimension_numbers<[1], [0], [0], [1], [0, 0, 1, 1], [], []>} : vector<256x4xf32>, vector<4x4xf32>, vector<256x4xf32> -> vector<256x4xf32>
    %109 = arith.addf %103, %108 : vector<256x4xf32>
    %c1_112 = arith.constant 1 : index
    %c0_113 = arith.constant 0 : index
    %c0_114 = arith.constant 0 : index
    %110 = vector.load %arg8[%c1_112, %c0_113, %c0_114] : memref<18x18x4xf32, #tpu.memory_space<vmem>>, vector<16x16x4xf32>
    %111 = vector.shape_cast %110 : vector<16x16x4xf32> to vector<256x4xf32>
    %c3_115 = arith.constant 3 : index
    %c0_116 = arith.constant 0 : index
    %c0_117 = arith.constant 0 : index
    %112 = vector.load %arg4[%c3_115, %c0_116, %c0_117] : memref<9x4x4xf32, #tpu.memory_space<vmem>>, vector<1x4x4xf32>
    %113 = vector.shape_cast %112 : vector<1x4x4xf32> to vector<4x4xf32>
    %cst_118 = arith.constant dense<0.000000e+00> : vector<256x4xf32>
    %114 = tpu.matmul %111, %113, %cst_118 {dimension_numbers = #tpu.dot_dimension_numbers<[1], [0], [0], [1], [0, 0, 1, 1], [], []>} : vector<256x4xf32>, vector<4x4xf32>, vector<256x4xf32> -> vector<256x4xf32>
    %115 = arith.addf %109, %114 : vector<256x4xf32>
    %c1_119 = arith.constant 1 : index
    %c1_120 = arith.constant 1 : index
    %c0_121 = arith.constant 0 : index
    %116 = vector.load %arg8[%c1_119, %c1_120, %c0_121] : memref<18x18x4xf32, #tpu.memory_space<vmem>>, vector<16x16x4xf32>
    %117 = vector.shape_cast %116 : vector<16x16x4xf32> to vector<256x4xf32>
    %c4_122 = arith.constant 4 : index
    %c0_123 = arith.constant 0 : index
    %c0_124 = arith.constant 0 : index
    %118 = vector.load %arg4[%c4_122, %c0_123, %c0_124] : memref<9x4x4xf32, #tpu.memory_space<vmem>>, vector<1x4x4xf32>
    %119 = vector.shape_cast %118 : vector<1x4x4xf32> to vector<4x4xf32>
    %cst_125 = arith.constant dense<0.000000e+00> : vector<256x4xf32>
    %120 = tpu.matmul %117, %119, %cst_125 {dimension_numbers = #tpu.dot_dimension_numbers<[1], [0], [0], [1], [0, 0, 1, 1], [], []>} : vector<256x4xf32>, vector<4x4xf32>, vector<256x4xf32> -> vector<256x4xf32>
    %121 = arith.addf %115, %120 : vector<256x4xf32>
    %c1_126 = arith.constant 1 : index
    %c2_127 = arith.constant 2 : index
    %c0_128 = arith.constant 0 : index
    %122 = vector.load %arg8[%c1_126, %c2_127, %c0_128] : memref<18x18x4xf32, #tpu.memory_space<vmem>>, vector<16x16x4xf32>
    %123 = vector.shape_cast %122 : vector<16x16x4xf32> to vector<256x4xf32>
    %c5_129 = arith.constant 5 : index
    %c0_130 = arith.constant 0 : index
    %c0_131 = arith.constant 0 : index
    %124 = vector.load %arg4[%c5_129, %c0_130, %c0_131] : memref<9x4x4xf32, #tpu.memory_space<vmem>>, vector<1x4x4xf32>
    %125 = vector.shape_cast %124 : vector<1x4x4xf32> to vector<4x4xf32>
    %cst_132 = arith.constant dense<0.000000e+00> : vector<256x4xf32>
    %126 = tpu.matmul %123, %125, %cst_132 {dimension_numbers = #tpu.dot_dimension_numbers<[1], [0], [0], [1], [0, 0, 1, 1], [], []>} : vector<256x4xf32>, vector<4x4xf32>, vector<256x4xf32> -> vector<256x4xf32>
    %127 = arith.addf %121, %126 : vector<256x4xf32>
    %c2_133 = arith.constant 2 : index
    %c0_134 = arith.constant 0 : index
    %c0_135 = arith.constant 0 : index
    %128 = vector.load %arg8[%c2_133, %c0_134, %c0_135] : memref<18x18x4xf32, #tpu.memory_space<vmem>>, vector<16x16x4xf32>
    %129 = vector.shape_cast %128 : vector<16x16x4xf32> to vector<256x4xf32>
    %c6_136 = arith.constant 6 : index
    %c0_137 = arith.constant 0 : index
    %c0_138 = arith.constant 0 : index
    %130 = vector.load %arg4[%c6_136, %c0_137, %c0_138] : memref<9x4x4xf32, #tpu.memory_space<vmem>>, vector<1x4x4xf32>
    %131 = vector.shape_cast %130 : vector<1x4x4xf32> to vector<4x4xf32>
    %cst_139 = arith.constant dense<0.000000e+00> : vector<256x4xf32>
    %132 = tpu.matmul %129, %131, %cst_139 {dimension_numbers = #tpu.dot_dimension_numbers<[1], [0], [0], [1], [0, 0, 1, 1], [], []>} : vector<256x4xf32>, vector<4x4xf32>, vector<256x4xf32> -> vector<256x4xf32>
    %133 = arith.addf %127, %132 : vector<256x4xf32>
    %c2_140 = arith.constant 2 : index
    %c1_141 = arith.constant 1 : index
    %c0_142 = arith.constant 0 : index
    %134 = vector.load %arg8[%c2_140, %c1_141, %c0_142] : memref<18x18x4xf32, #tpu.memory_space<vmem>>, vector<16x16x4xf32>
    %135 = vector.shape_cast %134 : vector<16x16x4xf32> to vector<256x4xf32>
    %c7_143 = arith.constant 7 : index
    %c0_144 = arith.constant 0 : index
    %c0_145 = arith.constant 0 : index
    %136 = vector.load %arg4[%c7_143, %c0_144, %c0_145] : memref<9x4x4xf32, #tpu.memory_space<vmem>>, vector<1x4x4xf32>
    %137 = vector.shape_cast %136 : vector<1x4x4xf32> to vector<4x4xf32>
    %cst_146 = arith.constant dense<0.000000e+00> : vector<256x4xf32>
    %138 = tpu.matmul %135, %137, %cst_146 {dimension_numbers = #tpu.dot_dimension_numbers<[1], [0], [0], [1], [0, 0, 1, 1], [], []>} : vector<256x4xf32>, vector<4x4xf32>, vector<256x4xf32> -> vector<256x4xf32>
    %139 = arith.addf %133, %138 : vector<256x4xf32>
    %c2_147 = arith.constant 2 : index
    %c2_148 = arith.constant 2 : index
    %c0_149 = arith.constant 0 : index
    %140 = vector.load %arg8[%c2_147, %c2_148, %c0_149] : memref<18x18x4xf32, #tpu.memory_space<vmem>>, vector<16x16x4xf32>
    %141 = vector.shape_cast %140 : vector<16x16x4xf32> to vector<256x4xf32>
    %c8_150 = arith.constant 8 : index
    %c0_151 = arith.constant 0 : index
    %c0_152 = arith.constant 0 : index
    %142 = vector.load %arg4[%c8_150, %c0_151, %c0_152] : memref<9x4x4xf32, #tpu.memory_space<vmem>>, vector<1x4x4xf32>
    %143 = vector.shape_cast %142 : vector<1x4x4xf32> to vector<4x4xf32>
    %cst_153 = arith.constant dense<0.000000e+00> : vector<256x4xf32>
    %144 = tpu.matmul %141, %143, %cst_153 {dimension_numbers = #tpu.dot_dimension_numbers<[1], [0], [0], [1], [0, 0, 1, 1], [], []>} : vector<256x4xf32>, vector<4x4xf32>, vector<256x4xf32> -> vector<256x4xf32>
    %145 = arith.addf %139, %144 : vector<256x4xf32>
    %cst_154 = arith.constant dense<0.000000e+00> : vector<4xf32>
    %146 = vector.multi_reduction <add>, %145, %cst_154 [0] : vector<256x4xf32> to vector<4xf32>
    %147 = vector.shape_cast %146 : vector<4xf32> to vector<1x4xf32>
    %148 = arith.addf %75, %147 : vector<1x4xf32>
    %149 = arith.mulf %145, %145 : vector<256x4xf32>
    %cst_155 = arith.constant dense<0.000000e+00> : vector<4xf32>
    %150 = vector.multi_reduction <add>, %149, %cst_155 [0] : vector<256x4xf32> to vector<4xf32>
    %151 = vector.shape_cast %150 : vector<4xf32> to vector<1x4xf32>
    %152 = arith.addf %79, %151 : vector<1x4xf32>
    %c1_156 = arith.constant 1 : index
    %c0_157 = arith.constant 0 : index
    %c0_158 = arith.constant 0 : index
    %153 = vector.load %arg5[%c1_156, %c0_157, %c0_158] : memref<2x256x4xf32, #tpu.memory_space<vmem>>, vector<1x256x4xf32>
    %154 = vector.shape_cast %153 : vector<1x256x4xf32> to vector<256x4xf32>
    %155 = vector.shape_cast %145 : vector<256x4xf32> to vector<1x256x4xf32>
    tpu.vector_store %arg5[%c1_156, %c0_157, %c0_158], %155 {strides = array<i32>} : memref<2x256x4xf32, #tpu.memory_space<vmem>>, vector<1x256x4xf32>,
    %156 = vector.shape_cast %148 : vector<1x4xf32> to vector<1x1x4xf32>
    %c0_159 = arith.constant 0 : index
    %c0_160 = arith.constant 0 : index
    %c0_161 = arith.constant 0 : index
    %157 = vector.load %arg6[%c0_159, %c0_160, %c0_161] : memref<1x1x4xf32, #tpu.memory_space<vmem>>, vector<1x1x4xf32>
    tpu.vector_store %arg6[%c0_159, %c0_160, %c0_161], %156 {strides = array<i32>} : memref<1x1x4xf32, #tpu.memory_space<vmem>>, vector<1x1x4xf32>,
    %158 = vector.shape_cast %152 : vector<1x4xf32> to vector<1x1x4xf32>
    %c0_162 = arith.constant 0 : index
    %c0_163 = arith.constant 0 : index
    %c0_164 = arith.constant 0 : index
    %159 = vector.load %arg7[%c0_162, %c0_163, %c0_164] : memref<1x1x4xf32, #tpu.memory_space<vmem>>, vector<1x1x4xf32>
    tpu.vector_store %arg7[%c0_162, %c0_163, %c0_164], %158 {strides = array<i32>} : memref<1x1x4xf32, #tpu.memory_space<vmem>>, vector<1x1x4xf32>,
    return
  }
  func.func @transform_0(%arg0: i32) -> (i32, i32, i32) {
    %c0_i32 = arith.constant 0 : i32
    %c0_i32_0 = arith.constant 0 : i32
    %c0_i32_1 = arith.constant 0 : i32
    return %arg0, %c0_i32, %c0_i32_0 : i32, i32, i32
  }
  func.func @transform_1(%arg0: i32) -> (i32, i32) {
    %c0_i32 = arith.constant 0 : i32
    %c0_i32_0 = arith.constant 0 : i32
    %c0_i32_1 = arith.constant 0 : i32
    return %c0_i32, %c0_i32_0 : i32, i32
  }
  func.func @transform_2(%arg0: i32) -> (i32, i32) {
    %c0_i32 = arith.constant 0 : i32
    %c0_i32_0 = arith.constant 0 : i32
    %c0_i32_1 = arith.constant 0 : i32
    return %c0_i32, %c0_i32_0 : i32, i32
  }
  func.func @transform_3(%arg0: i32) -> (i32, i32, i32) {
    %c0_i32 = arith.constant 0 : i32
    %c0_i32_0 = arith.constant 0 : i32
    %c0_i32_1 = arith.constant 0 : i32
    %c0_i32_2 = arith.constant 0 : i32
    return %c0_i32, %c0_i32_0, %c0_i32_1 : i32, i32, i32
  }
  func.func @transform_4(%arg0: i32) -> (i32, i32, i32) {
    %c0_i32 = arith.constant 0 : i32
    %c0_i32_0 = arith.constant 0 : i32
    %c0_i32_1 = arith.constant 0 : i32
    return %arg0, %c0_i32, %c0_i32_0 : i32, i32, i32
  }
  func.func @transform_5(%arg0: i32) -> (i32, i32, i32) {
    %c0_i32 = arith.constant 0 : i32
    %c0_i32_0 = arith.constant 0 : i32
    %c0_i32_1 = arith.constant 0 : i32
    return %arg0, %c0_i32, %c0_i32_0 : i32, i32, i32
  }
  func.func @transform_6(%arg0: i32) -> (i32, i32, i32) {
    %c0_i32 = arith.constant 0 : i32
    %c0_i32_0 = arith.constant 0 : i32
    %c0_i32_1 = arith.constant 0 : i32
    return %arg0, %c0_i32, %c0_i32_0 : i32, i32, i32
  }
}

module attributes {stable_mosaic.version = 11 : i64} {
  func.func @_na_conv_kernel(%arg0: i32, %arg1: memref<2x256x4xf32, #tpu.memory_space<vmem>>, %arg2: memref<1x4xf32, #tpu.memory_space<vmem>>, %arg3: memref<1x4xf32, #tpu.memory_space<vmem>>, %arg4: memref<9x4x4xf32, #tpu.memory_space<vmem>>, %arg5: memref<2x256x4xf32, #tpu.memory_space<vmem>>, %arg6: memref<2x256x4xf32, #tpu.memory_space<vmem>>, %arg7: memref<18x18x4xf32, #tpu.memory_space<vmem>>) attributes {dimension_semantics = [#tpu.dimension_semantics<parallel>], iteration_bounds = array<i64: 1>, scalar_prefetch = 0 : i64, scratch_operands = 1 : i64, tpu.core_type = #tpu.core_type<tc>, window_params = [{transform_indices = @transform_0, window_bounds = array<i64: 2, 256, 4>}, {pipeline_mode = #tpu.pipeline_mode<synchronous>, transform_indices = @transform_1, window_bounds = array<i64: 1, 4>}, {pipeline_mode = #tpu.pipeline_mode<synchronous>, transform_indices = @transform_2, window_bounds = array<i64: 1, 4>}, {pipeline_mode = #tpu.pipeline_mode<synchronous>, transform_indices = @transform_3, window_bounds = array<i64: 9, 4, 4>}, {transform_indices = @transform_4, window_bounds = array<i64: 2, 256, 4>}, {transform_indices = @transform_5, window_bounds = array<i64: 2, 256, 4>}]} {
    %c0 = arith.constant 0 : index
    %c0_0 = arith.constant 0 : index
    %0 = vector.load %arg2[%c0, %c0_0] : memref<1x4xf32, #tpu.memory_space<vmem>>, vector<1x4xf32>
    %c0_1 = arith.constant 0 : index
    %c0_2 = arith.constant 0 : index
    %1 = vector.load %arg3[%c0_1, %c0_2] : memref<1x4xf32, #tpu.memory_space<vmem>>, vector<1x4xf32>
    %cst = arith.constant 0.000000e+00 : f32
    %2 = vector.broadcast %cst : f32 to vector<1x18x4xf32>
    %cst_3 = arith.constant 0.000000e+00 : f32
    %3 = vector.broadcast %cst_3 : f32 to vector<16x1x4xf32>
    %c0_4 = arith.constant 0 : index
    %c0_5 = arith.constant 0 : index
    %c0_6 = arith.constant 0 : index
    %4 = vector.load %arg7[%c0_4, %c0_5, %c0_6] : memref<18x18x4xf32, #tpu.memory_space<vmem>>, vector<1x18x4xf32>
    tpu.vector_store %arg7[%c0_4, %c0_5, %c0_6], %2 {strides = array<i32>} : memref<18x18x4xf32, #tpu.memory_space<vmem>>, vector<1x18x4xf32>,
    %c17 = arith.constant 17 : index
    %c0_7 = arith.constant 0 : index
    %c0_8 = arith.constant 0 : index
    %5 = vector.load %arg7[%c17, %c0_7, %c0_8] : memref<18x18x4xf32, #tpu.memory_space<vmem>>, vector<1x18x4xf32>
    tpu.vector_store %arg7[%c17, %c0_7, %c0_8], %2 {strides = array<i32>} : memref<18x18x4xf32, #tpu.memory_space<vmem>>, vector<1x18x4xf32>,
    %c1 = arith.constant 1 : index
    %c0_9 = arith.constant 0 : index
    %c0_10 = arith.constant 0 : index
    %6 = vector.load %arg7[%c1, %c0_9, %c0_10] : memref<18x18x4xf32, #tpu.memory_space<vmem>>, vector<16x1x4xf32>
    tpu.vector_store %arg7[%c1, %c0_9, %c0_10], %3 {strides = array<i32>} : memref<18x18x4xf32, #tpu.memory_space<vmem>>, vector<16x1x4xf32>,
    %c1_11 = arith.constant 1 : index
    %c17_12 = arith.constant 17 : index
    %c0_13 = arith.constant 0 : index
    %7 = vector.load %arg7[%c1_11, %c17_12, %c0_13] : memref<18x18x4xf32, #tpu.memory_space<vmem>>, vector<16x1x4xf32>
    tpu.vector_store %arg7[%c1_11, %c17_12, %c0_13], %3 {strides = array<i32>} : memref<18x18x4xf32, #tpu.memory_space<vmem>>, vector<16x1x4xf32>,
    %c0_14 = arith.constant 0 : index
    %c0_15 = arith.constant 0 : index
    %c0_16 = arith.constant 0 : index
    %8 = vector.load %arg1[%c0_14, %c0_15, %c0_16] : memref<2x256x4xf32, #tpu.memory_space<vmem>>, vector<1x256x4xf32>
    %9 = vector.shape_cast %8 : vector<1x256x4xf32> to vector<256x4xf32>
    %10 = vector.broadcast %0 : vector<1x4xf32> to vector<256x4xf32>
    %11 = arith.mulf %9, %10 : vector<256x4xf32>
    %12 = vector.broadcast %1 : vector<1x4xf32> to vector<256x4xf32>
    %13 = arith.addf %11, %12 : vector<256x4xf32>
    %cst_17 = arith.constant 0.000000e+00 : f32
    %14 = vector.broadcast %cst_17 : f32 to vector<256x4xf32>
    %15 = arith.maximumf %13, %14 : vector<256x4xf32>
    %16 = vector.shape_cast %15 : vector<256x4xf32> to vector<16x16x4xf32>
    %c1_18 = arith.constant 1 : index
    %c1_19 = arith.constant 1 : index
    %c0_20 = arith.constant 0 : index
    %17 = vector.load %arg7[%c1_18, %c1_19, %c0_20] : memref<18x18x4xf32, #tpu.memory_space<vmem>>, vector<16x16x4xf32>
    tpu.vector_store %arg7[%c1_18, %c1_19, %c0_20], %16 {strides = array<i32>} : memref<18x18x4xf32, #tpu.memory_space<vmem>>, vector<16x16x4xf32>,
    %c0_21 = arith.constant 0 : index
    %c0_22 = arith.constant 0 : index
    %c0_23 = arith.constant 0 : index
    %18 = vector.load %arg7[%c0_21, %c0_22, %c0_23] : memref<18x18x4xf32, #tpu.memory_space<vmem>>, vector<16x16x4xf32>
    %19 = vector.shape_cast %18 : vector<16x16x4xf32> to vector<256x4xf32>
    %c0_24 = arith.constant 0 : index
    %c0_25 = arith.constant 0 : index
    %c0_26 = arith.constant 0 : index
    %20 = vector.load %arg4[%c0_24, %c0_25, %c0_26] : memref<9x4x4xf32, #tpu.memory_space<vmem>>, vector<1x4x4xf32>
    %21 = vector.shape_cast %20 : vector<1x4x4xf32> to vector<4x4xf32>
    %cst_27 = arith.constant dense<0.000000e+00> : vector<256x4xf32>
    %22 = tpu.matmul %19, %21, %cst_27 {dimension_numbers = #tpu.dot_dimension_numbers<[1], [0], [0], [1], [0, 0, 1, 1], [], []>} : vector<256x4xf32>, vector<4x4xf32>, vector<256x4xf32> -> vector<256x4xf32>
    %c0_28 = arith.constant 0 : index
    %c1_29 = arith.constant 1 : index
    %c0_30 = arith.constant 0 : index
    %23 = vector.load %arg7[%c0_28, %c1_29, %c0_30] : memref<18x18x4xf32, #tpu.memory_space<vmem>>, vector<16x16x4xf32>
    %24 = vector.shape_cast %23 : vector<16x16x4xf32> to vector<256x4xf32>
    %c1_31 = arith.constant 1 : index
    %c0_32 = arith.constant 0 : index
    %c0_33 = arith.constant 0 : index
    %25 = vector.load %arg4[%c1_31, %c0_32, %c0_33] : memref<9x4x4xf32, #tpu.memory_space<vmem>>, vector<1x4x4xf32>
    %26 = vector.shape_cast %25 : vector<1x4x4xf32> to vector<4x4xf32>
    %cst_34 = arith.constant dense<0.000000e+00> : vector<256x4xf32>
    %27 = tpu.matmul %24, %26, %cst_34 {dimension_numbers = #tpu.dot_dimension_numbers<[1], [0], [0], [1], [0, 0, 1, 1], [], []>} : vector<256x4xf32>, vector<4x4xf32>, vector<256x4xf32> -> vector<256x4xf32>
    %28 = arith.addf %22, %27 : vector<256x4xf32>
    %c0_35 = arith.constant 0 : index
    %c2 = arith.constant 2 : index
    %c0_36 = arith.constant 0 : index
    %29 = vector.load %arg7[%c0_35, %c2, %c0_36] : memref<18x18x4xf32, #tpu.memory_space<vmem>>, vector<16x16x4xf32>
    %30 = vector.shape_cast %29 : vector<16x16x4xf32> to vector<256x4xf32>
    %c2_37 = arith.constant 2 : index
    %c0_38 = arith.constant 0 : index
    %c0_39 = arith.constant 0 : index
    %31 = vector.load %arg4[%c2_37, %c0_38, %c0_39] : memref<9x4x4xf32, #tpu.memory_space<vmem>>, vector<1x4x4xf32>
    %32 = vector.shape_cast %31 : vector<1x4x4xf32> to vector<4x4xf32>
    %cst_40 = arith.constant dense<0.000000e+00> : vector<256x4xf32>
    %33 = tpu.matmul %30, %32, %cst_40 {dimension_numbers = #tpu.dot_dimension_numbers<[1], [0], [0], [1], [0, 0, 1, 1], [], []>} : vector<256x4xf32>, vector<4x4xf32>, vector<256x4xf32> -> vector<256x4xf32>
    %34 = arith.addf %28, %33 : vector<256x4xf32>
    %c1_41 = arith.constant 1 : index
    %c0_42 = arith.constant 0 : index
    %c0_43 = arith.constant 0 : index
    %35 = vector.load %arg7[%c1_41, %c0_42, %c0_43] : memref<18x18x4xf32, #tpu.memory_space<vmem>>, vector<16x16x4xf32>
    %36 = vector.shape_cast %35 : vector<16x16x4xf32> to vector<256x4xf32>
    %c3 = arith.constant 3 : index
    %c0_44 = arith.constant 0 : index
    %c0_45 = arith.constant 0 : index
    %37 = vector.load %arg4[%c3, %c0_44, %c0_45] : memref<9x4x4xf32, #tpu.memory_space<vmem>>, vector<1x4x4xf32>
    %38 = vector.shape_cast %37 : vector<1x4x4xf32> to vector<4x4xf32>
    %cst_46 = arith.constant dense<0.000000e+00> : vector<256x4xf32>
    %39 = tpu.matmul %36, %38, %cst_46 {dimension_numbers = #tpu.dot_dimension_numbers<[1], [0], [0], [1], [0, 0, 1, 1], [], []>} : vector<256x4xf32>, vector<4x4xf32>, vector<256x4xf32> -> vector<256x4xf32>
    %40 = arith.addf %34, %39 : vector<256x4xf32>
    %c1_47 = arith.constant 1 : index
    %c1_48 = arith.constant 1 : index
    %c0_49 = arith.constant 0 : index
    %41 = vector.load %arg7[%c1_47, %c1_48, %c0_49] : memref<18x18x4xf32, #tpu.memory_space<vmem>>, vector<16x16x4xf32>
    %42 = vector.shape_cast %41 : vector<16x16x4xf32> to vector<256x4xf32>
    %c4 = arith.constant 4 : index
    %c0_50 = arith.constant 0 : index
    %c0_51 = arith.constant 0 : index
    %43 = vector.load %arg4[%c4, %c0_50, %c0_51] : memref<9x4x4xf32, #tpu.memory_space<vmem>>, vector<1x4x4xf32>
    %44 = vector.shape_cast %43 : vector<1x4x4xf32> to vector<4x4xf32>
    %cst_52 = arith.constant dense<0.000000e+00> : vector<256x4xf32>
    %45 = tpu.matmul %42, %44, %cst_52 {dimension_numbers = #tpu.dot_dimension_numbers<[1], [0], [0], [1], [0, 0, 1, 1], [], []>} : vector<256x4xf32>, vector<4x4xf32>, vector<256x4xf32> -> vector<256x4xf32>
    %46 = arith.addf %40, %45 : vector<256x4xf32>
    %c1_53 = arith.constant 1 : index
    %c2_54 = arith.constant 2 : index
    %c0_55 = arith.constant 0 : index
    %47 = vector.load %arg7[%c1_53, %c2_54, %c0_55] : memref<18x18x4xf32, #tpu.memory_space<vmem>>, vector<16x16x4xf32>
    %48 = vector.shape_cast %47 : vector<16x16x4xf32> to vector<256x4xf32>
    %c5 = arith.constant 5 : index
    %c0_56 = arith.constant 0 : index
    %c0_57 = arith.constant 0 : index
    %49 = vector.load %arg4[%c5, %c0_56, %c0_57] : memref<9x4x4xf32, #tpu.memory_space<vmem>>, vector<1x4x4xf32>
    %50 = vector.shape_cast %49 : vector<1x4x4xf32> to vector<4x4xf32>
    %cst_58 = arith.constant dense<0.000000e+00> : vector<256x4xf32>
    %51 = tpu.matmul %48, %50, %cst_58 {dimension_numbers = #tpu.dot_dimension_numbers<[1], [0], [0], [1], [0, 0, 1, 1], [], []>} : vector<256x4xf32>, vector<4x4xf32>, vector<256x4xf32> -> vector<256x4xf32>
    %52 = arith.addf %46, %51 : vector<256x4xf32>
    %c2_59 = arith.constant 2 : index
    %c0_60 = arith.constant 0 : index
    %c0_61 = arith.constant 0 : index
    %53 = vector.load %arg7[%c2_59, %c0_60, %c0_61] : memref<18x18x4xf32, #tpu.memory_space<vmem>>, vector<16x16x4xf32>
    %54 = vector.shape_cast %53 : vector<16x16x4xf32> to vector<256x4xf32>
    %c6 = arith.constant 6 : index
    %c0_62 = arith.constant 0 : index
    %c0_63 = arith.constant 0 : index
    %55 = vector.load %arg4[%c6, %c0_62, %c0_63] : memref<9x4x4xf32, #tpu.memory_space<vmem>>, vector<1x4x4xf32>
    %56 = vector.shape_cast %55 : vector<1x4x4xf32> to vector<4x4xf32>
    %cst_64 = arith.constant dense<0.000000e+00> : vector<256x4xf32>
    %57 = tpu.matmul %54, %56, %cst_64 {dimension_numbers = #tpu.dot_dimension_numbers<[1], [0], [0], [1], [0, 0, 1, 1], [], []>} : vector<256x4xf32>, vector<4x4xf32>, vector<256x4xf32> -> vector<256x4xf32>
    %58 = arith.addf %52, %57 : vector<256x4xf32>
    %c2_65 = arith.constant 2 : index
    %c1_66 = arith.constant 1 : index
    %c0_67 = arith.constant 0 : index
    %59 = vector.load %arg7[%c2_65, %c1_66, %c0_67] : memref<18x18x4xf32, #tpu.memory_space<vmem>>, vector<16x16x4xf32>
    %60 = vector.shape_cast %59 : vector<16x16x4xf32> to vector<256x4xf32>
    %c7 = arith.constant 7 : index
    %c0_68 = arith.constant 0 : index
    %c0_69 = arith.constant 0 : index
    %61 = vector.load %arg4[%c7, %c0_68, %c0_69] : memref<9x4x4xf32, #tpu.memory_space<vmem>>, vector<1x4x4xf32>
    %62 = vector.shape_cast %61 : vector<1x4x4xf32> to vector<4x4xf32>
    %cst_70 = arith.constant dense<0.000000e+00> : vector<256x4xf32>
    %63 = tpu.matmul %60, %62, %cst_70 {dimension_numbers = #tpu.dot_dimension_numbers<[1], [0], [0], [1], [0, 0, 1, 1], [], []>} : vector<256x4xf32>, vector<4x4xf32>, vector<256x4xf32> -> vector<256x4xf32>
    %64 = arith.addf %58, %63 : vector<256x4xf32>
    %c2_71 = arith.constant 2 : index
    %c2_72 = arith.constant 2 : index
    %c0_73 = arith.constant 0 : index
    %65 = vector.load %arg7[%c2_71, %c2_72, %c0_73] : memref<18x18x4xf32, #tpu.memory_space<vmem>>, vector<16x16x4xf32>
    %66 = vector.shape_cast %65 : vector<16x16x4xf32> to vector<256x4xf32>
    %c8 = arith.constant 8 : index
    %c0_74 = arith.constant 0 : index
    %c0_75 = arith.constant 0 : index
    %67 = vector.load %arg4[%c8, %c0_74, %c0_75] : memref<9x4x4xf32, #tpu.memory_space<vmem>>, vector<1x4x4xf32>
    %68 = vector.shape_cast %67 : vector<1x4x4xf32> to vector<4x4xf32>
    %cst_76 = arith.constant dense<0.000000e+00> : vector<256x4xf32>
    %69 = tpu.matmul %66, %68, %cst_76 {dimension_numbers = #tpu.dot_dimension_numbers<[1], [0], [0], [1], [0, 0, 1, 1], [], []>} : vector<256x4xf32>, vector<4x4xf32>, vector<256x4xf32> -> vector<256x4xf32>
    %70 = arith.addf %64, %69 : vector<256x4xf32>
    %c0_77 = arith.constant 0 : index
    %c0_78 = arith.constant 0 : index
    %c0_79 = arith.constant 0 : index
    %71 = vector.load %arg5[%c0_77, %c0_78, %c0_79] : memref<2x256x4xf32, #tpu.memory_space<vmem>>, vector<1x256x4xf32>
    %72 = vector.shape_cast %71 : vector<1x256x4xf32> to vector<256x4xf32>
    %73 = arith.addf %70, %72 : vector<256x4xf32>
    %c0_80 = arith.constant 0 : index
    %c0_81 = arith.constant 0 : index
    %c0_82 = arith.constant 0 : index
    %74 = vector.load %arg6[%c0_80, %c0_81, %c0_82] : memref<2x256x4xf32, #tpu.memory_space<vmem>>, vector<1x256x4xf32>
    %75 = vector.shape_cast %74 : vector<1x256x4xf32> to vector<256x4xf32>
    %76 = vector.shape_cast %73 : vector<256x4xf32> to vector<1x256x4xf32>
    tpu.vector_store %arg6[%c0_80, %c0_81, %c0_82], %76 {strides = array<i32>} : memref<2x256x4xf32, #tpu.memory_space<vmem>>, vector<1x256x4xf32>,
    %c1_83 = arith.constant 1 : index
    %c0_84 = arith.constant 0 : index
    %c0_85 = arith.constant 0 : index
    %77 = vector.load %arg1[%c1_83, %c0_84, %c0_85] : memref<2x256x4xf32, #tpu.memory_space<vmem>>, vector<1x256x4xf32>
    %78 = vector.shape_cast %77 : vector<1x256x4xf32> to vector<256x4xf32>
    %79 = vector.broadcast %0 : vector<1x4xf32> to vector<256x4xf32>
    %80 = arith.mulf %78, %79 : vector<256x4xf32>
    %81 = vector.broadcast %1 : vector<1x4xf32> to vector<256x4xf32>
    %82 = arith.addf %80, %81 : vector<256x4xf32>
    %cst_86 = arith.constant 0.000000e+00 : f32
    %83 = vector.broadcast %cst_86 : f32 to vector<256x4xf32>
    %84 = arith.maximumf %82, %83 : vector<256x4xf32>
    %85 = vector.shape_cast %84 : vector<256x4xf32> to vector<16x16x4xf32>
    %c1_87 = arith.constant 1 : index
    %c1_88 = arith.constant 1 : index
    %c0_89 = arith.constant 0 : index
    %86 = vector.load %arg7[%c1_87, %c1_88, %c0_89] : memref<18x18x4xf32, #tpu.memory_space<vmem>>, vector<16x16x4xf32>
    tpu.vector_store %arg7[%c1_87, %c1_88, %c0_89], %85 {strides = array<i32>} : memref<18x18x4xf32, #tpu.memory_space<vmem>>, vector<16x16x4xf32>,
    %c0_90 = arith.constant 0 : index
    %c0_91 = arith.constant 0 : index
    %c0_92 = arith.constant 0 : index
    %87 = vector.load %arg7[%c0_90, %c0_91, %c0_92] : memref<18x18x4xf32, #tpu.memory_space<vmem>>, vector<16x16x4xf32>
    %88 = vector.shape_cast %87 : vector<16x16x4xf32> to vector<256x4xf32>
    %c0_93 = arith.constant 0 : index
    %c0_94 = arith.constant 0 : index
    %c0_95 = arith.constant 0 : index
    %89 = vector.load %arg4[%c0_93, %c0_94, %c0_95] : memref<9x4x4xf32, #tpu.memory_space<vmem>>, vector<1x4x4xf32>
    %90 = vector.shape_cast %89 : vector<1x4x4xf32> to vector<4x4xf32>
    %cst_96 = arith.constant dense<0.000000e+00> : vector<256x4xf32>
    %91 = tpu.matmul %88, %90, %cst_96 {dimension_numbers = #tpu.dot_dimension_numbers<[1], [0], [0], [1], [0, 0, 1, 1], [], []>} : vector<256x4xf32>, vector<4x4xf32>, vector<256x4xf32> -> vector<256x4xf32>
    %c0_97 = arith.constant 0 : index
    %c1_98 = arith.constant 1 : index
    %c0_99 = arith.constant 0 : index
    %92 = vector.load %arg7[%c0_97, %c1_98, %c0_99] : memref<18x18x4xf32, #tpu.memory_space<vmem>>, vector<16x16x4xf32>
    %93 = vector.shape_cast %92 : vector<16x16x4xf32> to vector<256x4xf32>
    %c1_100 = arith.constant 1 : index
    %c0_101 = arith.constant 0 : index
    %c0_102 = arith.constant 0 : index
    %94 = vector.load %arg4[%c1_100, %c0_101, %c0_102] : memref<9x4x4xf32, #tpu.memory_space<vmem>>, vector<1x4x4xf32>
    %95 = vector.shape_cast %94 : vector<1x4x4xf32> to vector<4x4xf32>
    %cst_103 = arith.constant dense<0.000000e+00> : vector<256x4xf32>
    %96 = tpu.matmul %93, %95, %cst_103 {dimension_numbers = #tpu.dot_dimension_numbers<[1], [0], [0], [1], [0, 0, 1, 1], [], []>} : vector<256x4xf32>, vector<4x4xf32>, vector<256x4xf32> -> vector<256x4xf32>
    %97 = arith.addf %91, %96 : vector<256x4xf32>
    %c0_104 = arith.constant 0 : index
    %c2_105 = arith.constant 2 : index
    %c0_106 = arith.constant 0 : index
    %98 = vector.load %arg7[%c0_104, %c2_105, %c0_106] : memref<18x18x4xf32, #tpu.memory_space<vmem>>, vector<16x16x4xf32>
    %99 = vector.shape_cast %98 : vector<16x16x4xf32> to vector<256x4xf32>
    %c2_107 = arith.constant 2 : index
    %c0_108 = arith.constant 0 : index
    %c0_109 = arith.constant 0 : index
    %100 = vector.load %arg4[%c2_107, %c0_108, %c0_109] : memref<9x4x4xf32, #tpu.memory_space<vmem>>, vector<1x4x4xf32>
    %101 = vector.shape_cast %100 : vector<1x4x4xf32> to vector<4x4xf32>
    %cst_110 = arith.constant dense<0.000000e+00> : vector<256x4xf32>
    %102 = tpu.matmul %99, %101, %cst_110 {dimension_numbers = #tpu.dot_dimension_numbers<[1], [0], [0], [1], [0, 0, 1, 1], [], []>} : vector<256x4xf32>, vector<4x4xf32>, vector<256x4xf32> -> vector<256x4xf32>
    %103 = arith.addf %97, %102 : vector<256x4xf32>
    %c1_111 = arith.constant 1 : index
    %c0_112 = arith.constant 0 : index
    %c0_113 = arith.constant 0 : index
    %104 = vector.load %arg7[%c1_111, %c0_112, %c0_113] : memref<18x18x4xf32, #tpu.memory_space<vmem>>, vector<16x16x4xf32>
    %105 = vector.shape_cast %104 : vector<16x16x4xf32> to vector<256x4xf32>
    %c3_114 = arith.constant 3 : index
    %c0_115 = arith.constant 0 : index
    %c0_116 = arith.constant 0 : index
    %106 = vector.load %arg4[%c3_114, %c0_115, %c0_116] : memref<9x4x4xf32, #tpu.memory_space<vmem>>, vector<1x4x4xf32>
    %107 = vector.shape_cast %106 : vector<1x4x4xf32> to vector<4x4xf32>
    %cst_117 = arith.constant dense<0.000000e+00> : vector<256x4xf32>
    %108 = tpu.matmul %105, %107, %cst_117 {dimension_numbers = #tpu.dot_dimension_numbers<[1], [0], [0], [1], [0, 0, 1, 1], [], []>} : vector<256x4xf32>, vector<4x4xf32>, vector<256x4xf32> -> vector<256x4xf32>
    %109 = arith.addf %103, %108 : vector<256x4xf32>
    %c1_118 = arith.constant 1 : index
    %c1_119 = arith.constant 1 : index
    %c0_120 = arith.constant 0 : index
    %110 = vector.load %arg7[%c1_118, %c1_119, %c0_120] : memref<18x18x4xf32, #tpu.memory_space<vmem>>, vector<16x16x4xf32>
    %111 = vector.shape_cast %110 : vector<16x16x4xf32> to vector<256x4xf32>
    %c4_121 = arith.constant 4 : index
    %c0_122 = arith.constant 0 : index
    %c0_123 = arith.constant 0 : index
    %112 = vector.load %arg4[%c4_121, %c0_122, %c0_123] : memref<9x4x4xf32, #tpu.memory_space<vmem>>, vector<1x4x4xf32>
    %113 = vector.shape_cast %112 : vector<1x4x4xf32> to vector<4x4xf32>
    %cst_124 = arith.constant dense<0.000000e+00> : vector<256x4xf32>
    %114 = tpu.matmul %111, %113, %cst_124 {dimension_numbers = #tpu.dot_dimension_numbers<[1], [0], [0], [1], [0, 0, 1, 1], [], []>} : vector<256x4xf32>, vector<4x4xf32>, vector<256x4xf32> -> vector<256x4xf32>
    %115 = arith.addf %109, %114 : vector<256x4xf32>
    %c1_125 = arith.constant 1 : index
    %c2_126 = arith.constant 2 : index
    %c0_127 = arith.constant 0 : index
    %116 = vector.load %arg7[%c1_125, %c2_126, %c0_127] : memref<18x18x4xf32, #tpu.memory_space<vmem>>, vector<16x16x4xf32>
    %117 = vector.shape_cast %116 : vector<16x16x4xf32> to vector<256x4xf32>
    %c5_128 = arith.constant 5 : index
    %c0_129 = arith.constant 0 : index
    %c0_130 = arith.constant 0 : index
    %118 = vector.load %arg4[%c5_128, %c0_129, %c0_130] : memref<9x4x4xf32, #tpu.memory_space<vmem>>, vector<1x4x4xf32>
    %119 = vector.shape_cast %118 : vector<1x4x4xf32> to vector<4x4xf32>
    %cst_131 = arith.constant dense<0.000000e+00> : vector<256x4xf32>
    %120 = tpu.matmul %117, %119, %cst_131 {dimension_numbers = #tpu.dot_dimension_numbers<[1], [0], [0], [1], [0, 0, 1, 1], [], []>} : vector<256x4xf32>, vector<4x4xf32>, vector<256x4xf32> -> vector<256x4xf32>
    %121 = arith.addf %115, %120 : vector<256x4xf32>
    %c2_132 = arith.constant 2 : index
    %c0_133 = arith.constant 0 : index
    %c0_134 = arith.constant 0 : index
    %122 = vector.load %arg7[%c2_132, %c0_133, %c0_134] : memref<18x18x4xf32, #tpu.memory_space<vmem>>, vector<16x16x4xf32>
    %123 = vector.shape_cast %122 : vector<16x16x4xf32> to vector<256x4xf32>
    %c6_135 = arith.constant 6 : index
    %c0_136 = arith.constant 0 : index
    %c0_137 = arith.constant 0 : index
    %124 = vector.load %arg4[%c6_135, %c0_136, %c0_137] : memref<9x4x4xf32, #tpu.memory_space<vmem>>, vector<1x4x4xf32>
    %125 = vector.shape_cast %124 : vector<1x4x4xf32> to vector<4x4xf32>
    %cst_138 = arith.constant dense<0.000000e+00> : vector<256x4xf32>
    %126 = tpu.matmul %123, %125, %cst_138 {dimension_numbers = #tpu.dot_dimension_numbers<[1], [0], [0], [1], [0, 0, 1, 1], [], []>} : vector<256x4xf32>, vector<4x4xf32>, vector<256x4xf32> -> vector<256x4xf32>
    %127 = arith.addf %121, %126 : vector<256x4xf32>
    %c2_139 = arith.constant 2 : index
    %c1_140 = arith.constant 1 : index
    %c0_141 = arith.constant 0 : index
    %128 = vector.load %arg7[%c2_139, %c1_140, %c0_141] : memref<18x18x4xf32, #tpu.memory_space<vmem>>, vector<16x16x4xf32>
    %129 = vector.shape_cast %128 : vector<16x16x4xf32> to vector<256x4xf32>
    %c7_142 = arith.constant 7 : index
    %c0_143 = arith.constant 0 : index
    %c0_144 = arith.constant 0 : index
    %130 = vector.load %arg4[%c7_142, %c0_143, %c0_144] : memref<9x4x4xf32, #tpu.memory_space<vmem>>, vector<1x4x4xf32>
    %131 = vector.shape_cast %130 : vector<1x4x4xf32> to vector<4x4xf32>
    %cst_145 = arith.constant dense<0.000000e+00> : vector<256x4xf32>
    %132 = tpu.matmul %129, %131, %cst_145 {dimension_numbers = #tpu.dot_dimension_numbers<[1], [0], [0], [1], [0, 0, 1, 1], [], []>} : vector<256x4xf32>, vector<4x4xf32>, vector<256x4xf32> -> vector<256x4xf32>
    %133 = arith.addf %127, %132 : vector<256x4xf32>
    %c2_146 = arith.constant 2 : index
    %c2_147 = arith.constant 2 : index
    %c0_148 = arith.constant 0 : index
    %134 = vector.load %arg7[%c2_146, %c2_147, %c0_148] : memref<18x18x4xf32, #tpu.memory_space<vmem>>, vector<16x16x4xf32>
    %135 = vector.shape_cast %134 : vector<16x16x4xf32> to vector<256x4xf32>
    %c8_149 = arith.constant 8 : index
    %c0_150 = arith.constant 0 : index
    %c0_151 = arith.constant 0 : index
    %136 = vector.load %arg4[%c8_149, %c0_150, %c0_151] : memref<9x4x4xf32, #tpu.memory_space<vmem>>, vector<1x4x4xf32>
    %137 = vector.shape_cast %136 : vector<1x4x4xf32> to vector<4x4xf32>
    %cst_152 = arith.constant dense<0.000000e+00> : vector<256x4xf32>
    %138 = tpu.matmul %135, %137, %cst_152 {dimension_numbers = #tpu.dot_dimension_numbers<[1], [0], [0], [1], [0, 0, 1, 1], [], []>} : vector<256x4xf32>, vector<4x4xf32>, vector<256x4xf32> -> vector<256x4xf32>
    %139 = arith.addf %133, %138 : vector<256x4xf32>
    %c1_153 = arith.constant 1 : index
    %c0_154 = arith.constant 0 : index
    %c0_155 = arith.constant 0 : index
    %140 = vector.load %arg5[%c1_153, %c0_154, %c0_155] : memref<2x256x4xf32, #tpu.memory_space<vmem>>, vector<1x256x4xf32>
    %141 = vector.shape_cast %140 : vector<1x256x4xf32> to vector<256x4xf32>
    %142 = arith.addf %139, %141 : vector<256x4xf32>
    %c1_156 = arith.constant 1 : index
    %c0_157 = arith.constant 0 : index
    %c0_158 = arith.constant 0 : index
    %143 = vector.load %arg6[%c1_156, %c0_157, %c0_158] : memref<2x256x4xf32, #tpu.memory_space<vmem>>, vector<1x256x4xf32>
    %144 = vector.shape_cast %143 : vector<1x256x4xf32> to vector<256x4xf32>
    %145 = vector.shape_cast %142 : vector<256x4xf32> to vector<1x256x4xf32>
    tpu.vector_store %arg6[%c1_156, %c0_157, %c0_158], %145 {strides = array<i32>} : memref<2x256x4xf32, #tpu.memory_space<vmem>>, vector<1x256x4xf32>,
    return
  }
  func.func @transform_0(%arg0: i32) -> (i32, i32, i32) {
    %c0_i32 = arith.constant 0 : i32
    %c0_i32_0 = arith.constant 0 : i32
    %c0_i32_1 = arith.constant 0 : i32
    return %arg0, %c0_i32, %c0_i32_0 : i32, i32, i32
  }
  func.func @transform_1(%arg0: i32) -> (i32, i32) {
    %c0_i32 = arith.constant 0 : i32
    %c0_i32_0 = arith.constant 0 : i32
    %c0_i32_1 = arith.constant 0 : i32
    return %c0_i32, %c0_i32_0 : i32, i32
  }
  func.func @transform_2(%arg0: i32) -> (i32, i32) {
    %c0_i32 = arith.constant 0 : i32
    %c0_i32_0 = arith.constant 0 : i32
    %c0_i32_1 = arith.constant 0 : i32
    return %c0_i32, %c0_i32_0 : i32, i32
  }
  func.func @transform_3(%arg0: i32) -> (i32, i32, i32) {
    %c0_i32 = arith.constant 0 : i32
    %c0_i32_0 = arith.constant 0 : i32
    %c0_i32_1 = arith.constant 0 : i32
    %c0_i32_2 = arith.constant 0 : i32
    return %c0_i32, %c0_i32_0, %c0_i32_1 : i32, i32, i32
  }
  func.func @transform_4(%arg0: i32) -> (i32, i32, i32) {
    %c0_i32 = arith.constant 0 : i32
    %c0_i32_0 = arith.constant 0 : i32
    %c0_i32_1 = arith.constant 0 : i32
    return %arg0, %c0_i32, %c0_i32_0 : i32, i32, i32
  }
  func.func @transform_5(%arg0: i32) -> (i32, i32, i32) {
    %c0_i32 = arith.constant 0 : i32
    %c0_i32_0 = arith.constant 0 : i32
    %c0_i32_1 = arith.constant 0 : i32
    return %arg0, %c0_i32, %c0_i32_0 : i32, i32, i32
  }
}

</mosaic_0001>

<llo_original>
// kernel: preact_block.3
$region0: #{preact_block.3}
  #allocation0 [shape = 'u32[]', space=smem, size = 0x4, offset = 0x4, fixed_abs, tag = 'smem constant byte address 0x4 - core index']
  #allocation1 [shape = 'u32[72,128]{1,0:T(1,128)}', space=vmem, size = 0x9000, scoped, tag = 'internal scratch']
  #allocation2 [shape = 'f32[18,18,4]{2,1,0:T(8,128)}', space=vmem, size = 0x36000, scoped, tag = 'scratch operand']
  %s0 = inlined_call_operand.vmem [shape: f32[2,256,4], index: 0, kind: input, shape index: {}]
  %s1 = inlined_call_operand.vmem [shape: f32[1,4], index: 1, kind: input, shape index: {}]
  %s2 = inlined_call_operand.vmem [shape: f32[1,4], index: 2, kind: input, shape index: {}]
  %s3 = inlined_call_operand.vmem [shape: f32[9,4,4], index: 3, kind: input, shape index: {}]
  %s4 = inlined_call_operand.vmem [shape: f32[2,256,4], index: 4, kind: input, shape index: {}]
  %s5 = inlined_call_operand.vmem [shape: f32[2,256,4], index: 5, kind: output, shape index: {}]
  %s6 = sld [smem:[#allocation0]]
  $region30: #{preact_block.3} parent=0
    _
  %s8 = ssub.s32 1, %s6
  %s9 = scalar_select 0, %s8, %s6
  // Predicated region
  $region2: #{preact_block.3} parent=0 // pred_check
    _
  $region3: #{preact_block.3} parent=0 // pred_check_branch
    %11 = sbr.rel (0) target = $region5
  $region4: #{preact_block.3} parent=0 // pred_region
    _
  $region5: #{preact_block.3} parent=0 // pred_fallthru
    _
  // Predicated region
  $region6: #{preact_block.3} parent=0 // pred_check
    _
  $region7: #{preact_block.3} parent=0 // pred_check_branch
    %13 = sbr.rel (0) target = $region9
  $region8: #{preact_block.3} parent=0 // pred_region
    _
  $region9: #{preact_block.3} parent=0 // pred_fallthru
    _
  // Predicated region
  $region10: #{preact_block.3} parent=0 // pred_check
    _
  $region11: #{preact_block.3} parent=0 // pred_check_branch
    %15 = sbr.rel (0) target = $region13
  $region12: #{preact_block.3} parent=0 // pred_region
    _
  $region13: #{preact_block.3} parent=0 // pred_fallthru
    _
  // Predicated region
  $region14: #{preact_block.3} parent=0 // pred_check
    _
  $region15: #{preact_block.3} parent=0 // pred_check_branch
    %17 = sbr.rel (0) target = $region17
  $region16: #{preact_block.3} parent=0 // pred_region
    _
  $region17: #{preact_block.3} parent=0 // pred_fallthru
    _
  // Predicated region
  $region18: #{preact_block.3} parent=0 // pred_check
    _
  $region19: #{preact_block.3} parent=0 // pred_check_branch
    %19 = sbr.rel (0) target = $region21
  $region20: #{preact_block.3} parent=0 // pred_region
    _
  $region21: #{preact_block.3} parent=0 // pred_fallthru
    _
  %v20 = vld [vmem:[%s1] sm:$0x1]
  %v21 = vld [vmem:[%s2] sm:$0x1]
  %vm22 = vcmask 31744
  %23 = vst.msk [vmem:[#allocation2] sm:$0xff] %vm22, 0.0
  %24 = vst.msk [vmem:[#allocation2 + $0x8] sm:$0xff] %vm22, 0.0
  %vm25 = vcmask 25600
  %26 = vst.msk [vmem:[#allocation2 + $0x10] sm:$0x3] %vm25, 0.0
  %s27 = scalar_lea.vmem [#allocation2], 408
  %28 = vst.msk [vmem:[%s27] sm:$0xff] %vm22, 0.0
  %29 = vst.msk [vmem:[%s27 + $0x8] sm:$0xff] %vm22, 0.0
  %30 = vst.msk [vmem:[%s27 + $0x10] sm:$0x3] %vm25, 0.0
  %s31 = scalar_lea.vmem [#allocation2], 24
  %vm32 = vcmask 24576
  %33 = vst.msk [vmem:[%s31] sm:$0x1] %vm32, 0.0
  %34 = vst.msk [vmem:[%s31 + $0x18] sm:$0x1] %vm32, 0.0
  %35 = vst.msk [vmem:[%s31 + $0x30] sm:$0x1] %vm32, 0.0
  %36 = vst.msk [vmem:[%s31 + $0x48] sm:$0x1] %vm32, 0.0
  %37 = vst.msk [vmem:[%s31 + $0x60] sm:$0x1] %vm32, 0.0
  %38 = vst.msk [vmem:[%s31 + $0x78] sm:$0x1] %vm32, 0.0
  %39 = vst.msk [vmem:[%s31 + $0x90] sm:$0x1] %vm32, 0.0
  %40 = vst.msk [vmem:[%s31 + $0xa8] sm:$0x1] %vm32, 0.0
  %41 = vst.msk [vmem:[%s31 + $0xc0] sm:$0x1] %vm32, 0.0
  %42 = vst.msk [vmem:[%s31 + $0xd8] sm:$0x1] %vm32, 0.0
  %43 = vst.msk [vmem:[%s31 + $0xf0] sm:$0x1] %vm32, 0.0
  %44 = vst.msk [vmem:[%s31 + $0x108] sm:$0x1] %vm32, 0.0
  %45 = vst.msk [vmem:[%s31 + $0x120] sm:$0x1] %vm32, 0.0
  %46 = vst.msk [vmem:[%s31 + $0x138] sm:$0x1] %vm32, 0.0
  %47 = vst.msk [vmem:[%s31 + $0x150] sm:$0x1] %vm32, 0.0
  %48 = vst.msk [vmem:[%s31 + $0x168] sm:$0x1] %vm32, 0.0
  %49 = vst.msk [vmem:[%s31 + $0x11] sm:$0x1] %vm32, 0.0
  %50 = vst.msk [vmem:[%s31 + $0x29] sm:$0x1] %vm32, 0.0
  %51 = vst.msk [vmem:[%s31 + $0x41] sm:$0x1] %vm32, 0.0
  %52 = vst.msk [vmem:[%s31 + $0x59] sm:$0x1] %vm32, 0.0
  %53 = vst.msk [vmem:[%s31 + $0x71] sm:$0x1] %vm32, 0.0
  %54 = vst.msk [vmem:[%s31 + $0x89] sm:$0x1] %vm32, 0.0
  %55 = vst.msk [vmem:[%s31 + $0xa1] sm:$0x1] %vm32, 0.0
  %56 = vst.msk [vmem:[%s31 + $0xb9] sm:$0x1] %vm32, 0.0
  %57 = vst.msk [vmem:[%s31 + $0xd1] sm:$0x1] %vm32, 0.0
  %58 = vst.msk [vmem:[%s31 + $0xe9] sm:$0x1] %vm32, 0.0
  %59 = vst.msk [vmem:[%s31 + $0x101] sm:$0x1] %vm32, 0.0
  %60 = vst.msk [vmem:[%s31 + $0x119] sm:$0x1] %vm32, 0.0
  %61 = vst.msk [vmem:[%s31 + $0x131] sm:$0x1] %vm32, 0.0
  %62 = vst.msk [vmem:[%s31 + $0x149] sm:$0x1] %vm32, 0.0
  %63 = vst.msk [vmem:[%s31 + $0x161] sm:$0x1] %vm32, 0.0
  %64 = vst.msk [vmem:[%s31 + $0x179] sm:$0x1] %vm32, 0.0
  %v65 = vld [vmem:[%s0] sm:$0xff]
  %v66 = vld [vmem:[%s0 + $0x8] sm:$0xff]
  %v67 = vld [vmem:[%s0 + $0x10] sm:$0xff]
  %v68 = vld [vmem:[%s0 + $0x18] sm:$0xff]
  %v69 = vld [vmem:[%s0 + $0x20] sm:$0xff]
  %v70 = vld [vmem:[%s0 + $0x28] sm:$0xff]
  %v71 = vld [vmem:[%s0 + $0x30] sm:$0xff]
  %v72 = vld [vmem:[%s0 + $0x38] sm:$0xff]
  %v73 = vld [vmem:[%s0 + $0x40] sm:$0xff]
  %v74 = vld [vmem:[%s0 + $0x48] sm:$0xff]
  %v75 = vld [vmem:[%s0 + $0x50] sm:$0xff]
  %v76 = vld [vmem:[%s0 + $0x58] sm:$0xff]
  %v77 = vld [vmem:[%s0 + $0x60] sm:$0xff]
  %v78 = vld [vmem:[%s0 + $0x68] sm:$0xff]
  %v79 = vld [vmem:[%s0 + $0x70] sm:$0xff]
  %v80 = vld [vmem:[%s0 + $0x78] sm:$0xff]
  %v81 = vld [vmem:[%s0 + $0x80] sm:$0xff]
  %v82 = vld [vmem:[%s0 + $0x88] sm:$0xff]
  %v83 = vld [vmem:[%s0 + $0x90] sm:$0xff]
  %v84 = vld [vmem:[%s0 + $0x98] sm:$0xff]
  %v85 = vld [vmem:[%s0 + $0xa0] sm:$0xff]
  %v86 = vld [vmem:[%s0 + $0xa8] sm:$0xff]
  %v87 = vld [vmem:[%s0 + $0xb0] sm:$0xff]
  %v88 = vld [vmem:[%s0 + $0xb8] sm:$0xff]
  %v89 = vld [vmem:[%s0 + $0xc0] sm:$0xff]
  %v90 = vld [vmem:[%s0 + $0xc8] sm:$0xff]
  %v91 = vld [vmem:[%s0 + $0xd0] sm:$0xff]
  %v92 = vld [vmem:[%s0 + $0xd8] sm:$0xff]
  %v93 = vld [vmem:[%s0 + $0xe0] sm:$0xff]
  %v94 = vld [vmem:[%s0 + $0xe8] sm:$0xff]
  %v95 = vld [vmem:[%s0 + $0xf0] sm:$0xff]
  %v96 = vld [vmem:[%s0 + $0xf8] sm:$0xff]
  %v98 = vperm.slane %v20, 0
  %v100 = vmul.f32 %v65, %v98
  %v101 = vmul.f32 %v66, %v98
  %v102 = vmul.f32 %v67, %v98
  %v103 = vmul.f32 %v68, %v98
  %v104 = vmul.f32 %v69, %v98
  %v105 = vmul.f32 %v70, %v98
  %v106 = vmul.f32 %v71, %v98
  %v107 = vmul.f32 %v72, %v98
  %v108 = vmul.f32 %v73, %v98
  %v109 = vmul.f32 %v74, %v98
  %v110 = vmul.f32 %v75, %v98
  %v111 = vmul.f32 %v76, %v98
  %v112 = vmul.f32 %v77, %v98
  %v113 = vmul.f32 %v78, %v98
  %v114 = vmul.f32 %v79, %v98
  %v115 = vmul.f32 %v80, %v98
  %v116 = vmul.f32 %v81, %v98
  %v117 = vmul.f32 %v82, %v98
  %v118 = vmul.f32 %v83, %v98
  %v119 = vmul.f32 %v84, %v98
  %v120 = vmul.f32 %v85, %v98
  %v121 = vmul.f32 %v86, %v98
  %v122 = vmul.f32 %v87, %v98
  %v123 = vmul.f32 %v88, %v98
  %v124 = vmul.f32 %v89, %v98
  %v125 = vmul.f32 %v90, %v98
  %v126 = vmul.f32 %v91, %v98
  %v127 = vmul.f32 %v92, %v98
  %v128 = vmul.f32 %v93, %v98
  %v129 = vmul.f32 %v94, %v98
  %v130 = vmul.f32 %v95, %v98
  %v131 = vmul.f32 %v96, %v98
  %v133 = vperm.slane %v21, 0
  %v135 = vadd.f32 %v100, %v133
  %v136 = vadd.f32 %v101, %v133
  %v137 = vadd.f32 %v102, %v133
  %v138 = vadd.f32 %v103, %v133
  %v139 = vadd.f32 %v104, %v133
  %v140 = vadd.f32 %v105, %v133
  %v141 = vadd.f32 %v106, %v133
  %v142 = vadd.f32 %v107, %v133
  %v143 = vadd.f32 %v108, %v133
  %v144 = vadd.f32 %v109, %v133
  %v145 = vadd.f32 %v110, %v133
  %v146 = vadd.f32 %v111, %v133
  %v147 = vadd.f32 %v112, %v133
  %v148 = vadd.f32 %v113, %v133
  %v149 = vadd.f32 %v114, %v133
  %v150 = vadd.f32 %v115, %v133
  %v151 = vadd.f32 %v116, %v133
  %v152 = vadd.f32 %v117, %v133
  %v153 = vadd.f32 %v118, %v133
  %v154 = vadd.f32 %v119, %v133
  %v155 = vadd.f32 %v120, %v133
  %v156 = vadd.f32 %v121, %v133
  %v157 = vadd.f32 %v122, %v133
  %v158 = vadd.f32 %v123, %v133
  %v159 = vadd.f32 %v124, %v133
  %v160 = vadd.f32 %v125, %v133
  %v161 = vadd.f32 %v126, %v133
  %v162 = vadd.f32 %v127, %v133
  %v163 = vadd.f32 %v128, %v133
  %v164 = vadd.f32 %v129, %v133
  %v165 = vadd.f32 %v130, %v133
  %v166 = vadd.f32 %v131, %v133
  %v167 = vmax.f32 %v135, 0.0
  %v168 = vmax.f32 %v136, 0.0
  %v169 = vmax.f32 %v137, 0.0
  %v170 = vmax.f32 %v138, 0.0
  %v171 = vmax.f32 %v139, 0.0
  %v172 = vmax.f32 %v140, 0.0
  %v173 = vmax.f32 %v141, 0.0
  %v174 = vmax.f32 %v142, 0.0
  %v175 = vmax.f32 %v143, 0.0
  %v176 = vmax.f32 %v144, 0.0
  %v177 = vmax.f32 %v145, 0.0
  %v178 = vmax.f32 %v146, 0.0
  %v179 = vmax.f32 %v147, 0.0
  %v180 = vmax.f32 %v148, 0.0
  %v181 = vmax.f32 %v149, 0.0
  %v182 = vmax.f32 %v150, 0.0
  %v183 = vmax.f32 %v151, 0.0
  %v184 = vmax.f32 %v152, 0.0
  %v185 = vmax.f32 %v153, 0.0
  %v186 = vmax.f32 %v154, 0.0
  %v187 = vmax.f32 %v155, 0.0
  %v188 = vmax.f32 %v156, 0.0
  %v189 = vmax.f32 %v157, 0.0
  %v190 = vmax.f32 %v158, 0.0
  %v191 = vmax.f32 %v159, 0.0
  %v192 = vmax.f32 %v160, 0.0
  %v193 = vmax.f32 %v161, 0.0
  %v194 = vmax.f32 %v162, 0.0
  %v195 = vmax.f32 %v163, 0.0
  %v196 = vmax.f32 %v164, 0.0
  %v197 = vmax.f32 %v165, 0.0
  %v198 = vmax.f32 %v166, 0.0
  %199 = vst.msk [vmem:[%s31 + $0x1] sm:$0xff] %vm22, %v167
  %200 = vst.msk [vmem:[%s31 + $0x9] sm:$0xff] %vm22, %v168
  %201 = vst.msk [vmem:[%s31 + $0x19] sm:$0xff] %vm22, %v169
  %202 = vst.msk [vmem:[%s31 + $0x21] sm:$0xff] %vm22, %v170
  %203 = vst.msk [vmem:[%s31 + $0x31] sm:$0xff] %vm22, %v171
  %204 = vst.msk [vmem:[%s31 + $0x39] sm:$0xff] %vm22, %v172
  %205 = vst.msk [vmem:[%s31 + $0x49] sm:$0xff] %vm22, %v173
  %206 = vst.msk [vmem:[%s31 + $0x51] sm:$0xff] %vm22, %v174
  %207 = vst.msk [vmem:[%s31 + $0x61] sm:$0xff] %vm22, %v175
  %208 = vst.msk [vmem:[%s31 + $0x69] sm:$0xff] %vm22, %v176
  %209 = vst.msk [vmem:[%s31 + $0x79] sm:$0xff] %vm22, %v177
  %210 = vst.msk [vmem:[%s31 + $0x81] sm:$0xff] %vm22, %v178
  %211 = vst.msk [vmem:[%s31 + $0x91] sm:$0xff] %vm22, %v179
  %212 = vst.msk [vmem:[%s31 + $0x99] sm:$0xff] %vm22, %v180
  %213 = vst.msk [vmem:[%s31 + $0xa9] sm:$0xff] %vm22, %v181
  %214 = vst.msk [vmem:[%s31 + $0xb1] sm:$0xff] %vm22, %v182
  %215 = vst.msk [vmem:[%s31 + $0xc1] sm:$0xff] %vm22, %v183
  %216 = vst.msk [vmem:[%s31 + $0xc9] sm:$0xff] %vm22, %v184
  %217 = vst.msk [vmem:[%s31 + $0xd9] sm:$0xff] %vm22, %v185
  %218 = vst.msk [vmem:[%s31 + $0xe1] sm:$0xff] %vm22, %v186
  %219 = vst.msk [vmem:[%s31 + $0xf1] sm:$0xff] %vm22, %v187
  %220 = vst.msk [vmem:[%s31 + $0xf9] sm:$0xff] %vm22, %v188
  %221 = vst.msk [vmem:[%s31 + $0x109] sm:$0xff] %vm22, %v189
  %222 = vst.msk [vmem:[%s31 + $0x111] sm:$0xff] %vm22, %v190
  %223 = vst.msk [vmem:[%s31 + $0x121] sm:$0xff] %vm22, %v191
  %224 = vst.msk [vmem:[%s31 + $0x129] sm:$0xff] %vm22, %v192
  %225 = vst.msk [vmem:[%s31 + $0x139] sm:$0xff] %vm22, %v193
  %226 = vst.msk [vmem:[%s31 + $0x141] sm:$0xff] %vm22, %v194
  %227 = vst.msk [vmem:[%s31 + $0x151] sm:$0xff] %vm22, %v195
  %228 = vst.msk [vmem:[%s31 + $0x159] sm:$0xff] %vm22, %v196
  %229 = vst.msk [vmem:[%s31 + $0x169] sm:$0xff] %vm22, %v197
  %230 = vst.msk [vmem:[%s31 + $0x171] sm:$0xff] %vm22, %v198
  %v231 = vld [vmem:[#allocation2] sm:$0xff]
  %v232 = vld [vmem:[#allocation2 + $0x8] sm:$0xff]
  %v233 = vld [vmem:[#allocation2 + $0x18] sm:$0xff]
  %v234 = vld [vmem:[#allocation2 + $0x20] sm:$0xff]
  %v235 = vld [vmem:[#allocation2 + $0x30] sm:$0xff]
  %v236 = vld [vmem:[#allocation2 + $0x38] sm:$0xff]
  %v237 = vld [vmem:[#allocation2 + $0x48] sm:$0xff]
  %v238 = vld [vmem:[#allocation2 + $0x50] sm:$0xff]
  %v239 = vld [vmem:[#allocation2 + $0x60] sm:$0xff]
  %v240 = vld [vmem:[#allocation2 + $0x68] sm:$0xff]
  %v241 = vld [vmem:[#allocation2 + $0x78] sm:$0xff]
  %v242 = vld [vmem:[#allocation2 + $0x80] sm:$0xff]
  %v243 = vld [vmem:[#allocation2 + $0x90] sm:$0xff]
  %v244 = vld [vmem:[#allocation2 + $0x98] sm:$0xff]
  %v245 = vld [vmem:[#allocation2 + $0xa8] sm:$0xff]
  %v246 = vld [vmem:[#allocation2 + $0xb0] sm:$0xff]
  %v247 = vld [vmem:[#allocation2 + $0xc0] sm:$0xff]
  %v248 = vld [vmem:[#allocation2 + $0xc8] sm:$0xff]
  %v249 = vld [vmem:[#allocation2 + $0xd8] sm:$0xff]
  %v250 = vld [vmem:[#allocation2 + $0xe0] sm:$0xff]
  %v251 = vld [vmem:[#allocation2 + $0xf0] sm:$0xff]
  %v252 = vld [vmem:[#allocation2 + $0xf8] sm:$0xff]
  %v253 = vld [vmem:[#allocation2 + $0x108] sm:$0xff]
  %v254 = vld [vmem:[#allocation2 + $0x110] sm:$0xff]
  %v255 = vld [vmem:[#allocation2 + $0x120] sm:$0xff]
  %v256 = vld [vmem:[#allocation2 + $0x128] sm:$0xff]
  %v257 = vld [vmem:[#allocation2 + $0x138] sm:$0xff]
  %v258 = vld [vmem:[#allocation2 + $0x140] sm:$0xff]
  %v259 = vld [vmem:[#allocation2 + $0x150] sm:$0xff]
  %v260 = vld [vmem:[#allocation2 + $0x158] sm:$0xff]
  %v261 = vld [vmem:[#allocation2 + $0x168] sm:$0xff]
  %v262 = vld [vmem:[#allocation2 + $0x170] sm:$0xff]
  %v263 = vld [vmem:[%s3] sm:$0xf]
  %v264 = vld [vmem:[#allocation2 + $0x1] sm:$0xff]
  %v265 = vld [vmem:[#allocation2 + $0x9] sm:$0xff]
  %v266 = vld [vmem:[#allocation2 + $0x19] sm:$0xff]
  %v267 = vld [vmem:[#allocation2 + $0x21] sm:$0xff]
  %v268 = vld [vmem:[#allocation2 + $0x31] sm:$0xff]
  %v269 = vld [vmem:[#allocation2 + $0x39] sm:$0xff]
  %v270 = vld [vmem:[#allocation2 + $0x49] sm:$0xff]
  %v271 = vld [vmem:[#allocation2 + $0x51] sm:$0xff]
  %v272 = vld [vmem:[#allocation2 + $0x61] sm:$0xff]
  %v273 = vld [vmem:[#allocation2 + $0x69] sm:$0xff]
  %v274 = vld [vmem:[#allocation2 + $0x79] sm:$0xff]
  %v275 = vld [vmem:[#allocation2 + $0x81] sm:$0xff]
  %v276 = vld [vmem:[#allocation2 + $0x91] sm:$0xff]
  %v277 = vld [vmem:[#allocation2 + $0x99] sm:$0xff]
  %v278 = vld [vmem:[#allocation2 + $0xa9] sm:$0xff]
  %v279 = vld [vmem:[#allocation2 + $0xb1] sm:$0xff]
  %v280 = vld [vmem:[#allocation2 + $0xc1] sm:$0xff]
  %v281 = vld [vmem:[#allocation2 + $0xc9] sm:$0xff]
  %v282 = vld [vmem:[#allocation2 + $0xd9] sm:$0xff]
  %v283 = vld [vmem:[#allocation2 + $0xe1] sm:$0xff]
  %v284 = vld [vmem:[#allocation2 + $0xf1] sm:$0xff]
  %v285 = vld [vmem:[#allocation2 + $0xf9] sm:$0xff]
  %v286 = vld [vmem:[#allocation2 + $0x109] sm:$0xff]
  %v287 = vld [vmem:[#allocation2 + $0x111] sm:$0xff]
  %v288 = vld [vmem:[#allocation2 + $0x121] sm:$0xff]
  %v289 = vld [vmem:[#allocation2 + $0x129] sm:$0xff]
  %v290 = vld [vmem:[#allocation2 + $0x139] sm:$0xff]
  %v291 = vld [vmem:[#allocation2 + $0x141] sm:$0xff]
  %v292 = vld [vmem:[#allocation2 + $0x151] sm:$0xff]
  %v293 = vld [vmem:[#allocation2 + $0x159] sm:$0xff]
  %v294 = vld [vmem:[#allocation2 + $0x169] sm:$0xff]
  %v295 = vld [vmem:[#allocation2 + $0x171] sm:$0xff]
  %s296 = scalar_lea.vmem %s3, 4
  %v297 = vld [vmem:[%s296] sm:$0xf]
  %v299 = vsel %vm22, %v264, 0
  %v302 = vsel %vm22, %v265, 0
  %v305 = vsel %vm22, %v266, 0
  %v308 = vsel %vm22, %v267, 0
  %v311 = vsel %vm22, %v268, 0
  %v314 = vsel %vm22, %v269, 0
  %v317 = vsel %vm22, %v270, 0
  %v320 = vsel %vm22, %v271, 0
  %v323 = vsel %vm22, %v272, 0
  %v326 = vsel %vm22, %v273, 0
  %v329 = vsel %vm22, %v274, 0
  %v332 = vsel %vm22, %v275, 0
  %v335 = vsel %vm22, %v276, 0
  %v338 = vsel %vm22, %v277, 0
  %v341 = vsel %vm22, %v278, 0
  %v344 = vsel %vm22, %v279, 0
  %v347 = vsel %vm22, %v280, 0
  %v350 = vsel %vm22, %v281, 0
  %v353 = vsel %vm22, %v282, 0
  %v356 = vsel %vm22, %v283, 0
  %v359 = vsel %vm22, %v284, 0
  %v362 = vsel %vm22, %v285, 0
  %v365 = vsel %vm22, %v286, 0
  %v368 = vsel %vm22, %v287, 0
  %v371 = vsel %vm22, %v288, 0
  %v374 = vsel %vm22, %v289, 0
  %v377 = vsel %vm22, %v290, 0
  %v380 = vsel %vm22, %v291, 0
  %v383 = vsel %vm22, %v292, 0
  %v386 = vsel %vm22, %v293, 0
  %v389 = vsel %vm22, %v294, 0
  %v392 = vsel %vm22, %v295, 0
  %vm394 = vcmask 1043456
  %v396 = vsel %vm394, %v297, 0
  %398 = vmatpush.msra.mxu0 0.0
  %399 = vmatpush.msra.mxu0 0.0
  %400 = vmatpush.msra.mxu0 0.0
  %401 = vmatpush.msra.mxu0 0.0
  %402 = vmatpush.msra.mxu0 0.0
  %403 = vmatpush.msra.mxu0 0.0
  %404 = vmatpush.msra.mxu0 0.0
  %405 = vmatpush.msra.mxu0 0.0
  %406 = vmatpush.msra.mxu0 0.0
  %407 = vmatpush.msra.mxu0 0.0
  %408 = vmatpush.msra.mxu0 0.0
  %409 = vmatpush.msra.mxu0 0.0
  %410 = vmatpush.msra.mxu0 0.0
  %411 = vmatpush.msra.mxu0 0.0
  %412 = vmatpush.msra.mxu0 0.0
  %413 = vmatpush.msra.mxu0 %v396
  %414 = vmatmul.f32.gmra.mxu0 %v299
  %v415 = vpop.f32.mrf.mxu0
  %v416 = vadd.f32 0.0, %v415
  %417 = vmatmul.f32.gmra.mxu0 %v302
  %v418 = vpop.f32.mrf.mxu0
  %v419 = vadd.f32 0.0, %v418
  %420 = vmatmul.f32.gmra.mxu0 %v305
  %v421 = vpop.f32.mrf.mxu0
  %v422 = vadd.f32 0.0, %v421
  %423 = vmatmul.f32.gmra.mxu0 %v308
  %v424 = vpop.f32.mrf.mxu0
  %v425 = vadd.f32 0.0, %v424
  %426 = vmatmul.f32.gmra.mxu0 %v311
  %v427 = vpop.f32.mrf.mxu0
  %v428 = vadd.f32 0.0, %v427
  %429 = vmatmul.f32.gmra.mxu0 %v314
  %v430 = vpop.f32.mrf.mxu0
  %v431 = vadd.f32 0.0, %v430
  %432 = vmatmul.f32.gmra.mxu0 %v317
  %v433 = vpop.f32.mrf.mxu0
  %v434 = vadd.f32 0.0, %v433
  %435 = vmatmul.f32.gmra.mxu0 %v320
  %v436 = vpop.f32.mrf.mxu0
  %v437 = vadd.f32 0.0, %v436
  %438 = vmatmul.f32.gmra.mxu0 %v323
  %v439 = vpop.f32.mrf.mxu0
  %v440 = vadd.f32 0.0, %v439
  %441 = vmatmul.f32.gmra.mxu0 %v326
  %v442 = vpop.f32.mrf.mxu0
  %v443 = vadd.f32 0.0, %v442
  %444 = vmatmul.f32.gmra.mxu0 %v329
  %v445 = vpop.f32.mrf.mxu0
  %v446 = vadd.f32 0.0, %v445
  %447 = vmatmul.f32.gmra.mxu0 %v332
  %v448 = vpop.f32.mrf.mxu0
  %v449 = vadd.f32 0.0, %v448
  %450 = vmatmul.f32.gmra.mxu0 %v335
  %v451 = vpop.f32.mrf.mxu0
  %v452 = vadd.f32 0.0, %v451
  %453 = vmatmul.f32.gmra.mxu0 %v338
  %v454 = vpop.f32.mrf.mxu0
  %v455 = vadd.f32 0.0, %v454
  %456 = vmatmul.f32.gmra.mxu0 %v341
  %v457 = vpop.f32.mrf.mxu0
  %v458 = vadd.f32 0.0, %v457
  %459 = vmatmul.f32.gmra.mxu0 %v344
  %v460 = vpop.f32.mrf.mxu0
  %v461 = vadd.f32 0.0, %v460
  %462 = vmatmul.f32.gmra.mxu0 %v347
  %v463 = vpop.f32.mrf.mxu0
  %v464 = vadd.f32 0.0, %v463
  %465 = vmatmul.f32.gmra.mxu0 %v350
  %v466 = vpop.f32.mrf.mxu0
  %v467 = vadd.f32 0.0, %v466
  %468 = vmatmul.f32.gmra.mxu0 %v353
  %v469 = vpop.f32.mrf.mxu0
  %v470 = vadd.f32 0.0, %v469
  %471 = vmatmul.f32.gmra.mxu0 %v356
  %v472 = vpop.f32.mrf.mxu0
  %v473 = vadd.f32 0.0, %v472
  %474 = vmatmul.f32.gmra.mxu0 %v359
  %v475 = vpop.f32.mrf.mxu0
  %v476 = vadd.f32 0.0, %v475
  %477 = vmatmul.f32.gmra.mxu0 %v362
  %v478 = vpop.f32.mrf.mxu0
  %v479 = vadd.f32 0.0, %v478
  %480 = vmatmul.f32.gmra.mxu0 %v365
  %v481 = vpop.f32.mrf.mxu0
  %v482 = vadd.f32 0.0, %v481
  %483 = vmatmul.f32.gmra.mxu0 %v368
  %v484 = vpop.f32.mrf.mxu0
  %v485 = vadd.f32 0.0, %v484
  %486 = vmatmul.f32.gmra.mxu0 %v371
  %v487 = vpop.f32.mrf.mxu0
  %v488 = vadd.f32 0.0, %v487
  %489 = vmatmul.f32.gmra.mxu0 %v374
  %v490 = vpop.f32.mrf.mxu0
  %v491 = vadd.f32 0.0, %v490
  %492 = vmatmul.f32.gmra.mxu0 %v377
  %v493 = vpop.f32.mrf.mxu0
  %v494 = vadd.f32 0.0, %v493
  %495 = vmatmul.f32.gmra.mxu0 %v380
  %v496 = vpop.f32.mrf.mxu0
  %v497 = vadd.f32 0.0, %v496
  %498 = vmatmul.f32.gmra.mxu0 %v383
  %v499 = vpop.f32.mrf.mxu0
  %v500 = vadd.f32 0.0, %v499
  %501 = vmatmul.f32.gmra.mxu0 %v386
  %v502 = vpop.f32.mrf.mxu0
  %v503 = vadd.f32 0.0, %v502
  %504 = vmatmul.f32.gmra.mxu0 %v389
  %v505 = vpop.f32.mrf.mxu0
  %v506 = vadd.f32 0.0, %v505
  %507 = vmatmul.f32.gmra.mxu0 %v392
  %v508 = vpop.f32.mrf.mxu0
  %v509 = vadd.f32 0.0, %v508
  %510 = vdwg.mxu0
  %v512 = vsel %vm22, %v231, 0
  %v515 = vsel %vm22, %v232, 0
  %v518 = vsel %vm22, %v233, 0
  %v521 = vsel %vm22, %v234, 0
  %v524 = vsel %vm22, %v235, 0
  %v527 = vsel %vm22, %v236, 0
  %v530 = vsel %vm22, %v237, 0
  %v533 = vsel %vm22, %v238, 0
  %v536 = vsel %vm22, %v239, 0
  %v539 = vsel %vm22, %v240, 0
  %v542 = vsel %vm22, %v241, 0
  %v545 = vsel %vm22, %v242, 0
  %v548 = vsel %vm22, %v243, 0
  %v551 = vsel %vm22, %v244, 0
  %v554 = vsel %vm22, %v245, 0
  %v557 = vsel %vm22, %v246, 0
  %v560 = vsel %vm22, %v247, 0
  %v563 = vsel %vm22, %v248, 0
  %v566 = vsel %vm22, %v249, 0
  %v569 = vsel %vm22, %v250, 0
  %v572 = vsel %vm22, %v251, 0
  %v575 = vsel %vm22, %v252, 0
  %v578 = vsel %vm22, %v253, 0
  %v581 = vsel %vm22, %v254, 0
  %v584 = vsel %vm22, %v255, 0
  %v587 = vsel %vm22, %v256, 0
  %v590 = vsel %vm22, %v257, 0
  %v593 = vsel %vm22, %v258, 0
  %v596 = vsel %vm22, %v259, 0
  %v599 = vsel %vm22, %v260, 0
  %v602 = vsel %vm22, %v261, 0
  %v605 = vsel %vm22, %v262, 0
  %v608 = vsel %vm394, %v263, 0
  %610 = vmatpush.msra.mxu0 0.0
  %611 = vmatpush.msra.mxu0 0.0
  %612 = vmatpush.msra.mxu0 0.0
  %613 = vmatpush.msra.mxu0 0.0
  %614 = vmatpush.msra.mxu0 0.0
  %615 = vmatpush.msra.mxu0 0.0
  %616 = vmatpush.msra.mxu0 0.0
  %617 = vmatpush.msra.mxu0 0.0
  %618 = vmatpush.msra.mxu0 0.0
  %619 = vmatpush.msra.mxu0 0.0
  %620 = vmatpush.msra.mxu0 0.0
  %621 = vmatpush.msra.mxu0 0.0
  %622 = vmatpush.msra.mxu0 0.0
  %623 = vmatpush.msra.mxu0 0.0
  %624 = vmatpush.msra.mxu0 0.0
  %625 = vmatpush.msra.mxu0 %v608
  %626 = vmatmul.f32.gmra.mxu0 %v512
  %v627 = vpop.f32.mrf.mxu0
  %v628 = vadd.f32 %v416, %v627
  %629 = vmatmul.f32.gmra.mxu0 %v515
  %v630 = vpop.f32.mrf.mxu0
  %v631 = vadd.f32 %v419, %v630
  %632 = vmatmul.f32.gmra.mxu0 %v518
  %v633 = vpop.f32.mrf.mxu0
  %v634 = vadd.f32 %v422, %v633
  %635 = vmatmul.f32.gmra.mxu0 %v521
  %v636 = vpop.f32.mrf.mxu0
  %v637 = vadd.f32 %v425, %v636
  %638 = vmatmul.f32.gmra.mxu0 %v524
  %v639 = vpop.f32.mrf.mxu0
  %v640 = vadd.f32 %v428, %v639
  %641 = vmatmul.f32.gmra.mxu0 %v527
  %v642 = vpop.f32.mrf.mxu0
  %v643 = vadd.f32 %v431, %v642
  %644 = vmatmul.f32.gmra.mxu0 %v530
  %v645 = vpop.f32.mrf.mxu0
  %v646 = vadd.f32 %v434, %v645
  %647 = vmatmul.f32.gmra.mxu0 %v533
  %v648 = vpop.f32.mrf.mxu0
  %v649 = vadd.f32 %v437, %v648
  %650 = vmatmul.f32.gmra.mxu0 %v536
  %v651 = vpop.f32.mrf.mxu0
  %v652 = vadd.f32 %v440, %v651
  %653 = vmatmul.f32.gmra.mxu0 %v539
  %v654 = vpop.f32.mrf.mxu0
  %v655 = vadd.f32 %v443, %v654
  %656 = vmatmul.f32.gmra.mxu0 %v542
  %v657 = vpop.f32.mrf.mxu0
  %v658 = vadd.f32 %v446, %v657
  %659 = vmatmul.f32.gmra.mxu0 %v545
  %v660 = vpop.f32.mrf.mxu0
  %v661 = vadd.f32 %v449, %v660
  %662 = vmatmul.f32.gmra.mxu0 %v548
  %v663 = vpop.f32.mrf.mxu0
  %v664 = vadd.f32 %v452, %v663
  %665 = vmatmul.f32.gmra.mxu0 %v551
  %v666 = vpop.f32.mrf.mxu0
  %v667 = vadd.f32 %v455, %v666
  %668 = vmatmul.f32.gmra.mxu0 %v554
  %v669 = vpop.f32.mrf.mxu0
  %v670 = vadd.f32 %v458, %v669
  %671 = vmatmul.f32.gmra.mxu0 %v557
  %v672 = vpop.f32.mrf.mxu0
  %v673 = vadd.f32 %v461, %v672
  %674 = vmatmul.f32.gmra.mxu0 %v560
  %v675 = vpop.f32.mrf.mxu0
  %v676 = vadd.f32 %v464, %v675
  %677 = vmatmul.f32.gmra.mxu0 %v563
  %v678 = vpop.f32.mrf.mxu0
  %v679 = vadd.f32 %v467, %v678
  %680 = vmatmul.f32.gmra.mxu0 %v566
  %v681 = vpop.f32.mrf.mxu0
  %v682 = vadd.f32 %v470, %v681
  %683 = vmatmul.f32.gmra.mxu0 %v569
  %v684 = vpop.f32.mrf.mxu0
  %v685 = vadd.f32 %v473, %v684
  %686 = vmatmul.f32.gmra.mxu0 %v572
  %v687 = vpop.f32.mrf.mxu0
  %v688 = vadd.f32 %v476, %v687
  %689 = vmatmul.f32.gmra.mxu0 %v575
  %v690 = vpop.f32.mrf.mxu0
  %v691 = vadd.f32 %v479, %v690
  %692 = vmatmul.f32.gmra.mxu0 %v578
  %v693 = vpop.f32.mrf.mxu0
  %v694 = vadd.f32 %v482, %v693
  %695 = vmatmul.f32.gmra.mxu0 %v581
  %v696 = vpop.f32.mrf.mxu0
  %v697 = vadd.f32 %v485, %v696
  %698 = vmatmul.f32.gmra.mxu0 %v584
  %v699 = vpop.f32.mrf.mxu0
  %v700 = vadd.f32 %v488, %v699
  %701 = vmatmul.f32.gmra.mxu0 %v587
  %v702 = vpop.f32.mrf.mxu0
  %v703 = vadd.f32 %v491, %v702
  %704 = vmatmul.f32.gmra.mxu0 %v590
  %v705 = vpop.f32.mrf.mxu0
  %v706 = vadd.f32 %v494, %v705
  %707 = vmatmul.f32.gmra.mxu0 %v593
  %v708 = vpop.f32.mrf.mxu0
  %v709 = vadd.f32 %v497, %v708
  %710 = vmatmul.f32.gmra.mxu0 %v596
  %v711 = vpop.f32.mrf.mxu0
  %v712 = vadd.f32 %v500, %v711
  %713 = vmatmul.f32.gmra.mxu0 %v599
  %v714 = vpop.f32.mrf.mxu0
  %v715 = vadd.f32 %v503, %v714
  %716 = vmatmul.f32.gmra.mxu0 %v602
  %v717 = vpop.f32.mrf.mxu0
  %v718 = vadd.f32 %v506, %v717
  %719 = vmatmul.f32.gmra.mxu0 %v605
  %v720 = vpop.f32.mrf.mxu0
  %v721 = vadd.f32 %v509, %v720
  %722 = vdwg.mxu0
  %v723 = vld [vmem:[#allocation2 + $0x2] sm:$0xff]
  %v724 = vld [vmem:[#allocation2 + $0xa] sm:$0xff]
  %v725 = vld [vmem:[#allocation2 + $0x1a] sm:$0xff]
  %v726 = vld [vmem:[#allocation2 + $0x22] sm:$0xff]
  %v727 = vld [vmem:[#allocation2 + $0x32] sm:$0xff]
  %v728 = vld [vmem:[#allocation2 + $0x3a] sm:$0xff]
  %v729 = vld [vmem:[#allocation2 + $0x4a] sm:$0xff]
  %v730 = vld [vmem:[#allocation2 + $0x52] sm:$0xff]
  %v731 = vld [vmem:[#allocation2 + $0x62] sm:$0xff]
  %v732 = vld [vmem:[#allocation2 + $0x6a] sm:$0xff]
  %v733 = vld [vmem:[#allocation2 + $0x7a] sm:$0xff]
  %v734 = vld [vmem:[#allocation2 + $0x82] sm:$0xff]
  %v735 = vld [vmem:[#allocation2 + $0x92] sm:$0xff]
  %v736 = vld [vmem:[#allocation2 + $0x9a] sm:$0xff]
  %v737 = vld [vmem:[#allocation2 + $0xaa] sm:$0xff]
  %v738 = vld [vmem:[#allocation2 + $0xb2] sm:$0xff]
  %v739 = vld [vmem:[#allocation2 + $0xc2] sm:$0xff]
  %v740 = vld [vmem:[#allocation2 + $0xca] sm:$0xff]
  %v741 = vld [vmem:[#allocation2 + $0xda] sm:$0xff]
  %v742 = vld [vmem:[#allocation2 + $0xe2] sm:$0xff]
  %v743 = vld [vmem:[#allocation2 + $0xf2] sm:$0xff]
  %v744 = vld [vmem:[#allocation2 + $0xfa] sm:$0xff]
  %v745 = vld [vmem:[#allocation2 + $0x10a] sm:$0xff]
  %v746 = vld [vmem:[#allocation2 + $0x112] sm:$0xff]
  %v747 = vld [vmem:[#allocation2 + $0x122] sm:$0xff]
  %v748 = vld [vmem:[#allocation2 + $0x12a] sm:$0xff]
  %v749 = vld [vmem:[#allocation2 + $0x13a] sm:$0xff]
  %v750 = vld [vmem:[#allocation2 + $0x142] sm:$0xff]
  %v751 = vld [vmem:[#allocation2 + $0x152] sm:$0xff]
  %v752 = vld [vmem:[#allocation2 + $0x15a] sm:$0xff]
  %v753 = vld [vmem:[#allocation2 + $0x16a] sm:$0xff]
  %v754 = vld [vmem:[#allocation2 + $0x172] sm:$0xff]
  %s755 = scalar_lea.vmem %s3, 8
  %v756 = vld [vmem:[%s755] sm:$0xf]
  %v758 = vsel %vm22, %v723, 0
  %v761 = vsel %vm22, %v724, 0
  %v764 = vsel %vm22, %v725, 0
  %v767 = vsel %vm22, %v726, 0
  %v770 = vsel %vm22, %v727, 0
  %v773 = vsel %vm22, %v728, 0
  %v776 = vsel %vm22, %v729, 0
  %v779 = vsel %vm22, %v730, 0
  %v782 = vsel %vm22, %v731, 0
  %v785 = vsel %vm22, %v732, 0
  %v788 = vsel %vm22, %v733, 0
  %v791 = vsel %vm22, %v734, 0
  %v794 = vsel %vm22, %v735, 0
  %v797 = vsel %vm22, %v736, 0
  %v800 = vsel %vm22, %v737, 0
  %v803 = vsel %vm22, %v738, 0
  %v806 = vsel %vm22, %v739, 0
  %v809 = vsel %vm22, %v740, 0
  %v812 = vsel %vm22, %v741, 0
  %v815 = vsel %vm22, %v742, 0
  %v818 = vsel %vm22, %v743, 0
  %v821 = vsel %vm22, %v744, 0
  %v824 = vsel %vm22, %v745, 0
  %v827 = vsel %vm22, %v746, 0
  %v830 = vsel %vm22, %v747, 0
  %v833 = vsel %vm22, %v748, 0
  %v836 = vsel %vm22, %v749, 0
  %v839 = vsel %vm22, %v750, 0
  %v842 = vsel %vm22, %v751, 0
  %v845 = vsel %vm22, %v752, 0
  %v848 = vsel %vm22, %v753, 0
  %v851 = vsel %vm22, %v754, 0
  %v854 = vsel %vm394, %v756, 0
  %856 = vmatpush.msra.mxu0 0.0
  %857 = vmatpush.msra.mxu0 0.0
  %858 = vmatpush.msra.mxu0 0.0
  %859 = vmatpush.msra.mxu0 0.0
  %860 = vmatpush.msra.mxu0 0.0
  %861 = vmatpush.msra.mxu0 0.0
  %862 = vmatpush.msra.mxu0 0.0
  %863 = vmatpush.msra.mxu0 0.0
  %864 = vmatpush.msra.mxu0 0.0
  %865 = vmatpush.msra.mxu0 0.0
  %866 = vmatpush.msra.mxu0 0.0
  %867 = vmatpush.msra.mxu0 0.0
  %868 = vmatpush.msra.mxu0 0.0
  %869 = vmatpush.msra.mxu0 0.0
  %870 = vmatpush.msra.mxu0 0.0
  %871 = vmatpush.msra.mxu0 %v854
  %872 = vmatmul.f32.gmra.mxu0 %v758
  %v873 = vpop.f32.mrf.mxu0
  %v874 = vadd.f32 0.0, %v873
  %875 = vmatmul.f32.gmra.mxu0 %v761
  %v876 = vpop.f32.mrf.mxu0
  %v877 = vadd.f32 0.0, %v876
  %878 = vmatmul.f32.gmra.mxu0 %v764
  %v879 = vpop.f32.mrf.mxu0
  %v880 = vadd.f32 0.0, %v879
  %881 = vmatmul.f32.gmra.mxu0 %v767
  %v882 = vpop.f32.mrf.mxu0
  %v883 = vadd.f32 0.0, %v882
  %884 = vmatmul.f32.gmra.mxu0 %v770
  %v885 = vpop.f32.mrf.mxu0
  %v886 = vadd.f32 0.0, %v885
  %887 = vmatmul.f32.gmra.mxu0 %v773
  %v888 = vpop.f32.mrf.mxu0
  %v889 = vadd.f32 0.0, %v888
  %890 = vmatmul.f32.gmra.mxu0 %v776
  %v891 = vpop.f32.mrf.mxu0
  %v892 = vadd.f32 0.0, %v891
  %893 = vmatmul.f32.gmra.mxu0 %v779
  %v894 = vpop.f32.mrf.mxu0
  %v895 = vadd.f32 0.0, %v894
  %896 = vmatmul.f32.gmra.mxu0 %v782
  %v897 = vpop.f32.mrf.mxu0
  %v898 = vadd.f32 0.0, %v897
  %899 = vmatmul.f32.gmra.mxu0 %v785
  %v900 = vpop.f32.mrf.mxu0
  %v901 = vadd.f32 0.0, %v900
  %902 = vmatmul.f32.gmra.mxu0 %v788
  %v903 = vpop.f32.mrf.mxu0
  %v904 = vadd.f32 0.0, %v903
  %905 = vmatmul.f32.gmra.mxu0 %v791
  %v906 = vpop.f32.mrf.mxu0
  %v907 = vadd.f32 0.0, %v906
  %908 = vmatmul.f32.gmra.mxu0 %v794
  %v909 = vpop.f32.mrf.mxu0
  %v910 = vadd.f32 0.0, %v909
  %911 = vmatmul.f32.gmra.mxu0 %v797
  %v912 = vpop.f32.mrf.mxu0
  %v913 = vadd.f32 0.0, %v912
  %914 = vmatmul.f32.gmra.mxu0 %v800
  %v915 = vpop.f32.mrf.mxu0
  %v916 = vadd.f32 0.0, %v915
  %917 = vmatmul.f32.gmra.mxu0 %v803
  %v918 = vpop.f32.mrf.mxu0
  %v919 = vadd.f32 0.0, %v918
  %920 = vmatmul.f32.gmra.mxu0 %v806
  %v921 = vpop.f32.mrf.mxu0
  %v922 = vadd.f32 0.0, %v921
  %923 = vmatmul.f32.gmra.mxu0 %v809
  %v924 = vpop.f32.mrf.mxu0
  %v925 = vadd.f32 0.0, %v924
  %926 = vmatmul.f32.gmra.mxu0 %v812
  %v927 = vpop.f32.mrf.mxu0
  %v928 = vadd.f32 0.0, %v927
  %929 = vmatmul.f32.gmra.mxu0 %v815
  %v930 = vpop.f32.mrf.mxu0
  %v931 = vadd.f32 0.0, %v930
  %932 = vmatmul.f32.gmra.mxu0 %v818
  %v933 = vpop.f32.mrf.mxu0
  %v934 = vadd.f32 0.0, %v933
  %935 = vmatmul.f32.gmra.mxu0 %v821
  %v936 = vpop.f32.mrf.mxu0
  %v937 = vadd.f32 0.0, %v936
  %938 = vmatmul.f32.gmra.mxu0 %v824
  %v939 = vpop.f32.mrf.mxu0
  %v940 = vadd.f32 0.0, %v939
  %941 = vmatmul.f32.gmra.mxu0 %v827
  %v942 = vpop.f32.mrf.mxu0
  %v943 = vadd.f32 0.0, %v942
  %944 = vmatmul.f32.gmra.mxu0 %v830
  %v945 = vpop.f32.mrf.mxu0
  %v946 = vadd.f32 0.0, %v945
  %947 = vmatmul.f32.gmra.mxu0 %v833
  %v948 = vpop.f32.mrf.mxu0
  %v949 = vadd.f32 0.0, %v948
  %950 = vmatmul.f32.gmra.mxu0 %v836
  %v951 = vpop.f32.mrf.mxu0
  %v952 = vadd.f32 0.0, %v951
  %953 = vmatmul.f32.gmra.mxu0 %v839
  %v954 = vpop.f32.mrf.mxu0
  %v955 = vadd.f32 0.0, %v954
  %956 = vmatmul.f32.gmra.mxu0 %v842
  %v957 = vpop.f32.mrf.mxu0
  %v958 = vadd.f32 0.0, %v957
  %959 = vmatmul.f32.gmra.mxu0 %v845
  %v960 = vpop.f32.mrf.mxu0
  %v961 = vadd.f32 0.0, %v960
  %962 = vmatmul.f32.gmra.mxu0 %v848
  %v963 = vpop.f32.mrf.mxu0
  %v964 = vadd.f32 0.0, %v963
  %965 = vmatmul.f32.gmra.mxu0 %v851
  %v966 = vpop.f32.mrf.mxu0
  %v967 = vadd.f32 0.0, %v966
  %968 = vdwg.mxu0
  %v969 = vadd.f32 %v628, %v874
  %v970 = vadd.f32 %v631, %v877
  %v971 = vadd.f32 %v634, %v880
  %v972 = vadd.f32 %v637, %v883
  %v973 = vadd.f32 %v640, %v886
  %v974 = vadd.f32 %v643, %v889
  %v975 = vadd.f32 %v646, %v892
  %v976 = vadd.f32 %v649, %v895
  %v977 = vadd.f32 %v652, %v898
  %v978 = vadd.f32 %v655, %v901
  %v979 = vadd.f32 %v658, %v904
  %v980 = vadd.f32 %v661, %v907
  %v981 = vadd.f32 %v664, %v910
  %v982 = vadd.f32 %v667, %v913
  %v983 = vadd.f32 %v670, %v916
  %v984 = vadd.f32 %v673, %v919
  %v985 = vadd.f32 %v676, %v922
  %v986 = vadd.f32 %v679, %v925
  %v987 = vadd.f32 %v682, %v928
  %v988 = vadd.f32 %v685, %v931
  %v989 = vadd.f32 %v688, %v934
  %v990 = vadd.f32 %v691, %v937
  %v991 = vadd.f32 %v694, %v940
  %v992 = vadd.f32 %v697, %v943
  %v993 = vadd.f32 %v700, %v946
  %v994 = vadd.f32 %v703, %v949
  %v995 = vadd.f32 %v706, %v952
  %v996 = vadd.f32 %v709, %v955
  %v997 = vadd.f32 %v712, %v958
  %v998 = vadd.f32 %v715, %v961
  %v999 = vadd.f32 %v718, %v964
  %v1000 = vadd.f32 %v721, %v967
  %v1001 = vld [vmem:[%s31] sm:$0xff]
  %v1002 = vld [vmem:[%s31 + $0x8] sm:$0xff]
  %v1003 = vld [vmem:[%s31 + $0x18] sm:$0xff]
  %v1004 = vld [vmem:[%s31 + $0x20] sm:$0xff]
  %v1005 = vld [vmem:[%s31 + $0x30] sm:$0xff]
  %v1006 = vld [vmem:[%s31 + $0x38] sm:$0xff]
  %v1007 = vld [vmem:[%s31 + $0x48] sm:$0xff]
  %v1008 = vld [vmem:[%s31 + $0x50] sm:$0xff]
  %v1009 = vld [vmem:[%s31 + $0x60] sm:$0xff]
  %v1010 = vld [vmem:[%s31 + $0x68] sm:$0xff]
  %v1011 = vld [vmem:[%s31 + $0x78] sm:$0xff]
  %v1012 = vld [vmem:[%s31 + $0x80] sm:$0xff]
  %v1013 = vld [vmem:[%s31 + $0x90] sm:$0xff]
  %v1014 = vld [vmem:[%s31 + $0x98] sm:$0xff]
  %v1015 = vld [vmem:[%s31 + $0xa8] sm:$0xff]
  %v1016 = vld [vmem:[%s31 + $0xb0] sm:$0xff]
  %v1017 = vld [vmem:[%s31 + $0xc0] sm:$0xff]
  %v1018 = vld [vmem:[%s31 + $0xc8] sm:$0xff]
  %v1019 = vld [vmem:[%s31 + $0xd8] sm:$0xff]
  %v1020 = vld [vmem:[%s31 + $0xe0] sm:$0xff]
  %v1021 = vld [vmem:[%s31 + $0xf0] sm:$0xff]
  %v1022 = vld [vmem:[%s31 + $0xf8] sm:$0xff]
  %v1023 = vld [vmem:[%s31 + $0x108] sm:$0xff]
  %v1024 = vld [vmem:[%s31 + $0x110] sm:$0xff]
  %v1025 = vld [vmem:[%s31 + $0x120] sm:$0xff]
  %v1026 = vld [vmem:[%s31 + $0x128] sm:$0xff]
  %v1027 = vld [vmem:[%s31 + $0x138] sm:$0xff]
  %v1028 = vld [vmem:[%s31 + $0x140] sm:$0xff]
  %v1029 = vld [vmem:[%s31 + $0x150] sm:$0xff]
  %v1030 = vld [vmem:[%s31 + $0x158] sm:$0xff]
  %v1031 = vld [vmem:[%s31 + $0x168] sm:$0xff]
  %v1032 = vld [vmem:[%s31 + $0x170] sm:$0xff]
  %s1033 = scalar_lea.vmem %s3, 12
  %v1034 = vld [vmem:[%s1033] sm:$0xf]
  %v1036 = vsel %vm22, %v1001, 0
  %v1039 = vsel %vm22, %v1002, 0
  %v1042 = vsel %vm22, %v1003, 0
  %v1045 = vsel %vm22, %v1004, 0
  %v1048 = vsel %vm22, %v1005, 0
  %v1051 = vsel %vm22, %v1006, 0
  %v1054 = vsel %vm22, %v1007, 0
  %v1057 = vsel %vm22, %v1008, 0
  %v1060 = vsel %vm22, %v1009, 0
  %v1063 = vsel %vm22, %v1010, 0
  %v1066 = vsel %vm22, %v1011, 0
  %v1069 = vsel %vm22, %v1012, 0
  %v1072 = vsel %vm22, %v1013, 0
  %v1075 = vsel %vm22, %v1014, 0
  %v1078 = vsel %vm22, %v1015, 0
  %v1081 = vsel %vm22, %v1016, 0
  %v1084 = vsel %vm22, %v1017, 0
  %v1087 = vsel %vm22, %v1018, 0
  %v1090 = vsel %vm22, %v1019, 0
  %v1093 = vsel %vm22, %v1020, 0
  %v1096 = vsel %vm22, %v1021, 0
  %v1099 = vsel %vm22, %v1022, 0
  %v1102 = vsel %vm22, %v1023, 0
  %v1105 = vsel %vm22, %v1024, 0
  %v1108 = vsel %vm22, %v1025, 0
  %v1111 = vsel %vm22, %v1026, 0
  %v1114 = vsel %vm22, %v1027, 0
  %v1117 = vsel %vm22, %v1028, 0
  %v1120 = vsel %vm22, %v1029, 0
  %v1123 = vsel %vm22, %v1030, 0
  %v1126 = vsel %vm22, %v1031, 0
  %v1129 = vsel %vm22, %v1032, 0
  %v1132 = vsel %vm394, %v1034, 0
  %1134 = vmatpush.msra.mxu0 0.0
  %1135 = vmatpush.msra.mxu0 0.0
  %1136 = vmatpush.msra.mxu0 0.0
  %1137 = vmatpush.msra.mxu0 0.0
  %1138 = vmatpush.msra.mxu0 0.0
  %1139 = vmatpush.msra.mxu0 0.0
  %1140 = vmatpush.msra.mxu0 0.0
  %1141 = vmatpush.msra.mxu0 0.0
  %1142 = vmatpush.msra.mxu0 0.0
  %1143 = vmatpush.msra.mxu0 0.0
  %1144 = vmatpush.msra.mxu0 0.0
  %1145 = vmatpush.msra.mxu0 0.0
  %1146 = vmatpush.msra.mxu0 0.0
  %1147 = vmatpush.msra.mxu0 0.0
  %1148 = vmatpush.msra.mxu0 0.0
  %1149 = vmatpush.msra.mxu0 %v1132
  %1150 = vmatmul.f32.gmra.mxu0 %v1036
  %v1151 = vpop.f32.mrf.mxu0
  %v1152 = vadd.f32 0.0, %v1151
  %1153 = vmatmul.f32.gmra.mxu0 %v1039
  %v1154 = vpop.f32.mrf.mxu0
  %v1155 = vadd.f32 0.0, %v1154
  %1156 = vmatmul.f32.gmra.mxu0 %v1042
  %v1157 = vpop.f32.mrf.mxu0
  %v1158 = vadd.f32 0.0, %v1157
  %1159 = vmatmul.f32.gmra.mxu0 %v1045
  %v1160 = vpop.f32.mrf.mxu0
  %v1161 = vadd.f32 0.0, %v1160
  %1162 = vmatmul.f32.gmra.mxu0 %v1048
  %v1163 = vpop.f32.mrf.mxu0
  %v1164 = vadd.f32 0.0, %v1163
  %1165 = vmatmul.f32.gmra.mxu0 %v1051
  %v1166 = vpop.f32.mrf.mxu0
  %v1167 = vadd.f32 0.0, %v1166
  %1168 = vmatmul.f32.gmra.mxu0 %v1054
  %v1169 = vpop.f32.mrf.mxu0
  %v1170 = vadd.f32 0.0, %v1169
  %1171 = vmatmul.f32.gmra.mxu0 %v1057
  %v1172 = vpop.f32.mrf.mxu0
  %v1173 = vadd.f32 0.0, %v1172
  %1174 = vmatmul.f32.gmra.mxu0 %v1060
  %v1175 = vpop.f32.mrf.mxu0
  %v1176 = vadd.f32 0.0, %v1175
  %1177 = vmatmul.f32.gmra.mxu0 %v1063
  %v1178 = vpop.f32.mrf.mxu0
  %v1179 = vadd.f32 0.0, %v1178
  %1180 = vmatmul.f32.gmra.mxu0 %v1066
  %v1181 = vpop.f32.mrf.mxu0
  %v1182 = vadd.f32 0.0, %v1181
  %1183 = vmatmul.f32.gmra.mxu0 %v1069
  %v1184 = vpop.f32.mrf.mxu0
  %v1185 = vadd.f32 0.0, %v1184
  %1186 = vmatmul.f32.gmra.mxu0 %v1072
  %v1187 = vpop.f32.mrf.mxu0
  %v1188 = vadd.f32 0.0, %v1187
  %1189 = vmatmul.f32.gmra.mxu0 %v1075
  %v1190 = vpop.f32.mrf.mxu0
  %v1191 = vadd.f32 0.0, %v1190
  %1192 = vmatmul.f32.gmra.mxu0 %v1078
  %v1193 = vpop.f32.mrf.mxu0
  %v1194 = vadd.f32 0.0, %v1193
  %1195 = vmatmul.f32.gmra.mxu0 %v1081
  %v1196 = vpop.f32.mrf.mxu0
  %v1197 = vadd.f32 0.0, %v1196
  %1198 = vmatmul.f32.gmra.mxu0 %v1084
  %v1199 = vpop.f32.mrf.mxu0
  %v1200 = vadd.f32 0.0, %v1199
  %1201 = vmatmul.f32.gmra.mxu0 %v1087
  %v1202 = vpop.f32.mrf.mxu0
  %v1203 = vadd.f32 0.0, %v1202
  %1204 = vmatmul.f32.gmra.mxu0 %v1090
  %v1205 = vpop.f32.mrf.mxu0
  %v1206 = vadd.f32 0.0, %v1205
  %1207 = vmatmul.f32.gmra.mxu0 %v1093
  %v1208 = vpop.f32.mrf.mxu0
  %v1209 = vadd.f32 0.0, %v1208
  %1210 = vmatmul.f32.gmra.mxu0 %v1096
  %v1211 = vpop.f32.mrf.mxu0
  %v1212 = vadd.f32 0.0, %v1211
  %1213 = vmatmul.f32.gmra.mxu0 %v1099
  %v1214 = vpop.f32.mrf.mxu0
  %v1215 = vadd.f32 0.0, %v1214
  %1216 = vmatmul.f32.gmra.mxu0 %v1102
  %v1217 = vpop.f32.mrf.mxu0
  %v1218 = vadd.f32 0.0, %v1217
  %1219 = vmatmul.f32.gmra.mxu0 %v1105
  %v1220 = vpop.f32.mrf.mxu0
  %v1221 = vadd.f32 0.0, %v1220
  %1222 = vmatmul.f32.gmra.mxu0 %v1108
  %v1223 = vpop.f32.mrf.mxu0
  %v1224 = vadd.f32 0.0, %v1223
  %1225 = vmatmul.f32.gmra.mxu0 %v1111
  %v1226 = vpop.f32.mrf.mxu0
  %v1227 = vadd.f32 0.0, %v1226
  %1228 = vmatmul.f32.gmra.mxu0 %v1114
  %v1229 = vpop.f32.mrf.mxu0
  %v1230 = vadd.f32 0.0, %v1229
  %1231 = vmatmul.f32.gmra.mxu0 %v1117
  %v1232 = vpop.f32.mrf.mxu0
  %v1233 = vadd.f32 0.0, %v1232
  %1234 = vmatmul.f32.gmra.mxu0 %v1120
  %v1235 = vpop.f32.mrf.mxu0
  %v1236 = vadd.f32 0.0, %v1235
  %1237 = vmatmul.f32.gmra.mxu0 %v1123
  %v1238 = vpop.f32.mrf.mxu0
  %v1239 = vadd.f32 0.0, %v1238
  %1240 = vmatmul.f32.gmra.mxu0 %v1126
  %v1241 = vpop.f32.mrf.mxu0
  %v1242 = vadd.f32 0.0, %v1241
  %1243 = vmatmul.f32.gmra.mxu0 %v1129
  %v1244 = vpop.f32.mrf.mxu0
  %v1245 = vadd.f32 0.0, %v1244
  %1246 = vdwg.mxu0
  %v1247 = vadd.f32 %v969, %v1152
  %v1248 = vadd.f32 %v970, %v1155
  %v1249 = vadd.f32 %v971, %v1158
  %v1250 = vadd.f32 %v972, %v1161
  %v1251 = vadd.f32 %v973, %v1164
  %v1252 = vadd.f32 %v974, %v1167
  %v1253 = vadd.f32 %v975, %v1170
  %v1254 = vadd.f32 %v976, %v1173
  %v1255 = vadd.f32 %v977, %v1176
  %v1256 = vadd.f32 %v978, %v1179
  %v1257 = vadd.f32 %v979, %v1182
  %v1258 = vadd.f32 %v980, %v1185
  %v1259 = vadd.f32 %v981, %v1188
  %v1260 = vadd.f32 %v982, %v1191
  %v1261 = vadd.f32 %v983, %v1194
  %v1262 = vadd.f32 %v984, %v1197
  %v1263 = vadd.f32 %v985, %v1200
  %v1264 = vadd.f32 %v986, %v1203
  %v1265 = vadd.f32 %v987, %v1206
  %v1266 = vadd.f32 %v988, %v1209
  %v1267 = vadd.f32 %v989, %v1212
  %v1268 = vadd.f32 %v990, %v1215
  %v1269 = vadd.f32 %v991, %v1218
  %v1270 = vadd.f32 %v992, %v1221
  %v1271 = vadd.f32 %v993, %v1224
  %v1272 = vadd.f32 %v994, %v1227
  %v1273 = vadd.f32 %v995, %v1230
  %v1274 = vadd.f32 %v996, %v1233
  %v1275 = vadd.f32 %v997, %v1236
  %v1276 = vadd.f32 %v998, %v1239
  %v1277 = vadd.f32 %v999, %v1242
  %v1278 = vadd.f32 %v1000, %v1245
  %v1279 = vld [vmem:[%s31 + $0x1] sm:$0xff]
  %v1280 = vld [vmem:[%s31 + $0x9] sm:$0xff]
  %v1281 = vld [vmem:[%s31 + $0x19] sm:$0xff]
  %v1282 = vld [vmem:[%s31 + $0x21] sm:$0xff]
  %v1283 = vld [vmem:[%s31 + $0x31] sm:$0xff]
  %v1284 = vld [vmem:[%s31 + $0x39] sm:$0xff]
  %v1285 = vld [vmem:[%s31 + $0x49] sm:$0xff]
  %v1286 = vld [vmem:[%s31 + $0x51] sm:$0xff]
  %v1287 = vld [vmem:[%s31 + $0x61] sm:$0xff]
  %v1288 = vld [vmem:[%s31 + $0x69] sm:$0xff]
  %v1289 = vld [vmem:[%s31 + $0x79] sm:$0xff]
  %v1290 = vld [vmem:[%s31 + $0x81] sm:$0xff]
  %v1291 = vld [vmem:[%s31 + $0x91] sm:$0xff]
  %v1292 = vld [vmem:[%s31 + $0x99] sm:$0xff]
  %v1293 = vld [vmem:[%s31 + $0xa9] sm:$0xff]
  %v1294 = vld [vmem:[%s31 + $0xb1] sm:$0xff]
  %v1295 = vld [vmem:[%s31 + $0xc1] sm:$0xff]
  %v1296 = vld [vmem:[%s31 + $0xc9] sm:$0xff]
  %v1297 = vld [vmem:[%s31 + $0xd9] sm:$0xff]
  %v1298 = vld [vmem:[%s31 + $0xe1] sm:$0xff]
  %v1299 = vld [vmem:[%s31 + $0xf1] sm:$0xff]
  %v1300 = vld [vmem:[%s31 + $0xf9] sm:$0xff]
  %v1301 = vld [vmem:[%s31 + $0x109] sm:$0xff]
  %v1302 = vld [vmem:[%s31 + $0x111] sm:$0xff]
  %v1303 = vld [vmem:[%s31 + $0x121] sm:$0xff]
  %v1304 = vld [vmem:[%s31 + $0x129] sm:$0xff]
  %v1305 = vld [vmem:[%s31 + $0x139] sm:$0xff]
  %v1306 = vld [vmem:[%s31 + $0x141] sm:$0xff]
  %v1307 = vld [vmem:[%s31 + $0x151] sm:$0xff]
  %v1308 = vld [vmem:[%s31 + $0x159] sm:$0xff]
  %v1309 = vld [vmem:[%s31 + $0x169] sm:$0xff]
  %v1310 = vld [vmem:[%s31 + $0x171] sm:$0xff]
  %s1311 = scalar_lea.vmem %s3, 16
  %v1312 = vld [vmem:[%s1311] sm:$0xf]
  %v1314 = vsel %vm22, %v1279, 0
  %v1317 = vsel %vm22, %v1280, 0
  %v1320 = vsel %vm22, %v1281, 0
  %v1323 = vsel %vm22, %v1282, 0
  %v1326 = vsel %vm22, %v1283, 0
  %v1329 = vsel %vm22, %v1284, 0
  %v1332 = vsel %vm22, %v1285, 0
  %v1335 = vsel %vm22, %v1286, 0
  %v1338 = vsel %vm22, %v1287, 0
  %v1341 = vsel %vm22, %v1288, 0
  %v1344 = vsel %vm22, %v1289, 0
  %v1347 = vsel %vm22, %v1290, 0
  %v1350 = vsel %vm22, %v1291, 0
  %v1353 = vsel %vm22, %v1292, 0
  %v1356 = vsel %vm22, %v1293, 0
  %v1359 = vsel %vm22, %v1294, 0
  %v1362 = vsel %vm22, %v1295, 0
  %v1365 = vsel %vm22, %v1296, 0
  %v1368 = vsel %vm22, %v1297, 0
  %v1371 = vsel %vm22, %v1298, 0
  %v1374 = vsel %vm22, %v1299, 0
  %v1377 = vsel %vm22, %v1300, 0
  %v1380 = vsel %vm22, %v1301, 0
  %v1383 = vsel %vm22, %v1302, 0
  %v1386 = vsel %vm22, %v1303, 0
  %v1389 = vsel %vm22, %v1304, 0
  %v1392 = vsel %vm22, %v1305, 0
  %v1395 = vsel %vm22, %v1306, 0
  %v1398 = vsel %vm22, %v1307, 0
  %v1401 = vsel %vm22, %v1308, 0
  %v1404 = vsel %vm22, %v1309, 0
  %v1407 = vsel %vm22, %v1310, 0
  %v1410 = vsel %vm394, %v1312, 0
  %1412 = vmatpush.msra.mxu0 0.0
  %1413 = vmatpush.msra.mxu0 0.0
  %1414 = vmatpush.msra.mxu0 0.0
  %1415 = vmatpush.msra.mxu0 0.0
  %1416 = vmatpush.msra.mxu0 0.0
  %1417 = vmatpush.msra.mxu0 0.0
  %1418 = vmatpush.msra.mxu0 0.0
  %1419 = vmatpush.msra.mxu0 0.0
  %1420 = vmatpush.msra.mxu0 0.0
  %1421 = vmatpush.msra.mxu0 0.0
  %1422 = vmatpush.msra.mxu0 0.0
  %1423 = vmatpush.msra.mxu0 0.0
  %1424 = vmatpush.msra.mxu0 0.0
  %1425 = vmatpush.msra.mxu0 0.0
  %1426 = vmatpush.msra.mxu0 0.0
  %1427 = vmatpush.msra.mxu0 %v1410
  %1428 = vmatmul.f32.gmra.mxu0 %v1314
  %v1429 = vpop.f32.mrf.mxu0
  %v1430 = vadd.f32 0.0, %v1429
  %1431 = vmatmul.f32.gmra.mxu0 %v1317
  %v1432 = vpop.f32.mrf.mxu0
  %v1433 = vadd.f32 0.0, %v1432
  %1434 = vmatmul.f32.gmra.mxu0 %v1320
  %v1435 = vpop.f32.mrf.mxu0
  %v1436 = vadd.f32 0.0, %v1435
  %1437 = vmatmul.f32.gmra.mxu0 %v1323
  %v1438 = vpop.f32.mrf.mxu0
  %v1439 = vadd.f32 0.0, %v1438
  %1440 = vmatmul.f32.gmra.mxu0 %v1326
  %v1441 = vpop.f32.mrf.mxu0
  %v1442 = vadd.f32 0.0, %v1441
  %1443 = vmatmul.f32.gmra.mxu0 %v1329
  %v1444 = vpop.f32.mrf.mxu0
  %v1445 = vadd.f32 0.0, %v1444
  %1446 = vmatmul.f32.gmra.mxu0 %v1332
  %v1447 = vpop.f32.mrf.mxu0
  %v1448 = vadd.f32 0.0, %v1447
  %1449 = vmatmul.f32.gmra.mxu0 %v1335
  %v1450 = vpop.f32.mrf.mxu0
  %v1451 = vadd.f32 0.0, %v1450
  %1452 = vmatmul.f32.gmra.mxu0 %v1338
  %v1453 = vpop.f32.mrf.mxu0
  %v1454 = vadd.f32 0.0, %v1453
  %1455 = vmatmul.f32.gmra.mxu0 %v1341
  %v1456 = vpop.f32.mrf.mxu0
  %v1457 = vadd.f32 0.0, %v1456
  %1458 = vmatmul.f32.gmra.mxu0 %v1344
  %v1459 = vpop.f32.mrf.mxu0
  %v1460 = vadd.f32 0.0, %v1459
  %1461 = vmatmul.f32.gmra.mxu0 %v1347
  %v1462 = vpop.f32.mrf.mxu0
  %v1463 = vadd.f32 0.0, %v1462
  %1464 = vmatmul.f32.gmra.mxu0 %v1350
  %v1465 = vpop.f32.mrf.mxu0
  %v1466 = vadd.f32 0.0, %v1465
  %1467 = vmatmul.f32.gmra.mxu0 %v1353
  %v1468 = vpop.f32.mrf.mxu0
  %v1469 = vadd.f32 0.0, %v1468
  %1470 = vmatmul.f32.gmra.mxu0 %v1356
  %v1471 = vpop.f32.mrf.mxu0
  %v1472 = vadd.f32 0.0, %v1471
  %1473 = vmatmul.f32.gmra.mxu0 %v1359
  %v1474 = vpop.f32.mrf.mxu0
  %v1475 = vadd.f32 0.0, %v1474
  %1476 = vmatmul.f32.gmra.mxu0 %v1362
  %v1477 = vpop.f32.mrf.mxu0
  %v1478 = vadd.f32 0.0, %v1477
  %1479 = vmatmul.f32.gmra.mxu0 %v1365
  %v1480 = vpop.f32.mrf.mxu0
  %v1481 = vadd.f32 0.0, %v1480
  %1482 = vmatmul.f32.gmra.mxu0 %v1368
  %v1483 = vpop.f32.mrf.mxu0
  %v1484 = vadd.f32 0.0, %v1483
  %1485 = vmatmul.f32.gmra.mxu0 %v1371
  %v1486 = vpop.f32.mrf.mxu0
  %v1487 = vadd.f32 0.0, %v1486
  %1488 = vmatmul.f32.gmra.mxu0 %v1374
  %v1489 = vpop.f32.mrf.mxu0
  %v1490 = vadd.f32 0.0, %v1489
  %1491 = vmatmul.f32.gmra.mxu0 %v1377
  %v1492 = vpop.f32.mrf.mxu0
  %v1493 = vadd.f32 0.0, %v1492
  %1494 = vmatmul.f32.gmra.mxu0 %v1380
  %v1495 = vpop.f32.mrf.mxu0
  %v1496 = vadd.f32 0.0, %v1495
  %1497 = vmatmul.f32.gmra.mxu0 %v1383
  %v1498 = vpop.f32.mrf.mxu0
  %v1499 = vadd.f32 0.0, %v1498
  %1500 = vmatmul.f32.gmra.mxu0 %v1386
  %v1501 = vpop.f32.mrf.mxu0
  %v1502 = vadd.f32 0.0, %v1501
  %1503 = vmatmul.f32.gmra.mxu0 %v1389
  %v1504 = vpop.f32.mrf.mxu0
  %v1505 = vadd.f32 0.0, %v1504
  %1506 = vmatmul.f32.gmra.mxu0 %v1392
  %v1507 = vpop.f32.mrf.mxu0
  %v1508 = vadd.f32 0.0, %v1507
  %1509 = vmatmul.f32.gmra.mxu0 %v1395
  %v1510 = vpop.f32.mrf.mxu0
  %v1511 = vadd.f32 0.0, %v1510
  %1512 = vmatmul.f32.gmra.mxu0 %v1398
  %v1513 = vpop.f32.mrf.mxu0
  %v1514 = vadd.f32 0.0, %v1513
  %1515 = vmatmul.f32.gmra.mxu0 %v1401
  %v1516 = vpop.f32.mrf.mxu0
  %v1517 = vadd.f32 0.0, %v1516
  %1518 = vmatmul.f32.gmra.mxu0 %v1404
  %v1519 = vpop.f32.mrf.mxu0
  %v1520 = vadd.f32 0.0, %v1519
  %1521 = vmatmul.f32.gmra.mxu0 %v1407
  %v1522 = vpop.f32.mrf.mxu0
  %v1523 = vadd.f32 0.0, %v1522
  %1524 = vdwg.mxu0
  %v1525 = vadd.f32 %v1247, %v1430
  %v1526 = vadd.f32 %v1248, %v1433
  %v1527 = vadd.f32 %v1249, %v1436
  %v1528 = vadd.f32 %v1250, %v1439
  %v1529 = vadd.f32 %v1251, %v1442
  %v1530 = vadd.f32 %v1252, %v1445
  %v1531 = vadd.f32 %v1253, %v1448
  %v1532 = vadd.f32 %v1254, %v1451
  %v1533 = vadd.f32 %v1255, %v1454
  %v1534 = vadd.f32 %v1256, %v1457
  %v1535 = vadd.f32 %v1257, %v1460
  %v1536 = vadd.f32 %v1258, %v1463
  %v1537 = vadd.f32 %v1259, %v1466
  %v1538 = vadd.f32 %v1260, %v1469
  %v1539 = vadd.f32 %v1261, %v1472
  %v1540 = vadd.f32 %v1262, %v1475
  %v1541 = vadd.f32 %v1263, %v1478
  %v1542 = vadd.f32 %v1264, %v1481
  %v1543 = vadd.f32 %v1265, %v1484
  %v1544 = vadd.f32 %v1266, %v1487
  %v1545 = vadd.f32 %v1267, %v1490
  %v1546 = vadd.f32 %v1268, %v1493
  %v1547 = vadd.f32 %v1269, %v1496
  %v1548 = vadd.f32 %v1270, %v1499
  %v1549 = vadd.f32 %v1271, %v1502
  %v1550 = vadd.f32 %v1272, %v1505
  %v1551 = vadd.f32 %v1273, %v1508
  %v1552 = vadd.f32 %v1274, %v1511
  %v1553 = vadd.f32 %v1275, %v1514
  %v1554 = vadd.f32 %v1276, %v1517
  %v1555 = vadd.f32 %v1277, %v1520
  %v1556 = vadd.f32 %v1278, %v1523
  %v1557 = vld [vmem:[%s31 + $0x2] sm:$0xff]
  %v1558 = vld [vmem:[%s31 + $0xa] sm:$0xff]
  %v1559 = vld [vmem:[%s31 + $0x1a] sm:$0xff]
  %v1560 = vld [vmem:[%s31 + $0x22] sm:$0xff]
  %v1561 = vld [vmem:[%s31 + $0x32] sm:$0xff]
  %v1562 = vld [vmem:[%s31 + $0x3a] sm:$0xff]
  %v1563 = vld [vmem:[%s31 + $0x4a] sm:$0xff]
  %v1564 = vld [vmem:[%s31 + $0x52] sm:$0xff]
  %v1565 = vld [vmem:[%s31 + $0x62] sm:$0xff]
  %v1566 = vld [vmem:[%s31 + $0x6a] sm:$0xff]
  %v1567 = vld [vmem:[%s31 + $0x7a] sm:$0xff]
  %v1568 = vld [vmem:[%s31 + $0x82] sm:$0xff]
  %v1569 = vld [vmem:[%s31 + $0x92] sm:$0xff]
  %v1570 = vld [vmem:[%s31 + $0x9a] sm:$0xff]
  %v1571 = vld [vmem:[%s31 + $0xaa] sm:$0xff]
  %v1572 = vld [vmem:[%s31 + $0xb2] sm:$0xff]
  %v1573 = vld [vmem:[%s31 + $0xc2] sm:$0xff]
  %v1574 = vld [vmem:[%s31 + $0xca] sm:$0xff]
  %v1575 = vld [vmem:[%s31 + $0xda] sm:$0xff]
  %v1576 = vld [vmem:[%s31 + $0xe2] sm:$0xff]
  %v1577 = vld [vmem:[%s31 + $0xf2] sm:$0xff]
  %v1578 = vld [vmem:[%s31 + $0xfa] sm:$0xff]
  %v1579 = vld [vmem:[%s31 + $0x10a] sm:$0xff]
  %v1580 = vld [vmem:[%s31 + $0x112] sm:$0xff]
  %v1581 = vld [vmem:[%s31 + $0x122] sm:$0xff]
  %v1582 = vld [vmem:[%s31 + $0x12a] sm:$0xff]
  %v1583 = vld [vmem:[%s31 + $0x13a] sm:$0xff]
  %v1584 = vld [vmem:[%s31 + $0x142] sm:$0xff]
  %v1585 = vld [vmem:[%s31 + $0x152] sm:$0xff]
  %v1586 = vld [vmem:[%s31 + $0x15a] sm:$0xff]
  %v1587 = vld [vmem:[%s31 + $0x16a] sm:$0xff]
  %v1588 = vld [vmem:[%s31 + $0x172] sm:$0xff]
  %s1589 = scalar_lea.vmem %s3, 20
  %v1590 = vld [vmem:[%s1589] sm:$0xf]
  %v1592 = vsel %vm22, %v1557, 0
  %v1595 = vsel %vm22, %v1558, 0
  %v1598 = vsel %vm22, %v1559, 0
  %v1601 = vsel %vm22, %v1560, 0
  %v1604 = vsel %vm22, %v1561, 0
  %v1607 = vsel %vm22, %v1562, 0
  %v1610 = vsel %vm22, %v1563, 0
  %v1613 = vsel %vm22, %v1564, 0
  %v1616 = vsel %vm22, %v1565, 0
  %v1619 = vsel %vm22, %v1566, 0
  %v1622 = vsel %vm22, %v1567, 0
  %v1625 = vsel %vm22, %v1568, 0
  %v1628 = vsel %vm22, %v1569, 0
  %v1631 = vsel %vm22, %v1570, 0
  %v1634 = vsel %vm22, %v1571, 0
  %v1637 = vsel %vm22, %v1572, 0
  %v1640 = vsel %vm22, %v1573, 0
  %v1643 = vsel %vm22, %v1574, 0
  %v1646 = vsel %vm22, %v1575, 0
  %v1649 = vsel %vm22, %v1576, 0
  %v1652 = vsel %vm22, %v1577, 0
  %v1655 = vsel %vm22, %v1578, 0
  %v1658 = vsel %vm22, %v1579, 0
  %v1661 = vsel %vm22, %v1580, 0
  %v1664 = vsel %vm22, %v1581, 0
  %v1667 = vsel %vm22, %v1582, 0
  %v1670 = vsel %vm22, %v1583, 0
  %v1673 = vsel %vm22, %v1584, 0
  %v1676 = vsel %vm22, %v1585, 0
  %v1679 = vsel %vm22, %v1586, 0
  %v1682 = vsel %vm22, %v1587, 0
  %v1685 = vsel %vm22, %v1588, 0
  %v1688 = vsel %vm394, %v1590, 0
  %1690 = vmatpush.msra.mxu0 0.0
  %1691 = vmatpush.msra.mxu0 0.0
  %1692 = vmatpush.msra.mxu0 0.0
  %1693 = vmatpush.msra.mxu0 0.0
  %1694 = vmatpush.msra.mxu0 0.0
  %1695 = vmatpush.msra.mxu0 0.0
  %1696 = vmatpush.msra.mxu0 0.0
  %1697 = vmatpush.msra.mxu0 0.0
  %1698 = vmatpush.msra.mxu0 0.0
  %1699 = vmatpush.msra.mxu0 0.0
  %1700 = vmatpush.msra.mxu0 0.0
  %1701 = vmatpush.msra.mxu0 0.0
  %1702 = vmatpush.msra.mxu0 0.0
  %1703 = vmatpush.msra.mxu0 0.0
  %1704 = vmatpush.msra.mxu0 0.0
  %1705 = vmatpush.msra.mxu0 %v1688
  %1706 = vmatmul.f32.gmra.mxu0 %v1592
  %v1707 = vpop.f32.mrf.mxu0
  %v1708 = vadd.f32 0.0, %v1707
  %1709 = vmatmul.f32.gmra.mxu0 %v1595
  %v1710 = vpop.f32.mrf.mxu0
  %v1711 = vadd.f32 0.0, %v1710
  %1712 = vmatmul.f32.gmra.mxu0 %v1598
  %v1713 = vpop.f32.mrf.mxu0
  %v1714 = vadd.f32 0.0, %v1713
  %1715 = vmatmul.f32.gmra.mxu0 %v1601
  %v1716 = vpop.f32.mrf.mxu0
  %v1717 = vadd.f32 0.0, %v1716
  %1718 = vmatmul.f32.gmra.mxu0 %v1604
  %v1719 = vpop.f32.mrf.mxu0
  %v1720 = vadd.f32 0.0, %v1719
  %1721 = vmatmul.f32.gmra.mxu0 %v1607
  %v1722 = vpop.f32.mrf.mxu0
  %v1723 = vadd.f32 0.0, %v1722
  %1724 = vmatmul.f32.gmra.mxu0 %v1610
  %v1725 = vpop.f32.mrf.mxu0
  %v1726 = vadd.f32 0.0, %v1725
  %1727 = vmatmul.f32.gmra.mxu0 %v1613
  %v1728 = vpop.f32.mrf.mxu0
  %v1729 = vadd.f32 0.0, %v1728
  %1730 = vmatmul.f32.gmra.mxu0 %v1616
  %v1731 = vpop.f32.mrf.mxu0
  %v1732 = vadd.f32 0.0, %v1731
  %1733 = vmatmul.f32.gmra.mxu0 %v1619
  %v1734 = vpop.f32.mrf.mxu0
  %v1735 = vadd.f32 0.0, %v1734
  %1736 = vmatmul.f32.gmra.mxu0 %v1622
  %v1737 = vpop.f32.mrf.mxu0
  %v1738 = vadd.f32 0.0, %v1737
  %1739 = vmatmul.f32.gmra.mxu0 %v1625
  %v1740 = vpop.f32.mrf.mxu0
  %v1741 = vadd.f32 0.0, %v1740
  %1742 = vmatmul.f32.gmra.mxu0 %v1628
  %v1743 = vpop.f32.mrf.mxu0
  %v1744 = vadd.f32 0.0, %v1743
  %1745 = vmatmul.f32.gmra.mxu0 %v1631
  %v1746 = vpop.f32.mrf.mxu0
  %v1747 = vadd.f32 0.0, %v1746
  %1748 = vmatmul.f32.gmra.mxu0 %v1634
  %v1749 = vpop.f32.mrf.mxu0
  %v1750 = vadd.f32 0.0, %v1749
  %1751 = vmatmul.f32.gmra.mxu0 %v1637
  %v1752 = vpop.f32.mrf.mxu0
  %v1753 = vadd.f32 0.0, %v1752
  %1754 = vmatmul.f32.gmra.mxu0 %v1640
  %v1755 = vpop.f32.mrf.mxu0
  %v1756 = vadd.f32 0.0, %v1755
  %1757 = vmatmul.f32.gmra.mxu0 %v1643
  %v1758 = vpop.f32.mrf.mxu0
  %v1759 = vadd.f32 0.0, %v1758
  %1760 = vmatmul.f32.gmra.mxu0 %v1646
  %v1761 = vpop.f32.mrf.mxu0
  %v1762 = vadd.f32 0.0, %v1761
  %1763 = vmatmul.f32.gmra.mxu0 %v1649
  %v1764 = vpop.f32.mrf.mxu0
  %v1765 = vadd.f32 0.0, %v1764
  %1766 = vmatmul.f32.gmra.mxu0 %v1652
  %v1767 = vpop.f32.mrf.mxu0
  %v1768 = vadd.f32 0.0, %v1767
  %1769 = vmatmul.f32.gmra.mxu0 %v1655
  %v1770 = vpop.f32.mrf.mxu0
  %v1771 = vadd.f32 0.0, %v1770
  %1772 = vmatmul.f32.gmra.mxu0 %v1658
  %v1773 = vpop.f32.mrf.mxu0
  %v1774 = vadd.f32 0.0, %v1773
  %1775 = vmatmul.f32.gmra.mxu0 %v1661
  %v1776 = vpop.f32.mrf.mxu0
  %v1777 = vadd.f32 0.0, %v1776
  %1778 = vmatmul.f32.gmra.mxu0 %v1664
  %v1779 = vpop.f32.mrf.mxu0
  %v1780 = vadd.f32 0.0, %v1779
  %1781 = vmatmul.f32.gmra.mxu0 %v1667
  %v1782 = vpop.f32.mrf.mxu0
  %v1783 = vadd.f32 0.0, %v1782
  %1784 = vmatmul.f32.gmra.mxu0 %v1670
  %v1785 = vpop.f32.mrf.mxu0
  %v1786 = vadd.f32 0.0, %v1785
  %1787 = vmatmul.f32.gmra.mxu0 %v1673
  %v1788 = vpop.f32.mrf.mxu0
  %v1789 = vadd.f32 0.0, %v1788
  %1790 = vmatmul.f32.gmra.mxu0 %v1676
  %v1791 = vpop.f32.mrf.mxu0
  %v1792 = vadd.f32 0.0, %v1791
  %1793 = vmatmul.f32.gmra.mxu0 %v1679
  %v1794 = vpop.f32.mrf.mxu0
  %v1795 = vadd.f32 0.0, %v1794
  %1796 = vmatmul.f32.gmra.mxu0 %v1682
  %v1797 = vpop.f32.mrf.mxu0
  %v1798 = vadd.f32 0.0, %v1797
  %1799 = vmatmul.f32.gmra.mxu0 %v1685
  %v1800 = vpop.f32.mrf.mxu0
  %v1801 = vadd.f32 0.0, %v1800
  %1802 = vdwg.mxu0
  %v1803 = vadd.f32 %v1525, %v1708
  %v1804 = vadd.f32 %v1526, %v1711
  %v1805 = vadd.f32 %v1527, %v1714
  %v1806 = vadd.f32 %v1528, %v1717
  %v1807 = vadd.f32 %v1529, %v1720
  %v1808 = vadd.f32 %v1530, %v1723
  %v1809 = vadd.f32 %v1531, %v1726
  %v1810 = vadd.f32 %v1532, %v1729
  %v1811 = vadd.f32 %v1533, %v1732
  %v1812 = vadd.f32 %v1534, %v1735
  %v1813 = vadd.f32 %v1535, %v1738
  %v1814 = vadd.f32 %v1536, %v1741
  %v1815 = vadd.f32 %v1537, %v1744
  %v1816 = vadd.f32 %v1538, %v1747
  %v1817 = vadd.f32 %v1539, %v1750
  %v1818 = vadd.f32 %v1540, %v1753
  %v1819 = vadd.f32 %v1541, %v1756
  %v1820 = vadd.f32 %v1542, %v1759
  %v1821 = vadd.f32 %v1543, %v1762
  %v1822 = vadd.f32 %v1544, %v1765
  %v1823 = vadd.f32 %v1545, %v1768
  %v1824 = vadd.f32 %v1546, %v1771
  %v1825 = vadd.f32 %v1547, %v1774
  %v1826 = vadd.f32 %v1548, %v1777
  %v1827 = vadd.f32 %v1549, %v1780
  %v1828 = vadd.f32 %v1550, %v1783
  %v1829 = vadd.f32 %v1551, %v1786
  %v1830 = vadd.f32 %v1552, %v1789
  %v1831 = vadd.f32 %v1553, %v1792
  %v1832 = vadd.f32 %v1554, %v1795
  %v1833 = vadd.f32 %v1555, %v1798
  %v1834 = vadd.f32 %v1556, %v1801
  %s1835 = scalar_lea.vmem [#allocation2], 48
  %v1836 = vld [vmem:[%s1835] sm:$0xff]
  %v1837 = vld [vmem:[%s1835 + $0x8] sm:$0xff]
  %v1838 = vld [vmem:[%s1835 + $0x18] sm:$0xff]
  %v1839 = vld [vmem:[%s1835 + $0x20] sm:$0xff]
  %v1840 = vld [vmem:[%s1835 + $0x30] sm:$0xff]
  %v1841 = vld [vmem:[%s1835 + $0x38] sm:$0xff]
  %v1842 = vld [vmem:[%s1835 + $0x48] sm:$0xff]
  %v1843 = vld [vmem:[%s1835 + $0x50] sm:$0xff]
  %v1844 = vld [vmem:[%s1835 + $0x60] sm:$0xff]
  %v1845 = vld [vmem:[%s1835 + $0x68] sm:$0xff]
  %v1846 = vld [vmem:[%s1835 + $0x78] sm:$0xff]
  %v1847 = vld [vmem:[%s1835 + $0x80] sm:$0xff]
  %v1848 = vld [vmem:[%s1835 + $0x90] sm:$0xff]
  %v1849 = vld [vmem:[%s1835 + $0x98] sm:$0xff]
  %v1850 = vld [vmem:[%s1835 + $0xa8] sm:$0xff]
  %v1851 = vld [vmem:[%s1835 + $0xb0] sm:$0xff]
  %v1852 = vld [vmem:[%s1835 + $0xc0] sm:$0xff]
  %v1853 = vld [vmem:[%s1835 + $0xc8] sm:$0xff]
  %v1854 = vld [vmem:[%s1835 + $0xd8] sm:$0xff]
  %v1855 = vld [vmem:[%s1835 + $0xe0] sm:$0xff]
  %v1856 = vld [vmem:[%s1835 + $0xf0] sm:$0xff]
  %v1857 = vld [vmem:[%s1835 + $0xf8] sm:$0xff]
  %v1858 = vld [vmem:[%s1835 + $0x108] sm:$0xff]
  %v1859 = vld [vmem:[%s1835 + $0x110] sm:$0xff]
  %v1860 = vld [vmem:[%s1835 + $0x120] sm:$0xff]
  %v1861 = vld [vmem:[%s1835 + $0x128] sm:$0xff]
  %v1862 = vld [vmem:[%s1835 + $0x138] sm:$0xff]
  %v1863 = vld [vmem:[%s1835 + $0x140] sm:$0xff]
  %v1864 = vld [vmem:[%s1835 + $0x150] sm:$0xff]
  %v1865 = vld [vmem:[%s1835 + $0x158] sm:$0xff]
  %v1866 = vld [vmem:[%s1835 + $0x168] sm:$0xff]
  %v1867 = vld [vmem:[%s1835 + $0x170] sm:$0xff]
  %s1868 = scalar_lea.vmem %s3, 24
  %v1869 = vld [vmem:[%s1868] sm:$0xf]
  %v1871 = vsel %vm22, %v1836, 0
  %v1874 = vsel %vm22, %v1837, 0
  %v1877 = vsel %vm22, %v1838, 0
  %v1880 = vsel %vm22, %v1839, 0
  %v1883 = vsel %vm22, %v1840, 0
  %v1886 = vsel %vm22, %v1841, 0
  %v1889 = vsel %vm22, %v1842, 0
  %v1892 = vsel %vm22, %v1843, 0
  %v1895 = vsel %vm22, %v1844, 0
  %v1898 = vsel %vm22, %v1845, 0
  %v1901 = vsel %vm22, %v1846, 0
  %v1904 = vsel %vm22, %v1847, 0
  %v1907 = vsel %vm22, %v1848, 0
  %v1910 = vsel %vm22, %v1849, 0
  %v1913 = vsel %vm22, %v1850, 0
  %v1916 = vsel %vm22, %v1851, 0
  %v1919 = vsel %vm22, %v1852, 0
  %v1922 = vsel %vm22, %v1853, 0
  %v1925 = vsel %vm22, %v1854, 0
  %v1928 = vsel %vm22, %v1855, 0
  %v1931 = vsel %vm22, %v1856, 0
  %v1934 = vsel %vm22, %v1857, 0
  %v1937 = vsel %vm22, %v1858, 0
  %v1940 = vsel %vm22, %v1859, 0
  %v1943 = vsel %vm22, %v1860, 0
  %v1946 = vsel %vm22, %v1861, 0
  %v1949 = vsel %vm22, %v1862, 0
  %v1952 = vsel %vm22, %v1863, 0
  %v1955 = vsel %vm22, %v1864, 0
  %v1958 = vsel %vm22, %v1865, 0
  %v1961 = vsel %vm22, %v1866, 0
  %v1964 = vsel %vm22, %v1867, 0
  %v1967 = vsel %vm394, %v1869, 0
  %1969 = vmatpush.msra.mxu0 0.0
  %1970 = vmatpush.msra.mxu0 0.0
  %1971 = vmatpush.msra.mxu0 0.0
  %1972 = vmatpush.msra.mxu0 0.0
  %1973 = vmatpush.msra.mxu0 0.0
  %1974 = vmatpush.msra.mxu0 0.0
  %1975 = vmatpush.msra.mxu0 0.0
  %1976 = vmatpush.msra.mxu0 0.0
  %1977 = vmatpush.msra.mxu0 0.0
  %1978 = vmatpush.msra.mxu0 0.0
  %1979 = vmatpush.msra.mxu0 0.0
  %1980 = vmatpush.msra.mxu0 0.0
  %1981 = vmatpush.msra.mxu0 0.0
  %1982 = vmatpush.msra.mxu0 0.0
  %1983 = vmatpush.msra.mxu0 0.0
  %1984 = vmatpush.msra.mxu0 %v1967
  %1985 = vmatmul.f32.gmra.mxu0 %v1871
  %v1986 = vpop.f32.mrf.mxu0
  %v1987 = vadd.f32 0.0, %v1986
  %1988 = vmatmul.f32.gmra.mxu0 %v1874
  %v1989 = vpop.f32.mrf.mxu0
  %v1990 = vadd.f32 0.0, %v1989
  %1991 = vmatmul.f32.gmra.mxu0 %v1877
  %v1992 = vpop.f32.mrf.mxu0
  %v1993 = vadd.f32 0.0, %v1992
  %1994 = vmatmul.f32.gmra.mxu0 %v1880
  %v1995 = vpop.f32.mrf.mxu0
  %v1996 = vadd.f32 0.0, %v1995
  %1997 = vmatmul.f32.gmra.mxu0 %v1883
  %v1998 = vpop.f32.mrf.mxu0
  %v1999 = vadd.f32 0.0, %v1998
  %2000 = vmatmul.f32.gmra.mxu0 %v1886
  %v2001 = vpop.f32.mrf.mxu0
  %v2002 = vadd.f32 0.0, %v2001
  %2003 = vmatmul.f32.gmra.mxu0 %v1889
  %v2004 = vpop.f32.mrf.mxu0
  %v2005 = vadd.f32 0.0, %v2004
  %2006 = vmatmul.f32.gmra.mxu0 %v1892
  %v2007 = vpop.f32.mrf.mxu0
  %v2008 = vadd.f32 0.0, %v2007
  %2009 = vmatmul.f32.gmra.mxu0 %v1895
  %v2010 = vpop.f32.mrf.mxu0
  %v2011 = vadd.f32 0.0, %v2010
  %2012 = vmatmul.f32.gmra.mxu0 %v1898
  %v2013 = vpop.f32.mrf.mxu0
  %v2014 = vadd.f32 0.0, %v2013
  %2015 = vmatmul.f32.gmra.mxu0 %v1901
  %v2016 = vpop.f32.mrf.mxu0
  %v2017 = vadd.f32 0.0, %v2016
  %2018 = vmatmul.f32.gmra.mxu0 %v1904
  %v2019 = vpop.f32.mrf.mxu0
  %v2020 = vadd.f32 0.0, %v2019
  %2021 = vmatmul.f32.gmra.mxu0 %v1907
  %v2022 = vpop.f32.mrf.mxu0
  %v2023 = vadd.f32 0.0, %v2022
  %2024 = vmatmul.f32.gmra.mxu0 %v1910
  %v2025 = vpop.f32.mrf.mxu0
  %v2026 = vadd.f32 0.0, %v2025
  %2027 = vmatmul.f32.gmra.mxu0 %v1913
  %v2028 = vpop.f32.mrf.mxu0
  %v2029 = vadd.f32 0.0, %v2028
  %2030 = vmatmul.f32.gmra.mxu0 %v1916
  %v2031 = vpop.f32.mrf.mxu0
  %v2032 = vadd.f32 0.0, %v2031
  %2033 = vmatmul.f32.gmra.mxu0 %v1919
  %v2034 = vpop.f32.mrf.mxu0
  %v2035 = vadd.f32 0.0, %v2034
  %2036 = vmatmul.f32.gmra.mxu0 %v1922
  %v2037 = vpop.f32.mrf.mxu0
  %v2038 = vadd.f32 0.0, %v2037
  %2039 = vmatmul.f32.gmra.mxu0 %v1925
  %v2040 = vpop.f32.mrf.mxu0
  %v2041 = vadd.f32 0.0, %v2040
  %2042 = vmatmul.f32.gmra.mxu0 %v1928
  %v2043 = vpop.f32.mrf.mxu0
  %v2044 = vadd.f32 0.0, %v2043
  %2045 = vmatmul.f32.gmra.mxu0 %v1931
  %v2046 = vpop.f32.mrf.mxu0
  %v2047 = vadd.f32 0.0, %v2046
  %2048 = vmatmul.f32.gmra.mxu0 %v1934
  %v2049 = vpop.f32.mrf.mxu0
  %v2050 = vadd.f32 0.0, %v2049
  %2051 = vmatmul.f32.gmra.mxu0 %v1937
  %v2052 = vpop.f32.mrf.mxu0
  %v2053 = vadd.f32 0.0, %v2052
  %2054 = vmatmul.f32.gmra.mxu0 %v1940
  %v2055 = vpop.f32.mrf.mxu0
  %v2056 = vadd.f32 0.0, %v2055
  %2057 = vmatmul.f32.gmra.mxu0 %v1943
  %v2058 = vpop.f32.mrf.mxu0
  %v2059 = vadd.f32 0.0, %v2058
  %2060 = vmatmul.f32.gmra.mxu0 %v1946
  %v2061 = vpop.f32.mrf.mxu0
  %v2062 = vadd.f32 0.0, %v2061
  %2063 = vmatmul.f32.gmra.mxu0 %v1949
  %v2064 = vpop.f32.mrf.mxu0
  %v2065 = vadd.f32 0.0, %v2064
  %2066 = vmatmul.f32.gmra.mxu0 %v1952
  %v2067 = vpop.f32.mrf.mxu0
  %v2068 = vadd.f32 0.0, %v2067
  %2069 = vmatmul.f32.gmra.mxu0 %v1955
  %v2070 = vpop.f32.mrf.mxu0
  %v2071 = vadd.f32 0.0, %v2070
  %2072 = vmatmul.f32.gmra.mxu0 %v1958
  %v2073 = vpop.f32.mrf.mxu0
  %v2074 = vadd.f32 0.0, %v2073
  %2075 = vmatmul.f32.gmra.mxu0 %v1961
  %v2076 = vpop.f32.mrf.mxu0
  %v2077 = vadd.f32 0.0, %v2076
  %2078 = vmatmul.f32.gmra.mxu0 %v1964
  %v2079 = vpop.f32.mrf.mxu0
  %v2080 = vadd.f32 0.0, %v2079
  %2081 = vdwg.mxu0
  %v2082 = vadd.f32 %v1803, %v1987
  %v2083 = vadd.f32 %v1804, %v1990
  %v2084 = vadd.f32 %v1805, %v1993
  %v2085 = vadd.f32 %v1806, %v1996
  %v2086 = vadd.f32 %v1807, %v1999
  %v2087 = vadd.f32 %v1808, %v2002
  %v2088 = vadd.f32 %v1809, %v2005
  %v2089 = vadd.f32 %v1810, %v2008
  %v2090 = vadd.f32 %v1811, %v2011
  %v2091 = vadd.f32 %v1812, %v2014
  %v2092 = vadd.f32 %v1813, %v2017
  %v2093 = vadd.f32 %v1814, %v2020
  %v2094 = vadd.f32 %v1815, %v2023
  %v2095 = vadd.f32 %v1816, %v2026
  %v2096 = vadd.f32 %v1817, %v2029
  %v2097 = vadd.f32 %v1818, %v2032
  %v2098 = vadd.f32 %v1819, %v2035
  %v2099 = vadd.f32 %v1820, %v2038
  %v2100 = vadd.f32 %v1821, %v2041
  %v2101 = vadd.f32 %v1822, %v2044
  %v2102 = vadd.f32 %v1823, %v2047
  %v2103 = vadd.f32 %v1824, %v2050
  %v2104 = vadd.f32 %v1825, %v2053
  %v2105 = vadd.f32 %v1826, %v2056
  %v2106 = vadd.f32 %v1827, %v2059
  %v2107 = vadd.f32 %v1828, %v2062
  %v2108 = vadd.f32 %v1829, %v2065
  %v2109 = vadd.f32 %v1830, %v2068
  %v2110 = vadd.f32 %v1831, %v2071
  %v2111 = vadd.f32 %v1832, %v2074
  %v2112 = vadd.f32 %v1833, %v2077
  %v2113 = vadd.f32 %v1834, %v2080
  %v2114 = vld [vmem:[%s1835 + $0x1] sm:$0xff]
  %v2115 = vld [vmem:[%s1835 + $0x9] sm:$0xff]
  %v2116 = vld [vmem:[%s1835 + $0x19] sm:$0xff]
  %v2117 = vld [vmem:[%s1835 + $0x21] sm:$0xff]
  %v2118 = vld [vmem:[%s1835 + $0x31] sm:$0xff]
  %v2119 = vld [vmem:[%s1835 + $0x39] sm:$0xff]
  %v2120 = vld [vmem:[%s1835 + $0x49] sm:$0xff]
  %v2121 = vld [vmem:[%s1835 + $0x51] sm:$0xff]
  %v2122 = vld [vmem:[%s1835 + $0x61] sm:$0xff]
  %v2123 = vld [vmem:[%s1835 + $0x69] sm:$0xff]
  %v2124 = vld [vmem:[%s1835 + $0x79] sm:$0xff]
  %v2125 = vld [vmem:[%s1835 + $0x81] sm:$0xff]
  %v2126 = vld [vmem:[%s1835 + $0x91] sm:$0xff]
  %v2127 = vld [vmem:[%s1835 + $0x99] sm:$0xff]
  %v2128 = vld [vmem:[%s1835 + $0xa9] sm:$0xff]
  %v2129 = vld [vmem:[%s1835 + $0xb1] sm:$0xff]
  %v2130 = vld [vmem:[%s1835 + $0xc1] sm:$0xff]
  %v2131 = vld [vmem:[%s1835 + $0xc9] sm:$0xff]
  %v2132 = vld [vmem:[%s1835 + $0xd9] sm:$0xff]
  %v2133 = vld [vmem:[%s1835 + $0xe1] sm:$0xff]
  %v2134 = vld [vmem:[%s1835 + $0xf1] sm:$0xff]
  %v2135 = vld [vmem:[%s1835 + $0xf9] sm:$0xff]
  %v2136 = vld [vmem:[%s1835 + $0x109] sm:$0xff]
  %v2137 = vld [vmem:[%s1835 + $0x111] sm:$0xff]
  %v2138 = vld [vmem:[%s1835 + $0x121] sm:$0xff]
  %v2139 = vld [vmem:[%s1835 + $0x129] sm:$0xff]
  %v2140 = vld [vmem:[%s1835 + $0x139] sm:$0xff]
  %v2141 = vld [vmem:[%s1835 + $0x141] sm:$0xff]
  %v2142 = vld [vmem:[%s1835 + $0x151] sm:$0xff]
  %v2143 = vld [vmem:[%s1835 + $0x159] sm:$0xff]
  %v2144 = vld [vmem:[%s1835 + $0x169] sm:$0xff]
  %v2145 = vld [vmem:[%s1835 + $0x171] sm:$0xff]
  %s2146 = scalar_lea.vmem %s3, 28
  %v2147 = vld [vmem:[%s2146] sm:$0xf]
  %v2149 = vsel %vm22, %v2114, 0
  %v2152 = vsel %vm22, %v2115, 0
  %v2155 = vsel %vm22, %v2116, 0
  %v2158 = vsel %vm22, %v2117, 0
  %v2161 = vsel %vm22, %v2118, 0
  %v2164 = vsel %vm22, %v2119, 0
  %v2167 = vsel %vm22, %v2120, 0
  %v2170 = vsel %vm22, %v2121, 0
  %v2173 = vsel %vm22, %v2122, 0
  %v2176 = vsel %vm22, %v2123, 0
  %v2179 = vsel %vm22, %v2124, 0
  %v2182 = vsel %vm22, %v2125, 0
  %v2185 = vsel %vm22, %v2126, 0
  %v2188 = vsel %vm22, %v2127, 0
  %v2191 = vsel %vm22, %v2128, 0
  %v2194 = vsel %vm22, %v2129, 0
  %v2197 = vsel %vm22, %v2130, 0
  %v2200 = vsel %vm22, %v2131, 0
  %v2203 = vsel %vm22, %v2132, 0
  %v2206 = vsel %vm22, %v2133, 0
  %v2209 = vsel %vm22, %v2134, 0
  %v2212 = vsel %vm22, %v2135, 0
  %v2215 = vsel %vm22, %v2136, 0
  %v2218 = vsel %vm22, %v2137, 0
  %v2221 = vsel %vm22, %v2138, 0
  %v2224 = vsel %vm22, %v2139, 0
  %v2227 = vsel %vm22, %v2140, 0
  %v2230 = vsel %vm22, %v2141, 0
  %v2233 = vsel %vm22, %v2142, 0
  %v2236 = vsel %vm22, %v2143, 0
  %v2239 = vsel %vm22, %v2144, 0
  %v2242 = vsel %vm22, %v2145, 0
  %v2245 = vsel %vm394, %v2147, 0
  %2247 = vmatpush.msra.mxu0 0.0
  %2248 = vmatpush.msra.mxu0 0.0
  %2249 = vmatpush.msra.mxu0 0.0
  %2250 = vmatpush.msra.mxu0 0.0
  %2251 = vmatpush.msra.mxu0 0.0
  %2252 = vmatpush.msra.mxu0 0.0
  %2253 = vmatpush.msra.mxu0 0.0
  %2254 = vmatpush.msra.mxu0 0.0
  %2255 = vmatpush.msra.mxu0 0.0
  %2256 = vmatpush.msra.mxu0 0.0
  %2257 = vmatpush.msra.mxu0 0.0
  %2258 = vmatpush.msra.mxu0 0.0
  %2259 = vmatpush.msra.mxu0 0.0
  %2260 = vmatpush.msra.mxu0 0.0
  %2261 = vmatpush.msra.mxu0 0.0
  %2262 = vmatpush.msra.mxu0 %v2245
  %2263 = vmatmul.f32.gmra.mxu0 %v2149
  %v2264 = vpop.f32.mrf.mxu0
  %v2265 = vadd.f32 0.0, %v2264
  %2266 = vmatmul.f32.gmra.mxu0 %v2152
  %v2267 = vpop.f32.mrf.mxu0
  %v2268 = vadd.f32 0.0, %v2267
  %2269 = vmatmul.f32.gmra.mxu0 %v2155
  %v2270 = vpop.f32.mrf.mxu0
  %v2271 = vadd.f32 0.0, %v2270
  %2272 = vmatmul.f32.gmra.mxu0 %v2158
  %v2273 = vpop.f32.mrf.mxu0
  %v2274 = vadd.f32 0.0, %v2273
  %2275 = vmatmul.f32.gmra.mxu0 %v2161
  %v2276 = vpop.f32.mrf.mxu0
  %v2277 = vadd.f32 0.0, %v2276
  %2278 = vmatmul.f32.gmra.mxu0 %v2164
  %v2279 = vpop.f32.mrf.mxu0
  %v2280 = vadd.f32 0.0, %v2279
  %2281 = vmatmul.f32.gmra.mxu0 %v2167
  %v2282 = vpop.f32.mrf.mxu0
  %v2283 = vadd.f32 0.0, %v2282
  %2284 = vmatmul.f32.gmra.mxu0 %v2170
  %v2285 = vpop.f32.mrf.mxu0
  %v2286 = vadd.f32 0.0, %v2285
  %2287 = vmatmul.f32.gmra.mxu0 %v2173
  %v2288 = vpop.f32.mrf.mxu0
  %v2289 = vadd.f32 0.0, %v2288
  %2290 = vmatmul.f32.gmra.mxu0 %v2176
  %v2291 = vpop.f32.mrf.mxu0
  %v2292 = vadd.f32 0.0, %v2291
  %2293 = vmatmul.f32.gmra.mxu0 %v2179
  %v2294 = vpop.f32.mrf.mxu0
  %v2295 = vadd.f32 0.0, %v2294
  %2296 = vmatmul.f32.gmra.mxu0 %v2182
  %v2297 = vpop.f32.mrf.mxu0
  %v2298 = vadd.f32 0.0, %v2297
  %2299 = vmatmul.f32.gmra.mxu0 %v2185
  %v2300 = vpop.f32.mrf.mxu0
  %v2301 = vadd.f32 0.0, %v2300
  %2302 = vmatmul.f32.gmra.mxu0 %v2188
  %v2303 = vpop.f32.mrf.mxu0
  %v2304 = vadd.f32 0.0, %v2303
  %2305 = vmatmul.f32.gmra.mxu0 %v2191
  %v2306 = vpop.f32.mrf.mxu0
  %v2307 = vadd.f32 0.0, %v2306
  %2308 = vmatmul.f32.gmra.mxu0 %v2194
  %v2309 = vpop.f32.mrf.mxu0
  %v2310 = vadd.f32 0.0, %v2309
  %2311 = vmatmul.f32.gmra.mxu0 %v2197
  %v2312 = vpop.f32.mrf.mxu0
  %v2313 = vadd.f32 0.0, %v2312
  %2314 = vmatmul.f32.gmra.mxu0 %v2200
  %v2315 = vpop.f32.mrf.mxu0
  %v2316 = vadd.f32 0.0, %v2315
  %2317 = vmatmul.f32.gmra.mxu0 %v2203
  %v2318 = vpop.f32.mrf.mxu0
  %v2319 = vadd.f32 0.0, %v2318
  %2320 = vmatmul.f32.gmra.mxu0 %v2206
  %v2321 = vpop.f32.mrf.mxu0
  %v2322 = vadd.f32 0.0, %v2321
  %2323 = vmatmul.f32.gmra.mxu0 %v2209
  %v2324 = vpop.f32.mrf.mxu0
  %v2325 = vadd.f32 0.0, %v2324
  %2326 = vmatmul.f32.gmra.mxu0 %v2212
  %v2327 = vpop.f32.mrf.mxu0
  %v2328 = vadd.f32 0.0, %v2327
  %2329 = vmatmul.f32.gmra.mxu0 %v2215
  %v2330 = vpop.f32.mrf.mxu0
  %v2331 = vadd.f32 0.0, %v2330
  %2332 = vmatmul.f32.gmra.mxu0 %v2218
  %v2333 = vpop.f32.mrf.mxu0
  %v2334 = vadd.f32 0.0, %v2333
  %2335 = vmatmul.f32.gmra.mxu0 %v2221
  %v2336 = vpop.f32.mrf.mxu0
  %v2337 = vadd.f32 0.0, %v2336
  %2338 = vmatmul.f32.gmra.mxu0 %v2224
  %v2339 = vpop.f32.mrf.mxu0
  %v2340 = vadd.f32 0.0, %v2339
  %2341 = vmatmul.f32.gmra.mxu0 %v2227
  %v2342 = vpop.f32.mrf.mxu0
  %v2343 = vadd.f32 0.0, %v2342
  %2344 = vmatmul.f32.gmra.mxu0 %v2230
  %v2345 = vpop.f32.mrf.mxu0
  %v2346 = vadd.f32 0.0, %v2345
  %2347 = vmatmul.f32.gmra.mxu0 %v2233
  %v2348 = vpop.f32.mrf.mxu0
  %v2349 = vadd.f32 0.0, %v2348
  %2350 = vmatmul.f32.gmra.mxu0 %v2236
  %v2351 = vpop.f32.mrf.mxu0
  %v2352 = vadd.f32 0.0, %v2351
  %2353 = vmatmul.f32.gmra.mxu0 %v2239
  %v2354 = vpop.f32.mrf.mxu0
  %v2355 = vadd.f32 0.0, %v2354
  %2356 = vmatmul.f32.gmra.mxu0 %v2242
  %v2357 = vpop.f32.mrf.mxu0
  %v2358 = vadd.f32 0.0, %v2357
  %2359 = vdwg.mxu0
  %v2360 = vadd.f32 %v2082, %v2265
  %v2361 = vadd.f32 %v2083, %v2268
  %v2362 = vadd.f32 %v2084, %v2271
  %v2363 = vadd.f32 %v2085, %v2274
  %v2364 = vadd.f32 %v2086, %v2277
  %v2365 = vadd.f32 %v2087, %v2280
  %v2366 = vadd.f32 %v2088, %v2283
  %v2367 = vadd.f32 %v2089, %v2286
  %v2368 = vadd.f32 %v2090, %v2289
  %v2369 = vadd.f32 %v2091, %v2292
  %v2370 = vadd.f32 %v2092, %v2295
  %v2371 = vadd.f32 %v2093, %v2298
  %v2372 = vadd.f32 %v2094, %v2301
  %v2373 = vadd.f32 %v2095, %v2304
  %v2374 = vadd.f32 %v2096, %v2307
  %v2375 = vadd.f32 %v2097, %v2310
  %v2376 = vadd.f32 %v2098, %v2313
  %v2377 = vadd.f32 %v2099, %v2316
  %v2378 = vadd.f32 %v2100, %v2319
  %v2379 = vadd.f32 %v2101, %v2322
  %v2380 = vadd.f32 %v2102, %v2325
  %v2381 = vadd.f32 %v2103, %v2328
  %v2382 = vadd.f32 %v2104, %v2331
  %v2383 = vadd.f32 %v2105, %v2334
  %v2384 = vadd.f32 %v2106, %v2337
  %v2385 = vadd.f32 %v2107, %v2340
  %v2386 = vadd.f32 %v2108, %v2343
  %v2387 = vadd.f32 %v2109, %v2346
  %v2388 = vadd.f32 %v2110, %v2349
  %v2389 = vadd.f32 %v2111, %v2352
  %v2390 = vadd.f32 %v2112, %v2355
  %v2391 = vadd.f32 %v2113, %v2358
  %v2392 = vld [vmem:[%s1835 + $0x2] sm:$0xff]
  %v2393 = vld [vmem:[%s1835 + $0xa] sm:$0xff]
  %v2394 = vld [vmem:[%s1835 + $0x1a] sm:$0xff]
  %v2395 = vld [vmem:[%s1835 + $0x22] sm:$0xff]
  %v2396 = vld [vmem:[%s1835 + $0x32] sm:$0xff]
  %v2397 = vld [vmem:[%s1835 + $0x3a] sm:$0xff]
  %v2398 = vld [vmem:[%s1835 + $0x4a] sm:$0xff]
  %v2399 = vld [vmem:[%s1835 + $0x52] sm:$0xff]
  %v2400 = vld [vmem:[%s1835 + $0x62] sm:$0xff]
  %v2401 = vld [vmem:[%s1835 + $0x6a] sm:$0xff]
  %v2402 = vld [vmem:[%s1835 + $0x7a] sm:$0xff]
  %v2403 = vld [vmem:[%s1835 + $0x82] sm:$0xff]
  %v2404 = vld [vmem:[%s1835 + $0x92] sm:$0xff]
  %v2405 = vld [vmem:[%s1835 + $0x9a] sm:$0xff]
  %v2406 = vld [vmem:[%s1835 + $0xaa] sm:$0xff]
  %v2407 = vld [vmem:[%s1835 + $0xb2] sm:$0xff]
  %v2408 = vld [vmem:[%s1835 + $0xc2] sm:$0xff]
  %v2409 = vld [vmem:[%s1835 + $0xca] sm:$0xff]
  %v2410 = vld [vmem:[%s1835 + $0xda] sm:$0xff]
  %v2411 = vld [vmem:[%s1835 + $0xe2] sm:$0xff]
  %v2412 = vld [vmem:[%s1835 + $0xf2] sm:$0xff]
  %v2413 = vld [vmem:[%s1835 + $0xfa] sm:$0xff]
  %v2414 = vld [vmem:[%s1835 + $0x10a] sm:$0xff]
  %v2415 = vld [vmem:[%s1835 + $0x112] sm:$0xff]
  %v2416 = vld [vmem:[%s1835 + $0x122] sm:$0xff]
  %v2417 = vld [vmem:[%s1835 + $0x12a] sm:$0xff]
  %v2418 = vld [vmem:[%s1835 + $0x13a] sm:$0xff]
  %v2419 = vld [vmem:[%s1835 + $0x142] sm:$0xff]
  %v2420 = vld [vmem:[%s1835 + $0x152] sm:$0xff]
  %v2421 = vld [vmem:[%s1835 + $0x15a] sm:$0xff]
  %v2422 = vld [vmem:[%s1835 + $0x16a] sm:$0xff]
  %v2423 = vld [vmem:[%s1835 + $0x172] sm:$0xff]
  %s2424 = scalar_lea.vmem %s3, 32
  %v2425 = vld [vmem:[%s2424] sm:$0xf]
  %v2427 = vsel %vm22, %v2392, 0
  %v2430 = vsel %vm22, %v2393, 0
  %v2433 = vsel %vm22, %v2394, 0
  %v2436 = vsel %vm22, %v2395, 0
  %v2439 = vsel %vm22, %v2396, 0
  %v2442 = vsel %vm22, %v2397, 0
  %v2445 = vsel %vm22, %v2398, 0
  %v2448 = vsel %vm22, %v2399, 0
  %v2451 = vsel %vm22, %v2400, 0
  %v2454 = vsel %vm22, %v2401, 0
  %v2457 = vsel %vm22, %v2402, 0
  %v2460 = vsel %vm22, %v2403, 0
  %v2463 = vsel %vm22, %v2404, 0
  %v2466 = vsel %vm22, %v2405, 0
  %v2469 = vsel %vm22, %v2406, 0
  %v2472 = vsel %vm22, %v2407, 0
  %v2475 = vsel %vm22, %v2408, 0
  %v2478 = vsel %vm22, %v2409, 0
  %v2481 = vsel %vm22, %v2410, 0
  %v2484 = vsel %vm22, %v2411, 0
  %v2487 = vsel %vm22, %v2412, 0
  %v2490 = vsel %vm22, %v2413, 0
  %v2493 = vsel %vm22, %v2414, 0
  %v2496 = vsel %vm22, %v2415, 0
  %v2499 = vsel %vm22, %v2416, 0
  %v2502 = vsel %vm22, %v2417, 0
  %v2505 = vsel %vm22, %v2418, 0
  %v2508 = vsel %vm22, %v2419, 0
  %v2511 = vsel %vm22, %v2420, 0
  %v2514 = vsel %vm22, %v2421, 0
  %v2517 = vsel %vm22, %v2422, 0
  %v2520 = vsel %vm22, %v2423, 0
  %v2523 = vsel %vm394, %v2425, 0
  %2525 = vmatpush.msra.mxu0 0.0
  %2526 = vmatpush.msra.mxu0 0.0
  %2527 = vmatpush.msra.mxu0 0.0
  %2528 = vmatpush.msra.mxu0 0.0
  %2529 = vmatpush.msra.mxu0 0.0
  %2530 = vmatpush.msra.mxu0 0.0
  %2531 = vmatpush.msra.mxu0 0.0
  %2532 = vmatpush.msra.mxu0 0.0
  %2533 = vmatpush.msra.mxu0 0.0
  %2534 = vmatpush.msra.mxu0 0.0
  %2535 = vmatpush.msra.mxu0 0.0
  %2536 = vmatpush.msra.mxu0 0.0
  %2537 = vmatpush.msra.mxu0 0.0
  %2538 = vmatpush.msra.mxu0 0.0
  %2539 = vmatpush.msra.mxu0 0.0
  %2540 = vmatpush.msra.mxu0 %v2523
  %2541 = vmatmul.f32.gmra.mxu0 %v2427
  %v2542 = vpop.f32.mrf.mxu0
  %v2543 = vadd.f32 0.0, %v2542
  %2544 = vmatmul.f32.gmra.mxu0 %v2430
  %v2545 = vpop.f32.mrf.mxu0
  %v2546 = vadd.f32 0.0, %v2545
  %2547 = vmatmul.f32.gmra.mxu0 %v2433
  %v2548 = vpop.f32.mrf.mxu0
  %v2549 = vadd.f32 0.0, %v2548
  %2550 = vmatmul.f32.gmra.mxu0 %v2436
  %v2551 = vpop.f32.mrf.mxu0
  %v2552 = vadd.f32 0.0, %v2551
  %2553 = vmatmul.f32.gmra.mxu0 %v2439
  %v2554 = vpop.f32.mrf.mxu0
  %v2555 = vadd.f32 0.0, %v2554
  %2556 = vmatmul.f32.gmra.mxu0 %v2442
  %v2557 = vpop.f32.mrf.mxu0
  %v2558 = vadd.f32 0.0, %v2557
  %2559 = vmatmul.f32.gmra.mxu0 %v2445
  %v2560 = vpop.f32.mrf.mxu0
  %v2561 = vadd.f32 0.0, %v2560
  %2562 = vmatmul.f32.gmra.mxu0 %v2448
  %v2563 = vpop.f32.mrf.mxu0
  %v2564 = vadd.f32 0.0, %v2563
  %2565 = vmatmul.f32.gmra.mxu0 %v2451
  %v2566 = vpop.f32.mrf.mxu0
  %v2567 = vadd.f32 0.0, %v2566
  %2568 = vmatmul.f32.gmra.mxu0 %v2454
  %v2569 = vpop.f32.mrf.mxu0
  %v2570 = vadd.f32 0.0, %v2569
  %2571 = vmatmul.f32.gmra.mxu0 %v2457
  %v2572 = vpop.f32.mrf.mxu0
  %v2573 = vadd.f32 0.0, %v2572
  %2574 = vmatmul.f32.gmra.mxu0 %v2460
  %v2575 = vpop.f32.mrf.mxu0
  %v2576 = vadd.f32 0.0, %v2575
  %2577 = vmatmul.f32.gmra.mxu0 %v2463
  %v2578 = vpop.f32.mrf.mxu0
  %v2579 = vadd.f32 0.0, %v2578
  %2580 = vmatmul.f32.gmra.mxu0 %v2466
  %v2581 = vpop.f32.mrf.mxu0
  %v2582 = vadd.f32 0.0, %v2581
  %2583 = vmatmul.f32.gmra.mxu0 %v2469
  %v2584 = vpop.f32.mrf.mxu0
  %v2585 = vadd.f32 0.0, %v2584
  %2586 = vmatmul.f32.gmra.mxu0 %v2472
  %v2587 = vpop.f32.mrf.mxu0
  %v2588 = vadd.f32 0.0, %v2587
  %2589 = vmatmul.f32.gmra.mxu0 %v2475
  %v2590 = vpop.f32.mrf.mxu0
  %v2591 = vadd.f32 0.0, %v2590
  %2592 = vmatmul.f32.gmra.mxu0 %v2478
  %v2593 = vpop.f32.mrf.mxu0
  %v2594 = vadd.f32 0.0, %v2593
  %2595 = vmatmul.f32.gmra.mxu0 %v2481
  %v2596 = vpop.f32.mrf.mxu0
  %v2597 = vadd.f32 0.0, %v2596
  %2598 = vmatmul.f32.gmra.mxu0 %v2484
  %v2599 = vpop.f32.mrf.mxu0
  %v2600 = vadd.f32 0.0, %v2599
  %2601 = vmatmul.f32.gmra.mxu0 %v2487
  %v2602 = vpop.f32.mrf.mxu0
  %v2603 = vadd.f32 0.0, %v2602
  %2604 = vmatmul.f32.gmra.mxu0 %v2490
  %v2605 = vpop.f32.mrf.mxu0
  %v2606 = vadd.f32 0.0, %v2605
  %2607 = vmatmul.f32.gmra.mxu0 %v2493
  %v2608 = vpop.f32.mrf.mxu0
  %v2609 = vadd.f32 0.0, %v2608
  %2610 = vmatmul.f32.gmra.mxu0 %v2496
  %v2611 = vpop.f32.mrf.mxu0
  %v2612 = vadd.f32 0.0, %v2611
  %2613 = vmatmul.f32.gmra.mxu0 %v2499
  %v2614 = vpop.f32.mrf.mxu0
  %v2615 = vadd.f32 0.0, %v2614
  %2616 = vmatmul.f32.gmra.mxu0 %v2502
  %v2617 = vpop.f32.mrf.mxu0
  %v2618 = vadd.f32 0.0, %v2617
  %2619 = vmatmul.f32.gmra.mxu0 %v2505
  %v2620 = vpop.f32.mrf.mxu0
  %v2621 = vadd.f32 0.0, %v2620
  %2622 = vmatmul.f32.gmra.mxu0 %v2508
  %v2623 = vpop.f32.mrf.mxu0
  %v2624 = vadd.f32 0.0, %v2623
  %2625 = vmatmul.f32.gmra.mxu0 %v2511
  %v2626 = vpop.f32.mrf.mxu0
  %v2627 = vadd.f32 0.0, %v2626
  %2628 = vmatmul.f32.gmra.mxu0 %v2514
  %v2629 = vpop.f32.mrf.mxu0
  %v2630 = vadd.f32 0.0, %v2629
  %2631 = vmatmul.f32.gmra.mxu0 %v2517
  %v2632 = vpop.f32.mrf.mxu0
  %v2633 = vadd.f32 0.0, %v2632
  %2634 = vmatmul.f32.gmra.mxu0 %v2520
  %v2635 = vpop.f32.mrf.mxu0
  %v2636 = vadd.f32 0.0, %v2635
  %2637 = vdwg.mxu0
  %v2638 = vadd.f32 %v2360, %v2543
  %v2639 = vadd.f32 %v2361, %v2546
  %v2640 = vadd.f32 %v2362, %v2549
  %v2641 = vadd.f32 %v2363, %v2552
  %v2642 = vadd.f32 %v2364, %v2555
  %v2643 = vadd.f32 %v2365, %v2558
  %v2644 = vadd.f32 %v2366, %v2561
  %v2645 = vadd.f32 %v2367, %v2564
  %v2646 = vadd.f32 %v2368, %v2567
  %v2647 = vadd.f32 %v2369, %v2570
  %v2648 = vadd.f32 %v2370, %v2573
  %v2649 = vadd.f32 %v2371, %v2576
  %v2650 = vadd.f32 %v2372, %v2579
  %v2651 = vadd.f32 %v2373, %v2582
  %v2652 = vadd.f32 %v2374, %v2585
  %v2653 = vadd.f32 %v2375, %v2588
  %v2654 = vadd.f32 %v2376, %v2591
  %v2655 = vadd.f32 %v2377, %v2594
  %v2656 = vadd.f32 %v2378, %v2597
  %v2657 = vadd.f32 %v2379, %v2600
  %v2658 = vadd.f32 %v2380, %v2603
  %v2659 = vadd.f32 %v2381, %v2606
  %v2660 = vadd.f32 %v2382, %v2609
  %v2661 = vadd.f32 %v2383, %v2612
  %v2662 = vadd.f32 %v2384, %v2615
  %v2663 = vadd.f32 %v2385, %v2618
  %v2664 = vadd.f32 %v2386, %v2621
  %v2665 = vadd.f32 %v2387, %v2624
  %v2666 = vadd.f32 %v2388, %v2627
  %v2667 = vadd.f32 %v2389, %v2630
  %v2668 = vadd.f32 %v2390, %v2633
  %v2669 = vadd.f32 %v2391, %v2636
  %v2670 = vld [vmem:[%s4] sm:$0xff]
  %v2671 = vld [vmem:[%s4 + $0x8] sm:$0xff]
  %v2672 = vld [vmem:[%s4 + $0x10] sm:$0xff]
  %v2673 = vld [vmem:[%s4 + $0x18] sm:$0xff]
  %v2674 = vld [vmem:[%s4 + $0x20] sm:$0xff]
  %v2675 = vld [vmem:[%s4 + $0x28] sm:$0xff]
  %v2676 = vld [vmem:[%s4 + $0x30] sm:$0xff]
  %v2677 = vld [vmem:[%s4 + $0x38] sm:$0xff]
  %v2678 = vld [vmem:[%s4 + $0x40] sm:$0xff]
  %v2679 = vld [vmem:[%s4 + $0x48] sm:$0xff]
  %v2680 = vld [vmem:[%s4 + $0x50] sm:$0xff]
  %v2681 = vld [vmem:[%s4 + $0x58] sm:$0xff]
  %v2682 = vld [vmem:[%s4 + $0x60] sm:$0xff]
  %v2683 = vld [vmem:[%s4 + $0x68] sm:$0xff]
  %v2684 = vld [vmem:[%s4 + $0x70] sm:$0xff]
  %v2685 = vld [vmem:[%s4 + $0x78] sm:$0xff]
  %v2686 = vld [vmem:[%s4 + $0x80] sm:$0xff]
  %v2687 = vld [vmem:[%s4 + $0x88] sm:$0xff]
  %v2688 = vld [vmem:[%s4 + $0x90] sm:$0xff]
  %v2689 = vld [vmem:[%s4 + $0x98] sm:$0xff]
  %v2690 = vld [vmem:[%s4 + $0xa0] sm:$0xff]
  %v2691 = vld [vmem:[%s4 + $0xa8] sm:$0xff]
  %v2692 = vld [vmem:[%s4 + $0xb0] sm:$0xff]
  %v2693 = vld [vmem:[%s4 + $0xb8] sm:$0xff]
  %v2694 = vld [vmem:[%s4 + $0xc0] sm:$0xff]
  %v2695 = vld [vmem:[%s4 + $0xc8] sm:$0xff]
  %v2696 = vld [vmem:[%s4 + $0xd0] sm:$0xff]
  %v2697 = vld [vmem:[%s4 + $0xd8] sm:$0xff]
  %v2698 = vld [vmem:[%s4 + $0xe0] sm:$0xff]
  %v2699 = vld [vmem:[%s4 + $0xe8] sm:$0xff]
  %v2700 = vld [vmem:[%s4 + $0xf0] sm:$0xff]
  %v2701 = vld [vmem:[%s4 + $0xf8] sm:$0xff]
  %v2702 = vadd.f32 %v2638, %v2670
  %v2703 = vadd.f32 %v2639, %v2671
  %v2704 = vadd.f32 %v2640, %v2672
  %v2705 = vadd.f32 %v2641, %v2673
  %v2706 = vadd.f32 %v2642, %v2674
  %v2707 = vadd.f32 %v2643, %v2675
  %v2708 = vadd.f32 %v2644, %v2676
  %v2709 = vadd.f32 %v2645, %v2677
  %v2710 = vadd.f32 %v2646, %v2678
  %v2711 = vadd.f32 %v2647, %v2679
  %v2712 = vadd.f32 %v2648, %v2680
  %v2713 = vadd.f32 %v2649, %v2681
  %v2714 = vadd.f32 %v2650, %v2682
  %v2715 = vadd.f32 %v2651, %v2683
  %v2716 = vadd.f32 %v2652, %v2684
  %v2717 = vadd.f32 %v2653, %v2685
  %v2718 = vadd.f32 %v2654, %v2686
  %v2719 = vadd.f32 %v2655, %v2687
  %v2720 = vadd.f32 %v2656, %v2688
  %v2721 = vadd.f32 %v2657, %v2689
  %v2722 = vadd.f32 %v2658, %v2690
  %v2723 = vadd.f32 %v2659, %v2691
  %v2724 = vadd.f32 %v2660, %v2692
  %v2725 = vadd.f32 %v2661, %v2693
  %v2726 = vadd.f32 %v2662, %v2694
  %v2727 = vadd.f32 %v2663, %v2695
  %v2728 = vadd.f32 %v2664, %v2696
  %v2729 = vadd.f32 %v2665, %v2697
  %v2730 = vadd.f32 %v2666, %v2698
  %v2731 = vadd.f32 %v2667, %v2699
  %v2732 = vadd.f32 %v2668, %v2700
  %v2733 = vadd.f32 %v2669, %v2701
  %2734 = vst.msk [vmem:[%s5] sm:$0xff] %vm22, %v2702
  %2735 = vst.msk [vmem:[%s5 + $0x8] sm:$0xff] %vm22, %v2703
  %2736 = vst.msk [vmem:[%s5 + $0x10] sm:$0xff] %vm22, %v2704
  %2737 = vst.msk [vmem:[%s5 + $0x18] sm:$0xff] %vm22, %v2705
  %2738 = vst.msk [vmem:[%s5 + $0x20] sm:$0xff] %vm22, %v2706
  %2739 = vst.msk [vmem:[%s5 + $0x28] sm:$0xff] %vm22, %v2707
  %2740 = vst.msk [vmem:[%s5 + $0x30] sm:$0xff] %vm22, %v2708
  %2741 = vst.msk [vmem:[%s5 + $0x38] sm:$0xff] %vm22, %v2709
  %2742 = vst.msk [vmem:[%s5 + $0x40] sm:$0xff] %vm22, %v2710
  %2743 = vst.msk [vmem:[%s5 + $0x48] sm:$0xff] %vm22, %v2711
  %2744 = vst.msk [vmem:[%s5 + $0x50] sm:$0xff] %vm22, %v2712
  %2745 = vst.msk [vmem:[%s5 + $0x58] sm:$0xff] %vm22, %v2713
  %2746 = vst.msk [vmem:[%s5 + $0x60] sm:$0xff] %vm22, %v2714
  %2747 = vst.msk [vmem:[%s5 + $0x68] sm:$0xff] %vm22, %v2715
  %2748 = vst.msk [vmem:[%s5 + $0x70] sm:$0xff] %vm22, %v2716
  %2749 = vst.msk [vmem:[%s5 + $0x78] sm:$0xff] %vm22, %v2717
  %2750 = vst.msk [vmem:[%s5 + $0x80] sm:$0xff] %vm22, %v2718
  %2751 = vst.msk [vmem:[%s5 + $0x88] sm:$0xff] %vm22, %v2719
  %2752 = vst.msk [vmem:[%s5 + $0x90] sm:$0xff] %vm22, %v2720
  %2753 = vst.msk [vmem:[%s5 + $0x98] sm:$0xff] %vm22, %v2721
  %2754 = vst.msk [vmem:[%s5 + $0xa0] sm:$0xff] %vm22, %v2722
  %2755 = vst.msk [vmem:[%s5 + $0xa8] sm:$0xff] %vm22, %v2723
  %2756 = vst.msk [vmem:[%s5 + $0xb0] sm:$0xff] %vm22, %v2724
  %2757 = vst.msk [vmem:[%s5 + $0xb8] sm:$0xff] %vm22, %v2725
  %2758 = vst.msk [vmem:[%s5 + $0xc0] sm:$0xff] %vm22, %v2726
  %2759 = vst.msk [vmem:[%s5 + $0xc8] sm:$0xff] %vm22, %v2727
  %2760 = vst.msk [vmem:[%s5 + $0xd0] sm:$0xff] %vm22, %v2728
  %2761 = vst.msk [vmem:[%s5 + $0xd8] sm:$0xff] %vm22, %v2729
  %2762 = vst.msk [vmem:[%s5 + $0xe0] sm:$0xff] %vm22, %v2730
  %2763 = vst.msk [vmem:[%s5 + $0xe8] sm:$0xff] %vm22, %v2731
  %2764 = vst.msk [vmem:[%s5 + $0xf0] sm:$0xff] %vm22, %v2732
  %2765 = vst.msk [vmem:[%s5 + $0xf8] sm:$0xff] %vm22, %v2733
  %s2766 = scalar_lea.vmem %s0, 256
  %v2767 = vld [vmem:[%s2766] sm:$0xff]
  %v2768 = vld [vmem:[%s2766 + $0x8] sm:$0xff]
  %v2769 = vld [vmem:[%s2766 + $0x10] sm:$0xff]
  %v2770 = vld [vmem:[%s2766 + $0x18] sm:$0xff]
  %v2771 = vld [vmem:[%s2766 + $0x20] sm:$0xff]
  %v2772 = vld [vmem:[%s2766 + $0x28] sm:$0xff]
  %v2773 = vld [vmem:[%s2766 + $0x30] sm:$0xff]
  %v2774 = vld [vmem:[%s2766 + $0x38] sm:$0xff]
  %v2775 = vld [vmem:[%s2766 + $0x40] sm:$0xff]
  %v2776 = vld [vmem:[%s2766 + $0x48] sm:$0xff]
  %v2777 = vld [vmem:[%s2766 + $0x50] sm:$0xff]
  %v2778 = vld [vmem:[%s2766 + $0x58] sm:$0xff]
  %v2779 = vld [vmem:[%s2766 + $0x60] sm:$0xff]
  %v2780 = vld [vmem:[%s2766 + $0x68] sm:$0xff]
  %v2781 = vld [vmem:[%s2766 + $0x70] sm:$0xff]
  %v2782 = vld [vmem:[%s2766 + $0x78] sm:$0xff]
  %v2783 = vld [vmem:[%s2766 + $0x80] sm:$0xff]
  %v2784 = vld [vmem:[%s2766 + $0x88] sm:$0xff]
  %v2785 = vld [vmem:[%s2766 + $0x90] sm:$0xff]
  %v2786 = vld [vmem:[%s2766 + $0x98] sm:$0xff]
  %v2787 = vld [vmem:[%s2766 + $0xa0] sm:$0xff]
  %v2788 = vld [vmem:[%s2766 + $0xa8] sm:$0xff]
  %v2789 = vld [vmem:[%s2766 + $0xb0] sm:$0xff]
  %v2790 = vld [vmem:[%s2766 + $0xb8] sm:$0xff]
  %v2791 = vld [vmem:[%s2766 + $0xc0] sm:$0xff]
  %v2792 = vld [vmem:[%s2766 + $0xc8] sm:$0xff]
  %v2793 = vld [vmem:[%s2766 + $0xd0] sm:$0xff]
  %v2794 = vld [vmem:[%s2766 + $0xd8] sm:$0xff]
  %v2795 = vld [vmem:[%s2766 + $0xe0] sm:$0xff]
  %v2796 = vld [vmem:[%s2766 + $0xe8] sm:$0xff]
  %v2797 = vld [vmem:[%s2766 + $0xf0] sm:$0xff]
  %v2798 = vld [vmem:[%s2766 + $0xf8] sm:$0xff]
  %v2799 = vmul.f32 %v2767, %v98
  %v2800 = vmul.f32 %v2768, %v98
  %v2801 = vmul.f32 %v2769, %v98
  %v2802 = vmul.f32 %v2770, %v98
  %v2803 = vmul.f32 %v2771, %v98
  %v2804 = vmul.f32 %v2772, %v98
  %v2805 = vmul.f32 %v2773, %v98
  %v2806 = vmul.f32 %v2774, %v98
  %v2807 = vmul.f32 %v2775, %v98
  %v2808 = vmul.f32 %v2776, %v98
  %v2809 = vmul.f32 %v2777, %v98
  %v2810 = vmul.f32 %v2778, %v98
  %v2811 = vmul.f32 %v2779, %v98
  %v2812 = vmul.f32 %v2780, %v98
  %v2813 = vmul.f32 %v2781, %v98
  %v2814 = vmul.f32 %v2782, %v98
  %v2815 = vmul.f32 %v2783, %v98
  %v2816 = vmul.f32 %v2784, %v98
  %v2817 = vmul.f32 %v2785, %v98
  %v2818 = vmul.f32 %v2786, %v98
  %v2819 = vmul.f32 %v2787, %v98
  %v2820 = vmul.f32 %v2788, %v98
  %v2821 = vmul.f32 %v2789, %v98
  %v2822 = vmul.f32 %v2790, %v98
  %v2823 = vmul.f32 %v2791, %v98
  %v2824 = vmul.f32 %v2792, %v98
  %v2825 = vmul.f32 %v2793, %v98
  %v2826 = vmul.f32 %v2794, %v98
  %v2827 = vmul.f32 %v2795, %v98
  %v2828 = vmul.f32 %v2796, %v98
  %v2829 = vmul.f32 %v2797, %v98
  %v2830 = vmul.f32 %v2798, %v98
  %v2831 = vadd.f32 %v2799, %v133
  %v2832 = vadd.f32 %v2800, %v133
  %v2833 = vadd.f32 %v2801, %v133
  %v2834 = vadd.f32 %v2802, %v133
  %v2835 = vadd.f32 %v2803, %v133
  %v2836 = vadd.f32 %v2804, %v133
  %v2837 = vadd.f32 %v2805, %v133
  %v2838 = vadd.f32 %v2806, %v133
  %v2839 = vadd.f32 %v2807, %v133
  %v2840 = vadd.f32 %v2808, %v133
  %v2841 = vadd.f32 %v2809, %v133
  %v2842 = vadd.f32 %v2810, %v133
  %v2843 = vadd.f32 %v2811, %v133
  %v2844 = vadd.f32 %v2812, %v133
  %v2845 = vadd.f32 %v2813, %v133
  %v2846 = vadd.f32 %v2814, %v133
  %v2847 = vadd.f32 %v2815, %v133
  %v2848 = vadd.f32 %v2816, %v133
  %v2849 = vadd.f32 %v2817, %v133
  %v2850 = vadd.f32 %v2818, %v133
  %v2851 = vadd.f32 %v2819, %v133
  %v2852 = vadd.f32 %v2820, %v133
  %v2853 = vadd.f32 %v2821, %v133
  %v2854 = vadd.f32 %v2822, %v133
  %v2855 = vadd.f32 %v2823, %v133
  %v2856 = vadd.f32 %v2824, %v133
  %v2857 = vadd.f32 %v2825, %v133
  %v2858 = vadd.f32 %v2826, %v133
  %v2859 = vadd.f32 %v2827, %v133
  %v2860 = vadd.f32 %v2828, %v133
  %v2861 = vadd.f32 %v2829, %v133
  %v2862 = vadd.f32 %v2830, %v133
  %v2863 = vmax.f32 %v2831, 0.0
  %v2864 = vmax.f32 %v2832, 0.0
  %v2865 = vmax.f32 %v2833, 0.0
  %v2866 = vmax.f32 %v2834, 0.0
  %v2867 = vmax.f32 %v2835, 0.0
  %v2868 = vmax.f32 %v2836, 0.0
  %v2869 = vmax.f32 %v2837, 0.0
  %v2870 = vmax.f32 %v2838, 0.0
  %v2871 = vmax.f32 %v2839, 0.0
  %v2872 = vmax.f32 %v2840, 0.0
  %v2873 = vmax.f32 %v2841, 0.0
  %v2874 = vmax.f32 %v2842, 0.0
  %v2875 = vmax.f32 %v2843, 0.0
  %v2876 = vmax.f32 %v2844, 0.0
  %v2877 = vmax.f32 %v2845, 0.0
  %v2878 = vmax.f32 %v2846, 0.0
  %v2879 = vmax.f32 %v2847, 0.0
  %v2880 = vmax.f32 %v2848, 0.0
  %v2881 = vmax.f32 %v2849, 0.0
  %v2882 = vmax.f32 %v2850, 0.0
  %v2883 = vmax.f32 %v2851, 0.0
  %v2884 = vmax.f32 %v2852, 0.0
  %v2885 = vmax.f32 %v2853, 0.0
  %v2886 = vmax.f32 %v2854, 0.0
  %v2887 = vmax.f32 %v2855, 0.0
  %v2888 = vmax.f32 %v2856, 0.0
  %v2889 = vmax.f32 %v2857, 0.0
  %v2890 = vmax.f32 %v2858, 0.0
  %v2891 = vmax.f32 %v2859, 0.0
  %v2892 = vmax.f32 %v2860, 0.0
  %v2893 = vmax.f32 %v2861, 0.0
  %v2894 = vmax.f32 %v2862, 0.0
  %2895 = vst.msk [vmem:[%s31 + $0x1] sm:$0xff] %vm22, %v2863
  %2896 = vst.msk [vmem:[%s31 + $0x9] sm:$0xff] %vm22, %v2864
  %2897 = vst.msk [vmem:[%s31 + $0x19] sm:$0xff] %vm22, %v2865
  %2898 = vst.msk [vmem:[%s31 + $0x21] sm:$0xff] %vm22, %v2866
  %2899 = vst.msk [vmem:[%s31 + $0x31] sm:$0xff] %vm22, %v2867
  %2900 = vst.msk [vmem:[%s31 + $0x39] sm:$0xff] %vm22, %v2868
  %2901 = vst.msk [vmem:[%s31 + $0x49] sm:$0xff] %vm22, %v2869
  %2902 = vst.msk [vmem:[%s31 + $0x51] sm:$0xff] %vm22, %v2870
  %2903 = vst.msk [vmem:[%s31 + $0x61] sm:$0xff] %vm22, %v2871
  %2904 = vst.msk [vmem:[%s31 + $0x69] sm:$0xff] %vm22, %v2872
  %2905 = vst.msk [vmem:[%s31 + $0x79] sm:$0xff] %vm22, %v2873
  %2906 = vst.msk [vmem:[%s31 + $0x81] sm:$0xff] %vm22, %v2874
  %2907 = vst.msk [vmem:[%s31 + $0x91] sm:$0xff] %vm22, %v2875
  %2908 = vst.msk [vmem:[%s31 + $0x99] sm:$0xff] %vm22, %v2876
  %2909 = vst.msk [vmem:[%s31 + $0xa9] sm:$0xff] %vm22, %v2877
  %2910 = vst.msk [vmem:[%s31 + $0xb1] sm:$0xff] %vm22, %v2878
  %2911 = vst.msk [vmem:[%s31 + $0xc1] sm:$0xff] %vm22, %v2879
  %2912 = vst.msk [vmem:[%s31 + $0xc9] sm:$0xff] %vm22, %v2880
  %2913 = vst.msk [vmem:[%s31 + $0xd9] sm:$0xff] %vm22, %v2881
  %2914 = vst.msk [vmem:[%s31 + $0xe1] sm:$0xff] %vm22, %v2882
  %2915 = vst.msk [vmem:[%s31 + $0xf1] sm:$0xff] %vm22, %v2883
  %2916 = vst.msk [vmem:[%s31 + $0xf9] sm:$0xff] %vm22, %v2884
  %2917 = vst.msk [vmem:[%s31 + $0x109] sm:$0xff] %vm22, %v2885
  %2918 = vst.msk [vmem:[%s31 + $0x111] sm:$0xff] %vm22, %v2886
  %2919 = vst.msk [vmem:[%s31 + $0x121] sm:$0xff] %vm22, %v2887
  %2920 = vst.msk [vmem:[%s31 + $0x129] sm:$0xff] %vm22, %v2888
  %2921 = vst.msk [vmem:[%s31 + $0x139] sm:$0xff] %vm22, %v2889
  %2922 = vst.msk [vmem:[%s31 + $0x141] sm:$0xff] %vm22, %v2890
  %2923 = vst.msk [vmem:[%s31 + $0x151] sm:$0xff] %vm22, %v2891
  %2924 = vst.msk [vmem:[%s31 + $0x159] sm:$0xff] %vm22, %v2892
  %2925 = vst.msk [vmem:[%s31 + $0x169] sm:$0xff] %vm22, %v2893
  %2926 = vst.msk [vmem:[%s31 + $0x171] sm:$0xff] %vm22, %v2894
  %v2927 = vld [vmem:[#allocation2] sm:$0xff]
  %v2928 = vld [vmem:[#allocation2 + $0x8] sm:$0xff]
  %v2929 = vld [vmem:[#allocation2 + $0x18] sm:$0xff]
  %v2930 = vld [vmem:[#allocation2 + $0x20] sm:$0xff]
  %v2931 = vld [vmem:[#allocation2 + $0x30] sm:$0xff]
  %v2932 = vld [vmem:[#allocation2 + $0x38] sm:$0xff]
  %v2933 = vld [vmem:[#allocation2 + $0x48] sm:$0xff]
  %v2934 = vld [vmem:[#allocation2 + $0x50] sm:$0xff]
  %v2935 = vld [vmem:[#allocation2 + $0x60] sm:$0xff]
  %v2936 = vld [vmem:[#allocation2 + $0x68] sm:$0xff]
  %v2937 = vld [vmem:[#allocation2 + $0x78] sm:$0xff]
  %v2938 = vld [vmem:[#allocation2 + $0x80] sm:$0xff]
  %v2939 = vld [vmem:[#allocation2 + $0x90] sm:$0xff]
  %v2940 = vld [vmem:[#allocation2 + $0x98] sm:$0xff]
  %v2941 = vld [vmem:[#allocation2 + $0xa8] sm:$0xff]
  %v2942 = vld [vmem:[#allocation2 + $0xb0] sm:$0xff]
  %v2943 = vld [vmem:[#allocation2 + $0xc0] sm:$0xff]
  %v2944 = vld [vmem:[#allocation2 + $0xc8] sm:$0xff]
  %v2945 = vld [vmem:[#allocation2 + $0xd8] sm:$0xff]
  %v2946 = vld [vmem:[#allocation2 + $0xe0] sm:$0xff]
  %v2947 = vld [vmem:[#allocation2 + $0xf0] sm:$0xff]
  %v2948 = vld [vmem:[#allocation2 + $0xf8] sm:$0xff]
  %v2949 = vld [vmem:[#allocation2 + $0x108] sm:$0xff]
  %v2950 = vld [vmem:[#allocation2 + $0x110] sm:$0xff]
  %v2951 = vld [vmem:[#allocation2 + $0x120] sm:$0xff]
  %v2952 = vld [vmem:[#allocation2 + $0x128] sm:$0xff]
  %v2953 = vld [vmem:[#allocation2 + $0x138] sm:$0xff]
  %v2954 = vld [vmem:[#allocation2 + $0x140] sm:$0xff]
  %v2955 = vld [vmem:[#allocation2 + $0x150] sm:$0xff]
  %v2956 = vld [vmem:[#allocation2 + $0x158] sm:$0xff]
  %v2957 = vld [vmem:[#allocation2 + $0x168] sm:$0xff]
  %v2958 = vld [vmem:[#allocation2 + $0x170] sm:$0xff]
  %v2959 = vld [vmem:[%s3] sm:$0xf]
  %v2960 = vld [vmem:[#allocation2 + $0x1] sm:$0xff]
  %v2961 = vld [vmem:[#allocation2 + $0x9] sm:$0xff]
  %v2962 = vld [vmem:[#allocation2 + $0x19] sm:$0xff]
  %v2963 = vld [vmem:[#allocation2 + $0x21] sm:$0xff]
  %v2964 = vld [vmem:[#allocation2 + $0x31] sm:$0xff]
  %v2965 = vld [vmem:[#allocation2 + $0x39] sm:$0xff]
  %v2966 = vld [vmem:[#allocation2 + $0x49] sm:$0xff]
  %v2967 = vld [vmem:[#allocation2 + $0x51] sm:$0xff]
  %v2968 = vld [vmem:[#allocation2 + $0x61] sm:$0xff]
  %v2969 = vld [vmem:[#allocation2 + $0x69] sm:$0xff]
  %v2970 = vld [vmem:[#allocation2 + $0x79] sm:$0xff]
  %v2971 = vld [vmem:[#allocation2 + $0x81] sm:$0xff]
  %v2972 = vld [vmem:[#allocation2 + $0x91] sm:$0xff]
  %v2973 = vld [vmem:[#allocation2 + $0x99] sm:$0xff]
  %v2974 = vld [vmem:[#allocation2 + $0xa9] sm:$0xff]
  %v2975 = vld [vmem:[#allocation2 + $0xb1] sm:$0xff]
  %v2976 = vld [vmem:[#allocation2 + $0xc1] sm:$0xff]
  %v2977 = vld [vmem:[#allocation2 + $0xc9] sm:$0xff]
  %v2978 = vld [vmem:[#allocation2 + $0xd9] sm:$0xff]
  %v2979 = vld [vmem:[#allocation2 + $0xe1] sm:$0xff]
  %v2980 = vld [vmem:[#allocation2 + $0xf1] sm:$0xff]
  %v2981 = vld [vmem:[#allocation2 + $0xf9] sm:$0xff]
  %v2982 = vld [vmem:[#allocation2 + $0x109] sm:$0xff]
  %v2983 = vld [vmem:[#allocation2 + $0x111] sm:$0xff]
  %v2984 = vld [vmem:[#allocation2 + $0x121] sm:$0xff]
  %v2985 = vld [vmem:[#allocation2 + $0x129] sm:$0xff]
  %v2986 = vld [vmem:[#allocation2 + $0x139] sm:$0xff]
  %v2987 = vld [vmem:[#allocation2 + $0x141] sm:$0xff]
  %v2988 = vld [vmem:[#allocation2 + $0x151] sm:$0xff]
  %v2989 = vld [vmem:[#allocation2 + $0x159] sm:$0xff]
  %v2990 = vld [vmem:[#allocation2 + $0x169] sm:$0xff]
  %v2991 = vld [vmem:[#allocation2 + $0x171] sm:$0xff]
  %v2992 = vld [vmem:[%s296] sm:$0xf]
  %v2994 = vsel %vm22, %v2960, 0
  %v2997 = vsel %vm22, %v2961, 0
  %v3000 = vsel %vm22, %v2962, 0
  %v3003 = vsel %vm22, %v2963, 0
  %v3006 = vsel %vm22, %v2964, 0
  %v3009 = vsel %vm22, %v2965, 0
  %v3012 = vsel %vm22, %v2966, 0
  %v3015 = vsel %vm22, %v2967, 0
  %v3018 = vsel %vm22, %v2968, 0
  %v3021 = vsel %vm22, %v2969, 0
  %v3024 = vsel %vm22, %v2970, 0
  %v3027 = vsel %vm22, %v2971, 0
  %v3030 = vsel %vm22, %v2972, 0
  %v3033 = vsel %vm22, %v2973, 0
  %v3036 = vsel %vm22, %v2974, 0
  %v3039 = vsel %vm22, %v2975, 0
  %v3042 = vsel %vm22, %v2976, 0
  %v3045 = vsel %vm22, %v2977, 0
  %v3048 = vsel %vm22, %v2978, 0
  %v3051 = vsel %vm22, %v2979, 0
  %v3054 = vsel %vm22, %v2980, 0
  %v3057 = vsel %vm22, %v2981, 0
  %v3060 = vsel %vm22, %v2982, 0
  %v3063 = vsel %vm22, %v2983, 0
  %v3066 = vsel %vm22, %v2984, 0
  %v3069 = vsel %vm22, %v2985, 0
  %v3072 = vsel %vm22, %v2986, 0
  %v3075 = vsel %vm22, %v2987, 0
  %v3078 = vsel %vm22, %v2988, 0
  %v3081 = vsel %vm22, %v2989, 0
  %v3084 = vsel %vm22, %v2990, 0
  %v3087 = vsel %vm22, %v2991, 0
  %v3090 = vsel %vm394, %v2992, 0
  %3092 = vmatpush.msra.mxu0 0.0
  %3093 = vmatpush.msra.mxu0 0.0
  %3094 = vmatpush.msra.mxu0 0.0
  %3095 = vmatpush.msra.mxu0 0.0
  %3096 = vmatpush.msra.mxu0 0.0
  %3097 = vmatpush.msra.mxu0 0.0
  %3098 = vmatpush.msra.mxu0 0.0
  %3099 = vmatpush.msra.mxu0 0.0
  %3100 = vmatpush.msra.mxu0 0.0
  %3101 = vmatpush.msra.mxu0 0.0
  %3102 = vmatpush.msra.mxu0 0.0
  %3103 = vmatpush.msra.mxu0 0.0
  %3104 = vmatpush.msra.mxu0 0.0
  %3105 = vmatpush.msra.mxu0 0.0
  %3106 = vmatpush.msra.mxu0 0.0
  %3107 = vmatpush.msra.mxu0 %v3090
  %3108 = vmatmul.f32.gmra.mxu0 %v2994
  %v3109 = vpop.f32.mrf.mxu0
  %v3110 = vadd.f32 0.0, %v3109
  %3111 = vmatmul.f32.gmra.mxu0 %v2997
  %v3112 = vpop.f32.mrf.mxu0
  %v3113 = vadd.f32 0.0, %v3112
  %3114 = vmatmul.f32.gmra.mxu0 %v3000
  %v3115 = vpop.f32.mrf.mxu0
  %v3116 = vadd.f32 0.0, %v3115
  %3117 = vmatmul.f32.gmra.mxu0 %v3003
  %v3118 = vpop.f32.mrf.mxu0
  %v3119 = vadd.f32 0.0, %v3118
  %3120 = vmatmul.f32.gmra.mxu0 %v3006
  %v3121 = vpop.f32.mrf.mxu0
  %v3122 = vadd.f32 0.0, %v3121
  %3123 = vmatmul.f32.gmra.mxu0 %v3009
  %v3124 = vpop.f32.mrf.mxu0
  %v3125 = vadd.f32 0.0, %v3124
  %3126 = vmatmul.f32.gmra.mxu0 %v3012
  %v3127 = vpop.f32.mrf.mxu0
  %v3128 = vadd.f32 0.0, %v3127
  %3129 = vmatmul.f32.gmra.mxu0 %v3015
  %v3130 = vpop.f32.mrf.mxu0
  %v3131 = vadd.f32 0.0, %v3130
  %3132 = vmatmul.f32.gmra.mxu0 %v3018
  %v3133 = vpop.f32.mrf.mxu0
  %v3134 = vadd.f32 0.0, %v3133
  %3135 = vmatmul.f32.gmra.mxu0 %v3021
  %v3136 = vpop.f32.mrf.mxu0
  %v3137 = vadd.f32 0.0, %v3136
  %3138 = vmatmul.f32.gmra.mxu0 %v3024
  %v3139 = vpop.f32.mrf.mxu0
  %v3140 = vadd.f32 0.0, %v3139
  %3141 = vmatmul.f32.gmra.mxu0 %v3027
  %v3142 = vpop.f32.mrf.mxu0
  %v3143 = vadd.f32 0.0, %v3142
  %3144 = vmatmul.f32.gmra.mxu0 %v3030
  %v3145 = vpop.f32.mrf.mxu0
  %v3146 = vadd.f32 0.0, %v3145
  %3147 = vmatmul.f32.gmra.mxu0 %v3033
  %v3148 = vpop.f32.mrf.mxu0
  %v3149 = vadd.f32 0.0, %v3148
  %3150 = vmatmul.f32.gmra.mxu0 %v3036
  %v3151 = vpop.f32.mrf.mxu0
  %v3152 = vadd.f32 0.0, %v3151
  %3153 = vmatmul.f32.gmra.mxu0 %v3039
  %v3154 = vpop.f32.mrf.mxu0
  %v3155 = vadd.f32 0.0, %v3154
  %3156 = vmatmul.f32.gmra.mxu0 %v3042
  %v3157 = vpop.f32.mrf.mxu0
  %v3158 = vadd.f32 0.0, %v3157
  %3159 = vmatmul.f32.gmra.mxu0 %v3045
  %v3160 = vpop.f32.mrf.mxu0
  %v3161 = vadd.f32 0.0, %v3160
  %3162 = vmatmul.f32.gmra.mxu0 %v3048
  %v3163 = vpop.f32.mrf.mxu0
  %v3164 = vadd.f32 0.0, %v3163
  %3165 = vmatmul.f32.gmra.mxu0 %v3051
  %v3166 = vpop.f32.mrf.mxu0
  %v3167 = vadd.f32 0.0, %v3166
  %3168 = vmatmul.f32.gmra.mxu0 %v3054
  %v3169 = vpop.f32.mrf.mxu0
  %v3170 = vadd.f32 0.0, %v3169
  %3171 = vmatmul.f32.gmra.mxu0 %v3057
  %v3172 = vpop.f32.mrf.mxu0
  %v3173 = vadd.f32 0.0, %v3172
  %3174 = vmatmul.f32.gmra.mxu0 %v3060
  %v3175 = vpop.f32.mrf.mxu0
  %v3176 = vadd.f32 0.0, %v3175
  %3177 = vmatmul.f32.gmra.mxu0 %v3063
  %v3178 = vpop.f32.mrf.mxu0
  %v3179 = vadd.f32 0.0, %v3178
  %3180 = vmatmul.f32.gmra.mxu0 %v3066
  %v3181 = vpop.f32.mrf.mxu0
  %v3182 = vadd.f32 0.0, %v3181
  %3183 = vmatmul.f32.gmra.mxu0 %v3069
  %v3184 = vpop.f32.mrf.mxu0
  %v3185 = vadd.f32 0.0, %v3184
  %3186 = vmatmul.f32.gmra.mxu0 %v3072
  %v3187 = vpop.f32.mrf.mxu0
  %v3188 = vadd.f32 0.0, %v3187
  %3189 = vmatmul.f32.gmra.mxu0 %v3075
  %v3190 = vpop.f32.mrf.mxu0
  %v3191 = vadd.f32 0.0, %v3190
  %3192 = vmatmul.f32.gmra.mxu0 %v3078
  %v3193 = vpop.f32.mrf.mxu0
  %v3194 = vadd.f32 0.0, %v3193
  %3195 = vmatmul.f32.gmra.mxu0 %v3081
  %v3196 = vpop.f32.mrf.mxu0
  %v3197 = vadd.f32 0.0, %v3196
  %3198 = vmatmul.f32.gmra.mxu0 %v3084
  %v3199 = vpop.f32.mrf.mxu0
  %v3200 = vadd.f32 0.0, %v3199
  %3201 = vmatmul.f32.gmra.mxu0 %v3087
  %v3202 = vpop.f32.mrf.mxu0
  %v3203 = vadd.f32 0.0, %v3202
  %3204 = vdwg.mxu0
  %v3206 = vsel %vm22, %v2927, 0
  %v3209 = vsel %vm22, %v2928, 0
  %v3212 = vsel %vm22, %v2929, 0
  %v3215 = vsel %vm22, %v2930, 0
  %v3218 = vsel %vm22, %v2931, 0
  %v3221 = vsel %vm22, %v2932, 0
  %v3224 = vsel %vm22, %v2933, 0
  %v3227 = vsel %vm22, %v2934, 0
  %v3230 = vsel %vm22, %v2935, 0
  %v3233 = vsel %vm22, %v2936, 0
  %v3236 = vsel %vm22, %v2937, 0
  %v3239 = vsel %vm22, %v2938, 0
  %v3242 = vsel %vm22, %v2939, 0
  %v3245 = vsel %vm22, %v2940, 0
  %v3248 = vsel %vm22, %v2941, 0
  %v3251 = vsel %vm22, %v2942, 0
  %v3254 = vsel %vm22, %v2943, 0
  %v3257 = vsel %vm22, %v2944, 0
  %v3260 = vsel %vm22, %v2945, 0
  %v3263 = vsel %vm22, %v2946, 0
  %v3266 = vsel %vm22, %v2947, 0
  %v3269 = vsel %vm22, %v2948, 0
  %v3272 = vsel %vm22, %v2949, 0
  %v3275 = vsel %vm22, %v2950, 0
  %v3278 = vsel %vm22, %v2951, 0
  %v3281 = vsel %vm22, %v2952, 0
  %v3284 = vsel %vm22, %v2953, 0
  %v3287 = vsel %vm22, %v2954, 0
  %v3290 = vsel %vm22, %v2955, 0
  %v3293 = vsel %vm22, %v2956, 0
  %v3296 = vsel %vm22, %v2957, 0
  %v3299 = vsel %vm22, %v2958, 0
  %v3302 = vsel %vm394, %v2959, 0
  %3304 = vmatpush.msra.mxu0 0.0
  %3305 = vmatpush.msra.mxu0 0.0
  %3306 = vmatpush.msra.mxu0 0.0
  %3307 = vmatpush.msra.mxu0 0.0
  %3308 = vmatpush.msra.mxu0 0.0
  %3309 = vmatpush.msra.mxu0 0.0
  %3310 = vmatpush.msra.mxu0 0.0
  %3311 = vmatpush.msra.mxu0 0.0
  %3312 = vmatpush.msra.mxu0 0.0
  %3313 = vmatpush.msra.mxu0 0.0
  %3314 = vmatpush.msra.mxu0 0.0
  %3315 = vmatpush.msra.mxu0 0.0
  %3316 = vmatpush.msra.mxu0 0.0
  %3317 = vmatpush.msra.mxu0 0.0
  %3318 = vmatpush.msra.mxu0 0.0
  %3319 = vmatpush.msra.mxu0 %v3302
  %3320 = vmatmul.f32.gmra.mxu0 %v3206
  %v3321 = vpop.f32.mrf.mxu0
  %v3322 = vadd.f32 %v3110, %v3321
  %3323 = vmatmul.f32.gmra.mxu0 %v3209
  %v3324 = vpop.f32.mrf.mxu0
  %v3325 = vadd.f32 %v3113, %v3324
  %3326 = vmatmul.f32.gmra.mxu0 %v3212
  %v3327 = vpop.f32.mrf.mxu0
  %v3328 = vadd.f32 %v3116, %v3327
  %3329 = vmatmul.f32.gmra.mxu0 %v3215
  %v3330 = vpop.f32.mrf.mxu0
  %v3331 = vadd.f32 %v3119, %v3330
  %3332 = vmatmul.f32.gmra.mxu0 %v3218
  %v3333 = vpop.f32.mrf.mxu0
  %v3334 = vadd.f32 %v3122, %v3333
  %3335 = vmatmul.f32.gmra.mxu0 %v3221
  %v3336 = vpop.f32.mrf.mxu0
  %v3337 = vadd.f32 %v3125, %v3336
  %3338 = vmatmul.f32.gmra.mxu0 %v3224
  %v3339 = vpop.f32.mrf.mxu0
  %v3340 = vadd.f32 %v3128, %v3339
  %3341 = vmatmul.f32.gmra.mxu0 %v3227
  %v3342 = vpop.f32.mrf.mxu0
  %v3343 = vadd.f32 %v3131, %v3342
  %3344 = vmatmul.f32.gmra.mxu0 %v3230
  %v3345 = vpop.f32.mrf.mxu0
  %v3346 = vadd.f32 %v3134, %v3345
  %3347 = vmatmul.f32.gmra.mxu0 %v3233
  %v3348 = vpop.f32.mrf.mxu0
  %v3349 = vadd.f32 %v3137, %v3348
  %3350 = vmatmul.f32.gmra.mxu0 %v3236
  %v3351 = vpop.f32.mrf.mxu0
  %v3352 = vadd.f32 %v3140, %v3351
  %3353 = vmatmul.f32.gmra.mxu0 %v3239
  %v3354 = vpop.f32.mrf.mxu0
  %v3355 = vadd.f32 %v3143, %v3354
  %3356 = vmatmul.f32.gmra.mxu0 %v3242
  %v3357 = vpop.f32.mrf.mxu0
  %v3358 = vadd.f32 %v3146, %v3357
  %3359 = vmatmul.f32.gmra.mxu0 %v3245
  %v3360 = vpop.f32.mrf.mxu0
  %v3361 = vadd.f32 %v3149, %v3360
  %3362 = vmatmul.f32.gmra.mxu0 %v3248
  %v3363 = vpop.f32.mrf.mxu0
  %v3364 = vadd.f32 %v3152, %v3363
  %3365 = vmatmul.f32.gmra.mxu0 %v3251
  %v3366 = vpop.f32.mrf.mxu0
  %v3367 = vadd.f32 %v3155, %v3366
  %3368 = vmatmul.f32.gmra.mxu0 %v3254
  %v3369 = vpop.f32.mrf.mxu0
  %v3370 = vadd.f32 %v3158, %v3369
  %3371 = vmatmul.f32.gmra.mxu0 %v3257
  %v3372 = vpop.f32.mrf.mxu0
  %v3373 = vadd.f32 %v3161, %v3372
  %3374 = vmatmul.f32.gmra.mxu0 %v3260
  %v3375 = vpop.f32.mrf.mxu0
  %v3376 = vadd.f32 %v3164, %v3375
  %3377 = vmatmul.f32.gmra.mxu0 %v3263
  %v3378 = vpop.f32.mrf.mxu0
  %v3379 = vadd.f32 %v3167, %v3378
  %3380 = vmatmul.f32.gmra.mxu0 %v3266
  %v3381 = vpop.f32.mrf.mxu0
  %v3382 = vadd.f32 %v3170, %v3381
  %3383 = vmatmul.f32.gmra.mxu0 %v3269
  %v3384 = vpop.f32.mrf.mxu0
  %v3385 = vadd.f32 %v3173, %v3384
  %3386 = vmatmul.f32.gmra.mxu0 %v3272
  %v3387 = vpop.f32.mrf.mxu0
  %v3388 = vadd.f32 %v3176, %v3387
  %3389 = vmatmul.f32.gmra.mxu0 %v3275
  %v3390 = vpop.f32.mrf.mxu0
  %v3391 = vadd.f32 %v3179, %v3390
  %3392 = vmatmul.f32.gmra.mxu0 %v3278
  %v3393 = vpop.f32.mrf.mxu0
  %v3394 = vadd.f32 %v3182, %v3393
  %3395 = vmatmul.f32.gmra.mxu0 %v3281
  %v3396 = vpop.f32.mrf.mxu0
  %v3397 = vadd.f32 %v3185, %v3396
  %3398 = vmatmul.f32.gmra.mxu0 %v3284
  %v3399 = vpop.f32.mrf.mxu0
  %v3400 = vadd.f32 %v3188, %v3399
  %3401 = vmatmul.f32.gmra.mxu0 %v3287
  %v3402 = vpop.f32.mrf.mxu0
  %v3403 = vadd.f32 %v3191, %v3402
  %3404 = vmatmul.f32.gmra.mxu0 %v3290
  %v3405 = vpop.f32.mrf.mxu0
  %v3406 = vadd.f32 %v3194, %v3405
  %3407 = vmatmul.f32.gmra.mxu0 %v3293
  %v3408 = vpop.f32.mrf.mxu0
  %v3409 = vadd.f32 %v3197, %v3408
  %3410 = vmatmul.f32.gmra.mxu0 %v3296
  %v3411 = vpop.f32.mrf.mxu0
  %v3412 = vadd.f32 %v3200, %v3411
  %3413 = vmatmul.f32.gmra.mxu0 %v3299
  %v3414 = vpop.f32.mrf.mxu0
  %v3415 = vadd.f32 %v3203, %v3414
  %3416 = vdwg.mxu0
  %v3417 = vld [vmem:[#allocation2 + $0x2] sm:$0xff]
  %v3418 = vld [vmem:[#allocation2 + $0xa] sm:$0xff]
  %v3419 = vld [vmem:[#allocation2 + $0x1a] sm:$0xff]
  %v3420 = vld [vmem:[#allocation2 + $0x22] sm:$0xff]
  %v3421 = vld [vmem:[#allocation2 + $0x32] sm:$0xff]
  %v3422 = vld [vmem:[#allocation2 + $0x3a] sm:$0xff]
  %v3423 = vld [vmem:[#allocation2 + $0x4a] sm:$0xff]
  %v3424 = vld [vmem:[#allocation2 + $0x52] sm:$0xff]
  %v3425 = vld [vmem:[#allocation2 + $0x62] sm:$0xff]
  %v3426 = vld [vmem:[#allocation2 + $0x6a] sm:$0xff]
  %v3427 = vld [vmem:[#allocation2 + $0x7a] sm:$0xff]
  %v3428 = vld [vmem:[#allocation2 + $0x82] sm:$0xff]
  %v3429 = vld [vmem:[#allocation2 + $0x92] sm:$0xff]
  %v3430 = vld [vmem:[#allocation2 + $0x9a] sm:$0xff]
  %v3431 = vld [vmem:[#allocation2 + $0xaa] sm:$0xff]
  %v3432 = vld [vmem:[#allocation2 + $0xb2] sm:$0xff]
  %v3433 = vld [vmem:[#allocation2 + $0xc2] sm:$0xff]
  %v3434 = vld [vmem:[#allocation2 + $0xca] sm:$0xff]
  %v3435 = vld [vmem:[#allocation2 + $0xda] sm:$0xff]
  %v3436 = vld [vmem:[#allocation2 + $0xe2] sm:$0xff]
  %v3437 = vld [vmem:[#allocation2 + $0xf2] sm:$0xff]
  %v3438 = vld [vmem:[#allocation2 + $0xfa] sm:$0xff]
  %v3439 = vld [vmem:[#allocation2 + $0x10a] sm:$0xff]
  %v3440 = vld [vmem:[#allocation2 + $0x112] sm:$0xff]
  %v3441 = vld [vmem:[#allocation2 + $0x122] sm:$0xff]
  %v3442 = vld [vmem:[#allocation2 + $0x12a] sm:$0xff]
  %v3443 = vld [vmem:[#allocation2 + $0x13a] sm:$0xff]
  %v3444 = vld [vmem:[#allocation2 + $0x142] sm:$0xff]
  %v3445 = vld [vmem:[#allocation2 + $0x152] sm:$0xff]
  %v3446 = vld [vmem:[#allocation2 + $0x15a] sm:$0xff]
  %v3447 = vld [vmem:[#allocation2 + $0x16a] sm:$0xff]
  %v3448 = vld [vmem:[#allocation2 + $0x172] sm:$0xff]
  %v3449 = vld [vmem:[%s755] sm:$0xf]
  %v3451 = vsel %vm22, %v3417, 0
  %v3454 = vsel %vm22, %v3418, 0
  %v3457 = vsel %vm22, %v3419, 0
  %v3460 = vsel %vm22, %v3420, 0
  %v3463 = vsel %vm22, %v3421, 0
  %v3466 = vsel %vm22, %v3422, 0
  %v3469 = vsel %vm22, %v3423, 0
  %v3472 = vsel %vm22, %v3424, 0
  %v3475 = vsel %vm22, %v3425, 0
  %v3478 = vsel %vm22, %v3426, 0
  %v3481 = vsel %vm22, %v3427, 0
  %v3484 = vsel %vm22, %v3428, 0
  %v3487 = vsel %vm22, %v3429, 0
  %v3490 = vsel %vm22, %v3430, 0
  %v3493 = vsel %vm22, %v3431, 0
  %v3496 = vsel %vm22, %v3432, 0
  %v3499 = vsel %vm22, %v3433, 0
  %v3502 = vsel %vm22, %v3434, 0
  %v3505 = vsel %vm22, %v3435, 0
  %v3508 = vsel %vm22, %v3436, 0
  %v3511 = vsel %vm22, %v3437, 0
  %v3514 = vsel %vm22, %v3438, 0
  %v3517 = vsel %vm22, %v3439, 0
  %v3520 = vsel %vm22, %v3440, 0
  %v3523 = vsel %vm22, %v3441, 0
  %v3526 = vsel %vm22, %v3442, 0
  %v3529 = vsel %vm22, %v3443, 0
  %v3532 = vsel %vm22, %v3444, 0
  %v3535 = vsel %vm22, %v3445, 0
  %v3538 = vsel %vm22, %v3446, 0
  %v3541 = vsel %vm22, %v3447, 0
  %v3544 = vsel %vm22, %v3448, 0
  %v3547 = vsel %vm394, %v3449, 0
  %3549 = vmatpush.msra.mxu0 0.0
  %3550 = vmatpush.msra.mxu0 0.0
  %3551 = vmatpush.msra.mxu0 0.0
  %3552 = vmatpush.msra.mxu0 0.0
  %3553 = vmatpush.msra.mxu0 0.0
  %3554 = vmatpush.msra.mxu0 0.0
  %3555 = vmatpush.msra.mxu0 0.0
  %3556 = vmatpush.msra.mxu0 0.0
  %3557 = vmatpush.msra.mxu0 0.0
  %3558 = vmatpush.msra.mxu0 0.0
  %3559 = vmatpush.msra.mxu0 0.0
  %3560 = vmatpush.msra.mxu0 0.0
  %3561 = vmatpush.msra.mxu0 0.0
  %3562 = vmatpush.msra.mxu0 0.0
  %3563 = vmatpush.msra.mxu0 0.0
  %3564 = vmatpush.msra.mxu0 %v3547
  %3565 = vmatmul.f32.gmra.mxu0 %v3451
  %v3566 = vpop.f32.mrf.mxu0
  %v3567 = vadd.f32 0.0, %v3566
  %3568 = vmatmul.f32.gmra.mxu0 %v3454
  %v3569 = vpop.f32.mrf.mxu0
  %v3570 = vadd.f32 0.0, %v3569
  %3571 = vmatmul.f32.gmra.mxu0 %v3457
  %v3572 = vpop.f32.mrf.mxu0
  %v3573 = vadd.f32 0.0, %v3572
  %3574 = vmatmul.f32.gmra.mxu0 %v3460
  %v3575 = vpop.f32.mrf.mxu0
  %v3576 = vadd.f32 0.0, %v3575
  %3577 = vmatmul.f32.gmra.mxu0 %v3463
  %v3578 = vpop.f32.mrf.mxu0
  %v3579 = vadd.f32 0.0, %v3578
  %3580 = vmatmul.f32.gmra.mxu0 %v3466
  %v3581 = vpop.f32.mrf.mxu0
  %v3582 = vadd.f32 0.0, %v3581
  %3583 = vmatmul.f32.gmra.mxu0 %v3469
  %v3584 = vpop.f32.mrf.mxu0
  %v3585 = vadd.f32 0.0, %v3584
  %3586 = vmatmul.f32.gmra.mxu0 %v3472
  %v3587 = vpop.f32.mrf.mxu0
  %v3588 = vadd.f32 0.0, %v3587
  %3589 = vmatmul.f32.gmra.mxu0 %v3475
  %v3590 = vpop.f32.mrf.mxu0
  %v3591 = vadd.f32 0.0, %v3590
  %3592 = vmatmul.f32.gmra.mxu0 %v3478
  %v3593 = vpop.f32.mrf.mxu0
  %v3594 = vadd.f32 0.0, %v3593
  %3595 = vmatmul.f32.gmra.mxu0 %v3481
  %v3596 = vpop.f32.mrf.mxu0
  %v3597 = vadd.f32 0.0, %v3596
  %3598 = vmatmul.f32.gmra.mxu0 %v3484
  %v3599 = vpop.f32.mrf.mxu0
  %v3600 = vadd.f32 0.0, %v3599
  %3601 = vmatmul.f32.gmra.mxu0 %v3487
  %v3602 = vpop.f32.mrf.mxu0
  %v3603 = vadd.f32 0.0, %v3602
  %3604 = vmatmul.f32.gmra.mxu0 %v3490
  %v3605 = vpop.f32.mrf.mxu0
  %v3606 = vadd.f32 0.0, %v3605
  %3607 = vmatmul.f32.gmra.mxu0 %v3493
  %v3608 = vpop.f32.mrf.mxu0
  %v3609 = vadd.f32 0.0, %v3608
  %3610 = vmatmul.f32.gmra.mxu0 %v3496
  %v3611 = vpop.f32.mrf.mxu0
  %v3612 = vadd.f32 0.0, %v3611
  %3613 = vmatmul.f32.gmra.mxu0 %v3499
  %v3614 = vpop.f32.mrf.mxu0
  %v3615 = vadd.f32 0.0, %v3614
  %3616 = vmatmul.f32.gmra.mxu0 %v3502
  %v3617 = vpop.f32.mrf.mxu0
  %v3618 = vadd.f32 0.0, %v3617
  %3619 = vmatmul.f32.gmra.mxu0 %v3505
  %v3620 = vpop.f32.mrf.mxu0
  %v3621 = vadd.f32 0.0, %v3620
  %3622 = vmatmul.f32.gmra.mxu0 %v3508
  %v3623 = vpop.f32.mrf.mxu0
  %v3624 = vadd.f32 0.0, %v3623
  %3625 = vmatmul.f32.gmra.mxu0 %v3511
  %v3626 = vpop.f32.mrf.mxu0
  %v3627 = vadd.f32 0.0, %v3626
  %3628 = vmatmul.f32.gmra.mxu0 %v3514
  %v3629 = vpop.f32.mrf.mxu0
  %v3630 = vadd.f32 0.0, %v3629
  %3631 = vmatmul.f32.gmra.mxu0 %v3517
  %v3632 = vpop.f32.mrf.mxu0
  %v3633 = vadd.f32 0.0, %v3632
  %3634 = vmatmul.f32.gmra.mxu0 %v3520
  %v3635 = vpop.f32.mrf.mxu0
  %v3636 = vadd.f32 0.0, %v3635
  %3637 = vmatmul.f32.gmra.mxu0 %v3523
  %v3638 = vpop.f32.mrf.mxu0
  %v3639 = vadd.f32 0.0, %v3638
  %3640 = vmatmul.f32.gmra.mxu0 %v3526
  %v3641 = vpop.f32.mrf.mxu0
  %v3642 = vadd.f32 0.0, %v3641
  %3643 = vmatmul.f32.gmra.mxu0 %v3529
  %v3644 = vpop.f32.mrf.mxu0
  %v3645 = vadd.f32 0.0, %v3644
  %3646 = vmatmul.f32.gmra.mxu0 %v3532
  %v3647 = vpop.f32.mrf.mxu0
  %v3648 = vadd.f32 0.0, %v3647
  %3649 = vmatmul.f32.gmra.mxu0 %v3535
  %v3650 = vpop.f32.mrf.mxu0
  %v3651 = vadd.f32 0.0, %v3650
  %3652 = vmatmul.f32.gmra.mxu0 %v3538
  %v3653 = vpop.f32.mrf.mxu0
  %v3654 = vadd.f32 0.0, %v3653
  %3655 = vmatmul.f32.gmra.mxu0 %v3541
  %v3656 = vpop.f32.mrf.mxu0
  %v3657 = vadd.f32 0.0, %v3656
  %3658 = vmatmul.f32.gmra.mxu0 %v3544
  %v3659 = vpop.f32.mrf.mxu0
  %v3660 = vadd.f32 0.0, %v3659
  %3661 = vdwg.mxu0
  %v3662 = vadd.f32 %v3322, %v3567
  %v3663 = vadd.f32 %v3325, %v3570
  %v3664 = vadd.f32 %v3328, %v3573
  %v3665 = vadd.f32 %v3331, %v3576
  %v3666 = vadd.f32 %v3334, %v3579
  %v3667 = vadd.f32 %v3337, %v3582
  %v3668 = vadd.f32 %v3340, %v3585
  %v3669 = vadd.f32 %v3343, %v3588
  %v3670 = vadd.f32 %v3346, %v3591
  %v3671 = vadd.f32 %v3349, %v3594
  %v3672 = vadd.f32 %v3352, %v3597
  %v3673 = vadd.f32 %v3355, %v3600
  %v3674 = vadd.f32 %v3358, %v3603
  %v3675 = vadd.f32 %v3361, %v3606
  %v3676 = vadd.f32 %v3364, %v3609
  %v3677 = vadd.f32 %v3367, %v3612
  %v3678 = vadd.f32 %v3370, %v3615
  %v3679 = vadd.f32 %v3373, %v3618
  %v3680 = vadd.f32 %v3376, %v3621
  %v3681 = vadd.f32 %v3379, %v3624
  %v3682 = vadd.f32 %v3382, %v3627
  %v3683 = vadd.f32 %v3385, %v3630
  %v3684 = vadd.f32 %v3388, %v3633
  %v3685 = vadd.f32 %v3391, %v3636
  %v3686 = vadd.f32 %v3394, %v3639
  %v3687 = vadd.f32 %v3397, %v3642
  %v3688 = vadd.f32 %v3400, %v3645
  %v3689 = vadd.f32 %v3403, %v3648
  %v3690 = vadd.f32 %v3406, %v3651
  %v3691 = vadd.f32 %v3409, %v3654
  %v3692 = vadd.f32 %v3412, %v3657
  %v3693 = vadd.f32 %v3415, %v3660
  %v3694 = vld [vmem:[%s31] sm:$0xff]
  %v3695 = vld [vmem:[%s31 + $0x8] sm:$0xff]
  %v3696 = vld [vmem:[%s31 + $0x18] sm:$0xff]
  %v3697 = vld [vmem:[%s31 + $0x20] sm:$0xff]
  %v3698 = vld [vmem:[%s31 + $0x30] sm:$0xff]
  %v3699 = vld [vmem:[%s31 + $0x38] sm:$0xff]
  %v3700 = vld [vmem:[%s31 + $0x48] sm:$0xff]
  %v3701 = vld [vmem:[%s31 + $0x50] sm:$0xff]
  %v3702 = vld [vmem:[%s31 + $0x60] sm:$0xff]
  %v3703 = vld [vmem:[%s31 + $0x68] sm:$0xff]
  %v3704 = vld [vmem:[%s31 + $0x78] sm:$0xff]
  %v3705 = vld [vmem:[%s31 + $0x80] sm:$0xff]
  %v3706 = vld [vmem:[%s31 + $0x90] sm:$0xff]
  %v3707 = vld [vmem:[%s31 + $0x98] sm:$0xff]
  %v3708 = vld [vmem:[%s31 + $0xa8] sm:$0xff]
  %v3709 = vld [vmem:[%s31 + $0xb0] sm:$0xff]
  %v3710 = vld [vmem:[%s31 + $0xc0] sm:$0xff]
  %v3711 = vld [vmem:[%s31 + $0xc8] sm:$0xff]
  %v3712 = vld [vmem:[%s31 + $0xd8] sm:$0xff]
  %v3713 = vld [vmem:[%s31 + $0xe0] sm:$0xff]
  %v3714 = vld [vmem:[%s31 + $0xf0] sm:$0xff]
  %v3715 = vld [vmem:[%s31 + $0xf8] sm:$0xff]
  %v3716 = vld [vmem:[%s31 + $0x108] sm:$0xff]
  %v3717 = vld [vmem:[%s31 + $0x110] sm:$0xff]
  %v3718 = vld [vmem:[%s31 + $0x120] sm:$0xff]
  %v3719 = vld [vmem:[%s31 + $0x128] sm:$0xff]
  %v3720 = vld [vmem:[%s31 + $0x138] sm:$0xff]
  %v3721 = vld [vmem:[%s31 + $0x140] sm:$0xff]
  %v3722 = vld [vmem:[%s31 + $0x150] sm:$0xff]
  %v3723 = vld [vmem:[%s31 + $0x158] sm:$0xff]
  %v3724 = vld [vmem:[%s31 + $0x168] sm:$0xff]
  %v3725 = vld [vmem:[%s31 + $0x170] sm:$0xff]
  %v3726 = vld [vmem:[%s1033] sm:$0xf]
  %v3728 = vsel %vm22, %v3694, 0
  %v3731 = vsel %vm22, %v3695, 0
  %v3734 = vsel %vm22, %v3696, 0
  %v3737 = vsel %vm22, %v3697, 0
  %v3740 = vsel %vm22, %v3698, 0
  %v3743 = vsel %vm22, %v3699, 0
  %v3746 = vsel %vm22, %v3700, 0
  %v3749 = vsel %vm22, %v3701, 0
  %v3752 = vsel %vm22, %v3702, 0
  %v3755 = vsel %vm22, %v3703, 0
  %v3758 = vsel %vm22, %v3704, 0
  %v3761 = vsel %vm22, %v3705, 0
  %v3764 = vsel %vm22, %v3706, 0
  %v3767 = vsel %vm22, %v3707, 0
  %v3770 = vsel %vm22, %v3708, 0
  %v3773 = vsel %vm22, %v3709, 0
  %v3776 = vsel %vm22, %v3710, 0
  %v3779 = vsel %vm22, %v3711, 0
  %v3782 = vsel %vm22, %v3712, 0
  %v3785 = vsel %vm22, %v3713, 0
  %v3788 = vsel %vm22, %v3714, 0
  %v3791 = vsel %vm22, %v3715, 0
  %v3794 = vsel %vm22, %v3716, 0
  %v3797 = vsel %vm22, %v3717, 0
  %v3800 = vsel %vm22, %v3718, 0
  %v3803 = vsel %vm22, %v3719, 0
  %v3806 = vsel %vm22, %v3720, 0
  %v3809 = vsel %vm22, %v3721, 0
  %v3812 = vsel %vm22, %v3722, 0
  %v3815 = vsel %vm22, %v3723, 0
  %v3818 = vsel %vm22, %v3724, 0
  %v3821 = vsel %vm22, %v3725, 0
  %v3824 = vsel %vm394, %v3726, 0
  %3826 = vmatpush.msra.mxu0 0.0
  %3827 = vmatpush.msra.mxu0 0.0
  %3828 = vmatpush.msra.mxu0 0.0
  %3829 = vmatpush.msra.mxu0 0.0
  %3830 = vmatpush.msra.mxu0 0.0
  %3831 = vmatpush.msra.mxu0 0.0
  %3832 = vmatpush.msra.mxu0 0.0
  %3833 = vmatpush.msra.mxu0 0.0
  %3834 = vmatpush.msra.mxu0 0.0
  %3835 = vmatpush.msra.mxu0 0.0
  %3836 = vmatpush.msra.mxu0 0.0
  %3837 = vmatpush.msra.mxu0 0.0
  %3838 = vmatpush.msra.mxu0 0.0
  %3839 = vmatpush.msra.mxu0 0.0
  %3840 = vmatpush.msra.mxu0 0.0
  %3841 = vmatpush.msra.mxu0 %v3824
  %3842 = vmatmul.f32.gmra.mxu0 %v3728
  %v3843 = vpop.f32.mrf.mxu0
  %v3844 = vadd.f32 0.0, %v3843
  %3845 = vmatmul.f32.gmra.mxu0 %v3731
  %v3846 = vpop.f32.mrf.mxu0
  %v3847 = vadd.f32 0.0, %v3846
  %3848 = vmatmul.f32.gmra.mxu0 %v3734
  %v3849 = vpop.f32.mrf.mxu0
  %v3850 = vadd.f32 0.0, %v3849
  %3851 = vmatmul.f32.gmra.mxu0 %v3737
  %v3852 = vpop.f32.mrf.mxu0
  %v3853 = vadd.f32 0.0, %v3852
  %3854 = vmatmul.f32.gmra.mxu0 %v3740
  %v3855 = vpop.f32.mrf.mxu0
  %v3856 = vadd.f32 0.0, %v3855
  %3857 = vmatmul.f32.gmra.mxu0 %v3743
  %v3858 = vpop.f32.mrf.mxu0
  %v3859 = vadd.f32 0.0, %v3858
  %3860 = vmatmul.f32.gmra.mxu0 %v3746
  %v3861 = vpop.f32.mrf.mxu0
  %v3862 = vadd.f32 0.0, %v3861
  %3863 = vmatmul.f32.gmra.mxu0 %v3749
  %v3864 = vpop.f32.mrf.mxu0
  %v3865 = vadd.f32 0.0, %v3864
  %3866 = vmatmul.f32.gmra.mxu0 %v3752
  %v3867 = vpop.f32.mrf.mxu0
  %v3868 = vadd.f32 0.0, %v3867
  %3869 = vmatmul.f32.gmra.mxu0 %v3755
  %v3870 = vpop.f32.mrf.mxu0
  %v3871 = vadd.f32 0.0, %v3870
  %3872 = vmatmul.f32.gmra.mxu0 %v3758
  %v3873 = vpop.f32.mrf.mxu0
  %v3874 = vadd.f32 0.0, %v3873
  %3875 = vmatmul.f32.gmra.mxu0 %v3761
  %v3876 = vpop.f32.mrf.mxu0
  %v3877 = vadd.f32 0.0, %v3876
  %3878 = vmatmul.f32.gmra.mxu0 %v3764
  %v3879 = vpop.f32.mrf.mxu0
  %v3880 = vadd.f32 0.0, %v3879
  %3881 = vmatmul.f32.gmra.mxu0 %v3767
  %v3882 = vpop.f32.mrf.mxu0
  %v3883 = vadd.f32 0.0, %v3882
  %3884 = vmatmul.f32.gmra.mxu0 %v3770
  %v3885 = vpop.f32.mrf.mxu0
  %v3886 = vadd.f32 0.0, %v3885
  %3887 = vmatmul.f32.gmra.mxu0 %v3773
  %v3888 = vpop.f32.mrf.mxu0
  %v3889 = vadd.f32 0.0, %v3888
  %3890 = vmatmul.f32.gmra.mxu0 %v3776
  %v3891 = vpop.f32.mrf.mxu0
  %v3892 = vadd.f32 0.0, %v3891
  %3893 = vmatmul.f32.gmra.mxu0 %v3779
  %v3894 = vpop.f32.mrf.mxu0
  %v3895 = vadd.f32 0.0, %v3894
  %3896 = vmatmul.f32.gmra.mxu0 %v3782
  %v3897 = vpop.f32.mrf.mxu0
  %v3898 = vadd.f32 0.0, %v3897
  %3899 = vmatmul.f32.gmra.mxu0 %v3785
  %v3900 = vpop.f32.mrf.mxu0
  %v3901 = vadd.f32 0.0, %v3900
  %3902 = vmatmul.f32.gmra.mxu0 %v3788
  %v3903 = vpop.f32.mrf.mxu0
  %v3904 = vadd.f32 0.0, %v3903
  %3905 = vmatmul.f32.gmra.mxu0 %v3791
  %v3906 = vpop.f32.mrf.mxu0
  %v3907 = vadd.f32 0.0, %v3906
  %3908 = vmatmul.f32.gmra.mxu0 %v3794
  %v3909 = vpop.f32.mrf.mxu0
  %v3910 = vadd.f32 0.0, %v3909
  %3911 = vmatmul.f32.gmra.mxu0 %v3797
  %v3912 = vpop.f32.mrf.mxu0
  %v3913 = vadd.f32 0.0, %v3912
  %3914 = vmatmul.f32.gmra.mxu0 %v3800
  %v3915 = vpop.f32.mrf.mxu0
  %v3916 = vadd.f32 0.0, %v3915
  %3917 = vmatmul.f32.gmra.mxu0 %v3803
  %v3918 = vpop.f32.mrf.mxu0
  %v3919 = vadd.f32 0.0, %v3918
  %3920 = vmatmul.f32.gmra.mxu0 %v3806
  %v3921 = vpop.f32.mrf.mxu0
  %v3922 = vadd.f32 0.0, %v3921
  %3923 = vmatmul.f32.gmra.mxu0 %v3809
  %v3924 = vpop.f32.mrf.mxu0
  %v3925 = vadd.f32 0.0, %v3924
  %3926 = vmatmul.f32.gmra.mxu0 %v3812
  %v3927 = vpop.f32.mrf.mxu0
  %v3928 = vadd.f32 0.0, %v3927
  %3929 = vmatmul.f32.gmra.mxu0 %v3815
  %v3930 = vpop.f32.mrf.mxu0
  %v3931 = vadd.f32 0.0, %v3930
  %3932 = vmatmul.f32.gmra.mxu0 %v3818
  %v3933 = vpop.f32.mrf.mxu0
  %v3934 = vadd.f32 0.0, %v3933
  %3935 = vmatmul.f32.gmra.mxu0 %v3821
  %v3936 = vpop.f32.mrf.mxu0
  %v3937 = vadd.f32 0.0, %v3936
  %3938 = vdwg.mxu0
  %v3939 = vadd.f32 %v3662, %v3844
  %v3940 = vadd.f32 %v3663, %v3847
  %v3941 = vadd.f32 %v3664, %v3850
  %v3942 = vadd.f32 %v3665, %v3853
  %v3943 = vadd.f32 %v3666, %v3856
  %v3944 = vadd.f32 %v3667, %v3859
  %v3945 = vadd.f32 %v3668, %v3862
  %v3946 = vadd.f32 %v3669, %v3865
  %v3947 = vadd.f32 %v3670, %v3868
  %v3948 = vadd.f32 %v3671, %v3871
  %v3949 = vadd.f32 %v3672, %v3874
  %v3950 = vadd.f32 %v3673, %v3877
  %v3951 = vadd.f32 %v3674, %v3880
  %v3952 = vadd.f32 %v3675, %v3883
  %v3953 = vadd.f32 %v3676, %v3886
  %v3954 = vadd.f32 %v3677, %v3889
  %v3955 = vadd.f32 %v3678, %v3892
  %v3956 = vadd.f32 %v3679, %v3895
  %v3957 = vadd.f32 %v3680, %v3898
  %v3958 = vadd.f32 %v3681, %v3901
  %v3959 = vadd.f32 %v3682, %v3904
  %v3960 = vadd.f32 %v3683, %v3907
  %v3961 = vadd.f32 %v3684, %v3910
  %v3962 = vadd.f32 %v3685, %v3913
  %v3963 = vadd.f32 %v3686, %v3916
  %v3964 = vadd.f32 %v3687, %v3919
  %v3965 = vadd.f32 %v3688, %v3922
  %v3966 = vadd.f32 %v3689, %v3925
  %v3967 = vadd.f32 %v3690, %v3928
  %v3968 = vadd.f32 %v3691, %v3931
  %v3969 = vadd.f32 %v3692, %v3934
  %v3970 = vadd.f32 %v3693, %v3937
  %v3971 = vld [vmem:[%s31 + $0x1] sm:$0xff]
  %v3972 = vld [vmem:[%s31 + $0x9] sm:$0xff]
  %v3973 = vld [vmem:[%s31 + $0x19] sm:$0xff]
  %v3974 = vld [vmem:[%s31 + $0x21] sm:$0xff]
  %v3975 = vld [vmem:[%s31 + $0x31] sm:$0xff]
  %v3976 = vld [vmem:[%s31 + $0x39] sm:$0xff]
  %v3977 = vld [vmem:[%s31 + $0x49] sm:$0xff]
  %v3978 = vld [vmem:[%s31 + $0x51] sm:$0xff]
  %v3979 = vld [vmem:[%s31 + $0x61] sm:$0xff]
  %v3980 = vld [vmem:[%s31 + $0x69] sm:$0xff]
  %v3981 = vld [vmem:[%s31 + $0x79] sm:$0xff]
  %v3982 = vld [vmem:[%s31 + $0x81] sm:$0xff]
  %v3983 = vld [vmem:[%s31 + $0x91] sm:$0xff]
  %v3984 = vld [vmem:[%s31 + $0x99] sm:$0xff]
  %v3985 = vld [vmem:[%s31 + $0xa9] sm:$0xff]
  %v3986 = vld [vmem:[%s31 + $0xb1] sm:$0xff]
  %v3987 = vld [vmem:[%s31 + $0xc1] sm:$0xff]
  %v3988 = vld [vmem:[%s31 + $0xc9] sm:$0xff]
  %v3989 = vld [vmem:[%s31 + $0xd9] sm:$0xff]
  %v3990 = vld [vmem:[%s31 + $0xe1] sm:$0xff]
  %v3991 = vld [vmem:[%s31 + $0xf1] sm:$0xff]
  %v3992 = vld [vmem:[%s31 + $0xf9] sm:$0xff]
  %v3993 = vld [vmem:[%s31 + $0x109] sm:$0xff]
  %v3994 = vld [vmem:[%s31 + $0x111] sm:$0xff]
  %v3995 = vld [vmem:[%s31 + $0x121] sm:$0xff]
  %v3996 = vld [vmem:[%s31 + $0x129] sm:$0xff]
  %v3997 = vld [vmem:[%s31 + $0x139] sm:$0xff]
  %v3998 = vld [vmem:[%s31 + $0x141] sm:$0xff]
  %v3999 = vld [vmem:[%s31 + $0x151] sm:$0xff]
  %v4000 = vld [vmem:[%s31 + $0x159] sm:$0xff]
  %v4001 = vld [vmem:[%s31 + $0x169] sm:$0xff]
  %v4002 = vld [vmem:[%s31 + $0x171] sm:$0xff]
  %v4003 = vld [vmem:[%s1311] sm:$0xf]
  %v4005 = vsel %vm22, %v3971, 0
  %v4008 = vsel %vm22, %v3972, 0
  %v4011 = vsel %vm22, %v3973, 0
  %v4014 = vsel %vm22, %v3974, 0
  %v4017 = vsel %vm22, %v3975, 0
  %v4020 = vsel %vm22, %v3976, 0
  %v4023 = vsel %vm22, %v3977, 0
  %v4026 = vsel %vm22, %v3978, 0
  %v4029 = vsel %vm22, %v3979, 0
  %v4032 = vsel %vm22, %v3980, 0
  %v4035 = vsel %vm22, %v3981, 0
  %v4038 = vsel %vm22, %v3982, 0
  %v4041 = vsel %vm22, %v3983, 0
  %v4044 = vsel %vm22, %v3984, 0
  %v4047 = vsel %vm22, %v3985, 0
  %v4050 = vsel %vm22, %v3986, 0
  %v4053 = vsel %vm22, %v3987, 0
  %v4056 = vsel %vm22, %v3988, 0
  %v4059 = vsel %vm22, %v3989, 0
  %v4062 = vsel %vm22, %v3990, 0
  %v4065 = vsel %vm22, %v3991, 0
  %v4068 = vsel %vm22, %v3992, 0
  %v4071 = vsel %vm22, %v3993, 0
  %v4074 = vsel %vm22, %v3994, 0
  %v4077 = vsel %vm22, %v3995, 0
  %v4080 = vsel %vm22, %v3996, 0
  %v4083 = vsel %vm22, %v3997, 0
  %v4086 = vsel %vm22, %v3998, 0
  %v4089 = vsel %vm22, %v3999, 0
  %v4092 = vsel %vm22, %v4000, 0
  %v4095 = vsel %vm22, %v4001, 0
  %v4098 = vsel %vm22, %v4002, 0
  %v4101 = vsel %vm394, %v4003, 0
  %4103 = vmatpush.msra.mxu0 0.0
  %4104 = vmatpush.msra.mxu0 0.0
  %4105 = vmatpush.msra.mxu0 0.0
  %4106 = vmatpush.msra.mxu0 0.0
  %4107 = vmatpush.msra.mxu0 0.0
  %4108 = vmatpush.msra.mxu0 0.0
  %4109 = vmatpush.msra.mxu0 0.0
  %4110 = vmatpush.msra.mxu0 0.0
  %4111 = vmatpush.msra.mxu0 0.0
  %4112 = vmatpush.msra.mxu0 0.0
  %4113 = vmatpush.msra.mxu0 0.0
  %4114 = vmatpush.msra.mxu0 0.0
  %4115 = vmatpush.msra.mxu0 0.0
  %4116 = vmatpush.msra.mxu0 0.0
  %4117 = vmatpush.msra.mxu0 0.0
  %4118 = vmatpush.msra.mxu0 %v4101
  %4119 = vmatmul.f32.gmra.mxu0 %v4005
  %v4120 = vpop.f32.mrf.mxu0
  %v4121 = vadd.f32 0.0, %v4120
  %4122 = vmatmul.f32.gmra.mxu0 %v4008
  %v4123 = vpop.f32.mrf.mxu0
  %v4124 = vadd.f32 0.0, %v4123
  %4125 = vmatmul.f32.gmra.mxu0 %v4011
  %v4126 = vpop.f32.mrf.mxu0
  %v4127 = vadd.f32 0.0, %v4126
  %4128 = vmatmul.f32.gmra.mxu0 %v4014
  %v4129 = vpop.f32.mrf.mxu0
  %v4130 = vadd.f32 0.0, %v4129
  %4131 = vmatmul.f32.gmra.mxu0 %v4017
  %v4132 = vpop.f32.mrf.mxu0
  %v4133 = vadd.f32 0.0, %v4132
  %4134 = vmatmul.f32.gmra.mxu0 %v4020
  %v4135 = vpop.f32.mrf.mxu0
  %v4136 = vadd.f32 0.0, %v4135
  %4137 = vmatmul.f32.gmra.mxu0 %v4023
  %v4138 = vpop.f32.mrf.mxu0
  %v4139 = vadd.f32 0.0, %v4138
  %4140 = vmatmul.f32.gmra.mxu0 %v4026
  %v4141 = vpop.f32.mrf.mxu0
  %v4142 = vadd.f32 0.0, %v4141
  %4143 = vmatmul.f32.gmra.mxu0 %v4029
  %v4144 = vpop.f32.mrf.mxu0
  %v4145 = vadd.f32 0.0, %v4144
  %4146 = vmatmul.f32.gmra.mxu0 %v4032
  %v4147 = vpop.f32.mrf.mxu0
  %v4148 = vadd.f32 0.0, %v4147
  %4149 = vmatmul.f32.gmra.mxu0 %v4035
  %v4150 = vpop.f32.mrf.mxu0
  %v4151 = vadd.f32 0.0, %v4150
  %4152 = vmatmul.f32.gmra.mxu0 %v4038
  %v4153 = vpop.f32.mrf.mxu0
  %v4154 = vadd.f32 0.0, %v4153
  %4155 = vmatmul.f32.gmra.mxu0 %v4041
  %v4156 = vpop.f32.mrf.mxu0
  %v4157 = vadd.f32 0.0, %v4156
  %4158 = vmatmul.f32.gmra.mxu0 %v4044
  %v4159 = vpop.f32.mrf.mxu0
  %v4160 = vadd.f32 0.0, %v4159
  %4161 = vmatmul.f32.gmra.mxu0 %v4047
  %v4162 = vpop.f32.mrf.mxu0
  %v4163 = vadd.f32 0.0, %v4162
  %4164 = vmatmul.f32.gmra.mxu0 %v4050
  %v4165 = vpop.f32.mrf.mxu0
  %v4166 = vadd.f32 0.0, %v4165
  %4167 = vmatmul.f32.gmra.mxu0 %v4053
  %v4168 = vpop.f32.mrf.mxu0
  %v4169 = vadd.f32 0.0, %v4168
  %4170 = vmatmul.f32.gmra.mxu0 %v4056
  %v4171 = vpop.f32.mrf.mxu0
  %v4172 = vadd.f32 0.0, %v4171
  %4173 = vmatmul.f32.gmra.mxu0 %v4059
  %v4174 = vpop.f32.mrf.mxu0
  %v4175 = vadd.f32 0.0, %v4174
  %4176 = vmatmul.f32.gmra.mxu0 %v4062
  %v4177 = vpop.f32.mrf.mxu0
  %v4178 = vadd.f32 0.0, %v4177
  %4179 = vmatmul.f32.gmra.mxu0 %v4065
  %v4180 = vpop.f32.mrf.mxu0
  %v4181 = vadd.f32 0.0, %v4180
  %4182 = vmatmul.f32.gmra.mxu0 %v4068
  %v4183 = vpop.f32.mrf.mxu0
  %v4184 = vadd.f32 0.0, %v4183
  %4185 = vmatmul.f32.gmra.mxu0 %v4071
  %v4186 = vpop.f32.mrf.mxu0
  %v4187 = vadd.f32 0.0, %v4186
  %4188 = vmatmul.f32.gmra.mxu0 %v4074
  %v4189 = vpop.f32.mrf.mxu0
  %v4190 = vadd.f32 0.0, %v4189
  %4191 = vmatmul.f32.gmra.mxu0 %v4077
  %v4192 = vpop.f32.mrf.mxu0
  %v4193 = vadd.f32 0.0, %v4192
  %4194 = vmatmul.f32.gmra.mxu0 %v4080
  %v4195 = vpop.f32.mrf.mxu0
  %v4196 = vadd.f32 0.0, %v4195
  %4197 = vmatmul.f32.gmra.mxu0 %v4083
  %v4198 = vpop.f32.mrf.mxu0
  %v4199 = vadd.f32 0.0, %v4198
  %4200 = vmatmul.f32.gmra.mxu0 %v4086
  %v4201 = vpop.f32.mrf.mxu0
  %v4202 = vadd.f32 0.0, %v4201
  %4203 = vmatmul.f32.gmra.mxu0 %v4089
  %v4204 = vpop.f32.mrf.mxu0
  %v4205 = vadd.f32 0.0, %v4204
  %4206 = vmatmul.f32.gmra.mxu0 %v4092
  %v4207 = vpop.f32.mrf.mxu0
  %v4208 = vadd.f32 0.0, %v4207
  %4209 = vmatmul.f32.gmra.mxu0 %v4095
  %v4210 = vpop.f32.mrf.mxu0
  %v4211 = vadd.f32 0.0, %v4210
  %4212 = vmatmul.f32.gmra.mxu0 %v4098
  %v4213 = vpop.f32.mrf.mxu0
  %v4214 = vadd.f32 0.0, %v4213
  %4215 = vdwg.mxu0
  %v4216 = vadd.f32 %v3939, %v4121
  %v4217 = vadd.f32 %v3940, %v4124
  %v4218 = vadd.f32 %v3941, %v4127
  %v4219 = vadd.f32 %v3942, %v4130
  %v4220 = vadd.f32 %v3943, %v4133
  %v4221 = vadd.f32 %v3944, %v4136
  %v4222 = vadd.f32 %v3945, %v4139
  %v4223 = vadd.f32 %v3946, %v4142
  %v4224 = vadd.f32 %v3947, %v4145
  %v4225 = vadd.f32 %v3948, %v4148
  %v4226 = vadd.f32 %v3949, %v4151
  %v4227 = vadd.f32 %v3950, %v4154
  %v4228 = vadd.f32 %v3951, %v4157
  %v4229 = vadd.f32 %v3952, %v4160
  %v4230 = vadd.f32 %v3953, %v4163
  %v4231 = vadd.f32 %v3954, %v4166
  %v4232 = vadd.f32 %v3955, %v4169
  %v4233 = vadd.f32 %v3956, %v4172
  %v4234 = vadd.f32 %v3957, %v4175
  %v4235 = vadd.f32 %v3958, %v4178
  %v4236 = vadd.f32 %v3959, %v4181
  %v4237 = vadd.f32 %v3960, %v4184
  %v4238 = vadd.f32 %v3961, %v4187
  %v4239 = vadd.f32 %v3962, %v4190
  %v4240 = vadd.f32 %v3963, %v4193
  %v4241 = vadd.f32 %v3964, %v4196
  %v4242 = vadd.f32 %v3965, %v4199
  %v4243 = vadd.f32 %v3966, %v4202
  %v4244 = vadd.f32 %v3967, %v4205
  %v4245 = vadd.f32 %v3968, %v4208
  %v4246 = vadd.f32 %v3969, %v4211
  %v4247 = vadd.f32 %v3970, %v4214
  %v4248 = vld [vmem:[%s31 + $0x2] sm:$0xff]
  %v4249 = vld [vmem:[%s31 + $0xa] sm:$0xff]
  %v4250 = vld [vmem:[%s31 + $0x1a] sm:$0xff]
  %v4251 = vld [vmem:[%s31 + $0x22] sm:$0xff]
  %v4252 = vld [vmem:[%s31 + $0x32] sm:$0xff]
  %v4253 = vld [vmem:[%s31 + $0x3a] sm:$0xff]
  %v4254 = vld [vmem:[%s31 + $0x4a] sm:$0xff]
  %v4255 = vld [vmem:[%s31 + $0x52] sm:$0xff]
  %v4256 = vld [vmem:[%s31 + $0x62] sm:$0xff]
  %v4257 = vld [vmem:[%s31 + $0x6a] sm:$0xff]
  %v4258 = vld [vmem:[%s31 + $0x7a] sm:$0xff]
  %v4259 = vld [vmem:[%s31 + $0x82] sm:$0xff]
  %v4260 = vld [vmem:[%s31 + $0x92] sm:$0xff]
  %v4261 = vld [vmem:[%s31 + $0x9a] sm:$0xff]
  %v4262 = vld [vmem:[%s31 + $0xaa] sm:$0xff]
  %v4263 = vld [vmem:[%s31 + $0xb2] sm:$0xff]
  %v4264 = vld [vmem:[%s31 + $0xc2] sm:$0xff]
  %v4265 = vld [vmem:[%s31 + $0xca] sm:$0xff]
  %v4266 = vld [vmem:[%s31 + $0xda] sm:$0xff]
  %v4267 = vld [vmem:[%s31 + $0xe2] sm:$0xff]
  %v4268 = vld [vmem:[%s31 + $0xf2] sm:$0xff]
  %v4269 = vld [vmem:[%s31 + $0xfa] sm:$0xff]
  %v4270 = vld [vmem:[%s31 + $0x10a] sm:$0xff]
  %v4271 = vld [vmem:[%s31 + $0x112] sm:$0xff]
  %v4272 = vld [vmem:[%s31 + $0x122] sm:$0xff]
  %v4273 = vld [vmem:[%s31 + $0x12a] sm:$0xff]
  %v4274 = vld [vmem:[%s31 + $0x13a] sm:$0xff]
  %v4275 = vld [vmem:[%s31 + $0x142] sm:$0xff]
  %v4276 = vld [vmem:[%s31 + $0x152] sm:$0xff]
  %v4277 = vld [vmem:[%s31 + $0x15a] sm:$0xff]
  %v4278 = vld [vmem:[%s31 + $0x16a] sm:$0xff]
  %v4279 = vld [vmem:[%s31 + $0x172] sm:$0xff]
  %v4280 = vld [vmem:[%s1589] sm:$0xf]
  %v4282 = vsel %vm22, %v4248, 0
  %v4285 = vsel %vm22, %v4249, 0
  %v4288 = vsel %vm22, %v4250, 0
  %v4291 = vsel %vm22, %v4251, 0
  %v4294 = vsel %vm22, %v4252, 0
  %v4297 = vsel %vm22, %v4253, 0
  %v4300 = vsel %vm22, %v4254, 0
  %v4303 = vsel %vm22, %v4255, 0
  %v4306 = vsel %vm22, %v4256, 0
  %v4309 = vsel %vm22, %v4257, 0
  %v4312 = vsel %vm22, %v4258, 0
  %v4315 = vsel %vm22, %v4259, 0
  %v4318 = vsel %vm22, %v4260, 0
  %v4321 = vsel %vm22, %v4261, 0
  %v4324 = vsel %vm22, %v4262, 0
  %v4327 = vsel %vm22, %v4263, 0
  %v4330 = vsel %vm22, %v4264, 0
  %v4333 = vsel %vm22, %v4265, 0
  %v4336 = vsel %vm22, %v4266, 0
  %v4339 = vsel %vm22, %v4267, 0
  %v4342 = vsel %vm22, %v4268, 0
  %v4345 = vsel %vm22, %v4269, 0
  %v4348 = vsel %vm22, %v4270, 0
  %v4351 = vsel %vm22, %v4271, 0
  %v4354 = vsel %vm22, %v4272, 0
  %v4357 = vsel %vm22, %v4273, 0
  %v4360 = vsel %vm22, %v4274, 0
  %v4363 = vsel %vm22, %v4275, 0
  %v4366 = vsel %vm22, %v4276, 0
  %v4369 = vsel %vm22, %v4277, 0
  %v4372 = vsel %vm22, %v4278, 0
  %v4375 = vsel %vm22, %v4279, 0
  %v4378 = vsel %vm394, %v4280, 0
  %4380 = vmatpush.msra.mxu0 0.0
  %4381 = vmatpush.msra.mxu0 0.0
  %4382 = vmatpush.msra.mxu0 0.0
  %4383 = vmatpush.msra.mxu0 0.0
  %4384 = vmatpush.msra.mxu0 0.0
  %4385 = vmatpush.msra.mxu0 0.0
  %4386 = vmatpush.msra.mxu0 0.0
  %4387 = vmatpush.msra.mxu0 0.0
  %4388 = vmatpush.msra.mxu0 0.0
  %4389 = vmatpush.msra.mxu0 0.0
  %4390 = vmatpush.msra.mxu0 0.0
  %4391 = vmatpush.msra.mxu0 0.0
  %4392 = vmatpush.msra.mxu0 0.0
  %4393 = vmatpush.msra.mxu0 0.0
  %4394 = vmatpush.msra.mxu0 0.0
  %4395 = vmatpush.msra.mxu0 %v4378
  %4396 = vmatmul.f32.gmra.mxu0 %v4282
  %v4397 = vpop.f32.mrf.mxu0
  %v4398 = vadd.f32 0.0, %v4397
  %4399 = vmatmul.f32.gmra.mxu0 %v4285
  %v4400 = vpop.f32.mrf.mxu0
  %v4401 = vadd.f32 0.0, %v4400
  %4402 = vmatmul.f32.gmra.mxu0 %v4288
  %v4403 = vpop.f32.mrf.mxu0
  %v4404 = vadd.f32 0.0, %v4403
  %4405 = vmatmul.f32.gmra.mxu0 %v4291
  %v4406 = vpop.f32.mrf.mxu0
  %v4407 = vadd.f32 0.0, %v4406
  %4408 = vmatmul.f32.gmra.mxu0 %v4294
  %v4409 = vpop.f32.mrf.mxu0
  %v4410 = vadd.f32 0.0, %v4409
  %4411 = vmatmul.f32.gmra.mxu0 %v4297
  %v4412 = vpop.f32.mrf.mxu0
  %v4413 = vadd.f32 0.0, %v4412
  %4414 = vmatmul.f32.gmra.mxu0 %v4300
  %v4415 = vpop.f32.mrf.mxu0
  %v4416 = vadd.f32 0.0, %v4415
  %4417 = vmatmul.f32.gmra.mxu0 %v4303
  %v4418 = vpop.f32.mrf.mxu0
  %v4419 = vadd.f32 0.0, %v4418
  %4420 = vmatmul.f32.gmra.mxu0 %v4306
  %v4421 = vpop.f32.mrf.mxu0
  %v4422 = vadd.f32 0.0, %v4421
  %4423 = vmatmul.f32.gmra.mxu0 %v4309
  %v4424 = vpop.f32.mrf.mxu0
  %v4425 = vadd.f32 0.0, %v4424
  %4426 = vmatmul.f32.gmra.mxu0 %v4312
  %v4427 = vpop.f32.mrf.mxu0
  %v4428 = vadd.f32 0.0, %v4427
  %4429 = vmatmul.f32.gmra.mxu0 %v4315
  %v4430 = vpop.f32.mrf.mxu0
  %v4431 = vadd.f32 0.0, %v4430
  %4432 = vmatmul.f32.gmra.mxu0 %v4318
  %v4433 = vpop.f32.mrf.mxu0
  %v4434 = vadd.f32 0.0, %v4433
  %4435 = vmatmul.f32.gmra.mxu0 %v4321
  %v4436 = vpop.f32.mrf.mxu0
  %v4437 = vadd.f32 0.0, %v4436
  %4438 = vmatmul.f32.gmra.mxu0 %v4324
  %v4439 = vpop.f32.mrf.mxu0
  %v4440 = vadd.f32 0.0, %v4439
  %4441 = vmatmul.f32.gmra.mxu0 %v4327
  %v4442 = vpop.f32.mrf.mxu0
  %v4443 = vadd.f32 0.0, %v4442
  %4444 = vmatmul.f32.gmra.mxu0 %v4330
  %v4445 = vpop.f32.mrf.mxu0
  %v4446 = vadd.f32 0.0, %v4445
  %4447 = vmatmul.f32.gmra.mxu0 %v4333
  %v4448 = vpop.f32.mrf.mxu0
  %v4449 = vadd.f32 0.0, %v4448
  %4450 = vmatmul.f32.gmra.mxu0 %v4336
  %v4451 = vpop.f32.mrf.mxu0
  %v4452 = vadd.f32 0.0, %v4451
  %4453 = vmatmul.f32.gmra.mxu0 %v4339
  %v4454 = vpop.f32.mrf.mxu0
  %v4455 = vadd.f32 0.0, %v4454
  %4456 = vmatmul.f32.gmra.mxu0 %v4342
  %v4457 = vpop.f32.mrf.mxu0
  %v4458 = vadd.f32 0.0, %v4457
  %4459 = vmatmul.f32.gmra.mxu0 %v4345
  %v4460 = vpop.f32.mrf.mxu0
  %v4461 = vadd.f32 0.0, %v4460
  %4462 = vmatmul.f32.gmra.mxu0 %v4348
  %v4463 = vpop.f32.mrf.mxu0
  %v4464 = vadd.f32 0.0, %v4463
  %4465 = vmatmul.f32.gmra.mxu0 %v4351
  %v4466 = vpop.f32.mrf.mxu0
  %v4467 = vadd.f32 0.0, %v4466
  %4468 = vmatmul.f32.gmra.mxu0 %v4354
  %v4469 = vpop.f32.mrf.mxu0
  %v4470 = vadd.f32 0.0, %v4469
  %4471 = vmatmul.f32.gmra.mxu0 %v4357
  %v4472 = vpop.f32.mrf.mxu0
  %v4473 = vadd.f32 0.0, %v4472
  %4474 = vmatmul.f32.gmra.mxu0 %v4360
  %v4475 = vpop.f32.mrf.mxu0
  %v4476 = vadd.f32 0.0, %v4475
  %4477 = vmatmul.f32.gmra.mxu0 %v4363
  %v4478 = vpop.f32.mrf.mxu0
  %v4479 = vadd.f32 0.0, %v4478
  %4480 = vmatmul.f32.gmra.mxu0 %v4366
  %v4481 = vpop.f32.mrf.mxu0
  %v4482 = vadd.f32 0.0, %v4481
  %4483 = vmatmul.f32.gmra.mxu0 %v4369
  %v4484 = vpop.f32.mrf.mxu0
  %v4485 = vadd.f32 0.0, %v4484
  %4486 = vmatmul.f32.gmra.mxu0 %v4372
  %v4487 = vpop.f32.mrf.mxu0
  %v4488 = vadd.f32 0.0, %v4487
  %4489 = vmatmul.f32.gmra.mxu0 %v4375
  %v4490 = vpop.f32.mrf.mxu0
  %v4491 = vadd.f32 0.0, %v4490
  %4492 = vdwg.mxu0
  %v4493 = vadd.f32 %v4216, %v4398
  %v4494 = vadd.f32 %v4217, %v4401
  %v4495 = vadd.f32 %v4218, %v4404
  %v4496 = vadd.f32 %v4219, %v4407
  %v4497 = vadd.f32 %v4220, %v4410
  %v4498 = vadd.f32 %v4221, %v4413
  %v4499 = vadd.f32 %v4222, %v4416
  %v4500 = vadd.f32 %v4223, %v4419
  %v4501 = vadd.f32 %v4224, %v4422
  %v4502 = vadd.f32 %v4225, %v4425
  %v4503 = vadd.f32 %v4226, %v4428
  %v4504 = vadd.f32 %v4227, %v4431
  %v4505 = vadd.f32 %v4228, %v4434
  %v4506 = vadd.f32 %v4229, %v4437
  %v4507 = vadd.f32 %v4230, %v4440
  %v4508 = vadd.f32 %v4231, %v4443
  %v4509 = vadd.f32 %v4232, %v4446
  %v4510 = vadd.f32 %v4233, %v4449
  %v4511 = vadd.f32 %v4234, %v4452
  %v4512 = vadd.f32 %v4235, %v4455
  %v4513 = vadd.f32 %v4236, %v4458
  %v4514 = vadd.f32 %v4237, %v4461
  %v4515 = vadd.f32 %v4238, %v4464
  %v4516 = vadd.f32 %v4239, %v4467
  %v4517 = vadd.f32 %v4240, %v4470
  %v4518 = vadd.f32 %v4241, %v4473
  %v4519 = vadd.f32 %v4242, %v4476
  %v4520 = vadd.f32 %v4243, %v4479
  %v4521 = vadd.f32 %v4244, %v4482
  %v4522 = vadd.f32 %v4245, %v4485
  %v4523 = vadd.f32 %v4246, %v4488
  %v4524 = vadd.f32 %v4247, %v4491
  %v4525 = vld [vmem:[%s1835] sm:$0xff]
  %v4526 = vld [vmem:[%s1835 + $0x8] sm:$0xff]
  %v4527 = vld [vmem:[%s1835 + $0x18] sm:$0xff]
  %v4528 = vld [vmem:[%s1835 + $0x20] sm:$0xff]
  %v4529 = vld [vmem:[%s1835 + $0x30] sm:$0xff]
  %v4530 = vld [vmem:[%s1835 + $0x38] sm:$0xff]
  %v4531 = vld [vmem:[%s1835 + $0x48] sm:$0xff]
  %v4532 = vld [vmem:[%s1835 + $0x50] sm:$0xff]
  %v4533 = vld [vmem:[%s1835 + $0x60] sm:$0xff]
  %v4534 = vld [vmem:[%s1835 + $0x68] sm:$0xff]
  %v4535 = vld [vmem:[%s1835 + $0x78] sm:$0xff]
  %v4536 = vld [vmem:[%s1835 + $0x80] sm:$0xff]
  %v4537 = vld [vmem:[%s1835 + $0x90] sm:$0xff]
  %v4538 = vld [vmem:[%s1835 + $0x98] sm:$0xff]
  %v4539 = vld [vmem:[%s1835 + $0xa8] sm:$0xff]
  %v4540 = vld [vmem:[%s1835 + $0xb0] sm:$0xff]
  %v4541 = vld [vmem:[%s1835 + $0xc0] sm:$0xff]
  %v4542 = vld [vmem:[%s1835 + $0xc8] sm:$0xff]
  %v4543 = vld [vmem:[%s1835 + $0xd8] sm:$0xff]
  %v4544 = vld [vmem:[%s1835 + $0xe0] sm:$0xff]
  %v4545 = vld [vmem:[%s1835 + $0xf0] sm:$0xff]
  %v4546 = vld [vmem:[%s1835 + $0xf8] sm:$0xff]
  %v4547 = vld [vmem:[%s1835 + $0x108] sm:$0xff]
  %v4548 = vld [vmem:[%s1835 + $0x110] sm:$0xff]
  %v4549 = vld [vmem:[%s1835 + $0x120] sm:$0xff]
  %v4550 = vld [vmem:[%s1835 + $0x128] sm:$0xff]
  %v4551 = vld [vmem:[%s1835 + $0x138] sm:$0xff]
  %v4552 = vld [vmem:[%s1835 + $0x140] sm:$0xff]
  %v4553 = vld [vmem:[%s1835 + $0x150] sm:$0xff]
  %v4554 = vld [vmem:[%s1835 + $0x158] sm:$0xff]
  %v4555 = vld [vmem:[%s1835 + $0x168] sm:$0xff]
  %v4556 = vld [vmem:[%s1835 + $0x170] sm:$0xff]
  %v4557 = vld [vmem:[%s1868] sm:$0xf]
  %v4559 = vsel %vm22, %v4525, 0
  %v4562 = vsel %vm22, %v4526, 0
  %v4565 = vsel %vm22, %v4527, 0
  %v4568 = vsel %vm22, %v4528, 0
  %v4571 = vsel %vm22, %v4529, 0
  %v4574 = vsel %vm22, %v4530, 0
  %v4577 = vsel %vm22, %v4531, 0
  %v4580 = vsel %vm22, %v4532, 0
  %v4583 = vsel %vm22, %v4533, 0
  %v4586 = vsel %vm22, %v4534, 0
  %v4589 = vsel %vm22, %v4535, 0
  %v4592 = vsel %vm22, %v4536, 0
  %v4595 = vsel %vm22, %v4537, 0
  %v4598 = vsel %vm22, %v4538, 0
  %v4601 = vsel %vm22, %v4539, 0
  %v4604 = vsel %vm22, %v4540, 0
  %v4607 = vsel %vm22, %v4541, 0
  %v4610 = vsel %vm22, %v4542, 0
  %v4613 = vsel %vm22, %v4543, 0
  %v4616 = vsel %vm22, %v4544, 0
  %v4619 = vsel %vm22, %v4545, 0
  %v4622 = vsel %vm22, %v4546, 0
  %v4625 = vsel %vm22, %v4547, 0
  %v4628 = vsel %vm22, %v4548, 0
  %v4631 = vsel %vm22, %v4549, 0
  %v4634 = vsel %vm22, %v4550, 0
  %v4637 = vsel %vm22, %v4551, 0
  %v4640 = vsel %vm22, %v4552, 0
  %v4643 = vsel %vm22, %v4553, 0
  %v4646 = vsel %vm22, %v4554, 0
  %v4649 = vsel %vm22, %v4555, 0
  %v4652 = vsel %vm22, %v4556, 0
  %v4655 = vsel %vm394, %v4557, 0
  %4657 = vmatpush.msra.mxu0 0.0
  %4658 = vmatpush.msra.mxu0 0.0
  %4659 = vmatpush.msra.mxu0 0.0
  %4660 = vmatpush.msra.mxu0 0.0
  %4661 = vmatpush.msra.mxu0 0.0
  %4662 = vmatpush.msra.mxu0 0.0
  %4663 = vmatpush.msra.mxu0 0.0
  %4664 = vmatpush.msra.mxu0 0.0
  %4665 = vmatpush.msra.mxu0 0.0
  %4666 = vmatpush.msra.mxu0 0.0
  %4667 = vmatpush.msra.mxu0 0.0
  %4668 = vmatpush.msra.mxu0 0.0
  %4669 = vmatpush.msra.mxu0 0.0
  %4670 = vmatpush.msra.mxu0 0.0
  %4671 = vmatpush.msra.mxu0 0.0
  %4672 = vmatpush.msra.mxu0 %v4655
  %4673 = vmatmul.f32.gmra.mxu0 %v4559
  %v4674 = vpop.f32.mrf.mxu0
  %v4675 = vadd.f32 0.0, %v4674
  %4676 = vmatmul.f32.gmra.mxu0 %v4562
  %v4677 = vpop.f32.mrf.mxu0
  %v4678 = vadd.f32 0.0, %v4677
  %4679 = vmatmul.f32.gmra.mxu0 %v4565
  %v4680 = vpop.f32.mrf.mxu0
  %v4681 = vadd.f32 0.0, %v4680
  %4682 = vmatmul.f32.gmra.mxu0 %v4568
  %v4683 = vpop.f32.mrf.mxu0
  %v4684 = vadd.f32 0.0, %v4683
  %4685 = vmatmul.f32.gmra.mxu0 %v4571
  %v4686 = vpop.f32.mrf.mxu0
  %v4687 = vadd.f32 0.0, %v4686
  %4688 = vmatmul.f32.gmra.mxu0 %v4574
  %v4689 = vpop.f32.mrf.mxu0
  %v4690 = vadd.f32 0.0, %v4689
  %4691 = vmatmul.f32.gmra.mxu0 %v4577
  %v4692 = vpop.f32.mrf.mxu0
  %v4693 = vadd.f32 0.0, %v4692
  %4694 = vmatmul.f32.gmra.mxu0 %v4580
  %v4695 = vpop.f32.mrf.mxu0
  %v4696 = vadd.f32 0.0, %v4695
  %4697 = vmatmul.f32.gmra.mxu0 %v4583
  %v4698 = vpop.f32.mrf.mxu0
  %v4699 = vadd.f32 0.0, %v4698
  %4700 = vmatmul.f32.gmra.mxu0 %v4586
  %v4701 = vpop.f32.mrf.mxu0
  %v4702 = vadd.f32 0.0, %v4701
  %4703 = vmatmul.f32.gmra.mxu0 %v4589
  %v4704 = vpop.f32.mrf.mxu0
  %v4705 = vadd.f32 0.0, %v4704
  %4706 = vmatmul.f32.gmra.mxu0 %v4592
  %v4707 = vpop.f32.mrf.mxu0
  %v4708 = vadd.f32 0.0, %v4707
  %4709 = vmatmul.f32.gmra.mxu0 %v4595
  %v4710 = vpop.f32.mrf.mxu0
  %v4711 = vadd.f32 0.0, %v4710
  %4712 = vmatmul.f32.gmra.mxu0 %v4598
  %v4713 = vpop.f32.mrf.mxu0
  %v4714 = vadd.f32 0.0, %v4713
  %4715 = vmatmul.f32.gmra.mxu0 %v4601
  %v4716 = vpop.f32.mrf.mxu0
  %v4717 = vadd.f32 0.0, %v4716
  %4718 = vmatmul.f32.gmra.mxu0 %v4604
  %v4719 = vpop.f32.mrf.mxu0
  %v4720 = vadd.f32 0.0, %v4719
  %4721 = vmatmul.f32.gmra.mxu0 %v4607
  %v4722 = vpop.f32.mrf.mxu0
  %v4723 = vadd.f32 0.0, %v4722
  %4724 = vmatmul.f32.gmra.mxu0 %v4610
  %v4725 = vpop.f32.mrf.mxu0
  %v4726 = vadd.f32 0.0, %v4725
  %4727 = vmatmul.f32.gmra.mxu0 %v4613
  %v4728 = vpop.f32.mrf.mxu0
  %v4729 = vadd.f32 0.0, %v4728
  %4730 = vmatmul.f32.gmra.mxu0 %v4616
  %v4731 = vpop.f32.mrf.mxu0
  %v4732 = vadd.f32 0.0, %v4731
  %4733 = vmatmul.f32.gmra.mxu0 %v4619
  %v4734 = vpop.f32.mrf.mxu0
  %v4735 = vadd.f32 0.0, %v4734
  %4736 = vmatmul.f32.gmra.mxu0 %v4622
  %v4737 = vpop.f32.mrf.mxu0
  %v4738 = vadd.f32 0.0, %v4737
  %4739 = vmatmul.f32.gmra.mxu0 %v4625
  %v4740 = vpop.f32.mrf.mxu0
  %v4741 = vadd.f32 0.0, %v4740
  %4742 = vmatmul.f32.gmra.mxu0 %v4628
  %v4743 = vpop.f32.mrf.mxu0
  %v4744 = vadd.f32 0.0, %v4743
  %4745 = vmatmul.f32.gmra.mxu0 %v4631
  %v4746 = vpop.f32.mrf.mxu0
  %v4747 = vadd.f32 0.0, %v4746
  %4748 = vmatmul.f32.gmra.mxu0 %v4634
  %v4749 = vpop.f32.mrf.mxu0
  %v4750 = vadd.f32 0.0, %v4749
  %4751 = vmatmul.f32.gmra.mxu0 %v4637
  %v4752 = vpop.f32.mrf.mxu0
  %v4753 = vadd.f32 0.0, %v4752
  %4754 = vmatmul.f32.gmra.mxu0 %v4640
  %v4755 = vpop.f32.mrf.mxu0
  %v4756 = vadd.f32 0.0, %v4755
  %4757 = vmatmul.f32.gmra.mxu0 %v4643
  %v4758 = vpop.f32.mrf.mxu0
  %v4759 = vadd.f32 0.0, %v4758
  %4760 = vmatmul.f32.gmra.mxu0 %v4646
  %v4761 = vpop.f32.mrf.mxu0
  %v4762 = vadd.f32 0.0, %v4761
  %4763 = vmatmul.f32.gmra.mxu0 %v4649
  %v4764 = vpop.f32.mrf.mxu0
  %v4765 = vadd.f32 0.0, %v4764
  %4766 = vmatmul.f32.gmra.mxu0 %v4652
  %v4767 = vpop.f32.mrf.mxu0
  %v4768 = vadd.f32 0.0, %v4767
  %4769 = vdwg.mxu0
  %v4770 = vadd.f32 %v4493, %v4675
  %v4771 = vadd.f32 %v4494, %v4678
  %v4772 = vadd.f32 %v4495, %v4681
  %v4773 = vadd.f32 %v4496, %v4684
  %v4774 = vadd.f32 %v4497, %v4687
  %v4775 = vadd.f32 %v4498, %v4690
  %v4776 = vadd.f32 %v4499, %v4693
  %v4777 = vadd.f32 %v4500, %v4696
  %v4778 = vadd.f32 %v4501, %v4699
  %v4779 = vadd.f32 %v4502, %v4702
  %v4780 = vadd.f32 %v4503, %v4705
  %v4781 = vadd.f32 %v4504, %v4708
  %v4782 = vadd.f32 %v4505, %v4711
  %v4783 = vadd.f32 %v4506, %v4714
  %v4784 = vadd.f32 %v4507, %v4717
  %v4785 = vadd.f32 %v4508, %v4720
  %v4786 = vadd.f32 %v4509, %v4723
  %v4787 = vadd.f32 %v4510, %v4726
  %v4788 = vadd.f32 %v4511, %v4729
  %v4789 = vadd.f32 %v4512, %v4732
  %v4790 = vadd.f32 %v4513, %v4735
  %v4791 = vadd.f32 %v4514, %v4738
  %v4792 = vadd.f32 %v4515, %v4741
  %v4793 = vadd.f32 %v4516, %v4744
  %v4794 = vadd.f32 %v4517, %v4747
  %v4795 = vadd.f32 %v4518, %v4750
  %v4796 = vadd.f32 %v4519, %v4753
  %v4797 = vadd.f32 %v4520, %v4756
  %v4798 = vadd.f32 %v4521, %v4759
  %v4799 = vadd.f32 %v4522, %v4762
  %v4800 = vadd.f32 %v4523, %v4765
  %v4801 = vadd.f32 %v4524, %v4768
  %v4802 = vld [vmem:[%s1835 + $0x1] sm:$0xff]
  %v4803 = vld [vmem:[%s1835 + $0x9] sm:$0xff]
  %v4804 = vld [vmem:[%s1835 + $0x19] sm:$0xff]
  %v4805 = vld [vmem:[%s1835 + $0x21] sm:$0xff]
  %v4806 = vld [vmem:[%s1835 + $0x31] sm:$0xff]
  %v4807 = vld [vmem:[%s1835 + $0x39] sm:$0xff]
  %v4808 = vld [vmem:[%s1835 + $0x49] sm:$0xff]
  %v4809 = vld [vmem:[%s1835 + $0x51] sm:$0xff]
  %v4810 = vld [vmem:[%s1835 + $0x61] sm:$0xff]
  %v4811 = vld [vmem:[%s1835 + $0x69] sm:$0xff]
  %v4812 = vld [vmem:[%s1835 + $0x79] sm:$0xff]
  %v4813 = vld [vmem:[%s1835 + $0x81] sm:$0xff]
  %v4814 = vld [vmem:[%s1835 + $0x91] sm:$0xff]
  %v4815 = vld [vmem:[%s1835 + $0x99] sm:$0xff]
  %v4816 = vld [vmem:[%s1835 + $0xa9] sm:$0xff]
  %v4817 = vld [vmem:[%s1835 + $0xb1] sm:$0xff]
  %v4818 = vld [vmem:[%s1835 + $0xc1] sm:$0xff]
  %v4819 = vld [vmem:[%s1835 + $0xc9] sm:$0xff]
  %v4820 = vld [vmem:[%s1835 + $0xd9] sm:$0xff]
  %v4821 = vld [vmem:[%s1835 + $0xe1] sm:$0xff]
  %v4822 = vld [vmem:[%s1835 + $0xf1] sm:$0xff]
  %v4823 = vld [vmem:[%s1835 + $0xf9] sm:$0xff]
  %v4824 = vld [vmem:[%s1835 + $0x109] sm:$0xff]
  %v4825 = vld [vmem:[%s1835 + $0x111] sm:$0xff]
  %v4826 = vld [vmem:[%s1835 + $0x121] sm:$0xff]
  %v4827 = vld [vmem:[%s1835 + $0x129] sm:$0xff]
  %v4828 = vld [vmem:[%s1835 + $0x139] sm:$0xff]
  %v4829 = vld [vmem:[%s1835 + $0x141] sm:$0xff]
  %v4830 = vld [vmem:[%s1835 + $0x151] sm:$0xff]
  %v4831 = vld [vmem:[%s1835 + $0x159] sm:$0xff]
  %v4832 = vld [vmem:[%s1835 + $0x169] sm:$0xff]
  %v4833 = vld [vmem:[%s1835 + $0x171] sm:$0xff]
  %v4834 = vld [vmem:[%s2146] sm:$0xf]
  %v4836 = vsel %vm22, %v4802, 0
  %v4839 = vsel %vm22, %v4803, 0
  %v4842 = vsel %vm22, %v4804, 0
  %v4845 = vsel %vm22, %v4805, 0
  %v4848 = vsel %vm22, %v4806, 0
  %v4851 = vsel %vm22, %v4807, 0
  %v4854 = vsel %vm22, %v4808, 0
  %v4857 = vsel %vm22, %v4809, 0
  %v4860 = vsel %vm22, %v4810, 0
  %v4863 = vsel %vm22, %v4811, 0
  %v4866 = vsel %vm22, %v4812, 0
  %v4869 = vsel %vm22, %v4813, 0
  %v4872 = vsel %vm22, %v4814, 0
  %v4875 = vsel %vm22, %v4815, 0
  %v4878 = vsel %vm22, %v4816, 0
  %v4881 = vsel %vm22, %v4817, 0
  %v4884 = vsel %vm22, %v4818, 0
  %v4887 = vsel %vm22, %v4819, 0
  %v4890 = vsel %vm22, %v4820, 0
  %v4893 = vsel %vm22, %v4821, 0
  %v4896 = vsel %vm22, %v4822, 0
  %v4899 = vsel %vm22, %v4823, 0
  %v4902 = vsel %vm22, %v4824, 0
  %v4905 = vsel %vm22, %v4825, 0
  %v4908 = vsel %vm22, %v4826, 0
  %v4911 = vsel %vm22, %v4827, 0
  %v4914 = vsel %vm22, %v4828, 0
  %v4917 = vsel %vm22, %v4829, 0
  %v4920 = vsel %vm22, %v4830, 0
  %v4923 = vsel %vm22, %v4831, 0
  %v4926 = vsel %vm22, %v4832, 0
  %v4929 = vsel %vm22, %v4833, 0
  %v4932 = vsel %vm394, %v4834, 0
  %4934 = vmatpush.msra.mxu0 0.0
  %4935 = vmatpush.msra.mxu0 0.0
  %4936 = vmatpush.msra.mxu0 0.0
  %4937 = vmatpush.msra.mxu0 0.0
  %4938 = vmatpush.msra.mxu0 0.0
  %4939 = vmatpush.msra.mxu0 0.0
  %4940 = vmatpush.msra.mxu0 0.0
  %4941 = vmatpush.msra.mxu0 0.0
  %4942 = vmatpush.msra.mxu0 0.0
  %4943 = vmatpush.msra.mxu0 0.0
  %4944 = vmatpush.msra.mxu0 0.0
  %4945 = vmatpush.msra.mxu0 0.0
  %4946 = vmatpush.msra.mxu0 0.0
  %4947 = vmatpush.msra.mxu0 0.0
  %4948 = vmatpush.msra.mxu0 0.0
  %4949 = vmatpush.msra.mxu0 %v4932
  %4950 = vmatmul.f32.gmra.mxu0 %v4836
  %v4951 = vpop.f32.mrf.mxu0
  %v4952 = vadd.f32 0.0, %v4951
  %4953 = vmatmul.f32.gmra.mxu0 %v4839
  %v4954 = vpop.f32.mrf.mxu0
  %v4955 = vadd.f32 0.0, %v4954
  %4956 = vmatmul.f32.gmra.mxu0 %v4842
  %v4957 = vpop.f32.mrf.mxu0
  %v4958 = vadd.f32 0.0, %v4957
  %4959 = vmatmul.f32.gmra.mxu0 %v4845
  %v4960 = vpop.f32.mrf.mxu0
  %v4961 = vadd.f32 0.0, %v4960
  %4962 = vmatmul.f32.gmra.mxu0 %v4848
  %v4963 = vpop.f32.mrf.mxu0
  %v4964 = vadd.f32 0.0, %v4963
  %4965 = vmatmul.f32.gmra.mxu0 %v4851
  %v4966 = vpop.f32.mrf.mxu0
  %v4967 = vadd.f32 0.0, %v4966
  %4968 = vmatmul.f32.gmra.mxu0 %v4854
  %v4969 = vpop.f32.mrf.mxu0
  %v4970 = vadd.f32 0.0, %v4969
  %4971 = vmatmul.f32.gmra.mxu0 %v4857
  %v4972 = vpop.f32.mrf.mxu0
  %v4973 = vadd.f32 0.0, %v4972
  %4974 = vmatmul.f32.gmra.mxu0 %v4860
  %v4975 = vpop.f32.mrf.mxu0
  %v4976 = vadd.f32 0.0, %v4975
  %4977 = vmatmul.f32.gmra.mxu0 %v4863
  %v4978 = vpop.f32.mrf.mxu0
  %v4979 = vadd.f32 0.0, %v4978
  %4980 = vmatmul.f32.gmra.mxu0 %v4866
  %v4981 = vpop.f32.mrf.mxu0
  %v4982 = vadd.f32 0.0, %v4981
  %4983 = vmatmul.f32.gmra.mxu0 %v4869
  %v4984 = vpop.f32.mrf.mxu0
  %v4985 = vadd.f32 0.0, %v4984
  %4986 = vmatmul.f32.gmra.mxu0 %v4872
  %v4987 = vpop.f32.mrf.mxu0
  %v4988 = vadd.f32 0.0, %v4987
  %4989 = vmatmul.f32.gmra.mxu0 %v4875
  %v4990 = vpop.f32.mrf.mxu0
  %v4991 = vadd.f32 0.0, %v4990
  %4992 = vmatmul.f32.gmra.mxu0 %v4878
  %v4993 = vpop.f32.mrf.mxu0
  %v4994 = vadd.f32 0.0, %v4993
  %4995 = vmatmul.f32.gmra.mxu0 %v4881
  %v4996 = vpop.f32.mrf.mxu0
  %v4997 = vadd.f32 0.0, %v4996
  %4998 = vmatmul.f32.gmra.mxu0 %v4884
  %v4999 = vpop.f32.mrf.mxu0
  %v5000 = vadd.f32 0.0, %v4999
  %5001 = vmatmul.f32.gmra.mxu0 %v4887
  %v5002 = vpop.f32.mrf.mxu0
  %v5003 = vadd.f32 0.0, %v5002
  %5004 = vmatmul.f32.gmra.mxu0 %v4890
  %v5005 = vpop.f32.mrf.mxu0
  %v5006 = vadd.f32 0.0, %v5005
  %5007 = vmatmul.f32.gmra.mxu0 %v4893
  %v5008 = vpop.f32.mrf.mxu0
  %v5009 = vadd.f32 0.0, %v5008
  %5010 = vmatmul.f32.gmra.mxu0 %v4896
  %v5011 = vpop.f32.mrf.mxu0
  %v5012 = vadd.f32 0.0, %v5011
  %5013 = vmatmul.f32.gmra.mxu0 %v4899
  %v5014 = vpop.f32.mrf.mxu0
  %v5015 = vadd.f32 0.0, %v5014
  %5016 = vmatmul.f32.gmra.mxu0 %v4902
  %v5017 = vpop.f32.mrf.mxu0
  %v5018 = vadd.f32 0.0, %v5017
  %5019 = vmatmul.f32.gmra.mxu0 %v4905
  %v5020 = vpop.f32.mrf.mxu0
  %v5021 = vadd.f32 0.0, %v5020
  %5022 = vmatmul.f32.gmra.mxu0 %v4908
  %v5023 = vpop.f32.mrf.mxu0
  %v5024 = vadd.f32 0.0, %v5023
  %5025 = vmatmul.f32.gmra.mxu0 %v4911
  %v5026 = vpop.f32.mrf.mxu0
  %v5027 = vadd.f32 0.0, %v5026
  %5028 = vmatmul.f32.gmra.mxu0 %v4914
  %v5029 = vpop.f32.mrf.mxu0
  %v5030 = vadd.f32 0.0, %v5029
  %5031 = vmatmul.f32.gmra.mxu0 %v4917
  %v5032 = vpop.f32.mrf.mxu0
  %v5033 = vadd.f32 0.0, %v5032
  %5034 = vmatmul.f32.gmra.mxu0 %v4920
  %v5035 = vpop.f32.mrf.mxu0
  %v5036 = vadd.f32 0.0, %v5035
  %5037 = vmatmul.f32.gmra.mxu0 %v4923
  %v5038 = vpop.f32.mrf.mxu0
  %v5039 = vadd.f32 0.0, %v5038
  %5040 = vmatmul.f32.gmra.mxu0 %v4926
  %v5041 = vpop.f32.mrf.mxu0
  %v5042 = vadd.f32 0.0, %v5041
  %5043 = vmatmul.f32.gmra.mxu0 %v4929
  %v5044 = vpop.f32.mrf.mxu0
  %v5045 = vadd.f32 0.0, %v5044
  %5046 = vdwg.mxu0
  %v5047 = vadd.f32 %v4770, %v4952
  %v5048 = vadd.f32 %v4771, %v4955
  %v5049 = vadd.f32 %v4772, %v4958
  %v5050 = vadd.f32 %v4773, %v4961
  %v5051 = vadd.f32 %v4774, %v4964
  %v5052 = vadd.f32 %v4775, %v4967
  %v5053 = vadd.f32 %v4776, %v4970
  %v5054 = vadd.f32 %v4777, %v4973
  %v5055 = vadd.f32 %v4778, %v4976
  %v5056 = vadd.f32 %v4779, %v4979
  %v5057 = vadd.f32 %v4780, %v4982
  %v5058 = vadd.f32 %v4781, %v4985
  %v5059 = vadd.f32 %v4782, %v4988
  %v5060 = vadd.f32 %v4783, %v4991
  %v5061 = vadd.f32 %v4784, %v4994
  %v5062 = vadd.f32 %v4785, %v4997
  %v5063 = vadd.f32 %v4786, %v5000
  %v5064 = vadd.f32 %v4787, %v5003
  %v5065 = vadd.f32 %v4788, %v5006
  %v5066 = vadd.f32 %v4789, %v5009
  %v5067 = vadd.f32 %v4790, %v5012
  %v5068 = vadd.f32 %v4791, %v5015
  %v5069 = vadd.f32 %v4792, %v5018
  %v5070 = vadd.f32 %v4793, %v5021
  %v5071 = vadd.f32 %v4794, %v5024
  %v5072 = vadd.f32 %v4795, %v5027
  %v5073 = vadd.f32 %v4796, %v5030
  %v5074 = vadd.f32 %v4797, %v5033
  %v5075 = vadd.f32 %v4798, %v5036
  %v5076 = vadd.f32 %v4799, %v5039
  %v5077 = vadd.f32 %v4800, %v5042
  %v5078 = vadd.f32 %v4801, %v5045
  %v5079 = vld [vmem:[%s1835 + $0x2] sm:$0xff]
  %v5080 = vld [vmem:[%s1835 + $0xa] sm:$0xff]
  %v5081 = vld [vmem:[%s1835 + $0x1a] sm:$0xff]
  %v5082 = vld [vmem:[%s1835 + $0x22] sm:$0xff]
  %v5083 = vld [vmem:[%s1835 + $0x32] sm:$0xff]
  %v5084 = vld [vmem:[%s1835 + $0x3a] sm:$0xff]
  %v5085 = vld [vmem:[%s1835 + $0x4a] sm:$0xff]
  %v5086 = vld [vmem:[%s1835 + $0x52] sm:$0xff]
  %v5087 = vld [vmem:[%s1835 + $0x62] sm:$0xff]
  %v5088 = vld [vmem:[%s1835 + $0x6a] sm:$0xff]
  %v5089 = vld [vmem:[%s1835 + $0x7a] sm:$0xff]
  %v5090 = vld [vmem:[%s1835 + $0x82] sm:$0xff]
  %v5091 = vld [vmem:[%s1835 + $0x92] sm:$0xff]
  %v5092 = vld [vmem:[%s1835 + $0x9a] sm:$0xff]
  %v5093 = vld [vmem:[%s1835 + $0xaa] sm:$0xff]
  %v5094 = vld [vmem:[%s1835 + $0xb2] sm:$0xff]
  %v5095 = vld [vmem:[%s1835 + $0xc2] sm:$0xff]
  %v5096 = vld [vmem:[%s1835 + $0xca] sm:$0xff]
  %v5097 = vld [vmem:[%s1835 + $0xda] sm:$0xff]
  %v5098 = vld [vmem:[%s1835 + $0xe2] sm:$0xff]
  %v5099 = vld [vmem:[%s1835 + $0xf2] sm:$0xff]
  %v5100 = vld [vmem:[%s1835 + $0xfa] sm:$0xff]
  %v5101 = vld [vmem:[%s1835 + $0x10a] sm:$0xff]
  %v5102 = vld [vmem:[%s1835 + $0x112] sm:$0xff]
  %v5103 = vld [vmem:[%s1835 + $0x122] sm:$0xff]
  %v5104 = vld [vmem:[%s1835 + $0x12a] sm:$0xff]
  %v5105 = vld [vmem:[%s1835 + $0x13a] sm:$0xff]
  %v5106 = vld [vmem:[%s1835 + $0x142] sm:$0xff]
  %v5107 = vld [vmem:[%s1835 + $0x152] sm:$0xff]
  %v5108 = vld [vmem:[%s1835 + $0x15a] sm:$0xff]
  %v5109 = vld [vmem:[%s1835 + $0x16a] sm:$0xff]
  %v5110 = vld [vmem:[%s1835 + $0x172] sm:$0xff]
  %v5111 = vld [vmem:[%s2424] sm:$0xf]
  %v5113 = vsel %vm22, %v5079, 0
  %v5116 = vsel %vm22, %v5080, 0
  %v5119 = vsel %vm22, %v5081, 0
  %v5122 = vsel %vm22, %v5082, 0
  %v5125 = vsel %vm22, %v5083, 0
  %v5128 = vsel %vm22, %v5084, 0
  %v5131 = vsel %vm22, %v5085, 0
  %v5134 = vsel %vm22, %v5086, 0
  %v5137 = vsel %vm22, %v5087, 0
  %v5140 = vsel %vm22, %v5088, 0
  %v5143 = vsel %vm22, %v5089, 0
  %v5146 = vsel %vm22, %v5090, 0
  %v5149 = vsel %vm22, %v5091, 0
  %v5152 = vsel %vm22, %v5092, 0
  %v5155 = vsel %vm22, %v5093, 0
  %v5158 = vsel %vm22, %v5094, 0
  %v5161 = vsel %vm22, %v5095, 0
  %v5164 = vsel %vm22, %v5096, 0
  %v5167 = vsel %vm22, %v5097, 0
  %v5170 = vsel %vm22, %v5098, 0
  %v5173 = vsel %vm22, %v5099, 0
  %v5176 = vsel %vm22, %v5100, 0
  %v5179 = vsel %vm22, %v5101, 0
  %v5182 = vsel %vm22, %v5102, 0
  %v5185 = vsel %vm22, %v5103, 0
  %v5188 = vsel %vm22, %v5104, 0
  %v5191 = vsel %vm22, %v5105, 0
  %v5194 = vsel %vm22, %v5106, 0
  %v5197 = vsel %vm22, %v5107, 0
  %v5200 = vsel %vm22, %v5108, 0
  %v5203 = vsel %vm22, %v5109, 0
  %v5206 = vsel %vm22, %v5110, 0
  %v5209 = vsel %vm394, %v5111, 0
  %5211 = vmatpush.msra.mxu0 0.0
  %5212 = vmatpush.msra.mxu0 0.0
  %5213 = vmatpush.msra.mxu0 0.0
  %5214 = vmatpush.msra.mxu0 0.0
  %5215 = vmatpush.msra.mxu0 0.0
  %5216 = vmatpush.msra.mxu0 0.0
  %5217 = vmatpush.msra.mxu0 0.0
  %5218 = vmatpush.msra.mxu0 0.0
  %5219 = vmatpush.msra.mxu0 0.0
  %5220 = vmatpush.msra.mxu0 0.0
  %5221 = vmatpush.msra.mxu0 0.0
  %5222 = vmatpush.msra.mxu0 0.0
  %5223 = vmatpush.msra.mxu0 0.0
  %5224 = vmatpush.msra.mxu0 0.0
  %5225 = vmatpush.msra.mxu0 0.0
  %5226 = vmatpush.msra.mxu0 %v5209
  %5227 = vmatmul.f32.gmra.mxu0 %v5113
  %v5228 = vpop.f32.mrf.mxu0
  %v5229 = vadd.f32 0.0, %v5228
  %5230 = vmatmul.f32.gmra.mxu0 %v5116
  %v5231 = vpop.f32.mrf.mxu0
  %v5232 = vadd.f32 0.0, %v5231
  %5233 = vmatmul.f32.gmra.mxu0 %v5119
  %v5234 = vpop.f32.mrf.mxu0
  %v5235 = vadd.f32 0.0, %v5234
  %5236 = vmatmul.f32.gmra.mxu0 %v5122
  %v5237 = vpop.f32.mrf.mxu0
  %v5238 = vadd.f32 0.0, %v5237
  %5239 = vmatmul.f32.gmra.mxu0 %v5125
  %v5240 = vpop.f32.mrf.mxu0
  %v5241 = vadd.f32 0.0, %v5240
  %5242 = vmatmul.f32.gmra.mxu0 %v5128
  %v5243 = vpop.f32.mrf.mxu0
  %v5244 = vadd.f32 0.0, %v5243
  %5245 = vmatmul.f32.gmra.mxu0 %v5131
  %v5246 = vpop.f32.mrf.mxu0
  %v5247 = vadd.f32 0.0, %v5246
  %5248 = vmatmul.f32.gmra.mxu0 %v5134
  %v5249 = vpop.f32.mrf.mxu0
  %v5250 = vadd.f32 0.0, %v5249
  %5251 = vmatmul.f32.gmra.mxu0 %v5137
  %v5252 = vpop.f32.mrf.mxu0
  %v5253 = vadd.f32 0.0, %v5252
  %5254 = vmatmul.f32.gmra.mxu0 %v5140
  %v5255 = vpop.f32.mrf.mxu0
  %v5256 = vadd.f32 0.0, %v5255
  %5257 = vmatmul.f32.gmra.mxu0 %v5143
  %v5258 = vpop.f32.mrf.mxu0
  %v5259 = vadd.f32 0.0, %v5258
  %5260 = vmatmul.f32.gmra.mxu0 %v5146
  %v5261 = vpop.f32.mrf.mxu0
  %v5262 = vadd.f32 0.0, %v5261
  %5263 = vmatmul.f32.gmra.mxu0 %v5149
  %v5264 = vpop.f32.mrf.mxu0
  %v5265 = vadd.f32 0.0, %v5264
  %5266 = vmatmul.f32.gmra.mxu0 %v5152
  %v5267 = vpop.f32.mrf.mxu0
  %v5268 = vadd.f32 0.0, %v5267
  %5269 = vmatmul.f32.gmra.mxu0 %v5155
  %v5270 = vpop.f32.mrf.mxu0
  %v5271 = vadd.f32 0.0, %v5270
  %5272 = vmatmul.f32.gmra.mxu0 %v5158
  %v5273 = vpop.f32.mrf.mxu0
  %v5274 = vadd.f32 0.0, %v5273
  %5275 = vmatmul.f32.gmra.mxu0 %v5161
  %v5276 = vpop.f32.mrf.mxu0
  %v5277 = vadd.f32 0.0, %v5276
  %5278 = vmatmul.f32.gmra.mxu0 %v5164
  %v5279 = vpop.f32.mrf.mxu0
  %v5280 = vadd.f32 0.0, %v5279
  %5281 = vmatmul.f32.gmra.mxu0 %v5167
  %v5282 = vpop.f32.mrf.mxu0
  %v5283 = vadd.f32 0.0, %v5282
  %5284 = vmatmul.f32.gmra.mxu0 %v5170
  %v5285 = vpop.f32.mrf.mxu0
  %v5286 = vadd.f32 0.0, %v5285
  %5287 = vmatmul.f32.gmra.mxu0 %v5173
  %v5288 = vpop.f32.mrf.mxu0
  %v5289 = vadd.f32 0.0, %v5288
  %5290 = vmatmul.f32.gmra.mxu0 %v5176
  %v5291 = vpop.f32.mrf.mxu0
  %v5292 = vadd.f32 0.0, %v5291
  %5293 = vmatmul.f32.gmra.mxu0 %v5179
  %v5294 = vpop.f32.mrf.mxu0
  %v5295 = vadd.f32 0.0, %v5294
  %5296 = vmatmul.f32.gmra.mxu0 %v5182
  %v5297 = vpop.f32.mrf.mxu0
  %v5298 = vadd.f32 0.0, %v5297
  %5299 = vmatmul.f32.gmra.mxu0 %v5185
  %v5300 = vpop.f32.mrf.mxu0
  %v5301 = vadd.f32 0.0, %v5300
  %5302 = vmatmul.f32.gmra.mxu0 %v5188
  %v5303 = vpop.f32.mrf.mxu0
  %v5304 = vadd.f32 0.0, %v5303
  %5305 = vmatmul.f32.gmra.mxu0 %v5191
  %v5306 = vpop.f32.mrf.mxu0
  %v5307 = vadd.f32 0.0, %v5306
  %5308 = vmatmul.f32.gmra.mxu0 %v5194
  %v5309 = vpop.f32.mrf.mxu0
  %v5310 = vadd.f32 0.0, %v5309
  %5311 = vmatmul.f32.gmra.mxu0 %v5197
  %v5312 = vpop.f32.mrf.mxu0
  %v5313 = vadd.f32 0.0, %v5312
  %5314 = vmatmul.f32.gmra.mxu0 %v5200
  %v5315 = vpop.f32.mrf.mxu0
  %v5316 = vadd.f32 0.0, %v5315
  %5317 = vmatmul.f32.gmra.mxu0 %v5203
  %v5318 = vpop.f32.mrf.mxu0
  %v5319 = vadd.f32 0.0, %v5318
  %5320 = vmatmul.f32.gmra.mxu0 %v5206
  %v5321 = vpop.f32.mrf.mxu0
  %v5322 = vadd.f32 0.0, %v5321
  %5323 = vdwg.mxu0
  %v5324 = vadd.f32 %v5047, %v5229
  %v5325 = vadd.f32 %v5048, %v5232
  %v5326 = vadd.f32 %v5049, %v5235
  %v5327 = vadd.f32 %v5050, %v5238
  %v5328 = vadd.f32 %v5051, %v5241
  %v5329 = vadd.f32 %v5052, %v5244
  %v5330 = vadd.f32 %v5053, %v5247
  %v5331 = vadd.f32 %v5054, %v5250
  %v5332 = vadd.f32 %v5055, %v5253
  %v5333 = vadd.f32 %v5056, %v5256
  %v5334 = vadd.f32 %v5057, %v5259
  %v5335 = vadd.f32 %v5058, %v5262
  %v5336 = vadd.f32 %v5059, %v5265
  %v5337 = vadd.f32 %v5060, %v5268
  %v5338 = vadd.f32 %v5061, %v5271
  %v5339 = vadd.f32 %v5062, %v5274
  %v5340 = vadd.f32 %v5063, %v5277
  %v5341 = vadd.f32 %v5064, %v5280
  %v5342 = vadd.f32 %v5065, %v5283
  %v5343 = vadd.f32 %v5066, %v5286
  %v5344 = vadd.f32 %v5067, %v5289
  %v5345 = vadd.f32 %v5068, %v5292
  %v5346 = vadd.f32 %v5069, %v5295
  %v5347 = vadd.f32 %v5070, %v5298
  %v5348 = vadd.f32 %v5071, %v5301
  %v5349 = vadd.f32 %v5072, %v5304
  %v5350 = vadd.f32 %v5073, %v5307
  %v5351 = vadd.f32 %v5074, %v5310
  %v5352 = vadd.f32 %v5075, %v5313
  %v5353 = vadd.f32 %v5076, %v5316
  %v5354 = vadd.f32 %v5077, %v5319
  %v5355 = vadd.f32 %v5078, %v5322
  %s5356 = scalar_lea.vmem %s4, 256
  %v5357 = vld [vmem:[%s5356] sm:$0xff]
  %v5358 = vld [vmem:[%s5356 + $0x8] sm:$0xff]
  %v5359 = vld [vmem:[%s5356 + $0x10] sm:$0xff]
  %v5360 = vld [vmem:[%s5356 + $0x18] sm:$0xff]
  %v5361 = vld [vmem:[%s5356 + $0x20] sm:$0xff]
  %v5362 = vld [vmem:[%s5356 + $0x28] sm:$0xff]
  %v5363 = vld [vmem:[%s5356 + $0x30] sm:$0xff]
  %v5364 = vld [vmem:[%s5356 + $0x38] sm:$0xff]
  %v5365 = vld [vmem:[%s5356 + $0x40] sm:$0xff]
  %v5366 = vld [vmem:[%s5356 + $0x48] sm:$0xff]
  %v5367 = vld [vmem:[%s5356 + $0x50] sm:$0xff]
  %v5368 = vld [vmem:[%s5356 + $0x58] sm:$0xff]
  %v5369 = vld [vmem:[%s5356 + $0x60] sm:$0xff]
  %v5370 = vld [vmem:[%s5356 + $0x68] sm:$0xff]
  %v5371 = vld [vmem:[%s5356 + $0x70] sm:$0xff]
  %v5372 = vld [vmem:[%s5356 + $0x78] sm:$0xff]
  %v5373 = vld [vmem:[%s5356 + $0x80] sm:$0xff]
  %v5374 = vld [vmem:[%s5356 + $0x88] sm:$0xff]
  %v5375 = vld [vmem:[%s5356 + $0x90] sm:$0xff]
  %v5376 = vld [vmem:[%s5356 + $0x98] sm:$0xff]
  %v5377 = vld [vmem:[%s5356 + $0xa0] sm:$0xff]
  %v5378 = vld [vmem:[%s5356 + $0xa8] sm:$0xff]
  %v5379 = vld [vmem:[%s5356 + $0xb0] sm:$0xff]
  %v5380 = vld [vmem:[%s5356 + $0xb8] sm:$0xff]
  %v5381 = vld [vmem:[%s5356 + $0xc0] sm:$0xff]
  %v5382 = vld [vmem:[%s5356 + $0xc8] sm:$0xff]
  %v5383 = vld [vmem:[%s5356 + $0xd0] sm:$0xff]
  %v5384 = vld [vmem:[%s5356 + $0xd8] sm:$0xff]
  %v5385 = vld [vmem:[%s5356 + $0xe0] sm:$0xff]
  %v5386 = vld [vmem:[%s5356 + $0xe8] sm:$0xff]
  %v5387 = vld [vmem:[%s5356 + $0xf0] sm:$0xff]
  %v5388 = vld [vmem:[%s5356 + $0xf8] sm:$0xff]
  %v5389 = vadd.f32 %v5324, %v5357
  %v5390 = vadd.f32 %v5325, %v5358
  %v5391 = vadd.f32 %v5326, %v5359
  %v5392 = vadd.f32 %v5327, %v5360
  %v5393 = vadd.f32 %v5328, %v5361
  %v5394 = vadd.f32 %v5329, %v5362
  %v5395 = vadd.f32 %v5330, %v5363
  %v5396 = vadd.f32 %v5331, %v5364
  %v5397 = vadd.f32 %v5332, %v5365
  %v5398 = vadd.f32 %v5333, %v5366
  %v5399 = vadd.f32 %v5334, %v5367
  %v5400 = vadd.f32 %v5335, %v5368
  %v5401 = vadd.f32 %v5336, %v5369
  %v5402 = vadd.f32 %v5337, %v5370
  %v5403 = vadd.f32 %v5338, %v5371
  %v5404 = vadd.f32 %v5339, %v5372
  %v5405 = vadd.f32 %v5340, %v5373
  %v5406 = vadd.f32 %v5341, %v5374
  %v5407 = vadd.f32 %v5342, %v5375
  %v5408 = vadd.f32 %v5343, %v5376
  %v5409 = vadd.f32 %v5344, %v5377
  %v5410 = vadd.f32 %v5345, %v5378
  %v5411 = vadd.f32 %v5346, %v5379
  %v5412 = vadd.f32 %v5347, %v5380
  %v5413 = vadd.f32 %v5348, %v5381
  %v5414 = vadd.f32 %v5349, %v5382
  %v5415 = vadd.f32 %v5350, %v5383
  %v5416 = vadd.f32 %v5351, %v5384
  %v5417 = vadd.f32 %v5352, %v5385
  %v5418 = vadd.f32 %v5353, %v5386
  %v5419 = vadd.f32 %v5354, %v5387
  %v5420 = vadd.f32 %v5355, %v5388
  %s5421 = scalar_lea.vmem %s5, 256
  %5422 = vst.msk [vmem:[%s5421] sm:$0xff] %vm22, %v5389
  %5423 = vst.msk [vmem:[%s5421 + $0x8] sm:$0xff] %vm22, %v5390
  %5424 = vst.msk [vmem:[%s5421 + $0x10] sm:$0xff] %vm22, %v5391
  %5425 = vst.msk [vmem:[%s5421 + $0x18] sm:$0xff] %vm22, %v5392
  %5426 = vst.msk [vmem:[%s5421 + $0x20] sm:$0xff] %vm22, %v5393
  %5427 = vst.msk [vmem:[%s5421 + $0x28] sm:$0xff] %vm22, %v5394
  %5428 = vst.msk [vmem:[%s5421 + $0x30] sm:$0xff] %vm22, %v5395
  %5429 = vst.msk [vmem:[%s5421 + $0x38] sm:$0xff] %vm22, %v5396
  %5430 = vst.msk [vmem:[%s5421 + $0x40] sm:$0xff] %vm22, %v5397
  %5431 = vst.msk [vmem:[%s5421 + $0x48] sm:$0xff] %vm22, %v5398
  %5432 = vst.msk [vmem:[%s5421 + $0x50] sm:$0xff] %vm22, %v5399
  %5433 = vst.msk [vmem:[%s5421 + $0x58] sm:$0xff] %vm22, %v5400
  %5434 = vst.msk [vmem:[%s5421 + $0x60] sm:$0xff] %vm22, %v5401
  %5435 = vst.msk [vmem:[%s5421 + $0x68] sm:$0xff] %vm22, %v5402
  %5436 = vst.msk [vmem:[%s5421 + $0x70] sm:$0xff] %vm22, %v5403
  %5437 = vst.msk [vmem:[%s5421 + $0x78] sm:$0xff] %vm22, %v5404
  %5438 = vst.msk [vmem:[%s5421 + $0x80] sm:$0xff] %vm22, %v5405
  %5439 = vst.msk [vmem:[%s5421 + $0x88] sm:$0xff] %vm22, %v5406
  %5440 = vst.msk [vmem:[%s5421 + $0x90] sm:$0xff] %vm22, %v5407
  %5441 = vst.msk [vmem:[%s5421 + $0x98] sm:$0xff] %vm22, %v5408
  %5442 = vst.msk [vmem:[%s5421 + $0xa0] sm:$0xff] %vm22, %v5409
  %5443 = vst.msk [vmem:[%s5421 + $0xa8] sm:$0xff] %vm22, %v5410
  %5444 = vst.msk [vmem:[%s5421 + $0xb0] sm:$0xff] %vm22, %v5411
  %5445 = vst.msk [vmem:[%s5421 + $0xb8] sm:$0xff] %vm22, %v5412
  %5446 = vst.msk [vmem:[%s5421 + $0xc0] sm:$0xff] %vm22, %v5413
  %5447 = vst.msk [vmem:[%s5421 + $0xc8] sm:$0xff] %vm22, %v5414
  %5448 = vst.msk [vmem:[%s5421 + $0xd0] sm:$0xff] %vm22, %v5415
  %5449 = vst.msk [vmem:[%s5421 + $0xd8] sm:$0xff] %vm22, %v5416
  %5450 = vst.msk [vmem:[%s5421 + $0xe0] sm:$0xff] %vm22, %v5417
  %5451 = vst.msk [vmem:[%s5421 + $0xe8] sm:$0xff] %vm22, %v5418
  %5452 = vst.msk [vmem:[%s5421 + $0xf0] sm:$0xff] %vm22, %v5419
  %5453 = vst.msk [vmem:[%s5421 + $0xf8] sm:$0xff] %vm22, %v5420
  // Predicated region
  $region22: #{preact_block.3} parent=0 // pred_check
    _
  $region23: #{preact_block.3} parent=0 // pred_check_branch
    %5455 = sbr.rel (0) target = $region25
  $region24: #{preact_block.3} parent=0 // pred_region
    _
  $region25: #{preact_block.3} parent=0 // pred_fallthru
    _
  // Predicated region
  $region26: #{preact_block.3} parent=0 // pred_check
    _
  $region27: #{preact_block.3} parent=0 // pred_check_branch
    %5457 = sbr.rel (0) target = $region29
  $region28: #{preact_block.3} parent=0 // pred_region
    _
  $region29: #{preact_block.3} parent=0 // pred_fallthru
    _

// kernel: preact_block.2
$region0: #{preact_block.2}
  #allocation0 [shape = 'u32[]', space=smem, size = 0x4, offset = 0x4, fixed_abs, tag = 'smem constant byte address 0x4 - core index']
  #allocation1 [shape = 'u32[72,128]{1,0:T(1,128)}', space=vmem, size = 0x9000, scoped, tag = 'internal scratch']
  #allocation2 [shape = 'f32[18,18,4]{2,1,0:T(8,128)}', space=vmem, size = 0x36000, scoped, tag = 'scratch operand']
  %s0 = inlined_call_operand.vmem [shape: f32[2,256,4], index: 0, kind: input, shape index: {}]
  %s1 = inlined_call_operand.vmem [shape: f32[1,4], index: 1, kind: input, shape index: {}]
  %s2 = inlined_call_operand.vmem [shape: f32[1,4], index: 2, kind: input, shape index: {}]
  %s3 = inlined_call_operand.vmem [shape: f32[9,4,4], index: 3, kind: input, shape index: {}]
  %s4 = inlined_call_operand.vmem [shape: f32[2,256,4], index: 4, kind: output, shape index: {0}]
  %s5 = inlined_call_operand.vmem [shape: f32[1,1,4], index: 5, kind: output, shape index: {1}]
  %s6 = inlined_call_operand.vmem [shape: f32[1,1,4], index: 6, kind: output, shape index: {2}]
  %7 = xla_tuple %s4, %s5, %s6
  %s8 = sld [smem:[#allocation0]]
  $region42: #{preact_block.2} parent=0
    _
  %s10 = ssub.s32 1, %s8
  %s11 = scalar_select 0, %s10, %s8
  // Predicated region
  $region2: #{preact_block.2} parent=0 // pred_check
    _
  $region3: #{preact_block.2} parent=0 // pred_check_branch
    %13 = sbr.rel (0) target = $region5
  $region4: #{preact_block.2} parent=0 // pred_region
    _
  $region5: #{preact_block.2} parent=0 // pred_fallthru
    _
  // Predicated region
  $region6: #{preact_block.2} parent=0 // pred_check
    _
  $region7: #{preact_block.2} parent=0 // pred_check_branch
    %15 = sbr.rel (0) target = $region9
  $region8: #{preact_block.2} parent=0 // pred_region
    _
  $region9: #{preact_block.2} parent=0 // pred_fallthru
    _
  // Predicated region
  $region10: #{preact_block.2} parent=0 // pred_check
    _
  $region11: #{preact_block.2} parent=0 // pred_check_branch
    %17 = sbr.rel (0) target = $region13
  $region12: #{preact_block.2} parent=0 // pred_region
    _
  $region13: #{preact_block.2} parent=0 // pred_fallthru
    _
  // Predicated region
  $region14: #{preact_block.2} parent=0 // pred_check
    _
  $region15: #{preact_block.2} parent=0 // pred_check_branch
    %19 = sbr.rel (0) target = $region17
  $region16: #{preact_block.2} parent=0 // pred_region
    _
  $region17: #{preact_block.2} parent=0 // pred_fallthru
    _
  %v20 = vld [vmem:[%s1] sm:$0x1]
  %v21 = vld [vmem:[%s2] sm:$0x1]
  %vm22 = vcmask 31744
  %23 = vst.msk [vmem:[#allocation2] sm:$0xff] %vm22, 0.0
  %24 = vst.msk [vmem:[#allocation2 + $0x8] sm:$0xff] %vm22, 0.0
  %vm25 = vcmask 25600
  %26 = vst.msk [vmem:[#allocation2 + $0x10] sm:$0x3] %vm25, 0.0
  %s27 = scalar_lea.vmem [#allocation2], 408
  %28 = vst.msk [vmem:[%s27] sm:$0xff] %vm22, 0.0
  %29 = vst.msk [vmem:[%s27 + $0x8] sm:$0xff] %vm22, 0.0
  %30 = vst.msk [vmem:[%s27 + $0x10] sm:$0x3] %vm25, 0.0
  %s31 = scalar_lea.vmem [#allocation2], 24
  %vm32 = vcmask 24576
  %33 = vst.msk [vmem:[%s31] sm:$0x1] %vm32, 0.0
  %34 = vst.msk [vmem:[%s31 + $0x18] sm:$0x1] %vm32, 0.0
  %35 = vst.msk [vmem:[%s31 + $0x30] sm:$0x1] %vm32, 0.0
  %36 = vst.msk [vmem:[%s31 + $0x48] sm:$0x1] %vm32, 0.0
  %37 = vst.msk [vmem:[%s31 + $0x60] sm:$0x1] %vm32, 0.0
  %38 = vst.msk [vmem:[%s31 + $0x78] sm:$0x1] %vm32, 0.0
  %39 = vst.msk [vmem:[%s31 + $0x90] sm:$0x1] %vm32, 0.0
  %40 = vst.msk [vmem:[%s31 + $0xa8] sm:$0x1] %vm32, 0.0
  %41 = vst.msk [vmem:[%s31 + $0xc0] sm:$0x1] %vm32, 0.0
  %42 = vst.msk [vmem:[%s31 + $0xd8] sm:$0x1] %vm32, 0.0
  %43 = vst.msk [vmem:[%s31 + $0xf0] sm:$0x1] %vm32, 0.0
  %44 = vst.msk [vmem:[%s31 + $0x108] sm:$0x1] %vm32, 0.0
  %45 = vst.msk [vmem:[%s31 + $0x120] sm:$0x1] %vm32, 0.0
  %46 = vst.msk [vmem:[%s31 + $0x138] sm:$0x1] %vm32, 0.0
  %47 = vst.msk [vmem:[%s31 + $0x150] sm:$0x1] %vm32, 0.0
  %48 = vst.msk [vmem:[%s31 + $0x168] sm:$0x1] %vm32, 0.0
  %49 = vst.msk [vmem:[%s31 + $0x11] sm:$0x1] %vm32, 0.0
  %50 = vst.msk [vmem:[%s31 + $0x29] sm:$0x1] %vm32, 0.0
  %51 = vst.msk [vmem:[%s31 + $0x41] sm:$0x1] %vm32, 0.0
  %52 = vst.msk [vmem:[%s31 + $0x59] sm:$0x1] %vm32, 0.0
  %53 = vst.msk [vmem:[%s31 + $0x71] sm:$0x1] %vm32, 0.0
  %54 = vst.msk [vmem:[%s31 + $0x89] sm:$0x1] %vm32, 0.0
  %55 = vst.msk [vmem:[%s31 + $0xa1] sm:$0x1] %vm32, 0.0
  %56 = vst.msk [vmem:[%s31 + $0xb9] sm:$0x1] %vm32, 0.0
  %57 = vst.msk [vmem:[%s31 + $0xd1] sm:$0x1] %vm32, 0.0
  %58 = vst.msk [vmem:[%s31 + $0xe9] sm:$0x1] %vm32, 0.0
  %59 = vst.msk [vmem:[%s31 + $0x101] sm:$0x1] %vm32, 0.0
  %60 = vst.msk [vmem:[%s31 + $0x119] sm:$0x1] %vm32, 0.0
  %61 = vst.msk [vmem:[%s31 + $0x131] sm:$0x1] %vm32, 0.0
  %62 = vst.msk [vmem:[%s31 + $0x149] sm:$0x1] %vm32, 0.0
  %63 = vst.msk [vmem:[%s31 + $0x161] sm:$0x1] %vm32, 0.0
  %64 = vst.msk [vmem:[%s31 + $0x179] sm:$0x1] %vm32, 0.0
  %v65 = vld [vmem:[%s0] sm:$0xff]
  %v66 = vld [vmem:[%s0 + $0x8] sm:$0xff]
  %v67 = vld [vmem:[%s0 + $0x10] sm:$0xff]
  %v68 = vld [vmem:[%s0 + $0x18] sm:$0xff]
  %v69 = vld [vmem:[%s0 + $0x20] sm:$0xff]
  %v70 = vld [vmem:[%s0 + $0x28] sm:$0xff]
  %v71 = vld [vmem:[%s0 + $0x30] sm:$0xff]
  %v72 = vld [vmem:[%s0 + $0x38] sm:$0xff]
  %v73 = vld [vmem:[%s0 + $0x40] sm:$0xff]
  %v74 = vld [vmem:[%s0 + $0x48] sm:$0xff]
  %v75 = vld [vmem:[%s0 + $0x50] sm:$0xff]
  %v76 = vld [vmem:[%s0 + $0x58] sm:$0xff]
  %v77 = vld [vmem:[%s0 + $0x60] sm:$0xff]
  %v78 = vld [vmem:[%s0 + $0x68] sm:$0xff]
  %v79 = vld [vmem:[%s0 + $0x70] sm:$0xff]
  %v80 = vld [vmem:[%s0 + $0x78] sm:$0xff]
  %v81 = vld [vmem:[%s0 + $0x80] sm:$0xff]
  %v82 = vld [vmem:[%s0 + $0x88] sm:$0xff]
  %v83 = vld [vmem:[%s0 + $0x90] sm:$0xff]
  %v84 = vld [vmem:[%s0 + $0x98] sm:$0xff]
  %v85 = vld [vmem:[%s0 + $0xa0] sm:$0xff]
  %v86 = vld [vmem:[%s0 + $0xa8] sm:$0xff]
  %v87 = vld [vmem:[%s0 + $0xb0] sm:$0xff]
  %v88 = vld [vmem:[%s0 + $0xb8] sm:$0xff]
  %v89 = vld [vmem:[%s0 + $0xc0] sm:$0xff]
  %v90 = vld [vmem:[%s0 + $0xc8] sm:$0xff]
  %v91 = vld [vmem:[%s0 + $0xd0] sm:$0xff]
  %v92 = vld [vmem:[%s0 + $0xd8] sm:$0xff]
  %v93 = vld [vmem:[%s0 + $0xe0] sm:$0xff]
  %v94 = vld [vmem:[%s0 + $0xe8] sm:$0xff]
  %v95 = vld [vmem:[%s0 + $0xf0] sm:$0xff]
  %v96 = vld [vmem:[%s0 + $0xf8] sm:$0xff]
  %v98 = vperm.slane %v20, 0
  %v100 = vmul.f32 %v65, %v98
  %v101 = vmul.f32 %v66, %v98
  %v102 = vmul.f32 %v67, %v98
  %v103 = vmul.f32 %v68, %v98
  %v104 = vmul.f32 %v69, %v98
  %v105 = vmul.f32 %v70, %v98
  %v106 = vmul.f32 %v71, %v98
  %v107 = vmul.f32 %v72, %v98
  %v108 = vmul.f32 %v73, %v98
  %v109 = vmul.f32 %v74, %v98
  %v110 = vmul.f32 %v75, %v98
  %v111 = vmul.f32 %v76, %v98
  %v112 = vmul.f32 %v77, %v98
  %v113 = vmul.f32 %v78, %v98
  %v114 = vmul.f32 %v79, %v98
  %v115 = vmul.f32 %v80, %v98
  %v116 = vmul.f32 %v81, %v98
  %v117 = vmul.f32 %v82, %v98
  %v118 = vmul.f32 %v83, %v98
  %v119 = vmul.f32 %v84, %v98
  %v120 = vmul.f32 %v85, %v98
  %v121 = vmul.f32 %v86, %v98
  %v122 = vmul.f32 %v87, %v98
  %v123 = vmul.f32 %v88, %v98
  %v124 = vmul.f32 %v89, %v98
  %v125 = vmul.f32 %v90, %v98
  %v126 = vmul.f32 %v91, %v98
  %v127 = vmul.f32 %v92, %v98
  %v128 = vmul.f32 %v93, %v98
  %v129 = vmul.f32 %v94, %v98
  %v130 = vmul.f32 %v95, %v98
  %v131 = vmul.f32 %v96, %v98
  %v133 = vperm.slane %v21, 0
  %v135 = vadd.f32 %v100, %v133
  %v136 = vadd.f32 %v101, %v133
  %v137 = vadd.f32 %v102, %v133
  %v138 = vadd.f32 %v103, %v133
  %v139 = vadd.f32 %v104, %v133
  %v140 = vadd.f32 %v105, %v133
  %v141 = vadd.f32 %v106, %v133
  %v142 = vadd.f32 %v107, %v133
  %v143 = vadd.f32 %v108, %v133
  %v144 = vadd.f32 %v109, %v133
  %v145 = vadd.f32 %v110, %v133
  %v146 = vadd.f32 %v111, %v133
  %v147 = vadd.f32 %v112, %v133
  %v148 = vadd.f32 %v113, %v133
  %v149 = vadd.f32 %v114, %v133
  %v150 = vadd.f32 %v115, %v133
  %v151 = vadd.f32 %v116, %v133
  %v152 = vadd.f32 %v117, %v133
  %v153 = vadd.f32 %v118, %v133
  %v154 = vadd.f32 %v119, %v133
  %v155 = vadd.f32 %v120, %v133
  %v156 = vadd.f32 %v121, %v133
  %v157 = vadd.f32 %v122, %v133
  %v158 = vadd.f32 %v123, %v133
  %v159 = vadd.f32 %v124, %v133
  %v160 = vadd.f32 %v125, %v133
  %v161 = vadd.f32 %v126, %v133
  %v162 = vadd.f32 %v127, %v133
  %v163 = vadd.f32 %v128, %v133
  %v164 = vadd.f32 %v129, %v133
  %v165 = vadd.f32 %v130, %v133
  %v166 = vadd.f32 %v131, %v133
  %v167 = vmax.f32 %v135, 0.0
  %v168 = vmax.f32 %v136, 0.0
  %v169 = vmax.f32 %v137, 0.0
  %v170 = vmax.f32 %v138, 0.0
  %v171 = vmax.f32 %v139, 0.0
  %v172 = vmax.f32 %v140, 0.0
  %v173 = vmax.f32 %v141, 0.0
  %v174 = vmax.f32 %v142, 0.0
  %v175 = vmax.f32 %v143, 0.0
  %v176 = vmax.f32 %v144, 0.0
  %v177 = vmax.f32 %v145, 0.0
  %v178 = vmax.f32 %v146, 0.0
  %v179 = vmax.f32 %v147, 0.0
  %v180 = vmax.f32 %v148, 0.0
  %v181 = vmax.f32 %v149, 0.0
  %v182 = vmax.f32 %v150, 0.0
  %v183 = vmax.f32 %v151, 0.0
  %v184 = vmax.f32 %v152, 0.0
  %v185 = vmax.f32 %v153, 0.0
  %v186 = vmax.f32 %v154, 0.0
  %v187 = vmax.f32 %v155, 0.0
  %v188 = vmax.f32 %v156, 0.0
  %v189 = vmax.f32 %v157, 0.0
  %v190 = vmax.f32 %v158, 0.0
  %v191 = vmax.f32 %v159, 0.0
  %v192 = vmax.f32 %v160, 0.0
  %v193 = vmax.f32 %v161, 0.0
  %v194 = vmax.f32 %v162, 0.0
  %v195 = vmax.f32 %v163, 0.0
  %v196 = vmax.f32 %v164, 0.0
  %v197 = vmax.f32 %v165, 0.0
  %v198 = vmax.f32 %v166, 0.0
  %199 = vst.msk [vmem:[%s31 + $0x1] sm:$0xff] %vm22, %v167
  %200 = vst.msk [vmem:[%s31 + $0x9] sm:$0xff] %vm22, %v168
  %201 = vst.msk [vmem:[%s31 + $0x19] sm:$0xff] %vm22, %v169
  %202 = vst.msk [vmem:[%s31 + $0x21] sm:$0xff] %vm22, %v170
  %203 = vst.msk [vmem:[%s31 + $0x31] sm:$0xff] %vm22, %v171
  %204 = vst.msk [vmem:[%s31 + $0x39] sm:$0xff] %vm22, %v172
  %205 = vst.msk [vmem:[%s31 + $0x49] sm:$0xff] %vm22, %v173
  %206 = vst.msk [vmem:[%s31 + $0x51] sm:$0xff] %vm22, %v174
  %207 = vst.msk [vmem:[%s31 + $0x61] sm:$0xff] %vm22, %v175
  %208 = vst.msk [vmem:[%s31 + $0x69] sm:$0xff] %vm22, %v176
  %209 = vst.msk [vmem:[%s31 + $0x79] sm:$0xff] %vm22, %v177
  %210 = vst.msk [vmem:[%s31 + $0x81] sm:$0xff] %vm22, %v178
  %211 = vst.msk [vmem:[%s31 + $0x91] sm:$0xff] %vm22, %v179
  %212 = vst.msk [vmem:[%s31 + $0x99] sm:$0xff] %vm22, %v180
  %213 = vst.msk [vmem:[%s31 + $0xa9] sm:$0xff] %vm22, %v181
  %214 = vst.msk [vmem:[%s31 + $0xb1] sm:$0xff] %vm22, %v182
  %215 = vst.msk [vmem:[%s31 + $0xc1] sm:$0xff] %vm22, %v183
  %216 = vst.msk [vmem:[%s31 + $0xc9] sm:$0xff] %vm22, %v184
  %217 = vst.msk [vmem:[%s31 + $0xd9] sm:$0xff] %vm22, %v185
  %218 = vst.msk [vmem:[%s31 + $0xe1] sm:$0xff] %vm22, %v186
  %219 = vst.msk [vmem:[%s31 + $0xf1] sm:$0xff] %vm22, %v187
  %220 = vst.msk [vmem:[%s31 + $0xf9] sm:$0xff] %vm22, %v188
  %221 = vst.msk [vmem:[%s31 + $0x109] sm:$0xff] %vm22, %v189
  %222 = vst.msk [vmem:[%s31 + $0x111] sm:$0xff] %vm22, %v190
  %223 = vst.msk [vmem:[%s31 + $0x121] sm:$0xff] %vm22, %v191
  %224 = vst.msk [vmem:[%s31 + $0x129] sm:$0xff] %vm22, %v192
  %225 = vst.msk [vmem:[%s31 + $0x139] sm:$0xff] %vm22, %v193
  %226 = vst.msk [vmem:[%s31 + $0x141] sm:$0xff] %vm22, %v194
  %227 = vst.msk [vmem:[%s31 + $0x151] sm:$0xff] %vm22, %v195
  %228 = vst.msk [vmem:[%s31 + $0x159] sm:$0xff] %vm22, %v196
  %229 = vst.msk [vmem:[%s31 + $0x169] sm:$0xff] %vm22, %v197
  %230 = vst.msk [vmem:[%s31 + $0x171] sm:$0xff] %vm22, %v198
  %v231 = vld [vmem:[#allocation2] sm:$0xff]
  %v232 = vld [vmem:[#allocation2 + $0x8] sm:$0xff]
  %v233 = vld [vmem:[#allocation2 + $0x18] sm:$0xff]
  %v234 = vld [vmem:[#allocation2 + $0x20] sm:$0xff]
  %v235 = vld [vmem:[#allocation2 + $0x30] sm:$0xff]
  %v236 = vld [vmem:[#allocation2 + $0x38] sm:$0xff]
  %v237 = vld [vmem:[#allocation2 + $0x48] sm:$0xff]
  %v238 = vld [vmem:[#allocation2 + $0x50] sm:$0xff]
  %v239 = vld [vmem:[#allocation2 + $0x60] sm:$0xff]
  %v240 = vld [vmem:[#allocation2 + $0x68] sm:$0xff]
  %v241 = vld [vmem:[#allocation2 + $0x78] sm:$0xff]
  %v242 = vld [vmem:[#allocation2 + $0x80] sm:$0xff]
  %v243 = vld [vmem:[#allocation2 + $0x90] sm:$0xff]
  %v244 = vld [vmem:[#allocation2 + $0x98] sm:$0xff]
  %v245 = vld [vmem:[#allocation2 + $0xa8] sm:$0xff]
  %v246 = vld [vmem:[#allocation2 + $0xb0] sm:$0xff]
  %v247 = vld [vmem:[#allocation2 + $0xc0] sm:$0xff]
  %v248 = vld [vmem:[#allocation2 + $0xc8] sm:$0xff]
  %v249 = vld [vmem:[#allocation2 + $0xd8] sm:$0xff]
  %v250 = vld [vmem:[#allocation2 + $0xe0] sm:$0xff]
  %v251 = vld [vmem:[#allocation2 + $0xf0] sm:$0xff]
  %v252 = vld [vmem:[#allocation2 + $0xf8] sm:$0xff]
  %v253 = vld [vmem:[#allocation2 + $0x108] sm:$0xff]
  %v254 = vld [vmem:[#allocation2 + $0x110] sm:$0xff]
  %v255 = vld [vmem:[#allocation2 + $0x120] sm:$0xff]
  %v256 = vld [vmem:[#allocation2 + $0x128] sm:$0xff]
  %v257 = vld [vmem:[#allocation2 + $0x138] sm:$0xff]
  %v258 = vld [vmem:[#allocation2 + $0x140] sm:$0xff]
  %v259 = vld [vmem:[#allocation2 + $0x150] sm:$0xff]
  %v260 = vld [vmem:[#allocation2 + $0x158] sm:$0xff]
  %v261 = vld [vmem:[#allocation2 + $0x168] sm:$0xff]
  %v262 = vld [vmem:[#allocation2 + $0x170] sm:$0xff]
  %v263 = vld [vmem:[%s3] sm:$0xf]
  %v264 = vld [vmem:[#allocation2 + $0x1] sm:$0xff]
  %v265 = vld [vmem:[#allocation2 + $0x9] sm:$0xff]
  %v266 = vld [vmem:[#allocation2 + $0x19] sm:$0xff]
  %v267 = vld [vmem:[#allocation2 + $0x21] sm:$0xff]
  %v268 = vld [vmem:[#allocation2 + $0x31] sm:$0xff]
  %v269 = vld [vmem:[#allocation2 + $0x39] sm:$0xff]
  %v270 = vld [vmem:[#allocation2 + $0x49] sm:$0xff]
  %v271 = vld [vmem:[#allocation2 + $0x51] sm:$0xff]
  %v272 = vld [vmem:[#allocation2 + $0x61] sm:$0xff]
  %v273 = vld [vmem:[#allocation2 + $0x69] sm:$0xff]
  %v274 = vld [vmem:[#allocation2 + $0x79] sm:$0xff]
  %v275 = vld [vmem:[#allocation2 + $0x81] sm:$0xff]
  %v276 = vld [vmem:[#allocation2 + $0x91] sm:$0xff]
  %v277 = vld [vmem:[#allocation2 + $0x99] sm:$0xff]
  %v278 = vld [vmem:[#allocation2 + $0xa9] sm:$0xff]
  %v279 = vld [vmem:[#allocation2 + $0xb1] sm:$0xff]
  %v280 = vld [vmem:[#allocation2 + $0xc1] sm:$0xff]
  %v281 = vld [vmem:[#allocation2 + $0xc9] sm:$0xff]
  %v282 = vld [vmem:[#allocation2 + $0xd9] sm:$0xff]
  %v283 = vld [vmem:[#allocation2 + $0xe1] sm:$0xff]
  %v284 = vld [vmem:[#allocation2 + $0xf1] sm:$0xff]
  %v285 = vld [vmem:[#allocation2 + $0xf9] sm:$0xff]
  %v286 = vld [vmem:[#allocation2 + $0x109] sm:$0xff]
  %v287 = vld [vmem:[#allocation2 + $0x111] sm:$0xff]
  %v288 = vld [vmem:[#allocation2 + $0x121] sm:$0xff]
  %v289 = vld [vmem:[#allocation2 + $0x129] sm:$0xff]
  %v290 = vld [vmem:[#allocation2 + $0x139] sm:$0xff]
  %v291 = vld [vmem:[#allocation2 + $0x141] sm:$0xff]
  %v292 = vld [vmem:[#allocation2 + $0x151] sm:$0xff]
  %v293 = vld [vmem:[#allocation2 + $0x159] sm:$0xff]
  %v294 = vld [vmem:[#allocation2 + $0x169] sm:$0xff]
  %v295 = vld [vmem:[#allocation2 + $0x171] sm:$0xff]
  %s296 = scalar_lea.vmem %s3, 4
  %v297 = vld [vmem:[%s296] sm:$0xf]
  %v299 = vsel %vm22, %v264, 0
  %v302 = vsel %vm22, %v265, 0
  %v305 = vsel %vm22, %v266, 0
  %v308 = vsel %vm22, %v267, 0
  %v311 = vsel %vm22, %v268, 0
  %v314 = vsel %vm22, %v269, 0
  %v317 = vsel %vm22, %v270, 0
  %v320 = vsel %vm22, %v271, 0
  %v323 = vsel %vm22, %v272, 0
  %v326 = vsel %vm22, %v273, 0
  %v329 = vsel %vm22, %v274, 0
  %v332 = vsel %vm22, %v275, 0
  %v335 = vsel %vm22, %v276, 0
  %v338 = vsel %vm22, %v277, 0
  %v341 = vsel %vm22, %v278, 0
  %v344 = vsel %vm22, %v279, 0
  %v347 = vsel %vm22, %v280, 0
  %v350 = vsel %vm22, %v281, 0
  %v353 = vsel %vm22, %v282, 0
  %v356 = vsel %vm22, %v283, 0
  %v359 = vsel %vm22, %v284, 0
  %v362 = vsel %vm22, %v285, 0
  %v365 = vsel %vm22, %v286, 0
  %v368 = vsel %vm22, %v287, 0
  %v371 = vsel %vm22, %v288, 0
  %v374 = vsel %vm22, %v289, 0
  %v377 = vsel %vm22, %v290, 0
  %v380 = vsel %vm22, %v291, 0
  %v383 = vsel %vm22, %v292, 0
  %v386 = vsel %vm22, %v293, 0
  %v389 = vsel %vm22, %v294, 0
  %v392 = vsel %vm22, %v295, 0
  %vm394 = vcmask 1043456
  %v396 = vsel %vm394, %v297, 0
  %398 = vmatpush.msra.mxu0 0.0
  %399 = vmatpush.msra.mxu0 0.0
  %400 = vmatpush.msra.mxu0 0.0
  %401 = vmatpush.msra.mxu0 0.0
  %402 = vmatpush.msra.mxu0 0.0
  %403 = vmatpush.msra.mxu0 0.0
  %404 = vmatpush.msra.mxu0 0.0
  %405 = vmatpush.msra.mxu0 0.0
  %406 = vmatpush.msra.mxu0 0.0
  %407 = vmatpush.msra.mxu0 0.0
  %408 = vmatpush.msra.mxu0 0.0
  %409 = vmatpush.msra.mxu0 0.0
  %410 = vmatpush.msra.mxu0 0.0
  %411 = vmatpush.msra.mxu0 0.0
  %412 = vmatpush.msra.mxu0 0.0
  %413 = vmatpush.msra.mxu0 %v396
  %414 = vmatmul.f32.gmra.mxu0 %v299
  %v415 = vpop.f32.mrf.mxu0
  %v416 = vadd.f32 0.0, %v415
  %417 = vmatmul.f32.gmra.mxu0 %v302
  %v418 = vpop.f32.mrf.mxu0
  %v419 = vadd.f32 0.0, %v418
  %420 = vmatmul.f32.gmra.mxu0 %v305
  %v421 = vpop.f32.mrf.mxu0
  %v422 = vadd.f32 0.0, %v421
  %423 = vmatmul.f32.gmra.mxu0 %v308
  %v424 = vpop.f32.mrf.mxu0
  %v425 = vadd.f32 0.0, %v424
  %426 = vmatmul.f32.gmra.mxu0 %v311
  %v427 = vpop.f32.mrf.mxu0
  %v428 = vadd.f32 0.0, %v427
  %429 = vmatmul.f32.gmra.mxu0 %v314
  %v430 = vpop.f32.mrf.mxu0
  %v431 = vadd.f32 0.0, %v430
  %432 = vmatmul.f32.gmra.mxu0 %v317
  %v433 = vpop.f32.mrf.mxu0
  %v434 = vadd.f32 0.0, %v433
  %435 = vmatmul.f32.gmra.mxu0 %v320
  %v436 = vpop.f32.mrf.mxu0
  %v437 = vadd.f32 0.0, %v436
  %438 = vmatmul.f32.gmra.mxu0 %v323
  %v439 = vpop.f32.mrf.mxu0
  %v440 = vadd.f32 0.0, %v439
  %441 = vmatmul.f32.gmra.mxu0 %v326
  %v442 = vpop.f32.mrf.mxu0
  %v443 = vadd.f32 0.0, %v442
  %444 = vmatmul.f32.gmra.mxu0 %v329
  %v445 = vpop.f32.mrf.mxu0
  %v446 = vadd.f32 0.0, %v445
  %447 = vmatmul.f32.gmra.mxu0 %v332
  %v448 = vpop.f32.mrf.mxu0
  %v449 = vadd.f32 0.0, %v448
  %450 = vmatmul.f32.gmra.mxu0 %v335
  %v451 = vpop.f32.mrf.mxu0
  %v452 = vadd.f32 0.0, %v451
  %453 = vmatmul.f32.gmra.mxu0 %v338
  %v454 = vpop.f32.mrf.mxu0
  %v455 = vadd.f32 0.0, %v454
  %456 = vmatmul.f32.gmra.mxu0 %v341
  %v457 = vpop.f32.mrf.mxu0
  %v458 = vadd.f32 0.0, %v457
  %459 = vmatmul.f32.gmra.mxu0 %v344
  %v460 = vpop.f32.mrf.mxu0
  %v461 = vadd.f32 0.0, %v460
  %462 = vmatmul.f32.gmra.mxu0 %v347
  %v463 = vpop.f32.mrf.mxu0
  %v464 = vadd.f32 0.0, %v463
  %465 = vmatmul.f32.gmra.mxu0 %v350
  %v466 = vpop.f32.mrf.mxu0
  %v467 = vadd.f32 0.0, %v466
  %468 = vmatmul.f32.gmra.mxu0 %v353
  %v469 = vpop.f32.mrf.mxu0
  %v470 = vadd.f32 0.0, %v469
  %471 = vmatmul.f32.gmra.mxu0 %v356
  %v472 = vpop.f32.mrf.mxu0
  %v473 = vadd.f32 0.0, %v472
  %474 = vmatmul.f32.gmra.mxu0 %v359
  %v475 = vpop.f32.mrf.mxu0
  %v476 = vadd.f32 0.0, %v475
  %477 = vmatmul.f32.gmra.mxu0 %v362
  %v478 = vpop.f32.mrf.mxu0
  %v479 = vadd.f32 0.0, %v478
  %480 = vmatmul.f32.gmra.mxu0 %v365
  %v481 = vpop.f32.mrf.mxu0
  %v482 = vadd.f32 0.0, %v481
  %483 = vmatmul.f32.gmra.mxu0 %v368
  %v484 = vpop.f32.mrf.mxu0
  %v485 = vadd.f32 0.0, %v484
  %486 = vmatmul.f32.gmra.mxu0 %v371
  %v487 = vpop.f32.mrf.mxu0
  %v488 = vadd.f32 0.0, %v487
  %489 = vmatmul.f32.gmra.mxu0 %v374
  %v490 = vpop.f32.mrf.mxu0
  %v491 = vadd.f32 0.0, %v490
  %492 = vmatmul.f32.gmra.mxu0 %v377
  %v493 = vpop.f32.mrf.mxu0
  %v494 = vadd.f32 0.0, %v493
  %495 = vmatmul.f32.gmra.mxu0 %v380
  %v496 = vpop.f32.mrf.mxu0
  %v497 = vadd.f32 0.0, %v496
  %498 = vmatmul.f32.gmra.mxu0 %v383
  %v499 = vpop.f32.mrf.mxu0
  %v500 = vadd.f32 0.0, %v499
  %501 = vmatmul.f32.gmra.mxu0 %v386
  %v502 = vpop.f32.mrf.mxu0
  %v503 = vadd.f32 0.0, %v502
  %504 = vmatmul.f32.gmra.mxu0 %v389
  %v505 = vpop.f32.mrf.mxu0
  %v506 = vadd.f32 0.0, %v505
  %507 = vmatmul.f32.gmra.mxu0 %v392
  %v508 = vpop.f32.mrf.mxu0
  %v509 = vadd.f32 0.0, %v508
  %510 = vdwg.mxu0
  %v512 = vsel %vm22, %v231, 0
  %v515 = vsel %vm22, %v232, 0
  %v518 = vsel %vm22, %v233, 0
  %v521 = vsel %vm22, %v234, 0
  %v524 = vsel %vm22, %v235, 0
  %v527 = vsel %vm22, %v236, 0
  %v530 = vsel %vm22, %v237, 0
  %v533 = vsel %vm22, %v238, 0
  %v536 = vsel %vm22, %v239, 0
  %v539 = vsel %vm22, %v240, 0
  %v542 = vsel %vm22, %v241, 0
  %v545 = vsel %vm22, %v242, 0
  %v548 = vsel %vm22, %v243, 0
  %v551 = vsel %vm22, %v244, 0
  %v554 = vsel %vm22, %v245, 0
  %v557 = vsel %vm22, %v246, 0
  %v560 = vsel %vm22, %v247, 0
  %v563 = vsel %vm22, %v248, 0
  %v566 = vsel %vm22, %v249, 0
  %v569 = vsel %vm22, %v250, 0
  %v572 = vsel %vm22, %v251, 0
  %v575 = vsel %vm22, %v252, 0
  %v578 = vsel %vm22, %v253, 0
  %v581 = vsel %vm22, %v254, 0
  %v584 = vsel %vm22, %v255, 0
  %v587 = vsel %vm22, %v256, 0
  %v590 = vsel %vm22, %v257, 0
  %v593 = vsel %vm22, %v258, 0
  %v596 = vsel %vm22, %v259, 0
  %v599 = vsel %vm22, %v260, 0
  %v602 = vsel %vm22, %v261, 0
  %v605 = vsel %vm22, %v262, 0
  %v608 = vsel %vm394, %v263, 0
  %610 = vmatpush.msra.mxu0 0.0
  %611 = vmatpush.msra.mxu0 0.0
  %612 = vmatpush.msra.mxu0 0.0
  %613 = vmatpush.msra.mxu0 0.0
  %614 = vmatpush.msra.mxu0 0.0
  %615 = vmatpush.msra.mxu0 0.0
  %616 = vmatpush.msra.mxu0 0.0
  %617 = vmatpush.msra.mxu0 0.0
  %618 = vmatpush.msra.mxu0 0.0
  %619 = vmatpush.msra.mxu0 0.0
  %620 = vmatpush.msra.mxu0 0.0
  %621 = vmatpush.msra.mxu0 0.0
  %622 = vmatpush.msra.mxu0 0.0
  %623 = vmatpush.msra.mxu0 0.0
  %624 = vmatpush.msra.mxu0 0.0
  %625 = vmatpush.msra.mxu0 %v608
  %626 = vmatmul.f32.gmra.mxu0 %v512
  %v627 = vpop.f32.mrf.mxu0
  %v628 = vadd.f32 %v416, %v627
  %629 = vmatmul.f32.gmra.mxu0 %v515
  %v630 = vpop.f32.mrf.mxu0
  %v631 = vadd.f32 %v419, %v630
  %632 = vmatmul.f32.gmra.mxu0 %v518
  %v633 = vpop.f32.mrf.mxu0
  %v634 = vadd.f32 %v422, %v633
  %635 = vmatmul.f32.gmra.mxu0 %v521
  %v636 = vpop.f32.mrf.mxu0
  %v637 = vadd.f32 %v425, %v636
  %638 = vmatmul.f32.gmra.mxu0 %v524
  %v639 = vpop.f32.mrf.mxu0
  %v640 = vadd.f32 %v428, %v639
  %641 = vmatmul.f32.gmra.mxu0 %v527
  %v642 = vpop.f32.mrf.mxu0
  %v643 = vadd.f32 %v431, %v642
  %644 = vmatmul.f32.gmra.mxu0 %v530
  %v645 = vpop.f32.mrf.mxu0
  %v646 = vadd.f32 %v434, %v645
  %647 = vmatmul.f32.gmra.mxu0 %v533
  %v648 = vpop.f32.mrf.mxu0
  %v649 = vadd.f32 %v437, %v648
  %650 = vmatmul.f32.gmra.mxu0 %v536
  %v651 = vpop.f32.mrf.mxu0
  %v652 = vadd.f32 %v440, %v651
  %653 = vmatmul.f32.gmra.mxu0 %v539
  %v654 = vpop.f32.mrf.mxu0
  %v655 = vadd.f32 %v443, %v654
  %656 = vmatmul.f32.gmra.mxu0 %v542
  %v657 = vpop.f32.mrf.mxu0
  %v658 = vadd.f32 %v446, %v657
  %659 = vmatmul.f32.gmra.mxu0 %v545
  %v660 = vpop.f32.mrf.mxu0
  %v661 = vadd.f32 %v449, %v660
  %662 = vmatmul.f32.gmra.mxu0 %v548
  %v663 = vpop.f32.mrf.mxu0
  %v664 = vadd.f32 %v452, %v663
  %665 = vmatmul.f32.gmra.mxu0 %v551
  %v666 = vpop.f32.mrf.mxu0
  %v667 = vadd.f32 %v455, %v666
  %668 = vmatmul.f32.gmra.mxu0 %v554
  %v669 = vpop.f32.mrf.mxu0
  %v670 = vadd.f32 %v458, %v669
  %671 = vmatmul.f32.gmra.mxu0 %v557
  %v672 = vpop.f32.mrf.mxu0
  %v673 = vadd.f32 %v461, %v672
  %674 = vmatmul.f32.gmra.mxu0 %v560
  %v675 = vpop.f32.mrf.mxu0
  %v676 = vadd.f32 %v464, %v675
  %677 = vmatmul.f32.gmra.mxu0 %v563
  %v678 = vpop.f32.mrf.mxu0
  %v679 = vadd.f32 %v467, %v678
  %680 = vmatmul.f32.gmra.mxu0 %v566
  %v681 = vpop.f32.mrf.mxu0
  %v682 = vadd.f32 %v470, %v681
  %683 = vmatmul.f32.gmra.mxu0 %v569
  %v684 = vpop.f32.mrf.mxu0
  %v685 = vadd.f32 %v473, %v684
  %686 = vmatmul.f32.gmra.mxu0 %v572
  %v687 = vpop.f32.mrf.mxu0
  %v688 = vadd.f32 %v476, %v687
  %689 = vmatmul.f32.gmra.mxu0 %v575
  %v690 = vpop.f32.mrf.mxu0
  %v691 = vadd.f32 %v479, %v690
  %692 = vmatmul.f32.gmra.mxu0 %v578
  %v693 = vpop.f32.mrf.mxu0
  %v694 = vadd.f32 %v482, %v693
  %695 = vmatmul.f32.gmra.mxu0 %v581
  %v696 = vpop.f32.mrf.mxu0
  %v697 = vadd.f32 %v485, %v696
  %698 = vmatmul.f32.gmra.mxu0 %v584
  %v699 = vpop.f32.mrf.mxu0
  %v700 = vadd.f32 %v488, %v699
  %701 = vmatmul.f32.gmra.mxu0 %v587
  %v702 = vpop.f32.mrf.mxu0
  %v703 = vadd.f32 %v491, %v702
  %704 = vmatmul.f32.gmra.mxu0 %v590
  %v705 = vpop.f32.mrf.mxu0
  %v706 = vadd.f32 %v494, %v705
  %707 = vmatmul.f32.gmra.mxu0 %v593
  %v708 = vpop.f32.mrf.mxu0
  %v709 = vadd.f32 %v497, %v708
  %710 = vmatmul.f32.gmra.mxu0 %v596
  %v711 = vpop.f32.mrf.mxu0
  %v712 = vadd.f32 %v500, %v711
  %713 = vmatmul.f32.gmra.mxu0 %v599
  %v714 = vpop.f32.mrf.mxu0
  %v715 = vadd.f32 %v503, %v714
  %716 = vmatmul.f32.gmra.mxu0 %v602
  %v717 = vpop.f32.mrf.mxu0
  %v718 = vadd.f32 %v506, %v717
  %719 = vmatmul.f32.gmra.mxu0 %v605
  %v720 = vpop.f32.mrf.mxu0
  %v721 = vadd.f32 %v509, %v720
  %722 = vdwg.mxu0
  %v723 = vld [vmem:[#allocation2 + $0x2] sm:$0xff]
  %v724 = vld [vmem:[#allocation2 + $0xa] sm:$0xff]
  %v725 = vld [vmem:[#allocation2 + $0x1a] sm:$0xff]
  %v726 = vld [vmem:[#allocation2 + $0x22] sm:$0xff]
  %v727 = vld [vmem:[#allocation2 + $0x32] sm:$0xff]
  %v728 = vld [vmem:[#allocation2 + $0x3a] sm:$0xff]
  %v729 = vld [vmem:[#allocation2 + $0x4a] sm:$0xff]
  %v730 = vld [vmem:[#allocation2 + $0x52] sm:$0xff]
  %v731 = vld [vmem:[#allocation2 + $0x62] sm:$0xff]
  %v732 = vld [vmem:[#allocation2 + $0x6a] sm:$0xff]
  %v733 = vld [vmem:[#allocation2 + $0x7a] sm:$0xff]
  %v734 = vld [vmem:[#allocation2 + $0x82] sm:$0xff]
  %v735 = vld [vmem:[#allocation2 + $0x92] sm:$0xff]
  %v736 = vld [vmem:[#allocation2 + $0x9a] sm:$0xff]
  %v737 = vld [vmem:[#allocation2 + $0xaa] sm:$0xff]
  %v738 = vld [vmem:[#allocation2 + $0xb2] sm:$0xff]
  %v739 = vld [vmem:[#allocation2 + $0xc2] sm:$0xff]
  %v740 = vld [vmem:[#allocation2 + $0xca] sm:$0xff]
  %v741 = vld [vmem:[#allocation2 + $0xda] sm:$0xff]
  %v742 = vld [vmem:[#allocation2 + $0xe2] sm:$0xff]
  %v743 = vld [vmem:[#allocation2 + $0xf2] sm:$0xff]
  %v744 = vld [vmem:[#allocation2 + $0xfa] sm:$0xff]
  %v745 = vld [vmem:[#allocation2 + $0x10a] sm:$0xff]
  %v746 = vld [vmem:[#allocation2 + $0x112] sm:$0xff]
  %v747 = vld [vmem:[#allocation2 + $0x122] sm:$0xff]
  %v748 = vld [vmem:[#allocation2 + $0x12a] sm:$0xff]
  %v749 = vld [vmem:[#allocation2 + $0x13a] sm:$0xff]
  %v750 = vld [vmem:[#allocation2 + $0x142] sm:$0xff]
  %v751 = vld [vmem:[#allocation2 + $0x152] sm:$0xff]
  %v752 = vld [vmem:[#allocation2 + $0x15a] sm:$0xff]
  %v753 = vld [vmem:[#allocation2 + $0x16a] sm:$0xff]
  %v754 = vld [vmem:[#allocation2 + $0x172] sm:$0xff]
  %s755 = scalar_lea.vmem %s3, 8
  %v756 = vld [vmem:[%s755] sm:$0xf]
  %v758 = vsel %vm22, %v723, 0
  %v761 = vsel %vm22, %v724, 0
  %v764 = vsel %vm22, %v725, 0
  %v767 = vsel %vm22, %v726, 0
  %v770 = vsel %vm22, %v727, 0
  %v773 = vsel %vm22, %v728, 0
  %v776 = vsel %vm22, %v729, 0
  %v779 = vsel %vm22, %v730, 0
  %v782 = vsel %vm22, %v731, 0
  %v785 = vsel %vm22, %v732, 0
  %v788 = vsel %vm22, %v733, 0
  %v791 = vsel %vm22, %v734, 0
  %v794 = vsel %vm22, %v735, 0
  %v797 = vsel %vm22, %v736, 0
  %v800 = vsel %vm22, %v737, 0
  %v803 = vsel %vm22, %v738, 0
  %v806 = vsel %vm22, %v739, 0
  %v809 = vsel %vm22, %v740, 0
  %v812 = vsel %vm22, %v741, 0
  %v815 = vsel %vm22, %v742, 0
  %v818 = vsel %vm22, %v743, 0
  %v821 = vsel %vm22, %v744, 0
  %v824 = vsel %vm22, %v745, 0
  %v827 = vsel %vm22, %v746, 0
  %v830 = vsel %vm22, %v747, 0
  %v833 = vsel %vm22, %v748, 0
  %v836 = vsel %vm22, %v749, 0
  %v839 = vsel %vm22, %v750, 0
  %v842 = vsel %vm22, %v751, 0
  %v845 = vsel %vm22, %v752, 0
  %v848 = vsel %vm22, %v753, 0
  %v851 = vsel %vm22, %v754, 0
  %v854 = vsel %vm394, %v756, 0
  %856 = vmatpush.msra.mxu0 0.0
  %857 = vmatpush.msra.mxu0 0.0
  %858 = vmatpush.msra.mxu0 0.0
  %859 = vmatpush.msra.mxu0 0.0
  %860 = vmatpush.msra.mxu0 0.0
  %861 = vmatpush.msra.mxu0 0.0
  %862 = vmatpush.msra.mxu0 0.0
  %863 = vmatpush.msra.mxu0 0.0
  %864 = vmatpush.msra.mxu0 0.0
  %865 = vmatpush.msra.mxu0 0.0
  %866 = vmatpush.msra.mxu0 0.0
  %867 = vmatpush.msra.mxu0 0.0
  %868 = vmatpush.msra.mxu0 0.0
  %869 = vmatpush.msra.mxu0 0.0
  %870 = vmatpush.msra.mxu0 0.0
  %871 = vmatpush.msra.mxu0 %v854
  %872 = vmatmul.f32.gmra.mxu0 %v758
  %v873 = vpop.f32.mrf.mxu0
  %v874 = vadd.f32 0.0, %v873
  %875 = vmatmul.f32.gmra.mxu0 %v761
  %v876 = vpop.f32.mrf.mxu0
  %v877 = vadd.f32 0.0, %v876
  %878 = vmatmul.f32.gmra.mxu0 %v764
  %v879 = vpop.f32.mrf.mxu0
  %v880 = vadd.f32 0.0, %v879
  %881 = vmatmul.f32.gmra.mxu0 %v767
  %v882 = vpop.f32.mrf.mxu0
  %v883 = vadd.f32 0.0, %v882
  %884 = vmatmul.f32.gmra.mxu0 %v770
  %v885 = vpop.f32.mrf.mxu0
  %v886 = vadd.f32 0.0, %v885
  %887 = vmatmul.f32.gmra.mxu0 %v773
  %v888 = vpop.f32.mrf.mxu0
  %v889 = vadd.f32 0.0, %v888
  %890 = vmatmul.f32.gmra.mxu0 %v776
  %v891 = vpop.f32.mrf.mxu0
  %v892 = vadd.f32 0.0, %v891
  %893 = vmatmul.f32.gmra.mxu0 %v779
  %v894 = vpop.f32.mrf.mxu0
  %v895 = vadd.f32 0.0, %v894
  %896 = vmatmul.f32.gmra.mxu0 %v782
  %v897 = vpop.f32.mrf.mxu0
  %v898 = vadd.f32 0.0, %v897
  %899 = vmatmul.f32.gmra.mxu0 %v785
  %v900 = vpop.f32.mrf.mxu0
  %v901 = vadd.f32 0.0, %v900
  %902 = vmatmul.f32.gmra.mxu0 %v788
  %v903 = vpop.f32.mrf.mxu0
  %v904 = vadd.f32 0.0, %v903
  %905 = vmatmul.f32.gmra.mxu0 %v791
  %v906 = vpop.f32.mrf.mxu0
  %v907 = vadd.f32 0.0, %v906
  %908 = vmatmul.f32.gmra.mxu0 %v794
  %v909 = vpop.f32.mrf.mxu0
  %v910 = vadd.f32 0.0, %v909
  %911 = vmatmul.f32.gmra.mxu0 %v797
  %v912 = vpop.f32.mrf.mxu0
  %v913 = vadd.f32 0.0, %v912
  %914 = vmatmul.f32.gmra.mxu0 %v800
  %v915 = vpop.f32.mrf.mxu0
  %v916 = vadd.f32 0.0, %v915
  %917 = vmatmul.f32.gmra.mxu0 %v803
  %v918 = vpop.f32.mrf.mxu0
  %v919 = vadd.f32 0.0, %v918
  %920 = vmatmul.f32.gmra.mxu0 %v806
  %v921 = vpop.f32.mrf.mxu0
  %v922 = vadd.f32 0.0, %v921
  %923 = vmatmul.f32.gmra.mxu0 %v809
  %v924 = vpop.f32.mrf.mxu0
  %v925 = vadd.f32 0.0, %v924
  %926 = vmatmul.f32.gmra.mxu0 %v812
  %v927 = vpop.f32.mrf.mxu0
  %v928 = vadd.f32 0.0, %v927
  %929 = vmatmul.f32.gmra.mxu0 %v815
  %v930 = vpop.f32.mrf.mxu0
  %v931 = vadd.f32 0.0, %v930
  %932 = vmatmul.f32.gmra.mxu0 %v818
  %v933 = vpop.f32.mrf.mxu0
  %v934 = vadd.f32 0.0, %v933
  %935 = vmatmul.f32.gmra.mxu0 %v821
  %v936 = vpop.f32.mrf.mxu0
  %v937 = vadd.f32 0.0, %v936
  %938 = vmatmul.f32.gmra.mxu0 %v824
  %v939 = vpop.f32.mrf.mxu0
  %v940 = vadd.f32 0.0, %v939
  %941 = vmatmul.f32.gmra.mxu0 %v827
  %v942 = vpop.f32.mrf.mxu0
  %v943 = vadd.f32 0.0, %v942
  %944 = vmatmul.f32.gmra.mxu0 %v830
  %v945 = vpop.f32.mrf.mxu0
  %v946 = vadd.f32 0.0, %v945
  %947 = vmatmul.f32.gmra.mxu0 %v833
  %v948 = vpop.f32.mrf.mxu0
  %v949 = vadd.f32 0.0, %v948
  %950 = vmatmul.f32.gmra.mxu0 %v836
  %v951 = vpop.f32.mrf.mxu0
  %v952 = vadd.f32 0.0, %v951
  %953 = vmatmul.f32.gmra.mxu0 %v839
  %v954 = vpop.f32.mrf.mxu0
  %v955 = vadd.f32 0.0, %v954
  %956 = vmatmul.f32.gmra.mxu0 %v842
  %v957 = vpop.f32.mrf.mxu0
  %v958 = vadd.f32 0.0, %v957
  %959 = vmatmul.f32.gmra.mxu0 %v845
  %v960 = vpop.f32.mrf.mxu0
  %v961 = vadd.f32 0.0, %v960
  %962 = vmatmul.f32.gmra.mxu0 %v848
  %v963 = vpop.f32.mrf.mxu0
  %v964 = vadd.f32 0.0, %v963
  %965 = vmatmul.f32.gmra.mxu0 %v851
  %v966 = vpop.f32.mrf.mxu0
  %v967 = vadd.f32 0.0, %v966
  %968 = vdwg.mxu0
  %v969 = vadd.f32 %v628, %v874
  %v970 = vadd.f32 %v631, %v877
  %v971 = vadd.f32 %v634, %v880
  %v972 = vadd.f32 %v637, %v883
  %v973 = vadd.f32 %v640, %v886
  %v974 = vadd.f32 %v643, %v889
  %v975 = vadd.f32 %v646, %v892
  %v976 = vadd.f32 %v649, %v895
  %v977 = vadd.f32 %v652, %v898
  %v978 = vadd.f32 %v655, %v901
  %v979 = vadd.f32 %v658, %v904
  %v980 = vadd.f32 %v661, %v907
  %v981 = vadd.f32 %v664, %v910
  %v982 = vadd.f32 %v667, %v913
  %v983 = vadd.f32 %v670, %v916
  %v984 = vadd.f32 %v673, %v919
  %v985 = vadd.f32 %v676, %v922
  %v986 = vadd.f32 %v679, %v925
  %v987 = vadd.f32 %v682, %v928
  %v988 = vadd.f32 %v685, %v931
  %v989 = vadd.f32 %v688, %v934
  %v990 = vadd.f32 %v691, %v937
  %v991 = vadd.f32 %v694, %v940
  %v992 = vadd.f32 %v697, %v943
  %v993 = vadd.f32 %v700, %v946
  %v994 = vadd.f32 %v703, %v949
  %v995 = vadd.f32 %v706, %v952
  %v996 = vadd.f32 %v709, %v955
  %v997 = vadd.f32 %v712, %v958
  %v998 = vadd.f32 %v715, %v961
  %v999 = vadd.f32 %v718, %v964
  %v1000 = vadd.f32 %v721, %v967
  %v1001 = vld [vmem:[%s31] sm:$0xff]
  %v1002 = vld [vmem:[%s31 + $0x8] sm:$0xff]
  %v1003 = vld [vmem:[%s31 + $0x18] sm:$0xff]
  %v1004 = vld [vmem:[%s31 + $0x20] sm:$0xff]
  %v1005 = vld [vmem:[%s31 + $0x30] sm:$0xff]
  %v1006 = vld [vmem:[%s31 + $0x38] sm:$0xff]
  %v1007 = vld [vmem:[%s31 + $0x48] sm:$0xff]
  %v1008 = vld [vmem:[%s31 + $0x50] sm:$0xff]
  %v1009 = vld [vmem:[%s31 + $0x60] sm:$0xff]
  %v1010 = vld [vmem:[%s31 + $0x68] sm:$0xff]
  %v1011 = vld [vmem:[%s31 + $0x78] sm:$0xff]
  %v1012 = vld [vmem:[%s31 + $0x80] sm:$0xff]
  %v1013 = vld [vmem:[%s31 + $0x90] sm:$0xff]
  %v1014 = vld [vmem:[%s31 + $0x98] sm:$0xff]
  %v1015 = vld [vmem:[%s31 + $0xa8] sm:$0xff]
  %v1016 = vld [vmem:[%s31 + $0xb0] sm:$0xff]
  %v1017 = vld [vmem:[%s31 + $0xc0] sm:$0xff]
  %v1018 = vld [vmem:[%s31 + $0xc8] sm:$0xff]
  %v1019 = vld [vmem:[%s31 + $0xd8] sm:$0xff]
  %v1020 = vld [vmem:[%s31 + $0xe0] sm:$0xff]
  %v1021 = vld [vmem:[%s31 + $0xf0] sm:$0xff]
  %v1022 = vld [vmem:[%s31 + $0xf8] sm:$0xff]
  %v1023 = vld [vmem:[%s31 + $0x108] sm:$0xff]
  %v1024 = vld [vmem:[%s31 + $0x110] sm:$0xff]
  %v1025 = vld [vmem:[%s31 + $0x120] sm:$0xff]
  %v1026 = vld [vmem:[%s31 + $0x128] sm:$0xff]
  %v1027 = vld [vmem:[%s31 + $0x138] sm:$0xff]
  %v1028 = vld [vmem:[%s31 + $0x140] sm:$0xff]
  %v1029 = vld [vmem:[%s31 + $0x150] sm:$0xff]
  %v1030 = vld [vmem:[%s31 + $0x158] sm:$0xff]
  %v1031 = vld [vmem:[%s31 + $0x168] sm:$0xff]
  %v1032 = vld [vmem:[%s31 + $0x170] sm:$0xff]
  %s1033 = scalar_lea.vmem %s3, 12
  %v1034 = vld [vmem:[%s1033] sm:$0xf]
  %v1036 = vsel %vm22, %v1001, 0
  %v1039 = vsel %vm22, %v1002, 0
  %v1042 = vsel %vm22, %v1003, 0
  %v1045 = vsel %vm22, %v1004, 0
  %v1048 = vsel %vm22, %v1005, 0
  %v1051 = vsel %vm22, %v1006, 0
  %v1054 = vsel %vm22, %v1007, 0
  %v1057 = vsel %vm22, %v1008, 0
  %v1060 = vsel %vm22, %v1009, 0
  %v1063 = vsel %vm22, %v1010, 0
  %v1066 = vsel %vm22, %v1011, 0
  %v1069 = vsel %vm22, %v1012, 0
  %v1072 = vsel %vm22, %v1013, 0
  %v1075 = vsel %vm22, %v1014, 0
  %v1078 = vsel %vm22, %v1015, 0
  %v1081 = vsel %vm22, %v1016, 0
  %v1084 = vsel %vm22, %v1017, 0
  %v1087 = vsel %vm22, %v1018, 0
  %v1090 = vsel %vm22, %v1019, 0
  %v1093 = vsel %vm22, %v1020, 0
  %v1096 = vsel %vm22, %v1021, 0
  %v1099 = vsel %vm22, %v1022, 0
  %v1102 = vsel %vm22, %v1023, 0
  %v1105 = vsel %vm22, %v1024, 0
  %v1108 = vsel %vm22, %v1025, 0
  %v1111 = vsel %vm22, %v1026, 0
  %v1114 = vsel %vm22, %v1027, 0
  %v1117 = vsel %vm22, %v1028, 0
  %v1120 = vsel %vm22, %v1029, 0
  %v1123 = vsel %vm22, %v1030, 0
  %v1126 = vsel %vm22, %v1031, 0
  %v1129 = vsel %vm22, %v1032, 0
  %v1132 = vsel %vm394, %v1034, 0
  %1134 = vmatpush.msra.mxu0 0.0
  %1135 = vmatpush.msra.mxu0 0.0
  %1136 = vmatpush.msra.mxu0 0.0
  %1137 = vmatpush.msra.mxu0 0.0
  %1138 = vmatpush.msra.mxu0 0.0
  %1139 = vmatpush.msra.mxu0 0.0
  %1140 = vmatpush.msra.mxu0 0.0
  %1141 = vmatpush.msra.mxu0 0.0
  %1142 = vmatpush.msra.mxu0 0.0
  %1143 = vmatpush.msra.mxu0 0.0
  %1144 = vmatpush.msra.mxu0 0.0
  %1145 = vmatpush.msra.mxu0 0.0
  %1146 = vmatpush.msra.mxu0 0.0
  %1147 = vmatpush.msra.mxu0 0.0
  %1148 = vmatpush.msra.mxu0 0.0
  %1149 = vmatpush.msra.mxu0 %v1132
  %1150 = vmatmul.f32.gmra.mxu0 %v1036
  %v1151 = vpop.f32.mrf.mxu0
  %v1152 = vadd.f32 0.0, %v1151
  %1153 = vmatmul.f32.gmra.mxu0 %v1039
  %v1154 = vpop.f32.mrf.mxu0
  %v1155 = vadd.f32 0.0, %v1154
  %1156 = vmatmul.f32.gmra.mxu0 %v1042
  %v1157 = vpop.f32.mrf.mxu0
  %v1158 = vadd.f32 0.0, %v1157
  %1159 = vmatmul.f32.gmra.mxu0 %v1045
  %v1160 = vpop.f32.mrf.mxu0
  %v1161 = vadd.f32 0.0, %v1160
  %1162 = vmatmul.f32.gmra.mxu0 %v1048
  %v1163 = vpop.f32.mrf.mxu0
  %v1164 = vadd.f32 0.0, %v1163
  %1165 = vmatmul.f32.gmra.mxu0 %v1051
  %v1166 = vpop.f32.mrf.mxu0
  %v1167 = vadd.f32 0.0, %v1166
  %1168 = vmatmul.f32.gmra.mxu0 %v1054
  %v1169 = vpop.f32.mrf.mxu0
  %v1170 = vadd.f32 0.0, %v1169
  %1171 = vmatmul.f32.gmra.mxu0 %v1057
  %v1172 = vpop.f32.mrf.mxu0
  %v1173 = vadd.f32 0.0, %v1172
  %1174 = vmatmul.f32.gmra.mxu0 %v1060
  %v1175 = vpop.f32.mrf.mxu0
  %v1176 = vadd.f32 0.0, %v1175
  %1177 = vmatmul.f32.gmra.mxu0 %v1063
  %v1178 = vpop.f32.mrf.mxu0
  %v1179 = vadd.f32 0.0, %v1178
  %1180 = vmatmul.f32.gmra.mxu0 %v1066
  %v1181 = vpop.f32.mrf.mxu0
  %v1182 = vadd.f32 0.0, %v1181
  %1183 = vmatmul.f32.gmra.mxu0 %v1069
  %v1184 = vpop.f32.mrf.mxu0
  %v1185 = vadd.f32 0.0, %v1184
  %1186 = vmatmul.f32.gmra.mxu0 %v1072
  %v1187 = vpop.f32.mrf.mxu0
  %v1188 = vadd.f32 0.0, %v1187
  %1189 = vmatmul.f32.gmra.mxu0 %v1075
  %v1190 = vpop.f32.mrf.mxu0
  %v1191 = vadd.f32 0.0, %v1190
  %1192 = vmatmul.f32.gmra.mxu0 %v1078
  %v1193 = vpop.f32.mrf.mxu0
  %v1194 = vadd.f32 0.0, %v1193
  %1195 = vmatmul.f32.gmra.mxu0 %v1081
  %v1196 = vpop.f32.mrf.mxu0
  %v1197 = vadd.f32 0.0, %v1196
  %1198 = vmatmul.f32.gmra.mxu0 %v1084
  %v1199 = vpop.f32.mrf.mxu0
  %v1200 = vadd.f32 0.0, %v1199
  %1201 = vmatmul.f32.gmra.mxu0 %v1087
  %v1202 = vpop.f32.mrf.mxu0
  %v1203 = vadd.f32 0.0, %v1202
  %1204 = vmatmul.f32.gmra.mxu0 %v1090
  %v1205 = vpop.f32.mrf.mxu0
  %v1206 = vadd.f32 0.0, %v1205
  %1207 = vmatmul.f32.gmra.mxu0 %v1093
  %v1208 = vpop.f32.mrf.mxu0
  %v1209 = vadd.f32 0.0, %v1208
  %1210 = vmatmul.f32.gmra.mxu0 %v1096
  %v1211 = vpop.f32.mrf.mxu0
  %v1212 = vadd.f32 0.0, %v1211
  %1213 = vmatmul.f32.gmra.mxu0 %v1099
  %v1214 = vpop.f32.mrf.mxu0
  %v1215 = vadd.f32 0.0, %v1214
  %1216 = vmatmul.f32.gmra.mxu0 %v1102
  %v1217 = vpop.f32.mrf.mxu0
  %v1218 = vadd.f32 0.0, %v1217
  %1219 = vmatmul.f32.gmra.mxu0 %v1105
  %v1220 = vpop.f32.mrf.mxu0
  %v1221 = vadd.f32 0.0, %v1220
  %1222 = vmatmul.f32.gmra.mxu0 %v1108
  %v1223 = vpop.f32.mrf.mxu0
  %v1224 = vadd.f32 0.0, %v1223
  %1225 = vmatmul.f32.gmra.mxu0 %v1111
  %v1226 = vpop.f32.mrf.mxu0
  %v1227 = vadd.f32 0.0, %v1226
  %1228 = vmatmul.f32.gmra.mxu0 %v1114
  %v1229 = vpop.f32.mrf.mxu0
  %v1230 = vadd.f32 0.0, %v1229
  %1231 = vmatmul.f32.gmra.mxu0 %v1117
  %v1232 = vpop.f32.mrf.mxu0
  %v1233 = vadd.f32 0.0, %v1232
  %1234 = vmatmul.f32.gmra.mxu0 %v1120
  %v1235 = vpop.f32.mrf.mxu0
  %v1236 = vadd.f32 0.0, %v1235
  %1237 = vmatmul.f32.gmra.mxu0 %v1123
  %v1238 = vpop.f32.mrf.mxu0
  %v1239 = vadd.f32 0.0, %v1238
  %1240 = vmatmul.f32.gmra.mxu0 %v1126
  %v1241 = vpop.f32.mrf.mxu0
  %v1242 = vadd.f32 0.0, %v1241
  %1243 = vmatmul.f32.gmra.mxu0 %v1129
  %v1244 = vpop.f32.mrf.mxu0
  %v1245 = vadd.f32 0.0, %v1244
  %1246 = vdwg.mxu0
  %v1247 = vadd.f32 %v969, %v1152
  %v1248 = vadd.f32 %v970, %v1155
  %v1249 = vadd.f32 %v971, %v1158
  %v1250 = vadd.f32 %v972, %v1161
  %v1251 = vadd.f32 %v973, %v1164
  %v1252 = vadd.f32 %v974, %v1167
  %v1253 = vadd.f32 %v975, %v1170
  %v1254 = vadd.f32 %v976, %v1173
  %v1255 = vadd.f32 %v977, %v1176
  %v1256 = vadd.f32 %v978, %v1179
  %v1257 = vadd.f32 %v979, %v1182
  %v1258 = vadd.f32 %v980, %v1185
  %v1259 = vadd.f32 %v981, %v1188
  %v1260 = vadd.f32 %v982, %v1191
  %v1261 = vadd.f32 %v983, %v1194
  %v1262 = vadd.f32 %v984, %v1197
  %v1263 = vadd.f32 %v985, %v1200
  %v1264 = vadd.f32 %v986, %v1203
  %v1265 = vadd.f32 %v987, %v1206
  %v1266 = vadd.f32 %v988, %v1209
  %v1267 = vadd.f32 %v989, %v1212
  %v1268 = vadd.f32 %v990, %v1215
  %v1269 = vadd.f32 %v991, %v1218
  %v1270 = vadd.f32 %v992, %v1221
  %v1271 = vadd.f32 %v993, %v1224
  %v1272 = vadd.f32 %v994, %v1227
  %v1273 = vadd.f32 %v995, %v1230
  %v1274 = vadd.f32 %v996, %v1233
  %v1275 = vadd.f32 %v997, %v1236
  %v1276 = vadd.f32 %v998, %v1239
  %v1277 = vadd.f32 %v999, %v1242
  %v1278 = vadd.f32 %v1000, %v1245
  %v1279 = vld [vmem:[%s31 + $0x1] sm:$0xff]
  %v1280 = vld [vmem:[%s31 + $0x9] sm:$0xff]
  %v1281 = vld [vmem:[%s31 + $0x19] sm:$0xff]
  %v1282 = vld [vmem:[%s31 + $0x21] sm:$0xff]
  %v1283 = vld [vmem:[%s31 + $0x31] sm:$0xff]
  %v1284 = vld [vmem:[%s31 + $0x39] sm:$0xff]
  %v1285 = vld [vmem:[%s31 + $0x49] sm:$0xff]
  %v1286 = vld [vmem:[%s31 + $0x51] sm:$0xff]
  %v1287 = vld [vmem:[%s31 + $0x61] sm:$0xff]
  %v1288 = vld [vmem:[%s31 + $0x69] sm:$0xff]
  %v1289 = vld [vmem:[%s31 + $0x79] sm:$0xff]
  %v1290 = vld [vmem:[%s31 + $0x81] sm:$0xff]
  %v1291 = vld [vmem:[%s31 + $0x91] sm:$0xff]
  %v1292 = vld [vmem:[%s31 + $0x99] sm:$0xff]
  %v1293 = vld [vmem:[%s31 + $0xa9] sm:$0xff]
  %v1294 = vld [vmem:[%s31 + $0xb1] sm:$0xff]
  %v1295 = vld [vmem:[%s31 + $0xc1] sm:$0xff]
  %v1296 = vld [vmem:[%s31 + $0xc9] sm:$0xff]
  %v1297 = vld [vmem:[%s31 + $0xd9] sm:$0xff]
  %v1298 = vld [vmem:[%s31 + $0xe1] sm:$0xff]
  %v1299 = vld [vmem:[%s31 + $0xf1] sm:$0xff]
  %v1300 = vld [vmem:[%s31 + $0xf9] sm:$0xff]
  %v1301 = vld [vmem:[%s31 + $0x109] sm:$0xff]
  %v1302 = vld [vmem:[%s31 + $0x111] sm:$0xff]
  %v1303 = vld [vmem:[%s31 + $0x121] sm:$0xff]
  %v1304 = vld [vmem:[%s31 + $0x129] sm:$0xff]
  %v1305 = vld [vmem:[%s31 + $0x139] sm:$0xff]
  %v1306 = vld [vmem:[%s31 + $0x141] sm:$0xff]
  %v1307 = vld [vmem:[%s31 + $0x151] sm:$0xff]
  %v1308 = vld [vmem:[%s31 + $0x159] sm:$0xff]
  %v1309 = vld [vmem:[%s31 + $0x169] sm:$0xff]
  %v1310 = vld [vmem:[%s31 + $0x171] sm:$0xff]
  %s1311 = scalar_lea.vmem %s3, 16
  %v1312 = vld [vmem:[%s1311] sm:$0xf]
  %v1314 = vsel %vm22, %v1279, 0
  %v1317 = vsel %vm22, %v1280, 0
  %v1320 = vsel %vm22, %v1281, 0
  %v1323 = vsel %vm22, %v1282, 0
  %v1326 = vsel %vm22, %v1283, 0
  %v1329 = vsel %vm22, %v1284, 0
  %v1332 = vsel %vm22, %v1285, 0
  %v1335 = vsel %vm22, %v1286, 0
  %v1338 = vsel %vm22, %v1287, 0
  %v1341 = vsel %vm22, %v1288, 0
  %v1344 = vsel %vm22, %v1289, 0
  %v1347 = vsel %vm22, %v1290, 0
  %v1350 = vsel %vm22, %v1291, 0
  %v1353 = vsel %vm22, %v1292, 0
  %v1356 = vsel %vm22, %v1293, 0
  %v1359 = vsel %vm22, %v1294, 0
  %v1362 = vsel %vm22, %v1295, 0
  %v1365 = vsel %vm22, %v1296, 0
  %v1368 = vsel %vm22, %v1297, 0
  %v1371 = vsel %vm22, %v1298, 0
  %v1374 = vsel %vm22, %v1299, 0
  %v1377 = vsel %vm22, %v1300, 0
  %v1380 = vsel %vm22, %v1301, 0
  %v1383 = vsel %vm22, %v1302, 0
  %v1386 = vsel %vm22, %v1303, 0
  %v1389 = vsel %vm22, %v1304, 0
  %v1392 = vsel %vm22, %v1305, 0
  %v1395 = vsel %vm22, %v1306, 0
  %v1398 = vsel %vm22, %v1307, 0
  %v1401 = vsel %vm22, %v1308, 0
  %v1404 = vsel %vm22, %v1309, 0
  %v1407 = vsel %vm22, %v1310, 0
  %v1410 = vsel %vm394, %v1312, 0
  %1412 = vmatpush.msra.mxu0 0.0
  %1413 = vmatpush.msra.mxu0 0.0
  %1414 = vmatpush.msra.mxu0 0.0
  %1415 = vmatpush.msra.mxu0 0.0
  %1416 = vmatpush.msra.mxu0 0.0
  %1417 = vmatpush.msra.mxu0 0.0
  %1418 = vmatpush.msra.mxu0 0.0
  %1419 = vmatpush.msra.mxu0 0.0
  %1420 = vmatpush.msra.mxu0 0.0
  %1421 = vmatpush.msra.mxu0 0.0
  %1422 = vmatpush.msra.mxu0 0.0
  %1423 = vmatpush.msra.mxu0 0.0
  %1424 = vmatpush.msra.mxu0 0.0
  %1425 = vmatpush.msra.mxu0 0.0
  %1426 = vmatpush.msra.mxu0 0.0
  %1427 = vmatpush.msra.mxu0 %v1410
  %1428 = vmatmul.f32.gmra.mxu0 %v1314
  %v1429 = vpop.f32.mrf.mxu0
  %v1430 = vadd.f32 0.0, %v1429
  %1431 = vmatmul.f32.gmra.mxu0 %v1317
  %v1432 = vpop.f32.mrf.mxu0
  %v1433 = vadd.f32 0.0, %v1432
  %1434 = vmatmul.f32.gmra.mxu0 %v1320
  %v1435 = vpop.f32.mrf.mxu0
  %v1436 = vadd.f32 0.0, %v1435
  %1437 = vmatmul.f32.gmra.mxu0 %v1323
  %v1438 = vpop.f32.mrf.mxu0
  %v1439 = vadd.f32 0.0, %v1438
  %1440 = vmatmul.f32.gmra.mxu0 %v1326
  %v1441 = vpop.f32.mrf.mxu0
  %v1442 = vadd.f32 0.0, %v1441
  %1443 = vmatmul.f32.gmra.mxu0 %v1329
  %v1444 = vpop.f32.mrf.mxu0
  %v1445 = vadd.f32 0.0, %v1444
  %1446 = vmatmul.f32.gmra.mxu0 %v1332
  %v1447 = vpop.f32.mrf.mxu0
  %v1448 = vadd.f32 0.0, %v1447
  %1449 = vmatmul.f32.gmra.mxu0 %v1335
  %v1450 = vpop.f32.mrf.mxu0
  %v1451 = vadd.f32 0.0, %v1450
  %1452 = vmatmul.f32.gmra.mxu0 %v1338
  %v1453 = vpop.f32.mrf.mxu0
  %v1454 = vadd.f32 0.0, %v1453
  %1455 = vmatmul.f32.gmra.mxu0 %v1341
  %v1456 = vpop.f32.mrf.mxu0
  %v1457 = vadd.f32 0.0, %v1456
  %1458 = vmatmul.f32.gmra.mxu0 %v1344
  %v1459 = vpop.f32.mrf.mxu0
  %v1460 = vadd.f32 0.0, %v1459
  %1461 = vmatmul.f32.gmra.mxu0 %v1347
  %v1462 = vpop.f32.mrf.mxu0
  %v1463 = vadd.f32 0.0, %v1462
  %1464 = vmatmul.f32.gmra.mxu0 %v1350
  %v1465 = vpop.f32.mrf.mxu0
  %v1466 = vadd.f32 0.0, %v1465
  %1467 = vmatmul.f32.gmra.mxu0 %v1353
  %v1468 = vpop.f32.mrf.mxu0
  %v1469 = vadd.f32 0.0, %v1468
  %1470 = vmatmul.f32.gmra.mxu0 %v1356
  %v1471 = vpop.f32.mrf.mxu0
  %v1472 = vadd.f32 0.0, %v1471
  %1473 = vmatmul.f32.gmra.mxu0 %v1359
  %v1474 = vpop.f32.mrf.mxu0
  %v1475 = vadd.f32 0.0, %v1474
  %1476 = vmatmul.f32.gmra.mxu0 %v1362
  %v1477 = vpop.f32.mrf.mxu0
  %v1478 = vadd.f32 0.0, %v1477
  %1479 = vmatmul.f32.gmra.mxu0 %v1365
  %v1480 = vpop.f32.mrf.mxu0
  %v1481 = vadd.f32 0.0, %v1480
  %1482 = vmatmul.f32.gmra.mxu0 %v1368
  %v1483 = vpop.f32.mrf.mxu0
  %v1484 = vadd.f32 0.0, %v1483
  %1485 = vmatmul.f32.gmra.mxu0 %v1371
  %v1486 = vpop.f32.mrf.mxu0
  %v1487 = vadd.f32 0.0, %v1486
  %1488 = vmatmul.f32.gmra.mxu0 %v1374
  %v1489 = vpop.f32.mrf.mxu0
  %v1490 = vadd.f32 0.0, %v1489
  %1491 = vmatmul.f32.gmra.mxu0 %v1377
  %v1492 = vpop.f32.mrf.mxu0
  %v1493 = vadd.f32 0.0, %v1492
  %1494 = vmatmul.f32.gmra.mxu0 %v1380
  %v1495 = vpop.f32.mrf.mxu0
  %v1496 = vadd.f32 0.0, %v1495
  %1497 = vmatmul.f32.gmra.mxu0 %v1383
  %v1498 = vpop.f32.mrf.mxu0
  %v1499 = vadd.f32 0.0, %v1498
  %1500 = vmatmul.f32.gmra.mxu0 %v1386
  %v1501 = vpop.f32.mrf.mxu0
  %v1502 = vadd.f32 0.0, %v1501
  %1503 = vmatmul.f32.gmra.mxu0 %v1389
  %v1504 = vpop.f32.mrf.mxu0
  %v1505 = vadd.f32 0.0, %v1504
  %1506 = vmatmul.f32.gmra.mxu0 %v1392
  %v1507 = vpop.f32.mrf.mxu0
  %v1508 = vadd.f32 0.0, %v1507
  %1509 = vmatmul.f32.gmra.mxu0 %v1395
  %v1510 = vpop.f32.mrf.mxu0
  %v1511 = vadd.f32 0.0, %v1510
  %1512 = vmatmul.f32.gmra.mxu0 %v1398
  %v1513 = vpop.f32.mrf.mxu0
  %v1514 = vadd.f32 0.0, %v1513
  %1515 = vmatmul.f32.gmra.mxu0 %v1401
  %v1516 = vpop.f32.mrf.mxu0
  %v1517 = vadd.f32 0.0, %v1516
  %1518 = vmatmul.f32.gmra.mxu0 %v1404
  %v1519 = vpop.f32.mrf.mxu0
  %v1520 = vadd.f32 0.0, %v1519
  %1521 = vmatmul.f32.gmra.mxu0 %v1407
  %v1522 = vpop.f32.mrf.mxu0
  %v1523 = vadd.f32 0.0, %v1522
  %1524 = vdwg.mxu0
  %v1525 = vadd.f32 %v1247, %v1430
  %v1526 = vadd.f32 %v1248, %v1433
  %v1527 = vadd.f32 %v1249, %v1436
  %v1528 = vadd.f32 %v1250, %v1439
  %v1529 = vadd.f32 %v1251, %v1442
  %v1530 = vadd.f32 %v1252, %v1445
  %v1531 = vadd.f32 %v1253, %v1448
  %v1532 = vadd.f32 %v1254, %v1451
  %v1533 = vadd.f32 %v1255, %v1454
  %v1534 = vadd.f32 %v1256, %v1457
  %v1535 = vadd.f32 %v1257, %v1460
  %v1536 = vadd.f32 %v1258, %v1463
  %v1537 = vadd.f32 %v1259, %v1466
  %v1538 = vadd.f32 %v1260, %v1469
  %v1539 = vadd.f32 %v1261, %v1472
  %v1540 = vadd.f32 %v1262, %v1475
  %v1541 = vadd.f32 %v1263, %v1478
  %v1542 = vadd.f32 %v1264, %v1481
  %v1543 = vadd.f32 %v1265, %v1484
  %v1544 = vadd.f32 %v1266, %v1487
  %v1545 = vadd.f32 %v1267, %v1490
  %v1546 = vadd.f32 %v1268, %v1493
  %v1547 = vadd.f32 %v1269, %v1496
  %v1548 = vadd.f32 %v1270, %v1499
  %v1549 = vadd.f32 %v1271, %v1502
  %v1550 = vadd.f32 %v1272, %v1505
  %v1551 = vadd.f32 %v1273, %v1508
  %v1552 = vadd.f32 %v1274, %v1511
  %v1553 = vadd.f32 %v1275, %v1514
  %v1554 = vadd.f32 %v1276, %v1517
  %v1555 = vadd.f32 %v1277, %v1520
  %v1556 = vadd.f32 %v1278, %v1523
  %v1557 = vld [vmem:[%s31 + $0x2] sm:$0xff]
  %v1558 = vld [vmem:[%s31 + $0xa] sm:$0xff]
  %v1559 = vld [vmem:[%s31 + $0x1a] sm:$0xff]
  %v1560 = vld [vmem:[%s31 + $0x22] sm:$0xff]
  %v1561 = vld [vmem:[%s31 + $0x32] sm:$0xff]
  %v1562 = vld [vmem:[%s31 + $0x3a] sm:$0xff]
  %v1563 = vld [vmem:[%s31 + $0x4a] sm:$0xff]
  %v1564 = vld [vmem:[%s31 + $0x52] sm:$0xff]
  %v1565 = vld [vmem:[%s31 + $0x62] sm:$0xff]
  %v1566 = vld [vmem:[%s31 + $0x6a] sm:$0xff]
  %v1567 = vld [vmem:[%s31 + $0x7a] sm:$0xff]
  %v1568 = vld [vmem:[%s31 + $0x82] sm:$0xff]
  %v1569 = vld [vmem:[%s31 + $0x92] sm:$0xff]
  %v1570 = vld [vmem:[%s31 + $0x9a] sm:$0xff]
  %v1571 = vld [vmem:[%s31 + $0xaa] sm:$0xff]
  %v1572 = vld [vmem:[%s31 + $0xb2] sm:$0xff]
  %v1573 = vld [vmem:[%s31 + $0xc2] sm:$0xff]
  %v1574 = vld [vmem:[%s31 + $0xca] sm:$0xff]
  %v1575 = vld [vmem:[%s31 + $0xda] sm:$0xff]
  %v1576 = vld [vmem:[%s31 + $0xe2] sm:$0xff]
  %v1577 = vld [vmem:[%s31 + $0xf2] sm:$0xff]
  %v1578 = vld [vmem:[%s31 + $0xfa] sm:$0xff]
  %v1579 = vld [vmem:[%s31 + $0x10a] sm:$0xff]
  %v1580 = vld [vmem:[%s31 + $0x112] sm:$0xff]
  %v1581 = vld [vmem:[%s31 + $0x122] sm:$0xff]
  %v1582 = vld [vmem:[%s31 + $0x12a] sm:$0xff]
  %v1583 = vld [vmem:[%s31 + $0x13a] sm:$0xff]
  %v1584 = vld [vmem:[%s31 + $0x142] sm:$0xff]
  %v1585 = vld [vmem:[%s31 + $0x152] sm:$0xff]
  %v1586 = vld [vmem:[%s31 + $0x15a] sm:$0xff]
  %v1587 = vld [vmem:[%s31 + $0x16a] sm:$0xff]
  %v1588 = vld [vmem:[%s31 + $0x172] sm:$0xff]
  %s1589 = scalar_lea.vmem %s3, 20
  %v1590 = vld [vmem:[%s1589] sm:$0xf]
  %v1592 = vsel %vm22, %v1557, 0
  %v1595 = vsel %vm22, %v1558, 0
  %v1598 = vsel %vm22, %v1559, 0
  %v1601 = vsel %vm22, %v1560, 0
  %v1604 = vsel %vm22, %v1561, 0
  %v1607 = vsel %vm22, %v1562, 0
  %v1610 = vsel %vm22, %v1563, 0
  %v1613 = vsel %vm22, %v1564, 0
  %v1616 = vsel %vm22, %v1565, 0
  %v1619 = vsel %vm22, %v1566, 0
  %v1622 = vsel %vm22, %v1567, 0
  %v1625 = vsel %vm22, %v1568, 0
  %v1628 = vsel %vm22, %v1569, 0
  %v1631 = vsel %vm22, %v1570, 0
  %v1634 = vsel %vm22, %v1571, 0
  %v1637 = vsel %vm22, %v1572, 0
  %v1640 = vsel %vm22, %v1573, 0
  %v1643 = vsel %vm22, %v1574, 0
  %v1646 = vsel %vm22, %v1575, 0
  %v1649 = vsel %vm22, %v1576, 0
  %v1652 = vsel %vm22, %v1577, 0
  %v1655 = vsel %vm22, %v1578, 0
  %v1658 = vsel %vm22, %v1579, 0
  %v1661 = vsel %vm22, %v1580, 0
  %v1664 = vsel %vm22, %v1581, 0
  %v1667 = vsel %vm22, %v1582, 0
  %v1670 = vsel %vm22, %v1583, 0
  %v1673 = vsel %vm22, %v1584, 0
  %v1676 = vsel %vm22, %v1585, 0
  %v1679 = vsel %vm22, %v1586, 0
  %v1682 = vsel %vm22, %v1587, 0
  %v1685 = vsel %vm22, %v1588, 0
  %v1688 = vsel %vm394, %v1590, 0
  %1690 = vmatpush.msra.mxu0 0.0
  %1691 = vmatpush.msra.mxu0 0.0
  %1692 = vmatpush.msra.mxu0 0.0
  %1693 = vmatpush.msra.mxu0 0.0
  %1694 = vmatpush.msra.mxu0 0.0
  %1695 = vmatpush.msra.mxu0 0.0
  %1696 = vmatpush.msra.mxu0 0.0
  %1697 = vmatpush.msra.mxu0 0.0
  %1698 = vmatpush.msra.mxu0 0.0
  %1699 = vmatpush.msra.mxu0 0.0
  %1700 = vmatpush.msra.mxu0 0.0
  %1701 = vmatpush.msra.mxu0 0.0
  %1702 = vmatpush.msra.mxu0 0.0
  %1703 = vmatpush.msra.mxu0 0.0
  %1704 = vmatpush.msra.mxu0 0.0
  %1705 = vmatpush.msra.mxu0 %v1688
  %1706 = vmatmul.f32.gmra.mxu0 %v1592
  %v1707 = vpop.f32.mrf.mxu0
  %v1708 = vadd.f32 0.0, %v1707
  %1709 = vmatmul.f32.gmra.mxu0 %v1595
  %v1710 = vpop.f32.mrf.mxu0
  %v1711 = vadd.f32 0.0, %v1710
  %1712 = vmatmul.f32.gmra.mxu0 %v1598
  %v1713 = vpop.f32.mrf.mxu0
  %v1714 = vadd.f32 0.0, %v1713
  %1715 = vmatmul.f32.gmra.mxu0 %v1601
  %v1716 = vpop.f32.mrf.mxu0
  %v1717 = vadd.f32 0.0, %v1716
  %1718 = vmatmul.f32.gmra.mxu0 %v1604
  %v1719 = vpop.f32.mrf.mxu0
  %v1720 = vadd.f32 0.0, %v1719
  %1721 = vmatmul.f32.gmra.mxu0 %v1607
  %v1722 = vpop.f32.mrf.mxu0
  %v1723 = vadd.f32 0.0, %v1722
  %1724 = vmatmul.f32.gmra.mxu0 %v1610
  %v1725 = vpop.f32.mrf.mxu0
  %v1726 = vadd.f32 0.0, %v1725
  %1727 = vmatmul.f32.gmra.mxu0 %v1613
  %v1728 = vpop.f32.mrf.mxu0
  %v1729 = vadd.f32 0.0, %v1728
  %1730 = vmatmul.f32.gmra.mxu0 %v1616
  %v1731 = vpop.f32.mrf.mxu0
  %v1732 = vadd.f32 0.0, %v1731
  %1733 = vmatmul.f32.gmra.mxu0 %v1619
  %v1734 = vpop.f32.mrf.mxu0
  %v1735 = vadd.f32 0.0, %v1734
  %1736 = vmatmul.f32.gmra.mxu0 %v1622
  %v1737 = vpop.f32.mrf.mxu0
  %v1738 = vadd.f32 0.0, %v1737
  %1739 = vmatmul.f32.gmra.mxu0 %v1625
  %v1740 = vpop.f32.mrf.mxu0
  %v1741 = vadd.f32 0.0, %v1740
  %1742 = vmatmul.f32.gmra.mxu0 %v1628
  %v1743 = vpop.f32.mrf.mxu0
  %v1744 = vadd.f32 0.0, %v1743
  %1745 = vmatmul.f32.gmra.mxu0 %v1631
  %v1746 = vpop.f32.mrf.mxu0
  %v1747 = vadd.f32 0.0, %v1746
  %1748 = vmatmul.f32.gmra.mxu0 %v1634
  %v1749 = vpop.f32.mrf.mxu0
  %v1750 = vadd.f32 0.0, %v1749
  %1751 = vmatmul.f32.gmra.mxu0 %v1637
  %v1752 = vpop.f32.mrf.mxu0
  %v1753 = vadd.f32 0.0, %v1752
  %1754 = vmatmul.f32.gmra.mxu0 %v1640
  %v1755 = vpop.f32.mrf.mxu0
  %v1756 = vadd.f32 0.0, %v1755
  %1757 = vmatmul.f32.gmra.mxu0 %v1643
  %v1758 = vpop.f32.mrf.mxu0
  %v1759 = vadd.f32 0.0, %v1758
  %1760 = vmatmul.f32.gmra.mxu0 %v1646
  %v1761 = vpop.f32.mrf.mxu0
  %v1762 = vadd.f32 0.0, %v1761
  %1763 = vmatmul.f32.gmra.mxu0 %v1649
  %v1764 = vpop.f32.mrf.mxu0
  %v1765 = vadd.f32 0.0, %v1764
  %1766 = vmatmul.f32.gmra.mxu0 %v1652
  %v1767 = vpop.f32.mrf.mxu0
  %v1768 = vadd.f32 0.0, %v1767
  %1769 = vmatmul.f32.gmra.mxu0 %v1655
  %v1770 = vpop.f32.mrf.mxu0
  %v1771 = vadd.f32 0.0, %v1770
  %1772 = vmatmul.f32.gmra.mxu0 %v1658
  %v1773 = vpop.f32.mrf.mxu0
  %v1774 = vadd.f32 0.0, %v1773
  %1775 = vmatmul.f32.gmra.mxu0 %v1661
  %v1776 = vpop.f32.mrf.mxu0
  %v1777 = vadd.f32 0.0, %v1776
  %1778 = vmatmul.f32.gmra.mxu0 %v1664
  %v1779 = vpop.f32.mrf.mxu0
  %v1780 = vadd.f32 0.0, %v1779
  %1781 = vmatmul.f32.gmra.mxu0 %v1667
  %v1782 = vpop.f32.mrf.mxu0
  %v1783 = vadd.f32 0.0, %v1782
  %1784 = vmatmul.f32.gmra.mxu0 %v1670
  %v1785 = vpop.f32.mrf.mxu0
  %v1786 = vadd.f32 0.0, %v1785
  %1787 = vmatmul.f32.gmra.mxu0 %v1673
  %v1788 = vpop.f32.mrf.mxu0
  %v1789 = vadd.f32 0.0, %v1788
  %1790 = vmatmul.f32.gmra.mxu0 %v1676
  %v1791 = vpop.f32.mrf.mxu0
  %v1792 = vadd.f32 0.0, %v1791
  %1793 = vmatmul.f32.gmra.mxu0 %v1679
  %v1794 = vpop.f32.mrf.mxu0
  %v1795 = vadd.f32 0.0, %v1794
  %1796 = vmatmul.f32.gmra.mxu0 %v1682
  %v1797 = vpop.f32.mrf.mxu0
  %v1798 = vadd.f32 0.0, %v1797
  %1799 = vmatmul.f32.gmra.mxu0 %v1685
  %v1800 = vpop.f32.mrf.mxu0
  %v1801 = vadd.f32 0.0, %v1800
  %1802 = vdwg.mxu0
  %v1803 = vadd.f32 %v1525, %v1708
  %v1804 = vadd.f32 %v1526, %v1711
  %v1805 = vadd.f32 %v1527, %v1714
  %v1806 = vadd.f32 %v1528, %v1717
  %v1807 = vadd.f32 %v1529, %v1720
  %v1808 = vadd.f32 %v1530, %v1723
  %v1809 = vadd.f32 %v1531, %v1726
  %v1810 = vadd.f32 %v1532, %v1729
  %v1811 = vadd.f32 %v1533, %v1732
  %v1812 = vadd.f32 %v1534, %v1735
  %v1813 = vadd.f32 %v1535, %v1738
  %v1814 = vadd.f32 %v1536, %v1741
  %v1815 = vadd.f32 %v1537, %v1744
  %v1816 = vadd.f32 %v1538, %v1747
  %v1817 = vadd.f32 %v1539, %v1750
  %v1818 = vadd.f32 %v1540, %v1753
  %v1819 = vadd.f32 %v1541, %v1756
  %v1820 = vadd.f32 %v1542, %v1759
  %v1821 = vadd.f32 %v1543, %v1762
  %v1822 = vadd.f32 %v1544, %v1765
  %v1823 = vadd.f32 %v1545, %v1768
  %v1824 = vadd.f32 %v1546, %v1771
  %v1825 = vadd.f32 %v1547, %v1774
  %v1826 = vadd.f32 %v1548, %v1777
  %v1827 = vadd.f32 %v1549, %v1780
  %v1828 = vadd.f32 %v1550, %v1783
  %v1829 = vadd.f32 %v1551, %v1786
  %v1830 = vadd.f32 %v1552, %v1789
  %v1831 = vadd.f32 %v1553, %v1792
  %v1832 = vadd.f32 %v1554, %v1795
  %v1833 = vadd.f32 %v1555, %v1798
  %v1834 = vadd.f32 %v1556, %v1801
  %s1835 = scalar_lea.vmem [#allocation2], 48
  %v1836 = vld [vmem:[%s1835] sm:$0xff]
  %v1837 = vld [vmem:[%s1835 + $0x8] sm:$0xff]
  %v1838 = vld [vmem:[%s1835 + $0x18] sm:$0xff]
  %v1839 = vld [vmem:[%s1835 + $0x20] sm:$0xff]
  %v1840 = vld [vmem:[%s1835 + $0x30] sm:$0xff]
  %v1841 = vld [vmem:[%s1835 + $0x38] sm:$0xff]
  %v1842 = vld [vmem:[%s1835 + $0x48] sm:$0xff]
  %v1843 = vld [vmem:[%s1835 + $0x50] sm:$0xff]
  %v1844 = vld [vmem:[%s1835 + $0x60] sm:$0xff]
  %v1845 = vld [vmem:[%s1835 + $0x68] sm:$0xff]
  %v1846 = vld [vmem:[%s1835 + $0x78] sm:$0xff]
  %v1847 = vld [vmem:[%s1835 + $0x80] sm:$0xff]
  %v1848 = vld [vmem:[%s1835 + $0x90] sm:$0xff]
  %v1849 = vld [vmem:[%s1835 + $0x98] sm:$0xff]
  %v1850 = vld [vmem:[%s1835 + $0xa8] sm:$0xff]
  %v1851 = vld [vmem:[%s1835 + $0xb0] sm:$0xff]
  %v1852 = vld [vmem:[%s1835 + $0xc0] sm:$0xff]
  %v1853 = vld [vmem:[%s1835 + $0xc8] sm:$0xff]
  %v1854 = vld [vmem:[%s1835 + $0xd8] sm:$0xff]
  %v1855 = vld [vmem:[%s1835 + $0xe0] sm:$0xff]
  %v1856 = vld [vmem:[%s1835 + $0xf0] sm:$0xff]
  %v1857 = vld [vmem:[%s1835 + $0xf8] sm:$0xff]
  %v1858 = vld [vmem:[%s1835 + $0x108] sm:$0xff]
  %v1859 = vld [vmem:[%s1835 + $0x110] sm:$0xff]
  %v1860 = vld [vmem:[%s1835 + $0x120] sm:$0xff]
  %v1861 = vld [vmem:[%s1835 + $0x128] sm:$0xff]
  %v1862 = vld [vmem:[%s1835 + $0x138] sm:$0xff]
  %v1863 = vld [vmem:[%s1835 + $0x140] sm:$0xff]
  %v1864 = vld [vmem:[%s1835 + $0x150] sm:$0xff]
  %v1865 = vld [vmem:[%s1835 + $0x158] sm:$0xff]
  %v1866 = vld [vmem:[%s1835 + $0x168] sm:$0xff]
  %v1867 = vld [vmem:[%s1835 + $0x170] sm:$0xff]
  %s1868 = scalar_lea.vmem %s3, 24
  %v1869 = vld [vmem:[%s1868] sm:$0xf]
  %v1871 = vsel %vm22, %v1836, 0
  %v1874 = vsel %vm22, %v1837, 0
  %v1877 = vsel %vm22, %v1838, 0
  %v1880 = vsel %vm22, %v1839, 0
  %v1883 = vsel %vm22, %v1840, 0
  %v1886 = vsel %vm22, %v1841, 0
  %v1889 = vsel %vm22, %v1842, 0
  %v1892 = vsel %vm22, %v1843, 0
  %v1895 = vsel %vm22, %v1844, 0
  %v1898 = vsel %vm22, %v1845, 0
  %v1901 = vsel %vm22, %v1846, 0
  %v1904 = vsel %vm22, %v1847, 0
  %v1907 = vsel %vm22, %v1848, 0
  %v1910 = vsel %vm22, %v1849, 0
  %v1913 = vsel %vm22, %v1850, 0
  %v1916 = vsel %vm22, %v1851, 0
  %v1919 = vsel %vm22, %v1852, 0
  %v1922 = vsel %vm22, %v1853, 0
  %v1925 = vsel %vm22, %v1854, 0
  %v1928 = vsel %vm22, %v1855, 0
  %v1931 = vsel %vm22, %v1856, 0
  %v1934 = vsel %vm22, %v1857, 0
  %v1937 = vsel %vm22, %v1858, 0
  %v1940 = vsel %vm22, %v1859, 0
  %v1943 = vsel %vm22, %v1860, 0
  %v1946 = vsel %vm22, %v1861, 0
  %v1949 = vsel %vm22, %v1862, 0
  %v1952 = vsel %vm22, %v1863, 0
  %v1955 = vsel %vm22, %v1864, 0
  %v1958 = vsel %vm22, %v1865, 0
  %v1961 = vsel %vm22, %v1866, 0
  %v1964 = vsel %vm22, %v1867, 0
  %v1967 = vsel %vm394, %v1869, 0
  %1969 = vmatpush.msra.mxu0 0.0
  %1970 = vmatpush.msra.mxu0 0.0
  %1971 = vmatpush.msra.mxu0 0.0
  %1972 = vmatpush.msra.mxu0 0.0
  %1973 = vmatpush.msra.mxu0 0.0
  %1974 = vmatpush.msra.mxu0 0.0
  %1975 = vmatpush.msra.mxu0 0.0
  %1976 = vmatpush.msra.mxu0 0.0
  %1977 = vmatpush.msra.mxu0 0.0
  %1978 = vmatpush.msra.mxu0 0.0
  %1979 = vmatpush.msra.mxu0 0.0
  %1980 = vmatpush.msra.mxu0 0.0
  %1981 = vmatpush.msra.mxu0 0.0
  %1982 = vmatpush.msra.mxu0 0.0
  %1983 = vmatpush.msra.mxu0 0.0
  %1984 = vmatpush.msra.mxu0 %v1967
  %1985 = vmatmul.f32.gmra.mxu0 %v1871
  %v1986 = vpop.f32.mrf.mxu0
  %v1987 = vadd.f32 0.0, %v1986
  %1988 = vmatmul.f32.gmra.mxu0 %v1874
  %v1989 = vpop.f32.mrf.mxu0
  %v1990 = vadd.f32 0.0, %v1989
  %1991 = vmatmul.f32.gmra.mxu0 %v1877
  %v1992 = vpop.f32.mrf.mxu0
  %v1993 = vadd.f32 0.0, %v1992
  %1994 = vmatmul.f32.gmra.mxu0 %v1880
  %v1995 = vpop.f32.mrf.mxu0
  %v1996 = vadd.f32 0.0, %v1995
  %1997 = vmatmul.f32.gmra.mxu0 %v1883
  %v1998 = vpop.f32.mrf.mxu0
  %v1999 = vadd.f32 0.0, %v1998
  %2000 = vmatmul.f32.gmra.mxu0 %v1886
  %v2001 = vpop.f32.mrf.mxu0
  %v2002 = vadd.f32 0.0, %v2001
  %2003 = vmatmul.f32.gmra.mxu0 %v1889
  %v2004 = vpop.f32.mrf.mxu0
  %v2005 = vadd.f32 0.0, %v2004
  %2006 = vmatmul.f32.gmra.mxu0 %v1892
  %v2007 = vpop.f32.mrf.mxu0
  %v2008 = vadd.f32 0.0, %v2007
  %2009 = vmatmul.f32.gmra.mxu0 %v1895
  %v2010 = vpop.f32.mrf.mxu0
  %v2011 = vadd.f32 0.0, %v2010
  %2012 = vmatmul.f32.gmra.mxu0 %v1898
  %v2013 = vpop.f32.mrf.mxu0
  %v2014 = vadd.f32 0.0, %v2013
  %2015 = vmatmul.f32.gmra.mxu0 %v1901
  %v2016 = vpop.f32.mrf.mxu0
  %v2017 = vadd.f32 0.0, %v2016
  %2018 = vmatmul.f32.gmra.mxu0 %v1904
  %v2019 = vpop.f32.mrf.mxu0
  %v2020 = vadd.f32 0.0, %v2019
  %2021 = vmatmul.f32.gmra.mxu0 %v1907
  %v2022 = vpop.f32.mrf.mxu0
  %v2023 = vadd.f32 0.0, %v2022
  %2024 = vmatmul.f32.gmra.mxu0 %v1910
  %v2025 = vpop.f32.mrf.mxu0
  %v2026 = vadd.f32 0.0, %v2025
  %2027 = vmatmul.f32.gmra.mxu0 %v1913
  %v2028 = vpop.f32.mrf.mxu0
  %v2029 = vadd.f32 0.0, %v2028
  %2030 = vmatmul.f32.gmra.mxu0 %v1916
  %v2031 = vpop.f32.mrf.mxu0
  %v2032 = vadd.f32 0.0, %v2031
  %2033 = vmatmul.f32.gmra.mxu0 %v1919
  %v2034 = vpop.f32.mrf.mxu0
  %v2035 = vadd.f32 0.0, %v2034
  %2036 = vmatmul.f32.gmra.mxu0 %v1922
  %v2037 = vpop.f32.mrf.mxu0
  %v2038 = vadd.f32 0.0, %v2037
  %2039 = vmatmul.f32.gmra.mxu0 %v1925
  %v2040 = vpop.f32.mrf.mxu0
  %v2041 = vadd.f32 0.0, %v2040
  %2042 = vmatmul.f32.gmra.mxu0 %v1928
  %v2043 = vpop.f32.mrf.mxu0
  %v2044 = vadd.f32 0.0, %v2043
  %2045 = vmatmul.f32.gmra.mxu0 %v1931
  %v2046 = vpop.f32.mrf.mxu0
  %v2047 = vadd.f32 0.0, %v2046
  %2048 = vmatmul.f32.gmra.mxu0 %v1934
  %v2049 = vpop.f32.mrf.mxu0
  %v2050 = vadd.f32 0.0, %v2049
  %2051 = vmatmul.f32.gmra.mxu0 %v1937
  %v2052 = vpop.f32.mrf.mxu0
  %v2053 = vadd.f32 0.0, %v2052
  %2054 = vmatmul.f32.gmra.mxu0 %v1940
  %v2055 = vpop.f32.mrf.mxu0
  %v2056 = vadd.f32 0.0, %v2055
  %2057 = vmatmul.f32.gmra.mxu0 %v1943
  %v2058 = vpop.f32.mrf.mxu0
  %v2059 = vadd.f32 0.0, %v2058
  %2060 = vmatmul.f32.gmra.mxu0 %v1946
  %v2061 = vpop.f32.mrf.mxu0
  %v2062 = vadd.f32 0.0, %v2061
  %2063 = vmatmul.f32.gmra.mxu0 %v1949
  %v2064 = vpop.f32.mrf.mxu0
  %v2065 = vadd.f32 0.0, %v2064
  %2066 = vmatmul.f32.gmra.mxu0 %v1952
  %v2067 = vpop.f32.mrf.mxu0
  %v2068 = vadd.f32 0.0, %v2067
  %2069 = vmatmul.f32.gmra.mxu0 %v1955
  %v2070 = vpop.f32.mrf.mxu0
  %v2071 = vadd.f32 0.0, %v2070
  %2072 = vmatmul.f32.gmra.mxu0 %v1958
  %v2073 = vpop.f32.mrf.mxu0
  %v2074 = vadd.f32 0.0, %v2073
  %2075 = vmatmul.f32.gmra.mxu0 %v1961
  %v2076 = vpop.f32.mrf.mxu0
  %v2077 = vadd.f32 0.0, %v2076
  %2078 = vmatmul.f32.gmra.mxu0 %v1964
  %v2079 = vpop.f32.mrf.mxu0
  %v2080 = vadd.f32 0.0, %v2079
  %2081 = vdwg.mxu0
  %v2082 = vadd.f32 %v1803, %v1987
  %v2083 = vadd.f32 %v1804, %v1990
  %v2084 = vadd.f32 %v1805, %v1993
  %v2085 = vadd.f32 %v1806, %v1996
  %v2086 = vadd.f32 %v1807, %v1999
  %v2087 = vadd.f32 %v1808, %v2002
  %v2088 = vadd.f32 %v1809, %v2005
  %v2089 = vadd.f32 %v1810, %v2008
  %v2090 = vadd.f32 %v1811, %v2011
  %v2091 = vadd.f32 %v1812, %v2014
  %v2092 = vadd.f32 %v1813, %v2017
  %v2093 = vadd.f32 %v1814, %v2020
  %v2094 = vadd.f32 %v1815, %v2023
  %v2095 = vadd.f32 %v1816, %v2026
  %v2096 = vadd.f32 %v1817, %v2029
  %v2097 = vadd.f32 %v1818, %v2032
  %v2098 = vadd.f32 %v1819, %v2035
  %v2099 = vadd.f32 %v1820, %v2038
  %v2100 = vadd.f32 %v1821, %v2041
  %v2101 = vadd.f32 %v1822, %v2044
  %v2102 = vadd.f32 %v1823, %v2047
  %v2103 = vadd.f32 %v1824, %v2050
  %v2104 = vadd.f32 %v1825, %v2053
  %v2105 = vadd.f32 %v1826, %v2056
  %v2106 = vadd.f32 %v1827, %v2059
  %v2107 = vadd.f32 %v1828, %v2062
  %v2108 = vadd.f32 %v1829, %v2065
  %v2109 = vadd.f32 %v1830, %v2068
  %v2110 = vadd.f32 %v1831, %v2071
  %v2111 = vadd.f32 %v1832, %v2074
  %v2112 = vadd.f32 %v1833, %v2077
  %v2113 = vadd.f32 %v1834, %v2080
  %v2114 = vld [vmem:[%s1835 + $0x1] sm:$0xff]
  %v2115 = vld [vmem:[%s1835 + $0x9] sm:$0xff]
  %v2116 = vld [vmem:[%s1835 + $0x19] sm:$0xff]
  %v2117 = vld [vmem:[%s1835 + $0x21] sm:$0xff]
  %v2118 = vld [vmem:[%s1835 + $0x31] sm:$0xff]
  %v2119 = vld [vmem:[%s1835 + $0x39] sm:$0xff]
  %v2120 = vld [vmem:[%s1835 + $0x49] sm:$0xff]
  %v2121 = vld [vmem:[%s1835 + $0x51] sm:$0xff]
  %v2122 = vld [vmem:[%s1835 + $0x61] sm:$0xff]
  %v2123 = vld [vmem:[%s1835 + $0x69] sm:$0xff]
  %v2124 = vld [vmem:[%s1835 + $0x79] sm:$0xff]
  %v2125 = vld [vmem:[%s1835 + $0x81] sm:$0xff]
  %v2126 = vld [vmem:[%s1835 + $0x91] sm:$0xff]
  %v2127 = vld [vmem:[%s1835 + $0x99] sm:$0xff]
  %v2128 = vld [vmem:[%s1835 + $0xa9] sm:$0xff]
  %v2129 = vld [vmem:[%s1835 + $0xb1] sm:$0xff]
  %v2130 = vld [vmem:[%s1835 + $0xc1] sm:$0xff]
  %v2131 = vld [vmem:[%s1835 + $0xc9] sm:$0xff]
  %v2132 = vld [vmem:[%s1835 + $0xd9] sm:$0xff]
  %v2133 = vld [vmem:[%s1835 + $0xe1] sm:$0xff]
  %v2134 = vld [vmem:[%s1835 + $0xf1] sm:$0xff]
  %v2135 = vld [vmem:[%s1835 + $0xf9] sm:$0xff]
  %v2136 = vld [vmem:[%s1835 + $0x109] sm:$0xff]
  %v2137 = vld [vmem:[%s1835 + $0x111] sm:$0xff]
  %v2138 = vld [vmem:[%s1835 + $0x121] sm:$0xff]
  %v2139 = vld [vmem:[%s1835 + $0x129] sm:$0xff]
  %v2140 = vld [vmem:[%s1835 + $0x139] sm:$0xff]
  %v2141 = vld [vmem:[%s1835 + $0x141] sm:$0xff]
  %v2142 = vld [vmem:[%s1835 + $0x151] sm:$0xff]
  %v2143 = vld [vmem:[%s1835 + $0x159] sm:$0xff]
  %v2144 = vld [vmem:[%s1835 + $0x169] sm:$0xff]
  %v2145 = vld [vmem:[%s1835 + $0x171] sm:$0xff]
  %s2146 = scalar_lea.vmem %s3, 28
  %v2147 = vld [vmem:[%s2146] sm:$0xf]
  %v2149 = vsel %vm22, %v2114, 0
  %v2152 = vsel %vm22, %v2115, 0
  %v2155 = vsel %vm22, %v2116, 0
  %v2158 = vsel %vm22, %v2117, 0
  %v2161 = vsel %vm22, %v2118, 0
  %v2164 = vsel %vm22, %v2119, 0
  %v2167 = vsel %vm22, %v2120, 0
  %v2170 = vsel %vm22, %v2121, 0
  %v2173 = vsel %vm22, %v2122, 0
  %v2176 = vsel %vm22, %v2123, 0
  %v2179 = vsel %vm22, %v2124, 0
  %v2182 = vsel %vm22, %v2125, 0
  %v2185 = vsel %vm22, %v2126, 0
  %v2188 = vsel %vm22, %v2127, 0
  %v2191 = vsel %vm22, %v2128, 0
  %v2194 = vsel %vm22, %v2129, 0
  %v2197 = vsel %vm22, %v2130, 0
  %v2200 = vsel %vm22, %v2131, 0
  %v2203 = vsel %vm22, %v2132, 0
  %v2206 = vsel %vm22, %v2133, 0
  %v2209 = vsel %vm22, %v2134, 0
  %v2212 = vsel %vm22, %v2135, 0
  %v2215 = vsel %vm22, %v2136, 0
  %v2218 = vsel %vm22, %v2137, 0
  %v2221 = vsel %vm22, %v2138, 0
  %v2224 = vsel %vm22, %v2139, 0
  %v2227 = vsel %vm22, %v2140, 0
  %v2230 = vsel %vm22, %v2141, 0
  %v2233 = vsel %vm22, %v2142, 0
  %v2236 = vsel %vm22, %v2143, 0
  %v2239 = vsel %vm22, %v2144, 0
  %v2242 = vsel %vm22, %v2145, 0
  %v2245 = vsel %vm394, %v2147, 0
  %2247 = vmatpush.msra.mxu0 0.0
  %2248 = vmatpush.msra.mxu0 0.0
  %2249 = vmatpush.msra.mxu0 0.0
  %2250 = vmatpush.msra.mxu0 0.0
  %2251 = vmatpush.msra.mxu0 0.0
  %2252 = vmatpush.msra.mxu0 0.0
  %2253 = vmatpush.msra.mxu0 0.0
  %2254 = vmatpush.msra.mxu0 0.0
  %2255 = vmatpush.msra.mxu0 0.0
  %2256 = vmatpush.msra.mxu0 0.0
  %2257 = vmatpush.msra.mxu0 0.0
  %2258 = vmatpush.msra.mxu0 0.0
  %2259 = vmatpush.msra.mxu0 0.0
  %2260 = vmatpush.msra.mxu0 0.0
  %2261 = vmatpush.msra.mxu0 0.0
  %2262 = vmatpush.msra.mxu0 %v2245
  %2263 = vmatmul.f32.gmra.mxu0 %v2149
  %v2264 = vpop.f32.mrf.mxu0
  %v2265 = vadd.f32 0.0, %v2264
  %2266 = vmatmul.f32.gmra.mxu0 %v2152
  %v2267 = vpop.f32.mrf.mxu0
  %v2268 = vadd.f32 0.0, %v2267
  %2269 = vmatmul.f32.gmra.mxu0 %v2155
  %v2270 = vpop.f32.mrf.mxu0
  %v2271 = vadd.f32 0.0, %v2270
  %2272 = vmatmul.f32.gmra.mxu0 %v2158
  %v2273 = vpop.f32.mrf.mxu0
  %v2274 = vadd.f32 0.0, %v2273
  %2275 = vmatmul.f32.gmra.mxu0 %v2161
  %v2276 = vpop.f32.mrf.mxu0
  %v2277 = vadd.f32 0.0, %v2276
  %2278 = vmatmul.f32.gmra.mxu0 %v2164
  %v2279 = vpop.f32.mrf.mxu0
  %v2280 = vadd.f32 0.0, %v2279
  %2281 = vmatmul.f32.gmra.mxu0 %v2167
  %v2282 = vpop.f32.mrf.mxu0
  %v2283 = vadd.f32 0.0, %v2282
  %2284 = vmatmul.f32.gmra.mxu0 %v2170
  %v2285 = vpop.f32.mrf.mxu0
  %v2286 = vadd.f32 0.0, %v2285
  %2287 = vmatmul.f32.gmra.mxu0 %v2173
  %v2288 = vpop.f32.mrf.mxu0
  %v2289 = vadd.f32 0.0, %v2288
  %2290 = vmatmul.f32.gmra.mxu0 %v2176
  %v2291 = vpop.f32.mrf.mxu0
  %v2292 = vadd.f32 0.0, %v2291
  %2293 = vmatmul.f32.gmra.mxu0 %v2179
  %v2294 = vpop.f32.mrf.mxu0
  %v2295 = vadd.f32 0.0, %v2294
  %2296 = vmatmul.f32.gmra.mxu0 %v2182
  %v2297 = vpop.f32.mrf.mxu0
  %v2298 = vadd.f32 0.0, %v2297
  %2299 = vmatmul.f32.gmra.mxu0 %v2185
  %v2300 = vpop.f32.mrf.mxu0
  %v2301 = vadd.f32 0.0, %v2300
  %2302 = vmatmul.f32.gmra.mxu0 %v2188
  %v2303 = vpop.f32.mrf.mxu0
  %v2304 = vadd.f32 0.0, %v2303
  %2305 = vmatmul.f32.gmra.mxu0 %v2191
  %v2306 = vpop.f32.mrf.mxu0
  %v2307 = vadd.f32 0.0, %v2306
  %2308 = vmatmul.f32.gmra.mxu0 %v2194
  %v2309 = vpop.f32.mrf.mxu0
  %v2310 = vadd.f32 0.0, %v2309
  %2311 = vmatmul.f32.gmra.mxu0 %v2197
  %v2312 = vpop.f32.mrf.mxu0
  %v2313 = vadd.f32 0.0, %v2312
  %2314 = vmatmul.f32.gmra.mxu0 %v2200
  %v2315 = vpop.f32.mrf.mxu0
  %v2316 = vadd.f32 0.0, %v2315
  %2317 = vmatmul.f32.gmra.mxu0 %v2203
  %v2318 = vpop.f32.mrf.mxu0
  %v2319 = vadd.f32 0.0, %v2318
  %2320 = vmatmul.f32.gmra.mxu0 %v2206
  %v2321 = vpop.f32.mrf.mxu0
  %v2322 = vadd.f32 0.0, %v2321
  %2323 = vmatmul.f32.gmra.mxu0 %v2209
  %v2324 = vpop.f32.mrf.mxu0
  %v2325 = vadd.f32 0.0, %v2324
  %2326 = vmatmul.f32.gmra.mxu0 %v2212
  %v2327 = vpop.f32.mrf.mxu0
  %v2328 = vadd.f32 0.0, %v2327
  %2329 = vmatmul.f32.gmra.mxu0 %v2215
  %v2330 = vpop.f32.mrf.mxu0
  %v2331 = vadd.f32 0.0, %v2330
  %2332 = vmatmul.f32.gmra.mxu0 %v2218
  %v2333 = vpop.f32.mrf.mxu0
  %v2334 = vadd.f32 0.0, %v2333
  %2335 = vmatmul.f32.gmra.mxu0 %v2221
  %v2336 = vpop.f32.mrf.mxu0
  %v2337 = vadd.f32 0.0, %v2336
  %2338 = vmatmul.f32.gmra.mxu0 %v2224
  %v2339 = vpop.f32.mrf.mxu0
  %v2340 = vadd.f32 0.0, %v2339
  %2341 = vmatmul.f32.gmra.mxu0 %v2227
  %v2342 = vpop.f32.mrf.mxu0
  %v2343 = vadd.f32 0.0, %v2342
  %2344 = vmatmul.f32.gmra.mxu0 %v2230
  %v2345 = vpop.f32.mrf.mxu0
  %v2346 = vadd.f32 0.0, %v2345
  %2347 = vmatmul.f32.gmra.mxu0 %v2233
  %v2348 = vpop.f32.mrf.mxu0
  %v2349 = vadd.f32 0.0, %v2348
  %2350 = vmatmul.f32.gmra.mxu0 %v2236
  %v2351 = vpop.f32.mrf.mxu0
  %v2352 = vadd.f32 0.0, %v2351
  %2353 = vmatmul.f32.gmra.mxu0 %v2239
  %v2354 = vpop.f32.mrf.mxu0
  %v2355 = vadd.f32 0.0, %v2354
  %2356 = vmatmul.f32.gmra.mxu0 %v2242
  %v2357 = vpop.f32.mrf.mxu0
  %v2358 = vadd.f32 0.0, %v2357
  %2359 = vdwg.mxu0
  %v2360 = vadd.f32 %v2082, %v2265
  %v2361 = vadd.f32 %v2083, %v2268
  %v2362 = vadd.f32 %v2084, %v2271
  %v2363 = vadd.f32 %v2085, %v2274
  %v2364 = vadd.f32 %v2086, %v2277
  %v2365 = vadd.f32 %v2087, %v2280
  %v2366 = vadd.f32 %v2088, %v2283
  %v2367 = vadd.f32 %v2089, %v2286
  %v2368 = vadd.f32 %v2090, %v2289
  %v2369 = vadd.f32 %v2091, %v2292
  %v2370 = vadd.f32 %v2092, %v2295
  %v2371 = vadd.f32 %v2093, %v2298
  %v2372 = vadd.f32 %v2094, %v2301
  %v2373 = vadd.f32 %v2095, %v2304
  %v2374 = vadd.f32 %v2096, %v2307
  %v2375 = vadd.f32 %v2097, %v2310
  %v2376 = vadd.f32 %v2098, %v2313
  %v2377 = vadd.f32 %v2099, %v2316
  %v2378 = vadd.f32 %v2100, %v2319
  %v2379 = vadd.f32 %v2101, %v2322
  %v2380 = vadd.f32 %v2102, %v2325
  %v2381 = vadd.f32 %v2103, %v2328
  %v2382 = vadd.f32 %v2104, %v2331
  %v2383 = vadd.f32 %v2105, %v2334
  %v2384 = vadd.f32 %v2106, %v2337
  %v2385 = vadd.f32 %v2107, %v2340
  %v2386 = vadd.f32 %v2108, %v2343
  %v2387 = vadd.f32 %v2109, %v2346
  %v2388 = vadd.f32 %v2110, %v2349
  %v2389 = vadd.f32 %v2111, %v2352
  %v2390 = vadd.f32 %v2112, %v2355
  %v2391 = vadd.f32 %v2113, %v2358
  %v2392 = vld [vmem:[%s1835 + $0x2] sm:$0xff]
  %v2393 = vld [vmem:[%s1835 + $0xa] sm:$0xff]
  %v2394 = vld [vmem:[%s1835 + $0x1a] sm:$0xff]
  %v2395 = vld [vmem:[%s1835 + $0x22] sm:$0xff]
  %v2396 = vld [vmem:[%s1835 + $0x32] sm:$0xff]
  %v2397 = vld [vmem:[%s1835 + $0x3a] sm:$0xff]
  %v2398 = vld [vmem:[%s1835 + $0x4a] sm:$0xff]
  %v2399 = vld [vmem:[%s1835 + $0x52] sm:$0xff]
  %v2400 = vld [vmem:[%s1835 + $0x62] sm:$0xff]
  %v2401 = vld [vmem:[%s1835 + $0x6a] sm:$0xff]
  %v2402 = vld [vmem:[%s1835 + $0x7a] sm:$0xff]
  %v2403 = vld [vmem:[%s1835 + $0x82] sm:$0xff]
  %v2404 = vld [vmem:[%s1835 + $0x92] sm:$0xff]
  %v2405 = vld [vmem:[%s1835 + $0x9a] sm:$0xff]
  %v2406 = vld [vmem:[%s1835 + $0xaa] sm:$0xff]
  %v2407 = vld [vmem:[%s1835 + $0xb2] sm:$0xff]
  %v2408 = vld [vmem:[%s1835 + $0xc2] sm:$0xff]
  %v2409 = vld [vmem:[%s1835 + $0xca] sm:$0xff]
  %v2410 = vld [vmem:[%s1835 + $0xda] sm:$0xff]
  %v2411 = vld [vmem:[%s1835 + $0xe2] sm:$0xff]
  %v2412 = vld [vmem:[%s1835 + $0xf2] sm:$0xff]
  %v2413 = vld [vmem:[%s1835 + $0xfa] sm:$0xff]
  %v2414 = vld [vmem:[%s1835 + $0x10a] sm:$0xff]
  %v2415 = vld [vmem:[%s1835 + $0x112] sm:$0xff]
  %v2416 = vld [vmem:[%s1835 + $0x122] sm:$0xff]
  %v2417 = vld [vmem:[%s1835 + $0x12a] sm:$0xff]
  %v2418 = vld [vmem:[%s1835 + $0x13a] sm:$0xff]
  %v2419 = vld [vmem:[%s1835 + $0x142] sm:$0xff]
  %v2420 = vld [vmem:[%s1835 + $0x152] sm:$0xff]
  %v2421 = vld [vmem:[%s1835 + $0x15a] sm:$0xff]
  %v2422 = vld [vmem:[%s1835 + $0x16a] sm:$0xff]
  %v2423 = vld [vmem:[%s1835 + $0x172] sm:$0xff]
  %s2424 = scalar_lea.vmem %s3, 32
  %v2425 = vld [vmem:[%s2424] sm:$0xf]
  %v2427 = vsel %vm22, %v2392, 0
  %v2430 = vsel %vm22, %v2393, 0
  %v2433 = vsel %vm22, %v2394, 0
  %v2436 = vsel %vm22, %v2395, 0
  %v2439 = vsel %vm22, %v2396, 0
  %v2442 = vsel %vm22, %v2397, 0
  %v2445 = vsel %vm22, %v2398, 0
  %v2448 = vsel %vm22, %v2399, 0
  %v2451 = vsel %vm22, %v2400, 0
  %v2454 = vsel %vm22, %v2401, 0
  %v2457 = vsel %vm22, %v2402, 0
  %v2460 = vsel %vm22, %v2403, 0
  %v2463 = vsel %vm22, %v2404, 0
  %v2466 = vsel %vm22, %v2405, 0
  %v2469 = vsel %vm22, %v2406, 0
  %v2472 = vsel %vm22, %v2407, 0
  %v2475 = vsel %vm22, %v2408, 0
  %v2478 = vsel %vm22, %v2409, 0
  %v2481 = vsel %vm22, %v2410, 0
  %v2484 = vsel %vm22, %v2411, 0
  %v2487 = vsel %vm22, %v2412, 0
  %v2490 = vsel %vm22, %v2413, 0
  %v2493 = vsel %vm22, %v2414, 0
  %v2496 = vsel %vm22, %v2415, 0
  %v2499 = vsel %vm22, %v2416, 0
  %v2502 = vsel %vm22, %v2417, 0
  %v2505 = vsel %vm22, %v2418, 0
  %v2508 = vsel %vm22, %v2419, 0
  %v2511 = vsel %vm22, %v2420, 0
  %v2514 = vsel %vm22, %v2421, 0
  %v2517 = vsel %vm22, %v2422, 0
  %v2520 = vsel %vm22, %v2423, 0
  %v2523 = vsel %vm394, %v2425, 0
  %2525 = vmatpush.msra.mxu0 0.0
  %2526 = vmatpush.msra.mxu0 0.0
  %2527 = vmatpush.msra.mxu0 0.0
  %2528 = vmatpush.msra.mxu0 0.0
  %2529 = vmatpush.msra.mxu0 0.0
  %2530 = vmatpush.msra.mxu0 0.0
  %2531 = vmatpush.msra.mxu0 0.0
  %2532 = vmatpush.msra.mxu0 0.0
  %2533 = vmatpush.msra.mxu0 0.0
  %2534 = vmatpush.msra.mxu0 0.0
  %2535 = vmatpush.msra.mxu0 0.0
  %2536 = vmatpush.msra.mxu0 0.0
  %2537 = vmatpush.msra.mxu0 0.0
  %2538 = vmatpush.msra.mxu0 0.0
  %2539 = vmatpush.msra.mxu0 0.0
  %2540 = vmatpush.msra.mxu0 %v2523
  %2541 = vmatmul.f32.gmra.mxu0 %v2427
  %v2542 = vpop.f32.mrf.mxu0
  %v2543 = vadd.f32 0.0, %v2542
  %2544 = vmatmul.f32.gmra.mxu0 %v2430
  %v2545 = vpop.f32.mrf.mxu0
  %v2546 = vadd.f32 0.0, %v2545
  %2547 = vmatmul.f32.gmra.mxu0 %v2433
  %v2548 = vpop.f32.mrf.mxu0
  %v2549 = vadd.f32 0.0, %v2548
  %2550 = vmatmul.f32.gmra.mxu0 %v2436
  %v2551 = vpop.f32.mrf.mxu0
  %v2552 = vadd.f32 0.0, %v2551
  %2553 = vmatmul.f32.gmra.mxu0 %v2439
  %v2554 = vpop.f32.mrf.mxu0
  %v2555 = vadd.f32 0.0, %v2554
  %2556 = vmatmul.f32.gmra.mxu0 %v2442
  %v2557 = vpop.f32.mrf.mxu0
  %v2558 = vadd.f32 0.0, %v2557
  %2559 = vmatmul.f32.gmra.mxu0 %v2445
  %v2560 = vpop.f32.mrf.mxu0
  %v2561 = vadd.f32 0.0, %v2560
  %2562 = vmatmul.f32.gmra.mxu0 %v2448
  %v2563 = vpop.f32.mrf.mxu0
  %v2564 = vadd.f32 0.0, %v2563
  %2565 = vmatmul.f32.gmra.mxu0 %v2451
  %v2566 = vpop.f32.mrf.mxu0
  %v2567 = vadd.f32 0.0, %v2566
  %2568 = vmatmul.f32.gmra.mxu0 %v2454
  %v2569 = vpop.f32.mrf.mxu0
  %v2570 = vadd.f32 0.0, %v2569
  %2571 = vmatmul.f32.gmra.mxu0 %v2457
  %v2572 = vpop.f32.mrf.mxu0
  %v2573 = vadd.f32 0.0, %v2572
  %2574 = vmatmul.f32.gmra.mxu0 %v2460
  %v2575 = vpop.f32.mrf.mxu0
  %v2576 = vadd.f32 0.0, %v2575
  %2577 = vmatmul.f32.gmra.mxu0 %v2463
  %v2578 = vpop.f32.mrf.mxu0
  %v2579 = vadd.f32 0.0, %v2578
  %2580 = vmatmul.f32.gmra.mxu0 %v2466
  %v2581 = vpop.f32.mrf.mxu0
  %v2582 = vadd.f32 0.0, %v2581
  %2583 = vmatmul.f32.gmra.mxu0 %v2469
  %v2584 = vpop.f32.mrf.mxu0
  %v2585 = vadd.f32 0.0, %v2584
  %2586 = vmatmul.f32.gmra.mxu0 %v2472
  %v2587 = vpop.f32.mrf.mxu0
  %v2588 = vadd.f32 0.0, %v2587
  %2589 = vmatmul.f32.gmra.mxu0 %v2475
  %v2590 = vpop.f32.mrf.mxu0
  %v2591 = vadd.f32 0.0, %v2590
  %2592 = vmatmul.f32.gmra.mxu0 %v2478
  %v2593 = vpop.f32.mrf.mxu0
  %v2594 = vadd.f32 0.0, %v2593
  %2595 = vmatmul.f32.gmra.mxu0 %v2481
  %v2596 = vpop.f32.mrf.mxu0
  %v2597 = vadd.f32 0.0, %v2596
  %2598 = vmatmul.f32.gmra.mxu0 %v2484
  %v2599 = vpop.f32.mrf.mxu0
  %v2600 = vadd.f32 0.0, %v2599
  %2601 = vmatmul.f32.gmra.mxu0 %v2487
  %v2602 = vpop.f32.mrf.mxu0
  %v2603 = vadd.f32 0.0, %v2602
  %2604 = vmatmul.f32.gmra.mxu0 %v2490
  %v2605 = vpop.f32.mrf.mxu0
  %v2606 = vadd.f32 0.0, %v2605
  %2607 = vmatmul.f32.gmra.mxu0 %v2493
  %v2608 = vpop.f32.mrf.mxu0
  %v2609 = vadd.f32 0.0, %v2608
  %2610 = vmatmul.f32.gmra.mxu0 %v2496
  %v2611 = vpop.f32.mrf.mxu0
  %v2612 = vadd.f32 0.0, %v2611
  %2613 = vmatmul.f32.gmra.mxu0 %v2499
  %v2614 = vpop.f32.mrf.mxu0
  %v2615 = vadd.f32 0.0, %v2614
  %2616 = vmatmul.f32.gmra.mxu0 %v2502
  %v2617 = vpop.f32.mrf.mxu0
  %v2618 = vadd.f32 0.0, %v2617
  %2619 = vmatmul.f32.gmra.mxu0 %v2505
  %v2620 = vpop.f32.mrf.mxu0
  %v2621 = vadd.f32 0.0, %v2620
  %2622 = vmatmul.f32.gmra.mxu0 %v2508
  %v2623 = vpop.f32.mrf.mxu0
  %v2624 = vadd.f32 0.0, %v2623
  %2625 = vmatmul.f32.gmra.mxu0 %v2511
  %v2626 = vpop.f32.mrf.mxu0
  %v2627 = vadd.f32 0.0, %v2626
  %2628 = vmatmul.f32.gmra.mxu0 %v2514
  %v2629 = vpop.f32.mrf.mxu0
  %v2630 = vadd.f32 0.0, %v2629
  %2631 = vmatmul.f32.gmra.mxu0 %v2517
  %v2632 = vpop.f32.mrf.mxu0
  %v2633 = vadd.f32 0.0, %v2632
  %2634 = vmatmul.f32.gmra.mxu0 %v2520
  %v2635 = vpop.f32.mrf.mxu0
  %v2636 = vadd.f32 0.0, %v2635
  %2637 = vdwg.mxu0
  %v2638 = vadd.f32 %v2360, %v2543
  %v2639 = vadd.f32 %v2361, %v2546
  %v2640 = vadd.f32 %v2362, %v2549
  %v2641 = vadd.f32 %v2363, %v2552
  %v2642 = vadd.f32 %v2364, %v2555
  %v2643 = vadd.f32 %v2365, %v2558
  %v2644 = vadd.f32 %v2366, %v2561
  %v2645 = vadd.f32 %v2367, %v2564
  %v2646 = vadd.f32 %v2368, %v2567
  %v2647 = vadd.f32 %v2369, %v2570
  %v2648 = vadd.f32 %v2370, %v2573
  %v2649 = vadd.f32 %v2371, %v2576
  %v2650 = vadd.f32 %v2372, %v2579
  %v2651 = vadd.f32 %v2373, %v2582
  %v2652 = vadd.f32 %v2374, %v2585
  %v2653 = vadd.f32 %v2375, %v2588
  %v2654 = vadd.f32 %v2376, %v2591
  %v2655 = vadd.f32 %v2377, %v2594
  %v2656 = vadd.f32 %v2378, %v2597
  %v2657 = vadd.f32 %v2379, %v2600
  %v2658 = vadd.f32 %v2380, %v2603
  %v2659 = vadd.f32 %v2381, %v2606
  %v2660 = vadd.f32 %v2382, %v2609
  %v2661 = vadd.f32 %v2383, %v2612
  %v2662 = vadd.f32 %v2384, %v2615
  %v2663 = vadd.f32 %v2385, %v2618
  %v2664 = vadd.f32 %v2386, %v2621
  %v2665 = vadd.f32 %v2387, %v2624
  %v2666 = vadd.f32 %v2388, %v2627
  %v2667 = vadd.f32 %v2389, %v2630
  %v2668 = vadd.f32 %v2390, %v2633
  %v2669 = vadd.f32 %v2391, %v2636
  %v2670 = vsel %vm22, %v2638, 0.0
  %v2671 = vsel %vm22, %v2639, 0.0
  %v2672 = vadd.f32 %v2670, %v2671
  %v2673 = vsel %vm22, %v2640, 0.0
  %v2674 = vadd.f32 %v2672, %v2673
  %v2675 = vsel %vm22, %v2641, 0.0
  %v2676 = vadd.f32 %v2674, %v2675
  %v2677 = vsel %vm22, %v2642, 0.0
  %v2678 = vadd.f32 %v2676, %v2677
  %v2679 = vsel %vm22, %v2643, 0.0
  %v2680 = vadd.f32 %v2678, %v2679
  %v2681 = vsel %vm22, %v2644, 0.0
  %v2682 = vadd.f32 %v2680, %v2681
  %v2683 = vsel %vm22, %v2645, 0.0
  %v2684 = vadd.f32 %v2682, %v2683
  %v2685 = vsel %vm22, %v2646, 0.0
  %v2686 = vadd.f32 %v2684, %v2685
  %v2687 = vsel %vm22, %v2647, 0.0
  %v2688 = vadd.f32 %v2686, %v2687
  %v2689 = vsel %vm22, %v2648, 0.0
  %v2690 = vadd.f32 %v2688, %v2689
  %v2691 = vsel %vm22, %v2649, 0.0
  %v2692 = vadd.f32 %v2690, %v2691
  %v2693 = vsel %vm22, %v2650, 0.0
  %v2694 = vadd.f32 %v2692, %v2693
  %v2695 = vsel %vm22, %v2651, 0.0
  %v2696 = vadd.f32 %v2694, %v2695
  %v2697 = vsel %vm22, %v2652, 0.0
  %v2698 = vadd.f32 %v2696, %v2697
  %v2699 = vsel %vm22, %v2653, 0.0
  %v2700 = vadd.f32 %v2698, %v2699
  %v2701 = vsel %vm22, %v2654, 0.0
  %v2702 = vadd.f32 %v2700, %v2701
  %v2703 = vsel %vm22, %v2655, 0.0
  %v2704 = vadd.f32 %v2702, %v2703
  %v2705 = vsel %vm22, %v2656, 0.0
  %v2706 = vadd.f32 %v2704, %v2705
  %v2707 = vsel %vm22, %v2657, 0.0
  %v2708 = vadd.f32 %v2706, %v2707
  %v2709 = vsel %vm22, %v2658, 0.0
  %v2710 = vadd.f32 %v2708, %v2709
  %v2711 = vsel %vm22, %v2659, 0.0
  %v2712 = vadd.f32 %v2710, %v2711
  %v2713 = vsel %vm22, %v2660, 0.0
  %v2714 = vadd.f32 %v2712, %v2713
  %v2715 = vsel %vm22, %v2661, 0.0
  %v2716 = vadd.f32 %v2714, %v2715
  %v2717 = vsel %vm22, %v2662, 0.0
  %v2718 = vadd.f32 %v2716, %v2717
  %v2719 = vsel %vm22, %v2663, 0.0
  %v2720 = vadd.f32 %v2718, %v2719
  %v2721 = vsel %vm22, %v2664, 0.0
  %v2722 = vadd.f32 %v2720, %v2721
  %v2723 = vsel %vm22, %v2665, 0.0
  %v2724 = vadd.f32 %v2722, %v2723
  %v2725 = vsel %vm22, %v2666, 0.0
  %v2726 = vadd.f32 %v2724, %v2725
  %v2727 = vsel %vm22, %v2667, 0.0
  %v2728 = vadd.f32 %v2726, %v2727
  %v2729 = vsel %vm22, %v2668, 0.0
  %v2730 = vadd.f32 %v2728, %v2729
  %v2731 = vsel %vm22, %v2669, 0.0
  %v2732 = vadd.f32 %v2730, %v2731
  %v2733 = vrot.slane %v2732, 4
  %v2734 = vadd.f32 %v2732, %v2733
  %v2735 = vrot.slane %v2734, 2
  %v2736 = vadd.f32 %v2734, %v2735
  %v2737 = vrot.slane %v2736, 1
  %v2738 = vadd.f32 %v2736, %v2737
  %v2739 = vadd.f32 %v2738, 0.0
  %v2740 = vmul.f32 %v2638, %v2638
  %v2741 = vmul.f32 %v2639, %v2639
  %v2742 = vmul.f32 %v2640, %v2640
  %v2743 = vmul.f32 %v2641, %v2641
  %v2744 = vmul.f32 %v2642, %v2642
  %v2745 = vmul.f32 %v2643, %v2643
  %v2746 = vmul.f32 %v2644, %v2644
  %v2747 = vmul.f32 %v2645, %v2645
  %v2748 = vmul.f32 %v2646, %v2646
  %v2749 = vmul.f32 %v2647, %v2647
  %v2750 = vmul.f32 %v2648, %v2648
  %v2751 = vmul.f32 %v2649, %v2649
  %v2752 = vmul.f32 %v2650, %v2650
  %v2753 = vmul.f32 %v2651, %v2651
  %v2754 = vmul.f32 %v2652, %v2652
  %v2755 = vmul.f32 %v2653, %v2653
  %v2756 = vmul.f32 %v2654, %v2654
  %v2757 = vmul.f32 %v2655, %v2655
  %v2758 = vmul.f32 %v2656, %v2656
  %v2759 = vmul.f32 %v2657, %v2657
  %v2760 = vmul.f32 %v2658, %v2658
  %v2761 = vmul.f32 %v2659, %v2659
  %v2762 = vmul.f32 %v2660, %v2660
  %v2763 = vmul.f32 %v2661, %v2661
  %v2764 = vmul.f32 %v2662, %v2662
  %v2765 = vmul.f32 %v2663, %v2663
  %v2766 = vmul.f32 %v2664, %v2664
  %v2767 = vmul.f32 %v2665, %v2665
  %v2768 = vmul.f32 %v2666, %v2666
  %v2769 = vmul.f32 %v2667, %v2667
  %v2770 = vmul.f32 %v2668, %v2668
  %v2771 = vmul.f32 %v2669, %v2669
  %v2772 = vsel %vm22, %v2740, 0.0
  %v2773 = vsel %vm22, %v2741, 0.0
  %v2774 = vadd.f32 %v2772, %v2773
  %v2775 = vsel %vm22, %v2742, 0.0
  %v2776 = vadd.f32 %v2774, %v2775
  %v2777 = vsel %vm22, %v2743, 0.0
  %v2778 = vadd.f32 %v2776, %v2777
  %v2779 = vsel %vm22, %v2744, 0.0
  %v2780 = vadd.f32 %v2778, %v2779
  %v2781 = vsel %vm22, %v2745, 0.0
  %v2782 = vadd.f32 %v2780, %v2781
  %v2783 = vsel %vm22, %v2746, 0.0
  %v2784 = vadd.f32 %v2782, %v2783
  %v2785 = vsel %vm22, %v2747, 0.0
  %v2786 = vadd.f32 %v2784, %v2785
  %v2787 = vsel %vm22, %v2748, 0.0
  %v2788 = vadd.f32 %v2786, %v2787
  %v2789 = vsel %vm22, %v2749, 0.0
  %v2790 = vadd.f32 %v2788, %v2789
  %v2791 = vsel %vm22, %v2750, 0.0
  %v2792 = vadd.f32 %v2790, %v2791
  %v2793 = vsel %vm22, %v2751, 0.0
  %v2794 = vadd.f32 %v2792, %v2793
  %v2795 = vsel %vm22, %v2752, 0.0
  %v2796 = vadd.f32 %v2794, %v2795
  %v2797 = vsel %vm22, %v2753, 0.0
  %v2798 = vadd.f32 %v2796, %v2797
  %v2799 = vsel %vm22, %v2754, 0.0
  %v2800 = vadd.f32 %v2798, %v2799
  %v2801 = vsel %vm22, %v2755, 0.0
  %v2802 = vadd.f32 %v2800, %v2801
  %v2803 = vsel %vm22, %v2756, 0.0
  %v2804 = vadd.f32 %v2802, %v2803
  %v2805 = vsel %vm22, %v2757, 0.0
  %v2806 = vadd.f32 %v2804, %v2805
  %v2807 = vsel %vm22, %v2758, 0.0
  %v2808 = vadd.f32 %v2806, %v2807
  %v2809 = vsel %vm22, %v2759, 0.0
  %v2810 = vadd.f32 %v2808, %v2809
  %v2811 = vsel %vm22, %v2760, 0.0
  %v2812 = vadd.f32 %v2810, %v2811
  %v2813 = vsel %vm22, %v2761, 0.0
  %v2814 = vadd.f32 %v2812, %v2813
  %v2815 = vsel %vm22, %v2762, 0.0
  %v2816 = vadd.f32 %v2814, %v2815
  %v2817 = vsel %vm22, %v2763, 0.0
  %v2818 = vadd.f32 %v2816, %v2817
  %v2819 = vsel %vm22, %v2764, 0.0
  %v2820 = vadd.f32 %v2818, %v2819
  %v2821 = vsel %vm22, %v2765, 0.0
  %v2822 = vadd.f32 %v2820, %v2821
  %v2823 = vsel %vm22, %v2766, 0.0
  %v2824 = vadd.f32 %v2822, %v2823
  %v2825 = vsel %vm22, %v2767, 0.0
  %v2826 = vadd.f32 %v2824, %v2825
  %v2827 = vsel %vm22, %v2768, 0.0
  %v2828 = vadd.f32 %v2826, %v2827
  %v2829 = vsel %vm22, %v2769, 0.0
  %v2830 = vadd.f32 %v2828, %v2829
  %v2831 = vsel %vm22, %v2770, 0.0
  %v2832 = vadd.f32 %v2830, %v2831
  %v2833 = vsel %vm22, %v2771, 0.0
  %v2834 = vadd.f32 %v2832, %v2833
  %v2835 = vrot.slane %v2834, 4
  %v2836 = vadd.f32 %v2834, %v2835
  %v2837 = vrot.slane %v2836, 2
  %v2838 = vadd.f32 %v2836, %v2837
  %v2839 = vrot.slane %v2838, 1
  %v2840 = vadd.f32 %v2838, %v2839
  %v2841 = vadd.f32 %v2840, 0.0
  %2842 = vst.msk [vmem:[%s4] sm:$0xff] %vm22, %v2638
  %2843 = vst.msk [vmem:[%s4 + $0x8] sm:$0xff] %vm22, %v2639
  %2844 = vst.msk [vmem:[%s4 + $0x10] sm:$0xff] %vm22, %v2640
  %2845 = vst.msk [vmem:[%s4 + $0x18] sm:$0xff] %vm22, %v2641
  %2846 = vst.msk [vmem:[%s4 + $0x20] sm:$0xff] %vm22, %v2642
  %2847 = vst.msk [vmem:[%s4 + $0x28] sm:$0xff] %vm22, %v2643
  %2848 = vst.msk [vmem:[%s4 + $0x30] sm:$0xff] %vm22, %v2644
  %2849 = vst.msk [vmem:[%s4 + $0x38] sm:$0xff] %vm22, %v2645
  %2850 = vst.msk [vmem:[%s4 + $0x40] sm:$0xff] %vm22, %v2646
  %2851 = vst.msk [vmem:[%s4 + $0x48] sm:$0xff] %vm22, %v2647
  %2852 = vst.msk [vmem:[%s4 + $0x50] sm:$0xff] %vm22, %v2648
  %2853 = vst.msk [vmem:[%s4 + $0x58] sm:$0xff] %vm22, %v2649
  %2854 = vst.msk [vmem:[%s4 + $0x60] sm:$0xff] %vm22, %v2650
  %2855 = vst.msk [vmem:[%s4 + $0x68] sm:$0xff] %vm22, %v2651
  %2856 = vst.msk [vmem:[%s4 + $0x70] sm:$0xff] %vm22, %v2652
  %2857 = vst.msk [vmem:[%s4 + $0x78] sm:$0xff] %vm22, %v2653
  %2858 = vst.msk [vmem:[%s4 + $0x80] sm:$0xff] %vm22, %v2654
  %2859 = vst.msk [vmem:[%s4 + $0x88] sm:$0xff] %vm22, %v2655
  %2860 = vst.msk [vmem:[%s4 + $0x90] sm:$0xff] %vm22, %v2656
  %2861 = vst.msk [vmem:[%s4 + $0x98] sm:$0xff] %vm22, %v2657
  %2862 = vst.msk [vmem:[%s4 + $0xa0] sm:$0xff] %vm22, %v2658
  %2863 = vst.msk [vmem:[%s4 + $0xa8] sm:$0xff] %vm22, %v2659
  %2864 = vst.msk [vmem:[%s4 + $0xb0] sm:$0xff] %vm22, %v2660
  %2865 = vst.msk [vmem:[%s4 + $0xb8] sm:$0xff] %vm22, %v2661
  %2866 = vst.msk [vmem:[%s4 + $0xc0] sm:$0xff] %vm22, %v2662
  %2867 = vst.msk [vmem:[%s4 + $0xc8] sm:$0xff] %vm22, %v2663
  %2868 = vst.msk [vmem:[%s4 + $0xd0] sm:$0xff] %vm22, %v2664
  %2869 = vst.msk [vmem:[%s4 + $0xd8] sm:$0xff] %vm22, %v2665
  %2870 = vst.msk [vmem:[%s4 + $0xe0] sm:$0xff] %vm22, %v2666
  %2871 = vst.msk [vmem:[%s4 + $0xe8] sm:$0xff] %vm22, %v2667
  %2872 = vst.msk [vmem:[%s4 + $0xf0] sm:$0xff] %vm22, %v2668
  %2873 = vst.msk [vmem:[%s4 + $0xf8] sm:$0xff] %vm22, %v2669
  %s2874 = scalar_lea.vmem %s0, 256
  %v2875 = vld [vmem:[%s2874] sm:$0xff]
  %v2876 = vld [vmem:[%s2874 + $0x8] sm:$0xff]
  %v2877 = vld [vmem:[%s2874 + $0x10] sm:$0xff]
  %v2878 = vld [vmem:[%s2874 + $0x18] sm:$0xff]
  %v2879 = vld [vmem:[%s2874 + $0x20] sm:$0xff]
  %v2880 = vld [vmem:[%s2874 + $0x28] sm:$0xff]
  %v2881 = vld [vmem:[%s2874 + $0x30] sm:$0xff]
  %v2882 = vld [vmem:[%s2874 + $0x38] sm:$0xff]
  %v2883 = vld [vmem:[%s2874 + $0x40] sm:$0xff]
  %v2884 = vld [vmem:[%s2874 + $0x48] sm:$0xff]
  %v2885 = vld [vmem:[%s2874 + $0x50] sm:$0xff]
  %v2886 = vld [vmem:[%s2874 + $0x58] sm:$0xff]
  %v2887 = vld [vmem:[%s2874 + $0x60] sm:$0xff]
  %v2888 = vld [vmem:[%s2874 + $0x68] sm:$0xff]
  %v2889 = vld [vmem:[%s2874 + $0x70] sm:$0xff]
  %v2890 = vld [vmem:[%s2874 + $0x78] sm:$0xff]
  %v2891 = vld [vmem:[%s2874 + $0x80] sm:$0xff]
  %v2892 = vld [vmem:[%s2874 + $0x88] sm:$0xff]
  %v2893 = vld [vmem:[%s2874 + $0x90] sm:$0xff]
  %v2894 = vld [vmem:[%s2874 + $0x98] sm:$0xff]
  %v2895 = vld [vmem:[%s2874 + $0xa0] sm:$0xff]
  %v2896 = vld [vmem:[%s2874 + $0xa8] sm:$0xff]
  %v2897 = vld [vmem:[%s2874 + $0xb0] sm:$0xff]
  %v2898 = vld [vmem:[%s2874 + $0xb8] sm:$0xff]
  %v2899 = vld [vmem:[%s2874 + $0xc0] sm:$0xff]
  %v2900 = vld [vmem:[%s2874 + $0xc8] sm:$0xff]
  %v2901 = vld [vmem:[%s2874 + $0xd0] sm:$0xff]
  %v2902 = vld [vmem:[%s2874 + $0xd8] sm:$0xff]
  %v2903 = vld [vmem:[%s2874 + $0xe0] sm:$0xff]
  %v2904 = vld [vmem:[%s2874 + $0xe8] sm:$0xff]
  %v2905 = vld [vmem:[%s2874 + $0xf0] sm:$0xff]
  %v2906 = vld [vmem:[%s2874 + $0xf8] sm:$0xff]
  %v2907 = vmul.f32 %v2875, %v98
  %v2908 = vmul.f32 %v2876, %v98
  %v2909 = vmul.f32 %v2877, %v98
  %v2910 = vmul.f32 %v2878, %v98
  %v2911 = vmul.f32 %v2879, %v98
  %v2912 = vmul.f32 %v2880, %v98
  %v2913 = vmul.f32 %v2881, %v98
  %v2914 = vmul.f32 %v2882, %v98
  %v2915 = vmul.f32 %v2883, %v98
  %v2916 = vmul.f32 %v2884, %v98
  %v2917 = vmul.f32 %v2885, %v98
  %v2918 = vmul.f32 %v2886, %v98
  %v2919 = vmul.f32 %v2887, %v98
  %v2920 = vmul.f32 %v2888, %v98
  %v2921 = vmul.f32 %v2889, %v98
  %v2922 = vmul.f32 %v2890, %v98
  %v2923 = vmul.f32 %v2891, %v98
  %v2924 = vmul.f32 %v2892, %v98
  %v2925 = vmul.f32 %v2893, %v98
  %v2926 = vmul.f32 %v2894, %v98
  %v2927 = vmul.f32 %v2895, %v98
  %v2928 = vmul.f32 %v2896, %v98
  %v2929 = vmul.f32 %v2897, %v98
  %v2930 = vmul.f32 %v2898, %v98
  %v2931 = vmul.f32 %v2899, %v98
  %v2932 = vmul.f32 %v2900, %v98
  %v2933 = vmul.f32 %v2901, %v98
  %v2934 = vmul.f32 %v2902, %v98
  %v2935 = vmul.f32 %v2903, %v98
  %v2936 = vmul.f32 %v2904, %v98
  %v2937 = vmul.f32 %v2905, %v98
  %v2938 = vmul.f32 %v2906, %v98
  %v2939 = vadd.f32 %v2907, %v133
  %v2940 = vadd.f32 %v2908, %v133
  %v2941 = vadd.f32 %v2909, %v133
  %v2942 = vadd.f32 %v2910, %v133
  %v2943 = vadd.f32 %v2911, %v133
  %v2944 = vadd.f32 %v2912, %v133
  %v2945 = vadd.f32 %v2913, %v133
  %v2946 = vadd.f32 %v2914, %v133
  %v2947 = vadd.f32 %v2915, %v133
  %v2948 = vadd.f32 %v2916, %v133
  %v2949 = vadd.f32 %v2917, %v133
  %v2950 = vadd.f32 %v2918, %v133
  %v2951 = vadd.f32 %v2919, %v133
  %v2952 = vadd.f32 %v2920, %v133
  %v2953 = vadd.f32 %v2921, %v133
  %v2954 = vadd.f32 %v2922, %v133
  %v2955 = vadd.f32 %v2923, %v133
  %v2956 = vadd.f32 %v2924, %v133
  %v2957 = vadd.f32 %v2925, %v133
  %v2958 = vadd.f32 %v2926, %v133
  %v2959 = vadd.f32 %v2927, %v133
  %v2960 = vadd.f32 %v2928, %v133
  %v2961 = vadd.f32 %v2929, %v133
  %v2962 = vadd.f32 %v2930, %v133
  %v2963 = vadd.f32 %v2931, %v133
  %v2964 = vadd.f32 %v2932, %v133
  %v2965 = vadd.f32 %v2933, %v133
  %v2966 = vadd.f32 %v2934, %v133
  %v2967 = vadd.f32 %v2935, %v133
  %v2968 = vadd.f32 %v2936, %v133
  %v2969 = vadd.f32 %v2937, %v133
  %v2970 = vadd.f32 %v2938, %v133
  %v2971 = vmax.f32 %v2939, 0.0
  %v2972 = vmax.f32 %v2940, 0.0
  %v2973 = vmax.f32 %v2941, 0.0
  %v2974 = vmax.f32 %v2942, 0.0
  %v2975 = vmax.f32 %v2943, 0.0
  %v2976 = vmax.f32 %v2944, 0.0
  %v2977 = vmax.f32 %v2945, 0.0
  %v2978 = vmax.f32 %v2946, 0.0
  %v2979 = vmax.f32 %v2947, 0.0
  %v2980 = vmax.f32 %v2948, 0.0
  %v2981 = vmax.f32 %v2949, 0.0
  %v2982 = vmax.f32 %v2950, 0.0
  %v2983 = vmax.f32 %v2951, 0.0
  %v2984 = vmax.f32 %v2952, 0.0
  %v2985 = vmax.f32 %v2953, 0.0
  %v2986 = vmax.f32 %v2954, 0.0
  %v2987 = vmax.f32 %v2955, 0.0
  %v2988 = vmax.f32 %v2956, 0.0
  %v2989 = vmax.f32 %v2957, 0.0
  %v2990 = vmax.f32 %v2958, 0.0
  %v2991 = vmax.f32 %v2959, 0.0
  %v2992 = vmax.f32 %v2960, 0.0
  %v2993 = vmax.f32 %v2961, 0.0
  %v2994 = vmax.f32 %v2962, 0.0
  %v2995 = vmax.f32 %v2963, 0.0
  %v2996 = vmax.f32 %v2964, 0.0
  %v2997 = vmax.f32 %v2965, 0.0
  %v2998 = vmax.f32 %v2966, 0.0
  %v2999 = vmax.f32 %v2967, 0.0
  %v3000 = vmax.f32 %v2968, 0.0
  %v3001 = vmax.f32 %v2969, 0.0
  %v3002 = vmax.f32 %v2970, 0.0
  %3003 = vst.msk [vmem:[%s31 + $0x1] sm:$0xff] %vm22, %v2971
  %3004 = vst.msk [vmem:[%s31 + $0x9] sm:$0xff] %vm22, %v2972
  %3005 = vst.msk [vmem:[%s31 + $0x19] sm:$0xff] %vm22, %v2973
  %3006 = vst.msk [vmem:[%s31 + $0x21] sm:$0xff] %vm22, %v2974
  %3007 = vst.msk [vmem:[%s31 + $0x31] sm:$0xff] %vm22, %v2975
  %3008 = vst.msk [vmem:[%s31 + $0x39] sm:$0xff] %vm22, %v2976
  %3009 = vst.msk [vmem:[%s31 + $0x49] sm:$0xff] %vm22, %v2977
  %3010 = vst.msk [vmem:[%s31 + $0x51] sm:$0xff] %vm22, %v2978
  %3011 = vst.msk [vmem:[%s31 + $0x61] sm:$0xff] %vm22, %v2979
  %3012 = vst.msk [vmem:[%s31 + $0x69] sm:$0xff] %vm22, %v2980
  %3013 = vst.msk [vmem:[%s31 + $0x79] sm:$0xff] %vm22, %v2981
  %3014 = vst.msk [vmem:[%s31 + $0x81] sm:$0xff] %vm22, %v2982
  %3015 = vst.msk [vmem:[%s31 + $0x91] sm:$0xff] %vm22, %v2983
  %3016 = vst.msk [vmem:[%s31 + $0x99] sm:$0xff] %vm22, %v2984
  %3017 = vst.msk [vmem:[%s31 + $0xa9] sm:$0xff] %vm22, %v2985
  %3018 = vst.msk [vmem:[%s31 + $0xb1] sm:$0xff] %vm22, %v2986
  %3019 = vst.msk [vmem:[%s31 + $0xc1] sm:$0xff] %vm22, %v2987
  %3020 = vst.msk [vmem:[%s31 + $0xc9] sm:$0xff] %vm22, %v2988
  %3021 = vst.msk [vmem:[%s31 + $0xd9] sm:$0xff] %vm22, %v2989
  %3022 = vst.msk [vmem:[%s31 + $0xe1] sm:$0xff] %vm22, %v2990
  %3023 = vst.msk [vmem:[%s31 + $0xf1] sm:$0xff] %vm22, %v2991
  %3024 = vst.msk [vmem:[%s31 + $0xf9] sm:$0xff] %vm22, %v2992
  %3025 = vst.msk [vmem:[%s31 + $0x109] sm:$0xff] %vm22, %v2993
  %3026 = vst.msk [vmem:[%s31 + $0x111] sm:$0xff] %vm22, %v2994
  %3027 = vst.msk [vmem:[%s31 + $0x121] sm:$0xff] %vm22, %v2995
  %3028 = vst.msk [vmem:[%s31 + $0x129] sm:$0xff] %vm22, %v2996
  %3029 = vst.msk [vmem:[%s31 + $0x139] sm:$0xff] %vm22, %v2997
  %3030 = vst.msk [vmem:[%s31 + $0x141] sm:$0xff] %vm22, %v2998
  %3031 = vst.msk [vmem:[%s31 + $0x151] sm:$0xff] %vm22, %v2999
  %3032 = vst.msk [vmem:[%s31 + $0x159] sm:$0xff] %vm22, %v3000
  %3033 = vst.msk [vmem:[%s31 + $0x169] sm:$0xff] %vm22, %v3001
  %3034 = vst.msk [vmem:[%s31 + $0x171] sm:$0xff] %vm22, %v3002
  %v3035 = vld [vmem:[#allocation2] sm:$0xff]
  %v3036 = vld [vmem:[#allocation2 + $0x8] sm:$0xff]
  %v3037 = vld [vmem:[#allocation2 + $0x18] sm:$0xff]
  %v3038 = vld [vmem:[#allocation2 + $0x20] sm:$0xff]
  %v3039 = vld [vmem:[#allocation2 + $0x30] sm:$0xff]
  %v3040 = vld [vmem:[#allocation2 + $0x38] sm:$0xff]
  %v3041 = vld [vmem:[#allocation2 + $0x48] sm:$0xff]
  %v3042 = vld [vmem:[#allocation2 + $0x50] sm:$0xff]
  %v3043 = vld [vmem:[#allocation2 + $0x60] sm:$0xff]
  %v3044 = vld [vmem:[#allocation2 + $0x68] sm:$0xff]
  %v3045 = vld [vmem:[#allocation2 + $0x78] sm:$0xff]
  %v3046 = vld [vmem:[#allocation2 + $0x80] sm:$0xff]
  %v3047 = vld [vmem:[#allocation2 + $0x90] sm:$0xff]
  %v3048 = vld [vmem:[#allocation2 + $0x98] sm:$0xff]
  %v3049 = vld [vmem:[#allocation2 + $0xa8] sm:$0xff]
  %v3050 = vld [vmem:[#allocation2 + $0xb0] sm:$0xff]
  %v3051 = vld [vmem:[#allocation2 + $0xc0] sm:$0xff]
  %v3052 = vld [vmem:[#allocation2 + $0xc8] sm:$0xff]
  %v3053 = vld [vmem:[#allocation2 + $0xd8] sm:$0xff]
  %v3054 = vld [vmem:[#allocation2 + $0xe0] sm:$0xff]
  %v3055 = vld [vmem:[#allocation2 + $0xf0] sm:$0xff]
  %v3056 = vld [vmem:[#allocation2 + $0xf8] sm:$0xff]
  %v3057 = vld [vmem:[#allocation2 + $0x108] sm:$0xff]
  %v3058 = vld [vmem:[#allocation2 + $0x110] sm:$0xff]
  %v3059 = vld [vmem:[#allocation2 + $0x120] sm:$0xff]
  %v3060 = vld [vmem:[#allocation2 + $0x128] sm:$0xff]
  %v3061 = vld [vmem:[#allocation2 + $0x138] sm:$0xff]
  %v3062 = vld [vmem:[#allocation2 + $0x140] sm:$0xff]
  %v3063 = vld [vmem:[#allocation2 + $0x150] sm:$0xff]
  %v3064 = vld [vmem:[#allocation2 + $0x158] sm:$0xff]
  %v3065 = vld [vmem:[#allocation2 + $0x168] sm:$0xff]
  %v3066 = vld [vmem:[#allocation2 + $0x170] sm:$0xff]
  %v3067 = vld [vmem:[%s3] sm:$0xf]
  %v3068 = vld [vmem:[#allocation2 + $0x1] sm:$0xff]
  %v3069 = vld [vmem:[#allocation2 + $0x9] sm:$0xff]
  %v3070 = vld [vmem:[#allocation2 + $0x19] sm:$0xff]
  %v3071 = vld [vmem:[#allocation2 + $0x21] sm:$0xff]
  %v3072 = vld [vmem:[#allocation2 + $0x31] sm:$0xff]
  %v3073 = vld [vmem:[#allocation2 + $0x39] sm:$0xff]
  %v3074 = vld [vmem:[#allocation2 + $0x49] sm:$0xff]
  %v3075 = vld [vmem:[#allocation2 + $0x51] sm:$0xff]
  %v3076 = vld [vmem:[#allocation2 + $0x61] sm:$0xff]
  %v3077 = vld [vmem:[#allocation2 + $0x69] sm:$0xff]
  %v3078 = vld [vmem:[#allocation2 + $0x79] sm:$0xff]
  %v3079 = vld [vmem:[#allocation2 + $0x81] sm:$0xff]
  %v3080 = vld [vmem:[#allocation2 + $0x91] sm:$0xff]
  %v3081 = vld [vmem:[#allocation2 + $0x99] sm:$0xff]
  %v3082 = vld [vmem:[#allocation2 + $0xa9] sm:$0xff]
  %v3083 = vld [vmem:[#allocation2 + $0xb1] sm:$0xff]
  %v3084 = vld [vmem:[#allocation2 + $0xc1] sm:$0xff]
  %v3085 = vld [vmem:[#allocation2 + $0xc9] sm:$0xff]
  %v3086 = vld [vmem:[#allocation2 + $0xd9] sm:$0xff]
  %v3087 = vld [vmem:[#allocation2 + $0xe1] sm:$0xff]
  %v3088 = vld [vmem:[#allocation2 + $0xf1] sm:$0xff]
  %v3089 = vld [vmem:[#allocation2 + $0xf9] sm:$0xff]
  %v3090 = vld [vmem:[#allocation2 + $0x109] sm:$0xff]
  %v3091 = vld [vmem:[#allocation2 + $0x111] sm:$0xff]
  %v3092 = vld [vmem:[#allocation2 + $0x121] sm:$0xff]
  %v3093 = vld [vmem:[#allocation2 + $0x129] sm:$0xff]
  %v3094 = vld [vmem:[#allocation2 + $0x139] sm:$0xff]
  %v3095 = vld [vmem:[#allocation2 + $0x141] sm:$0xff]
  %v3096 = vld [vmem:[#allocation2 + $0x151] sm:$0xff]
  %v3097 = vld [vmem:[#allocation2 + $0x159] sm:$0xff]
  %v3098 = vld [vmem:[#allocation2 + $0x169] sm:$0xff]
  %v3099 = vld [vmem:[#allocation2 + $0x171] sm:$0xff]
  %v3100 = vld [vmem:[%s296] sm:$0xf]
  %v3102 = vsel %vm22, %v3068, 0
  %v3105 = vsel %vm22, %v3069, 0
  %v3108 = vsel %vm22, %v3070, 0
  %v3111 = vsel %vm22, %v3071, 0
  %v3114 = vsel %vm22, %v3072, 0
  %v3117 = vsel %vm22, %v3073, 0
  %v3120 = vsel %vm22, %v3074, 0
  %v3123 = vsel %vm22, %v3075, 0
  %v3126 = vsel %vm22, %v3076, 0
  %v3129 = vsel %vm22, %v3077, 0
  %v3132 = vsel %vm22, %v3078, 0
  %v3135 = vsel %vm22, %v3079, 0
  %v3138 = vsel %vm22, %v3080, 0
  %v3141 = vsel %vm22, %v3081, 0
  %v3144 = vsel %vm22, %v3082, 0
  %v3147 = vsel %vm22, %v3083, 0
  %v3150 = vsel %vm22, %v3084, 0
  %v3153 = vsel %vm22, %v3085, 0
  %v3156 = vsel %vm22, %v3086, 0
  %v3159 = vsel %vm22, %v3087, 0
  %v3162 = vsel %vm22, %v3088, 0
  %v3165 = vsel %vm22, %v3089, 0
  %v3168 = vsel %vm22, %v3090, 0
  %v3171 = vsel %vm22, %v3091, 0
  %v3174 = vsel %vm22, %v3092, 0
  %v3177 = vsel %vm22, %v3093, 0
  %v3180 = vsel %vm22, %v3094, 0
  %v3183 = vsel %vm22, %v3095, 0
  %v3186 = vsel %vm22, %v3096, 0
  %v3189 = vsel %vm22, %v3097, 0
  %v3192 = vsel %vm22, %v3098, 0
  %v3195 = vsel %vm22, %v3099, 0
  %v3198 = vsel %vm394, %v3100, 0
  %3200 = vmatpush.msra.mxu0 0.0
  %3201 = vmatpush.msra.mxu0 0.0
  %3202 = vmatpush.msra.mxu0 0.0
  %3203 = vmatpush.msra.mxu0 0.0
  %3204 = vmatpush.msra.mxu0 0.0
  %3205 = vmatpush.msra.mxu0 0.0
  %3206 = vmatpush.msra.mxu0 0.0
  %3207 = vmatpush.msra.mxu0 0.0
  %3208 = vmatpush.msra.mxu0 0.0
  %3209 = vmatpush.msra.mxu0 0.0
  %3210 = vmatpush.msra.mxu0 0.0
  %3211 = vmatpush.msra.mxu0 0.0
  %3212 = vmatpush.msra.mxu0 0.0
  %3213 = vmatpush.msra.mxu0 0.0
  %3214 = vmatpush.msra.mxu0 0.0
  %3215 = vmatpush.msra.mxu0 %v3198
  %3216 = vmatmul.f32.gmra.mxu0 %v3102
  %v3217 = vpop.f32.mrf.mxu0
  %v3218 = vadd.f32 0.0, %v3217
  %3219 = vmatmul.f32.gmra.mxu0 %v3105
  %v3220 = vpop.f32.mrf.mxu0
  %v3221 = vadd.f32 0.0, %v3220
  %3222 = vmatmul.f32.gmra.mxu0 %v3108
  %v3223 = vpop.f32.mrf.mxu0
  %v3224 = vadd.f32 0.0, %v3223
  %3225 = vmatmul.f32.gmra.mxu0 %v3111
  %v3226 = vpop.f32.mrf.mxu0
  %v3227 = vadd.f32 0.0, %v3226
  %3228 = vmatmul.f32.gmra.mxu0 %v3114
  %v3229 = vpop.f32.mrf.mxu0
  %v3230 = vadd.f32 0.0, %v3229
  %3231 = vmatmul.f32.gmra.mxu0 %v3117
  %v3232 = vpop.f32.mrf.mxu0
  %v3233 = vadd.f32 0.0, %v3232
  %3234 = vmatmul.f32.gmra.mxu0 %v3120
  %v3235 = vpop.f32.mrf.mxu0
  %v3236 = vadd.f32 0.0, %v3235
  %3237 = vmatmul.f32.gmra.mxu0 %v3123
  %v3238 = vpop.f32.mrf.mxu0
  %v3239 = vadd.f32 0.0, %v3238
  %3240 = vmatmul.f32.gmra.mxu0 %v3126
  %v3241 = vpop.f32.mrf.mxu0
  %v3242 = vadd.f32 0.0, %v3241
  %3243 = vmatmul.f32.gmra.mxu0 %v3129
  %v3244 = vpop.f32.mrf.mxu0
  %v3245 = vadd.f32 0.0, %v3244
  %3246 = vmatmul.f32.gmra.mxu0 %v3132
  %v3247 = vpop.f32.mrf.mxu0
  %v3248 = vadd.f32 0.0, %v3247
  %3249 = vmatmul.f32.gmra.mxu0 %v3135
  %v3250 = vpop.f32.mrf.mxu0
  %v3251 = vadd.f32 0.0, %v3250
  %3252 = vmatmul.f32.gmra.mxu0 %v3138
  %v3253 = vpop.f32.mrf.mxu0
  %v3254 = vadd.f32 0.0, %v3253
  %3255 = vmatmul.f32.gmra.mxu0 %v3141
  %v3256 = vpop.f32.mrf.mxu0
  %v3257 = vadd.f32 0.0, %v3256
  %3258 = vmatmul.f32.gmra.mxu0 %v3144
  %v3259 = vpop.f32.mrf.mxu0
  %v3260 = vadd.f32 0.0, %v3259
  %3261 = vmatmul.f32.gmra.mxu0 %v3147
  %v3262 = vpop.f32.mrf.mxu0
  %v3263 = vadd.f32 0.0, %v3262
  %3264 = vmatmul.f32.gmra.mxu0 %v3150
  %v3265 = vpop.f32.mrf.mxu0
  %v3266 = vadd.f32 0.0, %v3265
  %3267 = vmatmul.f32.gmra.mxu0 %v3153
  %v3268 = vpop.f32.mrf.mxu0
  %v3269 = vadd.f32 0.0, %v3268
  %3270 = vmatmul.f32.gmra.mxu0 %v3156
  %v3271 = vpop.f32.mrf.mxu0
  %v3272 = vadd.f32 0.0, %v3271
  %3273 = vmatmul.f32.gmra.mxu0 %v3159
  %v3274 = vpop.f32.mrf.mxu0
  %v3275 = vadd.f32 0.0, %v3274
  %3276 = vmatmul.f32.gmra.mxu0 %v3162
  %v3277 = vpop.f32.mrf.mxu0
  %v3278 = vadd.f32 0.0, %v3277
  %3279 = vmatmul.f32.gmra.mxu0 %v3165
  %v3280 = vpop.f32.mrf.mxu0
  %v3281 = vadd.f32 0.0, %v3280
  %3282 = vmatmul.f32.gmra.mxu0 %v3168
  %v3283 = vpop.f32.mrf.mxu0
  %v3284 = vadd.f32 0.0, %v3283
  %3285 = vmatmul.f32.gmra.mxu0 %v3171
  %v3286 = vpop.f32.mrf.mxu0
  %v3287 = vadd.f32 0.0, %v3286
  %3288 = vmatmul.f32.gmra.mxu0 %v3174
  %v3289 = vpop.f32.mrf.mxu0
  %v3290 = vadd.f32 0.0, %v3289
  %3291 = vmatmul.f32.gmra.mxu0 %v3177
  %v3292 = vpop.f32.mrf.mxu0
  %v3293 = vadd.f32 0.0, %v3292
  %3294 = vmatmul.f32.gmra.mxu0 %v3180
  %v3295 = vpop.f32.mrf.mxu0
  %v3296 = vadd.f32 0.0, %v3295
  %3297 = vmatmul.f32.gmra.mxu0 %v3183
  %v3298 = vpop.f32.mrf.mxu0
  %v3299 = vadd.f32 0.0, %v3298
  %3300 = vmatmul.f32.gmra.mxu0 %v3186
  %v3301 = vpop.f32.mrf.mxu0
  %v3302 = vadd.f32 0.0, %v3301
  %3303 = vmatmul.f32.gmra.mxu0 %v3189
  %v3304 = vpop.f32.mrf.mxu0
  %v3305 = vadd.f32 0.0, %v3304
  %3306 = vmatmul.f32.gmra.mxu0 %v3192
  %v3307 = vpop.f32.mrf.mxu0
  %v3308 = vadd.f32 0.0, %v3307
  %3309 = vmatmul.f32.gmra.mxu0 %v3195
  %v3310 = vpop.f32.mrf.mxu0
  %v3311 = vadd.f32 0.0, %v3310
  %3312 = vdwg.mxu0
  %v3314 = vsel %vm22, %v3035, 0
  %v3317 = vsel %vm22, %v3036, 0
  %v3320 = vsel %vm22, %v3037, 0
  %v3323 = vsel %vm22, %v3038, 0
  %v3326 = vsel %vm22, %v3039, 0
  %v3329 = vsel %vm22, %v3040, 0
  %v3332 = vsel %vm22, %v3041, 0
  %v3335 = vsel %vm22, %v3042, 0
  %v3338 = vsel %vm22, %v3043, 0
  %v3341 = vsel %vm22, %v3044, 0
  %v3344 = vsel %vm22, %v3045, 0
  %v3347 = vsel %vm22, %v3046, 0
  %v3350 = vsel %vm22, %v3047, 0
  %v3353 = vsel %vm22, %v3048, 0
  %v3356 = vsel %vm22, %v3049, 0
  %v3359 = vsel %vm22, %v3050, 0
  %v3362 = vsel %vm22, %v3051, 0
  %v3365 = vsel %vm22, %v3052, 0
  %v3368 = vsel %vm22, %v3053, 0
  %v3371 = vsel %vm22, %v3054, 0
  %v3374 = vsel %vm22, %v3055, 0
  %v3377 = vsel %vm22, %v3056, 0
  %v3380 = vsel %vm22, %v3057, 0
  %v3383 = vsel %vm22, %v3058, 0
  %v3386 = vsel %vm22, %v3059, 0
  %v3389 = vsel %vm22, %v3060, 0
  %v3392 = vsel %vm22, %v3061, 0
  %v3395 = vsel %vm22, %v3062, 0
  %v3398 = vsel %vm22, %v3063, 0
  %v3401 = vsel %vm22, %v3064, 0
  %v3404 = vsel %vm22, %v3065, 0
  %v3407 = vsel %vm22, %v3066, 0
  %v3410 = vsel %vm394, %v3067, 0
  %3412 = vmatpush.msra.mxu0 0.0
  %3413 = vmatpush.msra.mxu0 0.0
  %3414 = vmatpush.msra.mxu0 0.0
  %3415 = vmatpush.msra.mxu0 0.0
  %3416 = vmatpush.msra.mxu0 0.0
  %3417 = vmatpush.msra.mxu0 0.0
  %3418 = vmatpush.msra.mxu0 0.0
  %3419 = vmatpush.msra.mxu0 0.0
  %3420 = vmatpush.msra.mxu0 0.0
  %3421 = vmatpush.msra.mxu0 0.0
  %3422 = vmatpush.msra.mxu0 0.0
  %3423 = vmatpush.msra.mxu0 0.0
  %3424 = vmatpush.msra.mxu0 0.0
  %3425 = vmatpush.msra.mxu0 0.0
  %3426 = vmatpush.msra.mxu0 0.0
  %3427 = vmatpush.msra.mxu0 %v3410
  %3428 = vmatmul.f32.gmra.mxu0 %v3314
  %v3429 = vpop.f32.mrf.mxu0
  %v3430 = vadd.f32 %v3218, %v3429
  %3431 = vmatmul.f32.gmra.mxu0 %v3317
  %v3432 = vpop.f32.mrf.mxu0
  %v3433 = vadd.f32 %v3221, %v3432
  %3434 = vmatmul.f32.gmra.mxu0 %v3320
  %v3435 = vpop.f32.mrf.mxu0
  %v3436 = vadd.f32 %v3224, %v3435
  %3437 = vmatmul.f32.gmra.mxu0 %v3323
  %v3438 = vpop.f32.mrf.mxu0
  %v3439 = vadd.f32 %v3227, %v3438
  %3440 = vmatmul.f32.gmra.mxu0 %v3326
  %v3441 = vpop.f32.mrf.mxu0
  %v3442 = vadd.f32 %v3230, %v3441
  %3443 = vmatmul.f32.gmra.mxu0 %v3329
  %v3444 = vpop.f32.mrf.mxu0
  %v3445 = vadd.f32 %v3233, %v3444
  %3446 = vmatmul.f32.gmra.mxu0 %v3332
  %v3447 = vpop.f32.mrf.mxu0
  %v3448 = vadd.f32 %v3236, %v3447
  %3449 = vmatmul.f32.gmra.mxu0 %v3335
  %v3450 = vpop.f32.mrf.mxu0
  %v3451 = vadd.f32 %v3239, %v3450
  %3452 = vmatmul.f32.gmra.mxu0 %v3338
  %v3453 = vpop.f32.mrf.mxu0
  %v3454 = vadd.f32 %v3242, %v3453
  %3455 = vmatmul.f32.gmra.mxu0 %v3341
  %v3456 = vpop.f32.mrf.mxu0
  %v3457 = vadd.f32 %v3245, %v3456
  %3458 = vmatmul.f32.gmra.mxu0 %v3344
  %v3459 = vpop.f32.mrf.mxu0
  %v3460 = vadd.f32 %v3248, %v3459
  %3461 = vmatmul.f32.gmra.mxu0 %v3347
  %v3462 = vpop.f32.mrf.mxu0
  %v3463 = vadd.f32 %v3251, %v3462
  %3464 = vmatmul.f32.gmra.mxu0 %v3350
  %v3465 = vpop.f32.mrf.mxu0
  %v3466 = vadd.f32 %v3254, %v3465
  %3467 = vmatmul.f32.gmra.mxu0 %v3353
  %v3468 = vpop.f32.mrf.mxu0
  %v3469 = vadd.f32 %v3257, %v3468
  %3470 = vmatmul.f32.gmra.mxu0 %v3356
  %v3471 = vpop.f32.mrf.mxu0
  %v3472 = vadd.f32 %v3260, %v3471
  %3473 = vmatmul.f32.gmra.mxu0 %v3359
  %v3474 = vpop.f32.mrf.mxu0
  %v3475 = vadd.f32 %v3263, %v3474
  %3476 = vmatmul.f32.gmra.mxu0 %v3362
  %v3477 = vpop.f32.mrf.mxu0
  %v3478 = vadd.f32 %v3266, %v3477
  %3479 = vmatmul.f32.gmra.mxu0 %v3365
  %v3480 = vpop.f32.mrf.mxu0
  %v3481 = vadd.f32 %v3269, %v3480
  %3482 = vmatmul.f32.gmra.mxu0 %v3368
  %v3483 = vpop.f32.mrf.mxu0
  %v3484 = vadd.f32 %v3272, %v3483
  %3485 = vmatmul.f32.gmra.mxu0 %v3371
  %v3486 = vpop.f32.mrf.mxu0
  %v3487 = vadd.f32 %v3275, %v3486
  %3488 = vmatmul.f32.gmra.mxu0 %v3374
  %v3489 = vpop.f32.mrf.mxu0
  %v3490 = vadd.f32 %v3278, %v3489
  %3491 = vmatmul.f32.gmra.mxu0 %v3377
  %v3492 = vpop.f32.mrf.mxu0
  %v3493 = vadd.f32 %v3281, %v3492
  %3494 = vmatmul.f32.gmra.mxu0 %v3380
  %v3495 = vpop.f32.mrf.mxu0
  %v3496 = vadd.f32 %v3284, %v3495
  %3497 = vmatmul.f32.gmra.mxu0 %v3383
  %v3498 = vpop.f32.mrf.mxu0
  %v3499 = vadd.f32 %v3287, %v3498
  %3500 = vmatmul.f32.gmra.mxu0 %v3386
  %v3501 = vpop.f32.mrf.mxu0
  %v3502 = vadd.f32 %v3290, %v3501
  %3503 = vmatmul.f32.gmra.mxu0 %v3389
  %v3504 = vpop.f32.mrf.mxu0
  %v3505 = vadd.f32 %v3293, %v3504
  %3506 = vmatmul.f32.gmra.mxu0 %v3392
  %v3507 = vpop.f32.mrf.mxu0
  %v3508 = vadd.f32 %v3296, %v3507
  %3509 = vmatmul.f32.gmra.mxu0 %v3395
  %v3510 = vpop.f32.mrf.mxu0
  %v3511 = vadd.f32 %v3299, %v3510
  %3512 = vmatmul.f32.gmra.mxu0 %v3398
  %v3513 = vpop.f32.mrf.mxu0
  %v3514 = vadd.f32 %v3302, %v3513
  %3515 = vmatmul.f32.gmra.mxu0 %v3401
  %v3516 = vpop.f32.mrf.mxu0
  %v3517 = vadd.f32 %v3305, %v3516
  %3518 = vmatmul.f32.gmra.mxu0 %v3404
  %v3519 = vpop.f32.mrf.mxu0
  %v3520 = vadd.f32 %v3308, %v3519
  %3521 = vmatmul.f32.gmra.mxu0 %v3407
  %v3522 = vpop.f32.mrf.mxu0
  %v3523 = vadd.f32 %v3311, %v3522
  %3524 = vdwg.mxu0
  %v3525 = vld [vmem:[#allocation2 + $0x2] sm:$0xff]
  %v3526 = vld [vmem:[#allocation2 + $0xa] sm:$0xff]
  %v3527 = vld [vmem:[#allocation2 + $0x1a] sm:$0xff]
  %v3528 = vld [vmem:[#allocation2 + $0x22] sm:$0xff]
  %v3529 = vld [vmem:[#allocation2 + $0x32] sm:$0xff]
  %v3530 = vld [vmem:[#allocation2 + $0x3a] sm:$0xff]
  %v3531 = vld [vmem:[#allocation2 + $0x4a] sm:$0xff]
  %v3532 = vld [vmem:[#allocation2 + $0x52] sm:$0xff]
  %v3533 = vld [vmem:[#allocation2 + $0x62] sm:$0xff]
  %v3534 = vld [vmem:[#allocation2 + $0x6a] sm:$0xff]
  %v3535 = vld [vmem:[#allocation2 + $0x7a] sm:$0xff]
  %v3536 = vld [vmem:[#allocation2 + $0x82] sm:$0xff]
  %v3537 = vld [vmem:[#allocation2 + $0x92] sm:$0xff]
  %v3538 = vld [vmem:[#allocation2 + $0x9a] sm:$0xff]
  %v3539 = vld [vmem:[#allocation2 + $0xaa] sm:$0xff]
  %v3540 = vld [vmem:[#allocation2 + $0xb2] sm:$0xff]
  %v3541 = vld [vmem:[#allocation2 + $0xc2] sm:$0xff]
  %v3542 = vld [vmem:[#allocation2 + $0xca] sm:$0xff]
  %v3543 = vld [vmem:[#allocation2 + $0xda] sm:$0xff]
  %v3544 = vld [vmem:[#allocation2 + $0xe2] sm:$0xff]
  %v3545 = vld [vmem:[#allocation2 + $0xf2] sm:$0xff]
  %v3546 = vld [vmem:[#allocation2 + $0xfa] sm:$0xff]
  %v3547 = vld [vmem:[#allocation2 + $0x10a] sm:$0xff]
  %v3548 = vld [vmem:[#allocation2 + $0x112] sm:$0xff]
  %v3549 = vld [vmem:[#allocation2 + $0x122] sm:$0xff]
  %v3550 = vld [vmem:[#allocation2 + $0x12a] sm:$0xff]
  %v3551 = vld [vmem:[#allocation2 + $0x13a] sm:$0xff]
  %v3552 = vld [vmem:[#allocation2 + $0x142] sm:$0xff]
  %v3553 = vld [vmem:[#allocation2 + $0x152] sm:$0xff]
  %v3554 = vld [vmem:[#allocation2 + $0x15a] sm:$0xff]
  %v3555 = vld [vmem:[#allocation2 + $0x16a] sm:$0xff]
  %v3556 = vld [vmem:[#allocation2 + $0x172] sm:$0xff]
  %v3557 = vld [vmem:[%s755] sm:$0xf]
  %v3559 = vsel %vm22, %v3525, 0
  %v3562 = vsel %vm22, %v3526, 0
  %v3565 = vsel %vm22, %v3527, 0
  %v3568 = vsel %vm22, %v3528, 0
  %v3571 = vsel %vm22, %v3529, 0
  %v3574 = vsel %vm22, %v3530, 0
  %v3577 = vsel %vm22, %v3531, 0
  %v3580 = vsel %vm22, %v3532, 0
  %v3583 = vsel %vm22, %v3533, 0
  %v3586 = vsel %vm22, %v3534, 0
  %v3589 = vsel %vm22, %v3535, 0
  %v3592 = vsel %vm22, %v3536, 0
  %v3595 = vsel %vm22, %v3537, 0
  %v3598 = vsel %vm22, %v3538, 0
  %v3601 = vsel %vm22, %v3539, 0
  %v3604 = vsel %vm22, %v3540, 0
  %v3607 = vsel %vm22, %v3541, 0
  %v3610 = vsel %vm22, %v3542, 0
  %v3613 = vsel %vm22, %v3543, 0
  %v3616 = vsel %vm22, %v3544, 0
  %v3619 = vsel %vm22, %v3545, 0
  %v3622 = vsel %vm22, %v3546, 0
  %v3625 = vsel %vm22, %v3547, 0
  %v3628 = vsel %vm22, %v3548, 0
  %v3631 = vsel %vm22, %v3549, 0
  %v3634 = vsel %vm22, %v3550, 0
  %v3637 = vsel %vm22, %v3551, 0
  %v3640 = vsel %vm22, %v3552, 0
  %v3643 = vsel %vm22, %v3553, 0
  %v3646 = vsel %vm22, %v3554, 0
  %v3649 = vsel %vm22, %v3555, 0
  %v3652 = vsel %vm22, %v3556, 0
  %v3655 = vsel %vm394, %v3557, 0
  %3657 = vmatpush.msra.mxu0 0.0
  %3658 = vmatpush.msra.mxu0 0.0
  %3659 = vmatpush.msra.mxu0 0.0
  %3660 = vmatpush.msra.mxu0 0.0
  %3661 = vmatpush.msra.mxu0 0.0
  %3662 = vmatpush.msra.mxu0 0.0
  %3663 = vmatpush.msra.mxu0 0.0
  %3664 = vmatpush.msra.mxu0 0.0
  %3665 = vmatpush.msra.mxu0 0.0
  %3666 = vmatpush.msra.mxu0 0.0
  %3667 = vmatpush.msra.mxu0 0.0
  %3668 = vmatpush.msra.mxu0 0.0
  %3669 = vmatpush.msra.mxu0 0.0
  %3670 = vmatpush.msra.mxu0 0.0
  %3671 = vmatpush.msra.mxu0 0.0
  %3672 = vmatpush.msra.mxu0 %v3655
  %3673 = vmatmul.f32.gmra.mxu0 %v3559
  %v3674 = vpop.f32.mrf.mxu0
  %v3675 = vadd.f32 0.0, %v3674
  %3676 = vmatmul.f32.gmra.mxu0 %v3562
  %v3677 = vpop.f32.mrf.mxu0
  %v3678 = vadd.f32 0.0, %v3677
  %3679 = vmatmul.f32.gmra.mxu0 %v3565
  %v3680 = vpop.f32.mrf.mxu0
  %v3681 = vadd.f32 0.0, %v3680
  %3682 = vmatmul.f32.gmra.mxu0 %v3568
  %v3683 = vpop.f32.mrf.mxu0
  %v3684 = vadd.f32 0.0, %v3683
  %3685 = vmatmul.f32.gmra.mxu0 %v3571
  %v3686 = vpop.f32.mrf.mxu0
  %v3687 = vadd.f32 0.0, %v3686
  %3688 = vmatmul.f32.gmra.mxu0 %v3574
  %v3689 = vpop.f32.mrf.mxu0
  %v3690 = vadd.f32 0.0, %v3689
  %3691 = vmatmul.f32.gmra.mxu0 %v3577
  %v3692 = vpop.f32.mrf.mxu0
  %v3693 = vadd.f32 0.0, %v3692
  %3694 = vmatmul.f32.gmra.mxu0 %v3580
  %v3695 = vpop.f32.mrf.mxu0
  %v3696 = vadd.f32 0.0, %v3695
  %3697 = vmatmul.f32.gmra.mxu0 %v3583
  %v3698 = vpop.f32.mrf.mxu0
  %v3699 = vadd.f32 0.0, %v3698
  %3700 = vmatmul.f32.gmra.mxu0 %v3586
  %v3701 = vpop.f32.mrf.mxu0
  %v3702 = vadd.f32 0.0, %v3701
  %3703 = vmatmul.f32.gmra.mxu0 %v3589
  %v3704 = vpop.f32.mrf.mxu0
  %v3705 = vadd.f32 0.0, %v3704
  %3706 = vmatmul.f32.gmra.mxu0 %v3592
  %v3707 = vpop.f32.mrf.mxu0
  %v3708 = vadd.f32 0.0, %v3707
  %3709 = vmatmul.f32.gmra.mxu0 %v3595
  %v3710 = vpop.f32.mrf.mxu0
  %v3711 = vadd.f32 0.0, %v3710
  %3712 = vmatmul.f32.gmra.mxu0 %v3598
  %v3713 = vpop.f32.mrf.mxu0
  %v3714 = vadd.f32 0.0, %v3713
  %3715 = vmatmul.f32.gmra.mxu0 %v3601
  %v3716 = vpop.f32.mrf.mxu0
  %v3717 = vadd.f32 0.0, %v3716
  %3718 = vmatmul.f32.gmra.mxu0 %v3604
  %v3719 = vpop.f32.mrf.mxu0
  %v3720 = vadd.f32 0.0, %v3719
  %3721 = vmatmul.f32.gmra.mxu0 %v3607
  %v3722 = vpop.f32.mrf.mxu0
  %v3723 = vadd.f32 0.0, %v3722
  %3724 = vmatmul.f32.gmra.mxu0 %v3610
  %v3725 = vpop.f32.mrf.mxu0
  %v3726 = vadd.f32 0.0, %v3725
  %3727 = vmatmul.f32.gmra.mxu0 %v3613
  %v3728 = vpop.f32.mrf.mxu0
  %v3729 = vadd.f32 0.0, %v3728
  %3730 = vmatmul.f32.gmra.mxu0 %v3616
  %v3731 = vpop.f32.mrf.mxu0
  %v3732 = vadd.f32 0.0, %v3731
  %3733 = vmatmul.f32.gmra.mxu0 %v3619
  %v3734 = vpop.f32.mrf.mxu0
  %v3735 = vadd.f32 0.0, %v3734
  %3736 = vmatmul.f32.gmra.mxu0 %v3622
  %v3737 = vpop.f32.mrf.mxu0
  %v3738 = vadd.f32 0.0, %v3737
  %3739 = vmatmul.f32.gmra.mxu0 %v3625
  %v3740 = vpop.f32.mrf.mxu0
  %v3741 = vadd.f32 0.0, %v3740
  %3742 = vmatmul.f32.gmra.mxu0 %v3628
  %v3743 = vpop.f32.mrf.mxu0
  %v3744 = vadd.f32 0.0, %v3743
  %3745 = vmatmul.f32.gmra.mxu0 %v3631
  %v3746 = vpop.f32.mrf.mxu0
  %v3747 = vadd.f32 0.0, %v3746
  %3748 = vmatmul.f32.gmra.mxu0 %v3634
  %v3749 = vpop.f32.mrf.mxu0
  %v3750 = vadd.f32 0.0, %v3749
  %3751 = vmatmul.f32.gmra.mxu0 %v3637
  %v3752 = vpop.f32.mrf.mxu0
  %v3753 = vadd.f32 0.0, %v3752
  %3754 = vmatmul.f32.gmra.mxu0 %v3640
  %v3755 = vpop.f32.mrf.mxu0
  %v3756 = vadd.f32 0.0, %v3755
  %3757 = vmatmul.f32.gmra.mxu0 %v3643
  %v3758 = vpop.f32.mrf.mxu0
  %v3759 = vadd.f32 0.0, %v3758
  %3760 = vmatmul.f32.gmra.mxu0 %v3646
  %v3761 = vpop.f32.mrf.mxu0
  %v3762 = vadd.f32 0.0, %v3761
  %3763 = vmatmul.f32.gmra.mxu0 %v3649
  %v3764 = vpop.f32.mrf.mxu0
  %v3765 = vadd.f32 0.0, %v3764
  %3766 = vmatmul.f32.gmra.mxu0 %v3652
  %v3767 = vpop.f32.mrf.mxu0
  %v3768 = vadd.f32 0.0, %v3767
  %3769 = vdwg.mxu0
  %v3770 = vadd.f32 %v3430, %v3675
  %v3771 = vadd.f32 %v3433, %v3678
  %v3772 = vadd.f32 %v3436, %v3681
  %v3773 = vadd.f32 %v3439, %v3684
  %v3774 = vadd.f32 %v3442, %v3687
  %v3775 = vadd.f32 %v3445, %v3690
  %v3776 = vadd.f32 %v3448, %v3693
  %v3777 = vadd.f32 %v3451, %v3696
  %v3778 = vadd.f32 %v3454, %v3699
  %v3779 = vadd.f32 %v3457, %v3702
  %v3780 = vadd.f32 %v3460, %v3705
  %v3781 = vadd.f32 %v3463, %v3708
  %v3782 = vadd.f32 %v3466, %v3711
  %v3783 = vadd.f32 %v3469, %v3714
  %v3784 = vadd.f32 %v3472, %v3717
  %v3785 = vadd.f32 %v3475, %v3720
  %v3786 = vadd.f32 %v3478, %v3723
  %v3787 = vadd.f32 %v3481, %v3726
  %v3788 = vadd.f32 %v3484, %v3729
  %v3789 = vadd.f32 %v3487, %v3732
  %v3790 = vadd.f32 %v3490, %v3735
  %v3791 = vadd.f32 %v3493, %v3738
  %v3792 = vadd.f32 %v3496, %v3741
  %v3793 = vadd.f32 %v3499, %v3744
  %v3794 = vadd.f32 %v3502, %v3747
  %v3795 = vadd.f32 %v3505, %v3750
  %v3796 = vadd.f32 %v3508, %v3753
  %v3797 = vadd.f32 %v3511, %v3756
  %v3798 = vadd.f32 %v3514, %v3759
  %v3799 = vadd.f32 %v3517, %v3762
  %v3800 = vadd.f32 %v3520, %v3765
  %v3801 = vadd.f32 %v3523, %v3768
  %v3802 = vld [vmem:[%s31] sm:$0xff]
  %v3803 = vld [vmem:[%s31 + $0x8] sm:$0xff]
  %v3804 = vld [vmem:[%s31 + $0x18] sm:$0xff]
  %v3805 = vld [vmem:[%s31 + $0x20] sm:$0xff]
  %v3806 = vld [vmem:[%s31 + $0x30] sm:$0xff]
  %v3807 = vld [vmem:[%s31 + $0x38] sm:$0xff]
  %v3808 = vld [vmem:[%s31 + $0x48] sm:$0xff]
  %v3809 = vld [vmem:[%s31 + $0x50] sm:$0xff]
  %v3810 = vld [vmem:[%s31 + $0x60] sm:$0xff]
  %v3811 = vld [vmem:[%s31 + $0x68] sm:$0xff]
  %v3812 = vld [vmem:[%s31 + $0x78] sm:$0xff]
  %v3813 = vld [vmem:[%s31 + $0x80] sm:$0xff]
  %v3814 = vld [vmem:[%s31 + $0x90] sm:$0xff]
  %v3815 = vld [vmem:[%s31 + $0x98] sm:$0xff]
  %v3816 = vld [vmem:[%s31 + $0xa8] sm:$0xff]
  %v3817 = vld [vmem:[%s31 + $0xb0] sm:$0xff]
  %v3818 = vld [vmem:[%s31 + $0xc0] sm:$0xff]
  %v3819 = vld [vmem:[%s31 + $0xc8] sm:$0xff]
  %v3820 = vld [vmem:[%s31 + $0xd8] sm:$0xff]
  %v3821 = vld [vmem:[%s31 + $0xe0] sm:$0xff]
  %v3822 = vld [vmem:[%s31 + $0xf0] sm:$0xff]
  %v3823 = vld [vmem:[%s31 + $0xf8] sm:$0xff]
  %v3824 = vld [vmem:[%s31 + $0x108] sm:$0xff]
  %v3825 = vld [vmem:[%s31 + $0x110] sm:$0xff]
  %v3826 = vld [vmem:[%s31 + $0x120] sm:$0xff]
  %v3827 = vld [vmem:[%s31 + $0x128] sm:$0xff]
  %v3828 = vld [vmem:[%s31 + $0x138] sm:$0xff]
  %v3829 = vld [vmem:[%s31 + $0x140] sm:$0xff]
  %v3830 = vld [vmem:[%s31 + $0x150] sm:$0xff]
  %v3831 = vld [vmem:[%s31 + $0x158] sm:$0xff]
  %v3832 = vld [vmem:[%s31 + $0x168] sm:$0xff]
  %v3833 = vld [vmem:[%s31 + $0x170] sm:$0xff]
  %v3834 = vld [vmem:[%s1033] sm:$0xf]
  %v3836 = vsel %vm22, %v3802, 0
  %v3839 = vsel %vm22, %v3803, 0
  %v3842 = vsel %vm22, %v3804, 0
  %v3845 = vsel %vm22, %v3805, 0
  %v3848 = vsel %vm22, %v3806, 0
  %v3851 = vsel %vm22, %v3807, 0
  %v3854 = vsel %vm22, %v3808, 0
  %v3857 = vsel %vm22, %v3809, 0
  %v3860 = vsel %vm22, %v3810, 0
  %v3863 = vsel %vm22, %v3811, 0
  %v3866 = vsel %vm22, %v3812, 0
  %v3869 = vsel %vm22, %v3813, 0
  %v3872 = vsel %vm22, %v3814, 0
  %v3875 = vsel %vm22, %v3815, 0
  %v3878 = vsel %vm22, %v3816, 0
  %v3881 = vsel %vm22, %v3817, 0
  %v3884 = vsel %vm22, %v3818, 0
  %v3887 = vsel %vm22, %v3819, 0
  %v3890 = vsel %vm22, %v3820, 0
  %v3893 = vsel %vm22, %v3821, 0
  %v3896 = vsel %vm22, %v3822, 0
  %v3899 = vsel %vm22, %v3823, 0
  %v3902 = vsel %vm22, %v3824, 0
  %v3905 = vsel %vm22, %v3825, 0
  %v3908 = vsel %vm22, %v3826, 0
  %v3911 = vsel %vm22, %v3827, 0
  %v3914 = vsel %vm22, %v3828, 0
  %v3917 = vsel %vm22, %v3829, 0
  %v3920 = vsel %vm22, %v3830, 0
  %v3923 = vsel %vm22, %v3831, 0
  %v3926 = vsel %vm22, %v3832, 0
  %v3929 = vsel %vm22, %v3833, 0
  %v3932 = vsel %vm394, %v3834, 0
  %3934 = vmatpush.msra.mxu0 0.0
  %3935 = vmatpush.msra.mxu0 0.0
  %3936 = vmatpush.msra.mxu0 0.0
  %3937 = vmatpush.msra.mxu0 0.0
  %3938 = vmatpush.msra.mxu0 0.0
  %3939 = vmatpush.msra.mxu0 0.0
  %3940 = vmatpush.msra.mxu0 0.0
  %3941 = vmatpush.msra.mxu0 0.0
  %3942 = vmatpush.msra.mxu0 0.0
  %3943 = vmatpush.msra.mxu0 0.0
  %3944 = vmatpush.msra.mxu0 0.0
  %3945 = vmatpush.msra.mxu0 0.0
  %3946 = vmatpush.msra.mxu0 0.0
  %3947 = vmatpush.msra.mxu0 0.0
  %3948 = vmatpush.msra.mxu0 0.0
  %3949 = vmatpush.msra.mxu0 %v3932
  %3950 = vmatmul.f32.gmra.mxu0 %v3836
  %v3951 = vpop.f32.mrf.mxu0
  %v3952 = vadd.f32 0.0, %v3951
  %3953 = vmatmul.f32.gmra.mxu0 %v3839
  %v3954 = vpop.f32.mrf.mxu0
  %v3955 = vadd.f32 0.0, %v3954
  %3956 = vmatmul.f32.gmra.mxu0 %v3842
  %v3957 = vpop.f32.mrf.mxu0
  %v3958 = vadd.f32 0.0, %v3957
  %3959 = vmatmul.f32.gmra.mxu0 %v3845
  %v3960 = vpop.f32.mrf.mxu0
  %v3961 = vadd.f32 0.0, %v3960
  %3962 = vmatmul.f32.gmra.mxu0 %v3848
  %v3963 = vpop.f32.mrf.mxu0
  %v3964 = vadd.f32 0.0, %v3963
  %3965 = vmatmul.f32.gmra.mxu0 %v3851
  %v3966 = vpop.f32.mrf.mxu0
  %v3967 = vadd.f32 0.0, %v3966
  %3968 = vmatmul.f32.gmra.mxu0 %v3854
  %v3969 = vpop.f32.mrf.mxu0
  %v3970 = vadd.f32 0.0, %v3969
  %3971 = vmatmul.f32.gmra.mxu0 %v3857
  %v3972 = vpop.f32.mrf.mxu0
  %v3973 = vadd.f32 0.0, %v3972
  %3974 = vmatmul.f32.gmra.mxu0 %v3860
  %v3975 = vpop.f32.mrf.mxu0
  %v3976 = vadd.f32 0.0, %v3975
  %3977 = vmatmul.f32.gmra.mxu0 %v3863
  %v3978 = vpop.f32.mrf.mxu0
  %v3979 = vadd.f32 0.0, %v3978
  %3980 = vmatmul.f32.gmra.mxu0 %v3866
  %v3981 = vpop.f32.mrf.mxu0
  %v3982 = vadd.f32 0.0, %v3981
  %3983 = vmatmul.f32.gmra.mxu0 %v3869
  %v3984 = vpop.f32.mrf.mxu0
  %v3985 = vadd.f32 0.0, %v3984
  %3986 = vmatmul.f32.gmra.mxu0 %v3872
  %v3987 = vpop.f32.mrf.mxu0
  %v3988 = vadd.f32 0.0, %v3987
  %3989 = vmatmul.f32.gmra.mxu0 %v3875
  %v3990 = vpop.f32.mrf.mxu0
  %v3991 = vadd.f32 0.0, %v3990
  %3992 = vmatmul.f32.gmra.mxu0 %v3878
  %v3993 = vpop.f32.mrf.mxu0
  %v3994 = vadd.f32 0.0, %v3993
  %3995 = vmatmul.f32.gmra.mxu0 %v3881
  %v3996 = vpop.f32.mrf.mxu0
  %v3997 = vadd.f32 0.0, %v3996
  %3998 = vmatmul.f32.gmra.mxu0 %v3884
  %v3999 = vpop.f32.mrf.mxu0
  %v4000 = vadd.f32 0.0, %v3999
  %4001 = vmatmul.f32.gmra.mxu0 %v3887
  %v4002 = vpop.f32.mrf.mxu0
  %v4003 = vadd.f32 0.0, %v4002
  %4004 = vmatmul.f32.gmra.mxu0 %v3890
  %v4005 = vpop.f32.mrf.mxu0
  %v4006 = vadd.f32 0.0, %v4005
  %4007 = vmatmul.f32.gmra.mxu0 %v3893
  %v4008 = vpop.f32.mrf.mxu0
  %v4009 = vadd.f32 0.0, %v4008
  %4010 = vmatmul.f32.gmra.mxu0 %v3896
  %v4011 = vpop.f32.mrf.mxu0
  %v4012 = vadd.f32 0.0, %v4011
  %4013 = vmatmul.f32.gmra.mxu0 %v3899
  %v4014 = vpop.f32.mrf.mxu0
  %v4015 = vadd.f32 0.0, %v4014
  %4016 = vmatmul.f32.gmra.mxu0 %v3902
  %v4017 = vpop.f32.mrf.mxu0
  %v4018 = vadd.f32 0.0, %v4017
  %4019 = vmatmul.f32.gmra.mxu0 %v3905
  %v4020 = vpop.f32.mrf.mxu0
  %v4021 = vadd.f32 0.0, %v4020
  %4022 = vmatmul.f32.gmra.mxu0 %v3908
  %v4023 = vpop.f32.mrf.mxu0
  %v4024 = vadd.f32 0.0, %v4023
  %4025 = vmatmul.f32.gmra.mxu0 %v3911
  %v4026 = vpop.f32.mrf.mxu0
  %v4027 = vadd.f32 0.0, %v4026
  %4028 = vmatmul.f32.gmra.mxu0 %v3914
  %v4029 = vpop.f32.mrf.mxu0
  %v4030 = vadd.f32 0.0, %v4029
  %4031 = vmatmul.f32.gmra.mxu0 %v3917
  %v4032 = vpop.f32.mrf.mxu0
  %v4033 = vadd.f32 0.0, %v4032
  %4034 = vmatmul.f32.gmra.mxu0 %v3920
  %v4035 = vpop.f32.mrf.mxu0
  %v4036 = vadd.f32 0.0, %v4035
  %4037 = vmatmul.f32.gmra.mxu0 %v3923
  %v4038 = vpop.f32.mrf.mxu0
  %v4039 = vadd.f32 0.0, %v4038
  %4040 = vmatmul.f32.gmra.mxu0 %v3926
  %v4041 = vpop.f32.mrf.mxu0
  %v4042 = vadd.f32 0.0, %v4041
  %4043 = vmatmul.f32.gmra.mxu0 %v3929
  %v4044 = vpop.f32.mrf.mxu0
  %v4045 = vadd.f32 0.0, %v4044
  %4046 = vdwg.mxu0
  %v4047 = vadd.f32 %v3770, %v3952
  %v4048 = vadd.f32 %v3771, %v3955
  %v4049 = vadd.f32 %v3772, %v3958
  %v4050 = vadd.f32 %v3773, %v3961
  %v4051 = vadd.f32 %v3774, %v3964
  %v4052 = vadd.f32 %v3775, %v3967
  %v4053 = vadd.f32 %v3776, %v3970
  %v4054 = vadd.f32 %v3777, %v3973
  %v4055 = vadd.f32 %v3778, %v3976
  %v4056 = vadd.f32 %v3779, %v3979
  %v4057 = vadd.f32 %v3780, %v3982
  %v4058 = vadd.f32 %v3781, %v3985
  %v4059 = vadd.f32 %v3782, %v3988
  %v4060 = vadd.f32 %v3783, %v3991
  %v4061 = vadd.f32 %v3784, %v3994
  %v4062 = vadd.f32 %v3785, %v3997
  %v4063 = vadd.f32 %v3786, %v4000
  %v4064 = vadd.f32 %v3787, %v4003
  %v4065 = vadd.f32 %v3788, %v4006
  %v4066 = vadd.f32 %v3789, %v4009
  %v4067 = vadd.f32 %v3790, %v4012
  %v4068 = vadd.f32 %v3791, %v4015
  %v4069 = vadd.f32 %v3792, %v4018
  %v4070 = vadd.f32 %v3793, %v4021
  %v4071 = vadd.f32 %v3794, %v4024
  %v4072 = vadd.f32 %v3795, %v4027
  %v4073 = vadd.f32 %v3796, %v4030
  %v4074 = vadd.f32 %v3797, %v4033
  %v4075 = vadd.f32 %v3798, %v4036
  %v4076 = vadd.f32 %v3799, %v4039
  %v4077 = vadd.f32 %v3800, %v4042
  %v4078 = vadd.f32 %v3801, %v4045
  %v4079 = vld [vmem:[%s31 + $0x1] sm:$0xff]
  %v4080 = vld [vmem:[%s31 + $0x9] sm:$0xff]
  %v4081 = vld [vmem:[%s31 + $0x19] sm:$0xff]
  %v4082 = vld [vmem:[%s31 + $0x21] sm:$0xff]
  %v4083 = vld [vmem:[%s31 + $0x31] sm:$0xff]
  %v4084 = vld [vmem:[%s31 + $0x39] sm:$0xff]
  %v4085 = vld [vmem:[%s31 + $0x49] sm:$0xff]
  %v4086 = vld [vmem:[%s31 + $0x51] sm:$0xff]
  %v4087 = vld [vmem:[%s31 + $0x61] sm:$0xff]
  %v4088 = vld [vmem:[%s31 + $0x69] sm:$0xff]
  %v4089 = vld [vmem:[%s31 + $0x79] sm:$0xff]
  %v4090 = vld [vmem:[%s31 + $0x81] sm:$0xff]
  %v4091 = vld [vmem:[%s31 + $0x91] sm:$0xff]
  %v4092 = vld [vmem:[%s31 + $0x99] sm:$0xff]
  %v4093 = vld [vmem:[%s31 + $0xa9] sm:$0xff]
  %v4094 = vld [vmem:[%s31 + $0xb1] sm:$0xff]
  %v4095 = vld [vmem:[%s31 + $0xc1] sm:$0xff]
  %v4096 = vld [vmem:[%s31 + $0xc9] sm:$0xff]
  %v4097 = vld [vmem:[%s31 + $0xd9] sm:$0xff]
  %v4098 = vld [vmem:[%s31 + $0xe1] sm:$0xff]
  %v4099 = vld [vmem:[%s31 + $0xf1] sm:$0xff]
  %v4100 = vld [vmem:[%s31 + $0xf9] sm:$0xff]
  %v4101 = vld [vmem:[%s31 + $0x109] sm:$0xff]
  %v4102 = vld [vmem:[%s31 + $0x111] sm:$0xff]
  %v4103 = vld [vmem:[%s31 + $0x121] sm:$0xff]
  %v4104 = vld [vmem:[%s31 + $0x129] sm:$0xff]
  %v4105 = vld [vmem:[%s31 + $0x139] sm:$0xff]
  %v4106 = vld [vmem:[%s31 + $0x141] sm:$0xff]
  %v4107 = vld [vmem:[%s31 + $0x151] sm:$0xff]
  %v4108 = vld [vmem:[%s31 + $0x159] sm:$0xff]
  %v4109 = vld [vmem:[%s31 + $0x169] sm:$0xff]
  %v4110 = vld [vmem:[%s31 + $0x171] sm:$0xff]
  %v4111 = vld [vmem:[%s1311] sm:$0xf]
  %v4113 = vsel %vm22, %v4079, 0
  %v4116 = vsel %vm22, %v4080, 0
  %v4119 = vsel %vm22, %v4081, 0
  %v4122 = vsel %vm22, %v4082, 0
  %v4125 = vsel %vm22, %v4083, 0
  %v4128 = vsel %vm22, %v4084, 0
  %v4131 = vsel %vm22, %v4085, 0
  %v4134 = vsel %vm22, %v4086, 0
  %v4137 = vsel %vm22, %v4087, 0
  %v4140 = vsel %vm22, %v4088, 0
  %v4143 = vsel %vm22, %v4089, 0
  %v4146 = vsel %vm22, %v4090, 0
  %v4149 = vsel %vm22, %v4091, 0
  %v4152 = vsel %vm22, %v4092, 0
  %v4155 = vsel %vm22, %v4093, 0
  %v4158 = vsel %vm22, %v4094, 0
  %v4161 = vsel %vm22, %v4095, 0
  %v4164 = vsel %vm22, %v4096, 0
  %v4167 = vsel %vm22, %v4097, 0
  %v4170 = vsel %vm22, %v4098, 0
  %v4173 = vsel %vm22, %v4099, 0
  %v4176 = vsel %vm22, %v4100, 0
  %v4179 = vsel %vm22, %v4101, 0
  %v4182 = vsel %vm22, %v4102, 0
  %v4185 = vsel %vm22, %v4103, 0
  %v4188 = vsel %vm22, %v4104, 0
  %v4191 = vsel %vm22, %v4105, 0
  %v4194 = vsel %vm22, %v4106, 0
  %v4197 = vsel %vm22, %v4107, 0
  %v4200 = vsel %vm22, %v4108, 0
  %v4203 = vsel %vm22, %v4109, 0
  %v4206 = vsel %vm22, %v4110, 0
  %v4209 = vsel %vm394, %v4111, 0
  %4211 = vmatpush.msra.mxu0 0.0
  %4212 = vmatpush.msra.mxu0 0.0
  %4213 = vmatpush.msra.mxu0 0.0
  %4214 = vmatpush.msra.mxu0 0.0
  %4215 = vmatpush.msra.mxu0 0.0
  %4216 = vmatpush.msra.mxu0 0.0
  %4217 = vmatpush.msra.mxu0 0.0
  %4218 = vmatpush.msra.mxu0 0.0
  %4219 = vmatpush.msra.mxu0 0.0
  %4220 = vmatpush.msra.mxu0 0.0
  %4221 = vmatpush.msra.mxu0 0.0
  %4222 = vmatpush.msra.mxu0 0.0
  %4223 = vmatpush.msra.mxu0 0.0
  %4224 = vmatpush.msra.mxu0 0.0
  %4225 = vmatpush.msra.mxu0 0.0
  %4226 = vmatpush.msra.mxu0 %v4209
  %4227 = vmatmul.f32.gmra.mxu0 %v4113
  %v4228 = vpop.f32.mrf.mxu0
  %v4229 = vadd.f32 0.0, %v4228
  %4230 = vmatmul.f32.gmra.mxu0 %v4116
  %v4231 = vpop.f32.mrf.mxu0
  %v4232 = vadd.f32 0.0, %v4231
  %4233 = vmatmul.f32.gmra.mxu0 %v4119
  %v4234 = vpop.f32.mrf.mxu0
  %v4235 = vadd.f32 0.0, %v4234
  %4236 = vmatmul.f32.gmra.mxu0 %v4122
  %v4237 = vpop.f32.mrf.mxu0
  %v4238 = vadd.f32 0.0, %v4237
  %4239 = vmatmul.f32.gmra.mxu0 %v4125
  %v4240 = vpop.f32.mrf.mxu0
  %v4241 = vadd.f32 0.0, %v4240
  %4242 = vmatmul.f32.gmra.mxu0 %v4128
  %v4243 = vpop.f32.mrf.mxu0
  %v4244 = vadd.f32 0.0, %v4243
  %4245 = vmatmul.f32.gmra.mxu0 %v4131
  %v4246 = vpop.f32.mrf.mxu0
  %v4247 = vadd.f32 0.0, %v4246
  %4248 = vmatmul.f32.gmra.mxu0 %v4134
  %v4249 = vpop.f32.mrf.mxu0
  %v4250 = vadd.f32 0.0, %v4249
  %4251 = vmatmul.f32.gmra.mxu0 %v4137
  %v4252 = vpop.f32.mrf.mxu0
  %v4253 = vadd.f32 0.0, %v4252
  %4254 = vmatmul.f32.gmra.mxu0 %v4140
  %v4255 = vpop.f32.mrf.mxu0
  %v4256 = vadd.f32 0.0, %v4255
  %4257 = vmatmul.f32.gmra.mxu0 %v4143
  %v4258 = vpop.f32.mrf.mxu0
  %v4259 = vadd.f32 0.0, %v4258
  %4260 = vmatmul.f32.gmra.mxu0 %v4146
  %v4261 = vpop.f32.mrf.mxu0
  %v4262 = vadd.f32 0.0, %v4261
  %4263 = vmatmul.f32.gmra.mxu0 %v4149
  %v4264 = vpop.f32.mrf.mxu0
  %v4265 = vadd.f32 0.0, %v4264
  %4266 = vmatmul.f32.gmra.mxu0 %v4152
  %v4267 = vpop.f32.mrf.mxu0
  %v4268 = vadd.f32 0.0, %v4267
  %4269 = vmatmul.f32.gmra.mxu0 %v4155
  %v4270 = vpop.f32.mrf.mxu0
  %v4271 = vadd.f32 0.0, %v4270
  %4272 = vmatmul.f32.gmra.mxu0 %v4158
  %v4273 = vpop.f32.mrf.mxu0
  %v4274 = vadd.f32 0.0, %v4273
  %4275 = vmatmul.f32.gmra.mxu0 %v4161
  %v4276 = vpop.f32.mrf.mxu0
  %v4277 = vadd.f32 0.0, %v4276
  %4278 = vmatmul.f32.gmra.mxu0 %v4164
  %v4279 = vpop.f32.mrf.mxu0
  %v4280 = vadd.f32 0.0, %v4279
  %4281 = vmatmul.f32.gmra.mxu0 %v4167
  %v4282 = vpop.f32.mrf.mxu0
  %v4283 = vadd.f32 0.0, %v4282
  %4284 = vmatmul.f32.gmra.mxu0 %v4170
  %v4285 = vpop.f32.mrf.mxu0
  %v4286 = vadd.f32 0.0, %v4285
  %4287 = vmatmul.f32.gmra.mxu0 %v4173
  %v4288 = vpop.f32.mrf.mxu0
  %v4289 = vadd.f32 0.0, %v4288
  %4290 = vmatmul.f32.gmra.mxu0 %v4176
  %v4291 = vpop.f32.mrf.mxu0
  %v4292 = vadd.f32 0.0, %v4291
  %4293 = vmatmul.f32.gmra.mxu0 %v4179
  %v4294 = vpop.f32.mrf.mxu0
  %v4295 = vadd.f32 0.0, %v4294
  %4296 = vmatmul.f32.gmra.mxu0 %v4182
  %v4297 = vpop.f32.mrf.mxu0
  %v4298 = vadd.f32 0.0, %v4297
  %4299 = vmatmul.f32.gmra.mxu0 %v4185
  %v4300 = vpop.f32.mrf.mxu0
  %v4301 = vadd.f32 0.0, %v4300
  %4302 = vmatmul.f32.gmra.mxu0 %v4188
  %v4303 = vpop.f32.mrf.mxu0
  %v4304 = vadd.f32 0.0, %v4303
  %4305 = vmatmul.f32.gmra.mxu0 %v4191
  %v4306 = vpop.f32.mrf.mxu0
  %v4307 = vadd.f32 0.0, %v4306
  %4308 = vmatmul.f32.gmra.mxu0 %v4194
  %v4309 = vpop.f32.mrf.mxu0
  %v4310 = vadd.f32 0.0, %v4309
  %4311 = vmatmul.f32.gmra.mxu0 %v4197
  %v4312 = vpop.f32.mrf.mxu0
  %v4313 = vadd.f32 0.0, %v4312
  %4314 = vmatmul.f32.gmra.mxu0 %v4200
  %v4315 = vpop.f32.mrf.mxu0
  %v4316 = vadd.f32 0.0, %v4315
  %4317 = vmatmul.f32.gmra.mxu0 %v4203
  %v4318 = vpop.f32.mrf.mxu0
  %v4319 = vadd.f32 0.0, %v4318
  %4320 = vmatmul.f32.gmra.mxu0 %v4206
  %v4321 = vpop.f32.mrf.mxu0
  %v4322 = vadd.f32 0.0, %v4321
  %4323 = vdwg.mxu0
  %v4324 = vadd.f32 %v4047, %v4229
  %v4325 = vadd.f32 %v4048, %v4232
  %v4326 = vadd.f32 %v4049, %v4235
  %v4327 = vadd.f32 %v4050, %v4238
  %v4328 = vadd.f32 %v4051, %v4241
  %v4329 = vadd.f32 %v4052, %v4244
  %v4330 = vadd.f32 %v4053, %v4247
  %v4331 = vadd.f32 %v4054, %v4250
  %v4332 = vadd.f32 %v4055, %v4253
  %v4333 = vadd.f32 %v4056, %v4256
  %v4334 = vadd.f32 %v4057, %v4259
  %v4335 = vadd.f32 %v4058, %v4262
  %v4336 = vadd.f32 %v4059, %v4265
  %v4337 = vadd.f32 %v4060, %v4268
  %v4338 = vadd.f32 %v4061, %v4271
  %v4339 = vadd.f32 %v4062, %v4274
  %v4340 = vadd.f32 %v4063, %v4277
  %v4341 = vadd.f32 %v4064, %v4280
  %v4342 = vadd.f32 %v4065, %v4283
  %v4343 = vadd.f32 %v4066, %v4286
  %v4344 = vadd.f32 %v4067, %v4289
  %v4345 = vadd.f32 %v4068, %v4292
  %v4346 = vadd.f32 %v4069, %v4295
  %v4347 = vadd.f32 %v4070, %v4298
  %v4348 = vadd.f32 %v4071, %v4301
  %v4349 = vadd.f32 %v4072, %v4304
  %v4350 = vadd.f32 %v4073, %v4307
  %v4351 = vadd.f32 %v4074, %v4310
  %v4352 = vadd.f32 %v4075, %v4313
  %v4353 = vadd.f32 %v4076, %v4316
  %v4354 = vadd.f32 %v4077, %v4319
  %v4355 = vadd.f32 %v4078, %v4322
  %v4356 = vld [vmem:[%s31 + $0x2] sm:$0xff]
  %v4357 = vld [vmem:[%s31 + $0xa] sm:$0xff]
  %v4358 = vld [vmem:[%s31 + $0x1a] sm:$0xff]
  %v4359 = vld [vmem:[%s31 + $0x22] sm:$0xff]
  %v4360 = vld [vmem:[%s31 + $0x32] sm:$0xff]
  %v4361 = vld [vmem:[%s31 + $0x3a] sm:$0xff]
  %v4362 = vld [vmem:[%s31 + $0x4a] sm:$0xff]
  %v4363 = vld [vmem:[%s31 + $0x52] sm:$0xff]
  %v4364 = vld [vmem:[%s31 + $0x62] sm:$0xff]
  %v4365 = vld [vmem:[%s31 + $0x6a] sm:$0xff]
  %v4366 = vld [vmem:[%s31 + $0x7a] sm:$0xff]
  %v4367 = vld [vmem:[%s31 + $0x82] sm:$0xff]
  %v4368 = vld [vmem:[%s31 + $0x92] sm:$0xff]
  %v4369 = vld [vmem:[%s31 + $0x9a] sm:$0xff]
  %v4370 = vld [vmem:[%s31 + $0xaa] sm:$0xff]
  %v4371 = vld [vmem:[%s31 + $0xb2] sm:$0xff]
  %v4372 = vld [vmem:[%s31 + $0xc2] sm:$0xff]
  %v4373 = vld [vmem:[%s31 + $0xca] sm:$0xff]
  %v4374 = vld [vmem:[%s31 + $0xda] sm:$0xff]
  %v4375 = vld [vmem:[%s31 + $0xe2] sm:$0xff]
  %v4376 = vld [vmem:[%s31 + $0xf2] sm:$0xff]
  %v4377 = vld [vmem:[%s31 + $0xfa] sm:$0xff]
  %v4378 = vld [vmem:[%s31 + $0x10a] sm:$0xff]
  %v4379 = vld [vmem:[%s31 + $0x112] sm:$0xff]
  %v4380 = vld [vmem:[%s31 + $0x122] sm:$0xff]
  %v4381 = vld [vmem:[%s31 + $0x12a] sm:$0xff]
  %v4382 = vld [vmem:[%s31 + $0x13a] sm:$0xff]
  %v4383 = vld [vmem:[%s31 + $0x142] sm:$0xff]
  %v4384 = vld [vmem:[%s31 + $0x152] sm:$0xff]
  %v4385 = vld [vmem:[%s31 + $0x15a] sm:$0xff]
  %v4386 = vld [vmem:[%s31 + $0x16a] sm:$0xff]
  %v4387 = vld [vmem:[%s31 + $0x172] sm:$0xff]
  %v4388 = vld [vmem:[%s1589] sm:$0xf]
  %v4390 = vsel %vm22, %v4356, 0
  %v4393 = vsel %vm22, %v4357, 0
  %v4396 = vsel %vm22, %v4358, 0
  %v4399 = vsel %vm22, %v4359, 0
  %v4402 = vsel %vm22, %v4360, 0
  %v4405 = vsel %vm22, %v4361, 0
  %v4408 = vsel %vm22, %v4362, 0
  %v4411 = vsel %vm22, %v4363, 0
  %v4414 = vsel %vm22, %v4364, 0
  %v4417 = vsel %vm22, %v4365, 0
  %v4420 = vsel %vm22, %v4366, 0
  %v4423 = vsel %vm22, %v4367, 0
  %v4426 = vsel %vm22, %v4368, 0
  %v4429 = vsel %vm22, %v4369, 0
  %v4432 = vsel %vm22, %v4370, 0
  %v4435 = vsel %vm22, %v4371, 0
  %v4438 = vsel %vm22, %v4372, 0
  %v4441 = vsel %vm22, %v4373, 0
  %v4444 = vsel %vm22, %v4374, 0
  %v4447 = vsel %vm22, %v4375, 0
  %v4450 = vsel %vm22, %v4376, 0
  %v4453 = vsel %vm22, %v4377, 0
  %v4456 = vsel %vm22, %v4378, 0
  %v4459 = vsel %vm22, %v4379, 0
  %v4462 = vsel %vm22, %v4380, 0
  %v4465 = vsel %vm22, %v4381, 0
  %v4468 = vsel %vm22, %v4382, 0
  %v4471 = vsel %vm22, %v4383, 0
  %v4474 = vsel %vm22, %v4384, 0
  %v4477 = vsel %vm22, %v4385, 0
  %v4480 = vsel %vm22, %v4386, 0
  %v4483 = vsel %vm22, %v4387, 0
  %v4486 = vsel %vm394, %v4388, 0
  %4488 = vmatpush.msra.mxu0 0.0
  %4489 = vmatpush.msra.mxu0 0.0
  %4490 = vmatpush.msra.mxu0 0.0
  %4491 = vmatpush.msra.mxu0 0.0
  %4492 = vmatpush.msra.mxu0 0.0
  %4493 = vmatpush.msra.mxu0 0.0
  %4494 = vmatpush.msra.mxu0 0.0
  %4495 = vmatpush.msra.mxu0 0.0
  %4496 = vmatpush.msra.mxu0 0.0
  %4497 = vmatpush.msra.mxu0 0.0
  %4498 = vmatpush.msra.mxu0 0.0
  %4499 = vmatpush.msra.mxu0 0.0
  %4500 = vmatpush.msra.mxu0 0.0
  %4501 = vmatpush.msra.mxu0 0.0
  %4502 = vmatpush.msra.mxu0 0.0
  %4503 = vmatpush.msra.mxu0 %v4486
  %4504 = vmatmul.f32.gmra.mxu0 %v4390
  %v4505 = vpop.f32.mrf.mxu0
  %v4506 = vadd.f32 0.0, %v4505
  %4507 = vmatmul.f32.gmra.mxu0 %v4393
  %v4508 = vpop.f32.mrf.mxu0
  %v4509 = vadd.f32 0.0, %v4508
  %4510 = vmatmul.f32.gmra.mxu0 %v4396
  %v4511 = vpop.f32.mrf.mxu0
  %v4512 = vadd.f32 0.0, %v4511
  %4513 = vmatmul.f32.gmra.mxu0 %v4399
  %v4514 = vpop.f32.mrf.mxu0
  %v4515 = vadd.f32 0.0, %v4514
  %4516 = vmatmul.f32.gmra.mxu0 %v4402
  %v4517 = vpop.f32.mrf.mxu0
  %v4518 = vadd.f32 0.0, %v4517
  %4519 = vmatmul.f32.gmra.mxu0 %v4405
  %v4520 = vpop.f32.mrf.mxu0
  %v4521 = vadd.f32 0.0, %v4520
  %4522 = vmatmul.f32.gmra.mxu0 %v4408
  %v4523 = vpop.f32.mrf.mxu0
  %v4524 = vadd.f32 0.0, %v4523
  %4525 = vmatmul.f32.gmra.mxu0 %v4411
  %v4526 = vpop.f32.mrf.mxu0
  %v4527 = vadd.f32 0.0, %v4526
  %4528 = vmatmul.f32.gmra.mxu0 %v4414
  %v4529 = vpop.f32.mrf.mxu0
  %v4530 = vadd.f32 0.0, %v4529
  %4531 = vmatmul.f32.gmra.mxu0 %v4417
  %v4532 = vpop.f32.mrf.mxu0
  %v4533 = vadd.f32 0.0, %v4532
  %4534 = vmatmul.f32.gmra.mxu0 %v4420
  %v4535 = vpop.f32.mrf.mxu0
  %v4536 = vadd.f32 0.0, %v4535
  %4537 = vmatmul.f32.gmra.mxu0 %v4423
  %v4538 = vpop.f32.mrf.mxu0
  %v4539 = vadd.f32 0.0, %v4538
  %4540 = vmatmul.f32.gmra.mxu0 %v4426
  %v4541 = vpop.f32.mrf.mxu0
  %v4542 = vadd.f32 0.0, %v4541
  %4543 = vmatmul.f32.gmra.mxu0 %v4429
  %v4544 = vpop.f32.mrf.mxu0
  %v4545 = vadd.f32 0.0, %v4544
  %4546 = vmatmul.f32.gmra.mxu0 %v4432
  %v4547 = vpop.f32.mrf.mxu0
  %v4548 = vadd.f32 0.0, %v4547
  %4549 = vmatmul.f32.gmra.mxu0 %v4435
  %v4550 = vpop.f32.mrf.mxu0
  %v4551 = vadd.f32 0.0, %v4550
  %4552 = vmatmul.f32.gmra.mxu0 %v4438
  %v4553 = vpop.f32.mrf.mxu0
  %v4554 = vadd.f32 0.0, %v4553
  %4555 = vmatmul.f32.gmra.mxu0 %v4441
  %v4556 = vpop.f32.mrf.mxu0
  %v4557 = vadd.f32 0.0, %v4556
  %4558 = vmatmul.f32.gmra.mxu0 %v4444
  %v4559 = vpop.f32.mrf.mxu0
  %v4560 = vadd.f32 0.0, %v4559
  %4561 = vmatmul.f32.gmra.mxu0 %v4447
  %v4562 = vpop.f32.mrf.mxu0
  %v4563 = vadd.f32 0.0, %v4562
  %4564 = vmatmul.f32.gmra.mxu0 %v4450
  %v4565 = vpop.f32.mrf.mxu0
  %v4566 = vadd.f32 0.0, %v4565
  %4567 = vmatmul.f32.gmra.mxu0 %v4453
  %v4568 = vpop.f32.mrf.mxu0
  %v4569 = vadd.f32 0.0, %v4568
  %4570 = vmatmul.f32.gmra.mxu0 %v4456
  %v4571 = vpop.f32.mrf.mxu0
  %v4572 = vadd.f32 0.0, %v4571
  %4573 = vmatmul.f32.gmra.mxu0 %v4459
  %v4574 = vpop.f32.mrf.mxu0
  %v4575 = vadd.f32 0.0, %v4574
  %4576 = vmatmul.f32.gmra.mxu0 %v4462
  %v4577 = vpop.f32.mrf.mxu0
  %v4578 = vadd.f32 0.0, %v4577
  %4579 = vmatmul.f32.gmra.mxu0 %v4465
  %v4580 = vpop.f32.mrf.mxu0
  %v4581 = vadd.f32 0.0, %v4580
  %4582 = vmatmul.f32.gmra.mxu0 %v4468
  %v4583 = vpop.f32.mrf.mxu0
  %v4584 = vadd.f32 0.0, %v4583
  %4585 = vmatmul.f32.gmra.mxu0 %v4471
  %v4586 = vpop.f32.mrf.mxu0
  %v4587 = vadd.f32 0.0, %v4586
  %4588 = vmatmul.f32.gmra.mxu0 %v4474
  %v4589 = vpop.f32.mrf.mxu0
  %v4590 = vadd.f32 0.0, %v4589
  %4591 = vmatmul.f32.gmra.mxu0 %v4477
  %v4592 = vpop.f32.mrf.mxu0
  %v4593 = vadd.f32 0.0, %v4592
  %4594 = vmatmul.f32.gmra.mxu0 %v4480
  %v4595 = vpop.f32.mrf.mxu0
  %v4596 = vadd.f32 0.0, %v4595
  %4597 = vmatmul.f32.gmra.mxu0 %v4483
  %v4598 = vpop.f32.mrf.mxu0
  %v4599 = vadd.f32 0.0, %v4598
  %4600 = vdwg.mxu0
  %v4601 = vadd.f32 %v4324, %v4506
  %v4602 = vadd.f32 %v4325, %v4509
  %v4603 = vadd.f32 %v4326, %v4512
  %v4604 = vadd.f32 %v4327, %v4515
  %v4605 = vadd.f32 %v4328, %v4518
  %v4606 = vadd.f32 %v4329, %v4521
  %v4607 = vadd.f32 %v4330, %v4524
  %v4608 = vadd.f32 %v4331, %v4527
  %v4609 = vadd.f32 %v4332, %v4530
  %v4610 = vadd.f32 %v4333, %v4533
  %v4611 = vadd.f32 %v4334, %v4536
  %v4612 = vadd.f32 %v4335, %v4539
  %v4613 = vadd.f32 %v4336, %v4542
  %v4614 = vadd.f32 %v4337, %v4545
  %v4615 = vadd.f32 %v4338, %v4548
  %v4616 = vadd.f32 %v4339, %v4551
  %v4617 = vadd.f32 %v4340, %v4554
  %v4618 = vadd.f32 %v4341, %v4557
  %v4619 = vadd.f32 %v4342, %v4560
  %v4620 = vadd.f32 %v4343, %v4563
  %v4621 = vadd.f32 %v4344, %v4566
  %v4622 = vadd.f32 %v4345, %v4569
  %v4623 = vadd.f32 %v4346, %v4572
  %v4624 = vadd.f32 %v4347, %v4575
  %v4625 = vadd.f32 %v4348, %v4578
  %v4626 = vadd.f32 %v4349, %v4581
  %v4627 = vadd.f32 %v4350, %v4584
  %v4628 = vadd.f32 %v4351, %v4587
  %v4629 = vadd.f32 %v4352, %v4590
  %v4630 = vadd.f32 %v4353, %v4593
  %v4631 = vadd.f32 %v4354, %v4596
  %v4632 = vadd.f32 %v4355, %v4599
  %v4633 = vld [vmem:[%s1835] sm:$0xff]
  %v4634 = vld [vmem:[%s1835 + $0x8] sm:$0xff]
  %v4635 = vld [vmem:[%s1835 + $0x18] sm:$0xff]
  %v4636 = vld [vmem:[%s1835 + $0x20] sm:$0xff]
  %v4637 = vld [vmem:[%s1835 + $0x30] sm:$0xff]
  %v4638 = vld [vmem:[%s1835 + $0x38] sm:$0xff]
  %v4639 = vld [vmem:[%s1835 + $0x48] sm:$0xff]
  %v4640 = vld [vmem:[%s1835 + $0x50] sm:$0xff]
  %v4641 = vld [vmem:[%s1835 + $0x60] sm:$0xff]
  %v4642 = vld [vmem:[%s1835 + $0x68] sm:$0xff]
  %v4643 = vld [vmem:[%s1835 + $0x78] sm:$0xff]
  %v4644 = vld [vmem:[%s1835 + $0x80] sm:$0xff]
  %v4645 = vld [vmem:[%s1835 + $0x90] sm:$0xff]
  %v4646 = vld [vmem:[%s1835 + $0x98] sm:$0xff]
  %v4647 = vld [vmem:[%s1835 + $0xa8] sm:$0xff]
  %v4648 = vld [vmem:[%s1835 + $0xb0] sm:$0xff]
  %v4649 = vld [vmem:[%s1835 + $0xc0] sm:$0xff]
  %v4650 = vld [vmem:[%s1835 + $0xc8] sm:$0xff]
  %v4651 = vld [vmem:[%s1835 + $0xd8] sm:$0xff]
  %v4652 = vld [vmem:[%s1835 + $0xe0] sm:$0xff]
  %v4653 = vld [vmem:[%s1835 + $0xf0] sm:$0xff]
  %v4654 = vld [vmem:[%s1835 + $0xf8] sm:$0xff]
  %v4655 = vld [vmem:[%s1835 + $0x108] sm:$0xff]
  %v4656 = vld [vmem:[%s1835 + $0x110] sm:$0xff]
  %v4657 = vld [vmem:[%s1835 + $0x120] sm:$0xff]
  %v4658 = vld [vmem:[%s1835 + $0x128] sm:$0xff]
  %v4659 = vld [vmem:[%s1835 + $0x138] sm:$0xff]
  %v4660 = vld [vmem:[%s1835 + $0x140] sm:$0xff]
  %v4661 = vld [vmem:[%s1835 + $0x150] sm:$0xff]
  %v4662 = vld [vmem:[%s1835 + $0x158] sm:$0xff]
  %v4663 = vld [vmem:[%s1835 + $0x168] sm:$0xff]
  %v4664 = vld [vmem:[%s1835 + $0x170] sm:$0xff]
  %v4665 = vld [vmem:[%s1868] sm:$0xf]
  %v4667 = vsel %vm22, %v4633, 0
  %v4670 = vsel %vm22, %v4634, 0
  %v4673 = vsel %vm22, %v4635, 0
  %v4676 = vsel %vm22, %v4636, 0
  %v4679 = vsel %vm22, %v4637, 0
  %v4682 = vsel %vm22, %v4638, 0
  %v4685 = vsel %vm22, %v4639, 0
  %v4688 = vsel %vm22, %v4640, 0
  %v4691 = vsel %vm22, %v4641, 0
  %v4694 = vsel %vm22, %v4642, 0
  %v4697 = vsel %vm22, %v4643, 0
  %v4700 = vsel %vm22, %v4644, 0
  %v4703 = vsel %vm22, %v4645, 0
  %v4706 = vsel %vm22, %v4646, 0
  %v4709 = vsel %vm22, %v4647, 0
  %v4712 = vsel %vm22, %v4648, 0
  %v4715 = vsel %vm22, %v4649, 0
  %v4718 = vsel %vm22, %v4650, 0
  %v4721 = vsel %vm22, %v4651, 0
  %v4724 = vsel %vm22, %v4652, 0
  %v4727 = vsel %vm22, %v4653, 0
  %v4730 = vsel %vm22, %v4654, 0
  %v4733 = vsel %vm22, %v4655, 0
  %v4736 = vsel %vm22, %v4656, 0
  %v4739 = vsel %vm22, %v4657, 0
  %v4742 = vsel %vm22, %v4658, 0
  %v4745 = vsel %vm22, %v4659, 0
  %v4748 = vsel %vm22, %v4660, 0
  %v4751 = vsel %vm22, %v4661, 0
  %v4754 = vsel %vm22, %v4662, 0
  %v4757 = vsel %vm22, %v4663, 0
  %v4760 = vsel %vm22, %v4664, 0
  %v4763 = vsel %vm394, %v4665, 0
  %4765 = vmatpush.msra.mxu0 0.0
  %4766 = vmatpush.msra.mxu0 0.0
  %4767 = vmatpush.msra.mxu0 0.0
  %4768 = vmatpush.msra.mxu0 0.0
  %4769 = vmatpush.msra.mxu0 0.0
  %4770 = vmatpush.msra.mxu0 0.0
  %4771 = vmatpush.msra.mxu0 0.0
  %4772 = vmatpush.msra.mxu0 0.0
  %4773 = vmatpush.msra.mxu0 0.0
  %4774 = vmatpush.msra.mxu0 0.0
  %4775 = vmatpush.msra.mxu0 0.0
  %4776 = vmatpush.msra.mxu0 0.0
  %4777 = vmatpush.msra.mxu0 0.0
  %4778 = vmatpush.msra.mxu0 0.0
  %4779 = vmatpush.msra.mxu0 0.0
  %4780 = vmatpush.msra.mxu0 %v4763
  %4781 = vmatmul.f32.gmra.mxu0 %v4667
  %v4782 = vpop.f32.mrf.mxu0
  %v4783 = vadd.f32 0.0, %v4782
  %4784 = vmatmul.f32.gmra.mxu0 %v4670
  %v4785 = vpop.f32.mrf.mxu0
  %v4786 = vadd.f32 0.0, %v4785
  %4787 = vmatmul.f32.gmra.mxu0 %v4673
  %v4788 = vpop.f32.mrf.mxu0
  %v4789 = vadd.f32 0.0, %v4788
  %4790 = vmatmul.f32.gmra.mxu0 %v4676
  %v4791 = vpop.f32.mrf.mxu0
  %v4792 = vadd.f32 0.0, %v4791
  %4793 = vmatmul.f32.gmra.mxu0 %v4679
  %v4794 = vpop.f32.mrf.mxu0
  %v4795 = vadd.f32 0.0, %v4794
  %4796 = vmatmul.f32.gmra.mxu0 %v4682
  %v4797 = vpop.f32.mrf.mxu0
  %v4798 = vadd.f32 0.0, %v4797
  %4799 = vmatmul.f32.gmra.mxu0 %v4685
  %v4800 = vpop.f32.mrf.mxu0
  %v4801 = vadd.f32 0.0, %v4800
  %4802 = vmatmul.f32.gmra.mxu0 %v4688
  %v4803 = vpop.f32.mrf.mxu0
  %v4804 = vadd.f32 0.0, %v4803
  %4805 = vmatmul.f32.gmra.mxu0 %v4691
  %v4806 = vpop.f32.mrf.mxu0
  %v4807 = vadd.f32 0.0, %v4806
  %4808 = vmatmul.f32.gmra.mxu0 %v4694
  %v4809 = vpop.f32.mrf.mxu0
  %v4810 = vadd.f32 0.0, %v4809
  %4811 = vmatmul.f32.gmra.mxu0 %v4697
  %v4812 = vpop.f32.mrf.mxu0
  %v4813 = vadd.f32 0.0, %v4812
  %4814 = vmatmul.f32.gmra.mxu0 %v4700
  %v4815 = vpop.f32.mrf.mxu0
  %v4816 = vadd.f32 0.0, %v4815
  %4817 = vmatmul.f32.gmra.mxu0 %v4703
  %v4818 = vpop.f32.mrf.mxu0
  %v4819 = vadd.f32 0.0, %v4818
  %4820 = vmatmul.f32.gmra.mxu0 %v4706
  %v4821 = vpop.f32.mrf.mxu0
  %v4822 = vadd.f32 0.0, %v4821
  %4823 = vmatmul.f32.gmra.mxu0 %v4709
  %v4824 = vpop.f32.mrf.mxu0
  %v4825 = vadd.f32 0.0, %v4824
  %4826 = vmatmul.f32.gmra.mxu0 %v4712
  %v4827 = vpop.f32.mrf.mxu0
  %v4828 = vadd.f32 0.0, %v4827
  %4829 = vmatmul.f32.gmra.mxu0 %v4715
  %v4830 = vpop.f32.mrf.mxu0
  %v4831 = vadd.f32 0.0, %v4830
  %4832 = vmatmul.f32.gmra.mxu0 %v4718
  %v4833 = vpop.f32.mrf.mxu0
  %v4834 = vadd.f32 0.0, %v4833
  %4835 = vmatmul.f32.gmra.mxu0 %v4721
  %v4836 = vpop.f32.mrf.mxu0
  %v4837 = vadd.f32 0.0, %v4836
  %4838 = vmatmul.f32.gmra.mxu0 %v4724
  %v4839 = vpop.f32.mrf.mxu0
  %v4840 = vadd.f32 0.0, %v4839
  %4841 = vmatmul.f32.gmra.mxu0 %v4727
  %v4842 = vpop.f32.mrf.mxu0
  %v4843 = vadd.f32 0.0, %v4842
  %4844 = vmatmul.f32.gmra.mxu0 %v4730
  %v4845 = vpop.f32.mrf.mxu0
  %v4846 = vadd.f32 0.0, %v4845
  %4847 = vmatmul.f32.gmra.mxu0 %v4733
  %v4848 = vpop.f32.mrf.mxu0
  %v4849 = vadd.f32 0.0, %v4848
  %4850 = vmatmul.f32.gmra.mxu0 %v4736
  %v4851 = vpop.f32.mrf.mxu0
  %v4852 = vadd.f32 0.0, %v4851
  %4853 = vmatmul.f32.gmra.mxu0 %v4739
  %v4854 = vpop.f32.mrf.mxu0
  %v4855 = vadd.f32 0.0, %v4854
  %4856 = vmatmul.f32.gmra.mxu0 %v4742
  %v4857 = vpop.f32.mrf.mxu0
  %v4858 = vadd.f32 0.0, %v4857
  %4859 = vmatmul.f32.gmra.mxu0 %v4745
  %v4860 = vpop.f32.mrf.mxu0
  %v4861 = vadd.f32 0.0, %v4860
  %4862 = vmatmul.f32.gmra.mxu0 %v4748
  %v4863 = vpop.f32.mrf.mxu0
  %v4864 = vadd.f32 0.0, %v4863
  %4865 = vmatmul.f32.gmra.mxu0 %v4751
  %v4866 = vpop.f32.mrf.mxu0
  %v4867 = vadd.f32 0.0, %v4866
  %4868 = vmatmul.f32.gmra.mxu0 %v4754
  %v4869 = vpop.f32.mrf.mxu0
  %v4870 = vadd.f32 0.0, %v4869
  %4871 = vmatmul.f32.gmra.mxu0 %v4757
  %v4872 = vpop.f32.mrf.mxu0
  %v4873 = vadd.f32 0.0, %v4872
  %4874 = vmatmul.f32.gmra.mxu0 %v4760
  %v4875 = vpop.f32.mrf.mxu0
  %v4876 = vadd.f32 0.0, %v4875
  %4877 = vdwg.mxu0
  %v4878 = vadd.f32 %v4601, %v4783
  %v4879 = vadd.f32 %v4602, %v4786
  %v4880 = vadd.f32 %v4603, %v4789
  %v4881 = vadd.f32 %v4604, %v4792
  %v4882 = vadd.f32 %v4605, %v4795
  %v4883 = vadd.f32 %v4606, %v4798
  %v4884 = vadd.f32 %v4607, %v4801
  %v4885 = vadd.f32 %v4608, %v4804
  %v4886 = vadd.f32 %v4609, %v4807
  %v4887 = vadd.f32 %v4610, %v4810
  %v4888 = vadd.f32 %v4611, %v4813
  %v4889 = vadd.f32 %v4612, %v4816
  %v4890 = vadd.f32 %v4613, %v4819
  %v4891 = vadd.f32 %v4614, %v4822
  %v4892 = vadd.f32 %v4615, %v4825
  %v4893 = vadd.f32 %v4616, %v4828
  %v4894 = vadd.f32 %v4617, %v4831
  %v4895 = vadd.f32 %v4618, %v4834
  %v4896 = vadd.f32 %v4619, %v4837
  %v4897 = vadd.f32 %v4620, %v4840
  %v4898 = vadd.f32 %v4621, %v4843
  %v4899 = vadd.f32 %v4622, %v4846
  %v4900 = vadd.f32 %v4623, %v4849
  %v4901 = vadd.f32 %v4624, %v4852
  %v4902 = vadd.f32 %v4625, %v4855
  %v4903 = vadd.f32 %v4626, %v4858
  %v4904 = vadd.f32 %v4627, %v4861
  %v4905 = vadd.f32 %v4628, %v4864
  %v4906 = vadd.f32 %v4629, %v4867
  %v4907 = vadd.f32 %v4630, %v4870
  %v4908 = vadd.f32 %v4631, %v4873
  %v4909 = vadd.f32 %v4632, %v4876
  %v4910 = vld [vmem:[%s1835 + $0x1] sm:$0xff]
  %v4911 = vld [vmem:[%s1835 + $0x9] sm:$0xff]
  %v4912 = vld [vmem:[%s1835 + $0x19] sm:$0xff]
  %v4913 = vld [vmem:[%s1835 + $0x21] sm:$0xff]
  %v4914 = vld [vmem:[%s1835 + $0x31] sm:$0xff]
  %v4915 = vld [vmem:[%s1835 + $0x39] sm:$0xff]
  %v4916 = vld [vmem:[%s1835 + $0x49] sm:$0xff]
  %v4917 = vld [vmem:[%s1835 + $0x51] sm:$0xff]
  %v4918 = vld [vmem:[%s1835 + $0x61] sm:$0xff]
  %v4919 = vld [vmem:[%s1835 + $0x69] sm:$0xff]
  %v4920 = vld [vmem:[%s1835 + $0x79] sm:$0xff]
  %v4921 = vld [vmem:[%s1835 + $0x81] sm:$0xff]
  %v4922 = vld [vmem:[%s1835 + $0x91] sm:$0xff]
  %v4923 = vld [vmem:[%s1835 + $0x99] sm:$0xff]
  %v4924 = vld [vmem:[%s1835 + $0xa9] sm:$0xff]
  %v4925 = vld [vmem:[%s1835 + $0xb1] sm:$0xff]
  %v4926 = vld [vmem:[%s1835 + $0xc1] sm:$0xff]
  %v4927 = vld [vmem:[%s1835 + $0xc9] sm:$0xff]
  %v4928 = vld [vmem:[%s1835 + $0xd9] sm:$0xff]
  %v4929 = vld [vmem:[%s1835 + $0xe1] sm:$0xff]
  %v4930 = vld [vmem:[%s1835 + $0xf1] sm:$0xff]
  %v4931 = vld [vmem:[%s1835 + $0xf9] sm:$0xff]
  %v4932 = vld [vmem:[%s1835 + $0x109] sm:$0xff]
  %v4933 = vld [vmem:[%s1835 + $0x111] sm:$0xff]
  %v4934 = vld [vmem:[%s1835 + $0x121] sm:$0xff]
  %v4935 = vld [vmem:[%s1835 + $0x129] sm:$0xff]
  %v4936 = vld [vmem:[%s1835 + $0x139] sm:$0xff]
  %v4937 = vld [vmem:[%s1835 + $0x141] sm:$0xff]
  %v4938 = vld [vmem:[%s1835 + $0x151] sm:$0xff]
  %v4939 = vld [vmem:[%s1835 + $0x159] sm:$0xff]
  %v4940 = vld [vmem:[%s1835 + $0x169] sm:$0xff]
  %v4941 = vld [vmem:[%s1835 + $0x171] sm:$0xff]
  %v4942 = vld [vmem:[%s2146] sm:$0xf]
  %v4944 = vsel %vm22, %v4910, 0
  %v4947 = vsel %vm22, %v4911, 0
  %v4950 = vsel %vm22, %v4912, 0
  %v4953 = vsel %vm22, %v4913, 0
  %v4956 = vsel %vm22, %v4914, 0
  %v4959 = vsel %vm22, %v4915, 0
  %v4962 = vsel %vm22, %v4916, 0
  %v4965 = vsel %vm22, %v4917, 0
  %v4968 = vsel %vm22, %v4918, 0
  %v4971 = vsel %vm22, %v4919, 0
  %v4974 = vsel %vm22, %v4920, 0
  %v4977 = vsel %vm22, %v4921, 0
  %v4980 = vsel %vm22, %v4922, 0
  %v4983 = vsel %vm22, %v4923, 0
  %v4986 = vsel %vm22, %v4924, 0
  %v4989 = vsel %vm22, %v4925, 0
  %v4992 = vsel %vm22, %v4926, 0
  %v4995 = vsel %vm22, %v4927, 0
  %v4998 = vsel %vm22, %v4928, 0
  %v5001 = vsel %vm22, %v4929, 0
  %v5004 = vsel %vm22, %v4930, 0
  %v5007 = vsel %vm22, %v4931, 0
  %v5010 = vsel %vm22, %v4932, 0
  %v5013 = vsel %vm22, %v4933, 0
  %v5016 = vsel %vm22, %v4934, 0
  %v5019 = vsel %vm22, %v4935, 0
  %v5022 = vsel %vm22, %v4936, 0
  %v5025 = vsel %vm22, %v4937, 0
  %v5028 = vsel %vm22, %v4938, 0
  %v5031 = vsel %vm22, %v4939, 0
  %v5034 = vsel %vm22, %v4940, 0
  %v5037 = vsel %vm22, %v4941, 0
  %v5040 = vsel %vm394, %v4942, 0
  %5042 = vmatpush.msra.mxu0 0.0
  %5043 = vmatpush.msra.mxu0 0.0
  %5044 = vmatpush.msra.mxu0 0.0
  %5045 = vmatpush.msra.mxu0 0.0
  %5046 = vmatpush.msra.mxu0 0.0
  %5047 = vmatpush.msra.mxu0 0.0
  %5048 = vmatpush.msra.mxu0 0.0
  %5049 = vmatpush.msra.mxu0 0.0
  %5050 = vmatpush.msra.mxu0 0.0
  %5051 = vmatpush.msra.mxu0 0.0
  %5052 = vmatpush.msra.mxu0 0.0
  %5053 = vmatpush.msra.mxu0 0.0
  %5054 = vmatpush.msra.mxu0 0.0
  %5055 = vmatpush.msra.mxu0 0.0
  %5056 = vmatpush.msra.mxu0 0.0
  %5057 = vmatpush.msra.mxu0 %v5040
  %5058 = vmatmul.f32.gmra.mxu0 %v4944
  %v5059 = vpop.f32.mrf.mxu0
  %v5060 = vadd.f32 0.0, %v5059
  %5061 = vmatmul.f32.gmra.mxu0 %v4947
  %v5062 = vpop.f32.mrf.mxu0
  %v5063 = vadd.f32 0.0, %v5062
  %5064 = vmatmul.f32.gmra.mxu0 %v4950
  %v5065 = vpop.f32.mrf.mxu0
  %v5066 = vadd.f32 0.0, %v5065
  %5067 = vmatmul.f32.gmra.mxu0 %v4953
  %v5068 = vpop.f32.mrf.mxu0
  %v5069 = vadd.f32 0.0, %v5068
  %5070 = vmatmul.f32.gmra.mxu0 %v4956
  %v5071 = vpop.f32.mrf.mxu0
  %v5072 = vadd.f32 0.0, %v5071
  %5073 = vmatmul.f32.gmra.mxu0 %v4959
  %v5074 = vpop.f32.mrf.mxu0
  %v5075 = vadd.f32 0.0, %v5074
  %5076 = vmatmul.f32.gmra.mxu0 %v4962
  %v5077 = vpop.f32.mrf.mxu0
  %v5078 = vadd.f32 0.0, %v5077
  %5079 = vmatmul.f32.gmra.mxu0 %v4965
  %v5080 = vpop.f32.mrf.mxu0
  %v5081 = vadd.f32 0.0, %v5080
  %5082 = vmatmul.f32.gmra.mxu0 %v4968
  %v5083 = vpop.f32.mrf.mxu0
  %v5084 = vadd.f32 0.0, %v5083
  %5085 = vmatmul.f32.gmra.mxu0 %v4971
  %v5086 = vpop.f32.mrf.mxu0
  %v5087 = vadd.f32 0.0, %v5086
  %5088 = vmatmul.f32.gmra.mxu0 %v4974
  %v5089 = vpop.f32.mrf.mxu0
  %v5090 = vadd.f32 0.0, %v5089
  %5091 = vmatmul.f32.gmra.mxu0 %v4977
  %v5092 = vpop.f32.mrf.mxu0
  %v5093 = vadd.f32 0.0, %v5092
  %5094 = vmatmul.f32.gmra.mxu0 %v4980
  %v5095 = vpop.f32.mrf.mxu0
  %v5096 = vadd.f32 0.0, %v5095
  %5097 = vmatmul.f32.gmra.mxu0 %v4983
  %v5098 = vpop.f32.mrf.mxu0
  %v5099 = vadd.f32 0.0, %v5098
  %5100 = vmatmul.f32.gmra.mxu0 %v4986
  %v5101 = vpop.f32.mrf.mxu0
  %v5102 = vadd.f32 0.0, %v5101
  %5103 = vmatmul.f32.gmra.mxu0 %v4989
  %v5104 = vpop.f32.mrf.mxu0
  %v5105 = vadd.f32 0.0, %v5104
  %5106 = vmatmul.f32.gmra.mxu0 %v4992
  %v5107 = vpop.f32.mrf.mxu0
  %v5108 = vadd.f32 0.0, %v5107
  %5109 = vmatmul.f32.gmra.mxu0 %v4995
  %v5110 = vpop.f32.mrf.mxu0
  %v5111 = vadd.f32 0.0, %v5110
  %5112 = vmatmul.f32.gmra.mxu0 %v4998
  %v5113 = vpop.f32.mrf.mxu0
  %v5114 = vadd.f32 0.0, %v5113
  %5115 = vmatmul.f32.gmra.mxu0 %v5001
  %v5116 = vpop.f32.mrf.mxu0
  %v5117 = vadd.f32 0.0, %v5116
  %5118 = vmatmul.f32.gmra.mxu0 %v5004
  %v5119 = vpop.f32.mrf.mxu0
  %v5120 = vadd.f32 0.0, %v5119
  %5121 = vmatmul.f32.gmra.mxu0 %v5007
  %v5122 = vpop.f32.mrf.mxu0
  %v5123 = vadd.f32 0.0, %v5122
  %5124 = vmatmul.f32.gmra.mxu0 %v5010
  %v5125 = vpop.f32.mrf.mxu0
  %v5126 = vadd.f32 0.0, %v5125
  %5127 = vmatmul.f32.gmra.mxu0 %v5013
  %v5128 = vpop.f32.mrf.mxu0
  %v5129 = vadd.f32 0.0, %v5128
  %5130 = vmatmul.f32.gmra.mxu0 %v5016
  %v5131 = vpop.f32.mrf.mxu0
  %v5132 = vadd.f32 0.0, %v5131
  %5133 = vmatmul.f32.gmra.mxu0 %v5019
  %v5134 = vpop.f32.mrf.mxu0
  %v5135 = vadd.f32 0.0, %v5134
  %5136 = vmatmul.f32.gmra.mxu0 %v5022
  %v5137 = vpop.f32.mrf.mxu0
  %v5138 = vadd.f32 0.0, %v5137
  %5139 = vmatmul.f32.gmra.mxu0 %v5025
  %v5140 = vpop.f32.mrf.mxu0
  %v5141 = vadd.f32 0.0, %v5140
  %5142 = vmatmul.f32.gmra.mxu0 %v5028
  %v5143 = vpop.f32.mrf.mxu0
  %v5144 = vadd.f32 0.0, %v5143
  %5145 = vmatmul.f32.gmra.mxu0 %v5031
  %v5146 = vpop.f32.mrf.mxu0
  %v5147 = vadd.f32 0.0, %v5146
  %5148 = vmatmul.f32.gmra.mxu0 %v5034
  %v5149 = vpop.f32.mrf.mxu0
  %v5150 = vadd.f32 0.0, %v5149
  %5151 = vmatmul.f32.gmra.mxu0 %v5037
  %v5152 = vpop.f32.mrf.mxu0
  %v5153 = vadd.f32 0.0, %v5152
  %5154 = vdwg.mxu0
  %v5155 = vadd.f32 %v4878, %v5060
  %v5156 = vadd.f32 %v4879, %v5063
  %v5157 = vadd.f32 %v4880, %v5066
  %v5158 = vadd.f32 %v4881, %v5069
  %v5159 = vadd.f32 %v4882, %v5072
  %v5160 = vadd.f32 %v4883, %v5075
  %v5161 = vadd.f32 %v4884, %v5078
  %v5162 = vadd.f32 %v4885, %v5081
  %v5163 = vadd.f32 %v4886, %v5084
  %v5164 = vadd.f32 %v4887, %v5087
  %v5165 = vadd.f32 %v4888, %v5090
  %v5166 = vadd.f32 %v4889, %v5093
  %v5167 = vadd.f32 %v4890, %v5096
  %v5168 = vadd.f32 %v4891, %v5099
  %v5169 = vadd.f32 %v4892, %v5102
  %v5170 = vadd.f32 %v4893, %v5105
  %v5171 = vadd.f32 %v4894, %v5108
  %v5172 = vadd.f32 %v4895, %v5111
  %v5173 = vadd.f32 %v4896, %v5114
  %v5174 = vadd.f32 %v4897, %v5117
  %v5175 = vadd.f32 %v4898, %v5120
  %v5176 = vadd.f32 %v4899, %v5123
  %v5177 = vadd.f32 %v4900, %v5126
  %v5178 = vadd.f32 %v4901, %v5129
  %v5179 = vadd.f32 %v4902, %v5132
  %v5180 = vadd.f32 %v4903, %v5135
  %v5181 = vadd.f32 %v4904, %v5138
  %v5182 = vadd.f32 %v4905, %v5141
  %v5183 = vadd.f32 %v4906, %v5144
  %v5184 = vadd.f32 %v4907, %v5147
  %v5185 = vadd.f32 %v4908, %v5150
  %v5186 = vadd.f32 %v4909, %v5153
  %v5187 = vld [vmem:[%s1835 + $0x2] sm:$0xff]
  %v5188 = vld [vmem:[%s1835 + $0xa] sm:$0xff]
  %v5189 = vld [vmem:[%s1835 + $0x1a] sm:$0xff]
  %v5190 = vld [vmem:[%s1835 + $0x22] sm:$0xff]
  %v5191 = vld [vmem:[%s1835 + $0x32] sm:$0xff]
  %v5192 = vld [vmem:[%s1835 + $0x3a] sm:$0xff]
  %v5193 = vld [vmem:[%s1835 + $0x4a] sm:$0xff]
  %v5194 = vld [vmem:[%s1835 + $0x52] sm:$0xff]
  %v5195 = vld [vmem:[%s1835 + $0x62] sm:$0xff]
  %v5196 = vld [vmem:[%s1835 + $0x6a] sm:$0xff]
  %v5197 = vld [vmem:[%s1835 + $0x7a] sm:$0xff]
  %v5198 = vld [vmem:[%s1835 + $0x82] sm:$0xff]
  %v5199 = vld [vmem:[%s1835 + $0x92] sm:$0xff]
  %v5200 = vld [vmem:[%s1835 + $0x9a] sm:$0xff]
  %v5201 = vld [vmem:[%s1835 + $0xaa] sm:$0xff]
  %v5202 = vld [vmem:[%s1835 + $0xb2] sm:$0xff]
  %v5203 = vld [vmem:[%s1835 + $0xc2] sm:$0xff]
  %v5204 = vld [vmem:[%s1835 + $0xca] sm:$0xff]
  %v5205 = vld [vmem:[%s1835 + $0xda] sm:$0xff]
  %v5206 = vld [vmem:[%s1835 + $0xe2] sm:$0xff]
  %v5207 = vld [vmem:[%s1835 + $0xf2] sm:$0xff]
  %v5208 = vld [vmem:[%s1835 + $0xfa] sm:$0xff]
  %v5209 = vld [vmem:[%s1835 + $0x10a] sm:$0xff]
  %v5210 = vld [vmem:[%s1835 + $0x112] sm:$0xff]
  %v5211 = vld [vmem:[%s1835 + $0x122] sm:$0xff]
  %v5212 = vld [vmem:[%s1835 + $0x12a] sm:$0xff]
  %v5213 = vld [vmem:[%s1835 + $0x13a] sm:$0xff]
  %v5214 = vld [vmem:[%s1835 + $0x142] sm:$0xff]
  %v5215 = vld [vmem:[%s1835 + $0x152] sm:$0xff]
  %v5216 = vld [vmem:[%s1835 + $0x15a] sm:$0xff]
  %v5217 = vld [vmem:[%s1835 + $0x16a] sm:$0xff]
  %v5218 = vld [vmem:[%s1835 + $0x172] sm:$0xff]
  %v5219 = vld [vmem:[%s2424] sm:$0xf]
  %v5221 = vsel %vm22, %v5187, 0
  %v5224 = vsel %vm22, %v5188, 0
  %v5227 = vsel %vm22, %v5189, 0
  %v5230 = vsel %vm22, %v5190, 0
  %v5233 = vsel %vm22, %v5191, 0
  %v5236 = vsel %vm22, %v5192, 0
  %v5239 = vsel %vm22, %v5193, 0
  %v5242 = vsel %vm22, %v5194, 0
  %v5245 = vsel %vm22, %v5195, 0
  %v5248 = vsel %vm22, %v5196, 0
  %v5251 = vsel %vm22, %v5197, 0
  %v5254 = vsel %vm22, %v5198, 0
  %v5257 = vsel %vm22, %v5199, 0
  %v5260 = vsel %vm22, %v5200, 0
  %v5263 = vsel %vm22, %v5201, 0
  %v5266 = vsel %vm22, %v5202, 0
  %v5269 = vsel %vm22, %v5203, 0
  %v5272 = vsel %vm22, %v5204, 0
  %v5275 = vsel %vm22, %v5205, 0
  %v5278 = vsel %vm22, %v5206, 0
  %v5281 = vsel %vm22, %v5207, 0
  %v5284 = vsel %vm22, %v5208, 0
  %v5287 = vsel %vm22, %v5209, 0
  %v5290 = vsel %vm22, %v5210, 0
  %v5293 = vsel %vm22, %v5211, 0
  %v5296 = vsel %vm22, %v5212, 0
  %v5299 = vsel %vm22, %v5213, 0
  %v5302 = vsel %vm22, %v5214, 0
  %v5305 = vsel %vm22, %v5215, 0
  %v5308 = vsel %vm22, %v5216, 0
  %v5311 = vsel %vm22, %v5217, 0
  %v5314 = vsel %vm22, %v5218, 0
  %v5317 = vsel %vm394, %v5219, 0
  %5319 = vmatpush.msra.mxu0 0.0
  %5320 = vmatpush.msra.mxu0 0.0
  %5321 = vmatpush.msra.mxu0 0.0
  %5322 = vmatpush.msra.mxu0 0.0
  %5323 = vmatpush.msra.mxu0 0.0
  %5324 = vmatpush.msra.mxu0 0.0
  %5325 = vmatpush.msra.mxu0 0.0
  %5326 = vmatpush.msra.mxu0 0.0
  %5327 = vmatpush.msra.mxu0 0.0
  %5328 = vmatpush.msra.mxu0 0.0
  %5329 = vmatpush.msra.mxu0 0.0
  %5330 = vmatpush.msra.mxu0 0.0
  %5331 = vmatpush.msra.mxu0 0.0
  %5332 = vmatpush.msra.mxu0 0.0
  %5333 = vmatpush.msra.mxu0 0.0
  %5334 = vmatpush.msra.mxu0 %v5317
  %5335 = vmatmul.f32.gmra.mxu0 %v5221
  %v5336 = vpop.f32.mrf.mxu0
  %v5337 = vadd.f32 0.0, %v5336
  %5338 = vmatmul.f32.gmra.mxu0 %v5224
  %v5339 = vpop.f32.mrf.mxu0
  %v5340 = vadd.f32 0.0, %v5339
  %5341 = vmatmul.f32.gmra.mxu0 %v5227
  %v5342 = vpop.f32.mrf.mxu0
  %v5343 = vadd.f32 0.0, %v5342
  %5344 = vmatmul.f32.gmra.mxu0 %v5230
  %v5345 = vpop.f32.mrf.mxu0
  %v5346 = vadd.f32 0.0, %v5345
  %5347 = vmatmul.f32.gmra.mxu0 %v5233
  %v5348 = vpop.f32.mrf.mxu0
  %v5349 = vadd.f32 0.0, %v5348
  %5350 = vmatmul.f32.gmra.mxu0 %v5236
  %v5351 = vpop.f32.mrf.mxu0
  %v5352 = vadd.f32 0.0, %v5351
  %5353 = vmatmul.f32.gmra.mxu0 %v5239
  %v5354 = vpop.f32.mrf.mxu0
  %v5355 = vadd.f32 0.0, %v5354
  %5356 = vmatmul.f32.gmra.mxu0 %v5242
  %v5357 = vpop.f32.mrf.mxu0
  %v5358 = vadd.f32 0.0, %v5357
  %5359 = vmatmul.f32.gmra.mxu0 %v5245
  %v5360 = vpop.f32.mrf.mxu0
  %v5361 = vadd.f32 0.0, %v5360
  %5362 = vmatmul.f32.gmra.mxu0 %v5248
  %v5363 = vpop.f32.mrf.mxu0
  %v5364 = vadd.f32 0.0, %v5363
  %5365 = vmatmul.f32.gmra.mxu0 %v5251
  %v5366 = vpop.f32.mrf.mxu0
  %v5367 = vadd.f32 0.0, %v5366
  %5368 = vmatmul.f32.gmra.mxu0 %v5254
  %v5369 = vpop.f32.mrf.mxu0
  %v5370 = vadd.f32 0.0, %v5369
  %5371 = vmatmul.f32.gmra.mxu0 %v5257
  %v5372 = vpop.f32.mrf.mxu0
  %v5373 = vadd.f32 0.0, %v5372
  %5374 = vmatmul.f32.gmra.mxu0 %v5260
  %v5375 = vpop.f32.mrf.mxu0
  %v5376 = vadd.f32 0.0, %v5375
  %5377 = vmatmul.f32.gmra.mxu0 %v5263
  %v5378 = vpop.f32.mrf.mxu0
  %v5379 = vadd.f32 0.0, %v5378
  %5380 = vmatmul.f32.gmra.mxu0 %v5266
  %v5381 = vpop.f32.mrf.mxu0
  %v5382 = vadd.f32 0.0, %v5381
  %5383 = vmatmul.f32.gmra.mxu0 %v5269
  %v5384 = vpop.f32.mrf.mxu0
  %v5385 = vadd.f32 0.0, %v5384
  %5386 = vmatmul.f32.gmra.mxu0 %v5272
  %v5387 = vpop.f32.mrf.mxu0
  %v5388 = vadd.f32 0.0, %v5387
  %5389 = vmatmul.f32.gmra.mxu0 %v5275
  %v5390 = vpop.f32.mrf.mxu0
  %v5391 = vadd.f32 0.0, %v5390
  %5392 = vmatmul.f32.gmra.mxu0 %v5278
  %v5393 = vpop.f32.mrf.mxu0
  %v5394 = vadd.f32 0.0, %v5393
  %5395 = vmatmul.f32.gmra.mxu0 %v5281
  %v5396 = vpop.f32.mrf.mxu0
  %v5397 = vadd.f32 0.0, %v5396
  %5398 = vmatmul.f32.gmra.mxu0 %v5284
  %v5399 = vpop.f32.mrf.mxu0
  %v5400 = vadd.f32 0.0, %v5399
  %5401 = vmatmul.f32.gmra.mxu0 %v5287
  %v5402 = vpop.f32.mrf.mxu0
  %v5403 = vadd.f32 0.0, %v5402
  %5404 = vmatmul.f32.gmra.mxu0 %v5290
  %v5405 = vpop.f32.mrf.mxu0
  %v5406 = vadd.f32 0.0, %v5405
  %5407 = vmatmul.f32.gmra.mxu0 %v5293
  %v5408 = vpop.f32.mrf.mxu0
  %v5409 = vadd.f32 0.0, %v5408
  %5410 = vmatmul.f32.gmra.mxu0 %v5296
  %v5411 = vpop.f32.mrf.mxu0
  %v5412 = vadd.f32 0.0, %v5411
  %5413 = vmatmul.f32.gmra.mxu0 %v5299
  %v5414 = vpop.f32.mrf.mxu0
  %v5415 = vadd.f32 0.0, %v5414
  %5416 = vmatmul.f32.gmra.mxu0 %v5302
  %v5417 = vpop.f32.mrf.mxu0
  %v5418 = vadd.f32 0.0, %v5417
  %5419 = vmatmul.f32.gmra.mxu0 %v5305
  %v5420 = vpop.f32.mrf.mxu0
  %v5421 = vadd.f32 0.0, %v5420
  %5422 = vmatmul.f32.gmra.mxu0 %v5308
  %v5423 = vpop.f32.mrf.mxu0
  %v5424 = vadd.f32 0.0, %v5423
  %5425 = vmatmul.f32.gmra.mxu0 %v5311
  %v5426 = vpop.f32.mrf.mxu0
  %v5427 = vadd.f32 0.0, %v5426
  %5428 = vmatmul.f32.gmra.mxu0 %v5314
  %v5429 = vpop.f32.mrf.mxu0
  %v5430 = vadd.f32 0.0, %v5429
  %5431 = vdwg.mxu0
  %v5432 = vadd.f32 %v5155, %v5337
  %v5433 = vadd.f32 %v5156, %v5340
  %v5434 = vadd.f32 %v5157, %v5343
  %v5435 = vadd.f32 %v5158, %v5346
  %v5436 = vadd.f32 %v5159, %v5349
  %v5437 = vadd.f32 %v5160, %v5352
  %v5438 = vadd.f32 %v5161, %v5355
  %v5439 = vadd.f32 %v5162, %v5358
  %v5440 = vadd.f32 %v5163, %v5361
  %v5441 = vadd.f32 %v5164, %v5364
  %v5442 = vadd.f32 %v5165, %v5367
  %v5443 = vadd.f32 %v5166, %v5370
  %v5444 = vadd.f32 %v5167, %v5373
  %v5445 = vadd.f32 %v5168, %v5376
  %v5446 = vadd.f32 %v5169, %v5379
  %v5447 = vadd.f32 %v5170, %v5382
  %v5448 = vadd.f32 %v5171, %v5385
  %v5449 = vadd.f32 %v5172, %v5388
  %v5450 = vadd.f32 %v5173, %v5391
  %v5451 = vadd.f32 %v5174, %v5394
  %v5452 = vadd.f32 %v5175, %v5397
  %v5453 = vadd.f32 %v5176, %v5400
  %v5454 = vadd.f32 %v5177, %v5403
  %v5455 = vadd.f32 %v5178, %v5406
  %v5456 = vadd.f32 %v5179, %v5409
  %v5457 = vadd.f32 %v5180, %v5412
  %v5458 = vadd.f32 %v5181, %v5415
  %v5459 = vadd.f32 %v5182, %v5418
  %v5460 = vadd.f32 %v5183, %v5421
  %v5461 = vadd.f32 %v5184, %v5424
  %v5462 = vadd.f32 %v5185, %v5427
  %v5463 = vadd.f32 %v5186, %v5430
  %v5464 = vsel %vm22, %v5432, 0.0
  %v5465 = vsel %vm22, %v5433, 0.0
  %v5466 = vadd.f32 %v5464, %v5465
  %v5467 = vsel %vm22, %v5434, 0.0
  %v5468 = vadd.f32 %v5466, %v5467
  %v5469 = vsel %vm22, %v5435, 0.0
  %v5470 = vadd.f32 %v5468, %v5469
  %v5471 = vsel %vm22, %v5436, 0.0
  %v5472 = vadd.f32 %v5470, %v5471
  %v5473 = vsel %vm22, %v5437, 0.0
  %v5474 = vadd.f32 %v5472, %v5473
  %v5475 = vsel %vm22, %v5438, 0.0
  %v5476 = vadd.f32 %v5474, %v5475
  %v5477 = vsel %vm22, %v5439, 0.0
  %v5478 = vadd.f32 %v5476, %v5477
  %v5479 = vsel %vm22, %v5440, 0.0
  %v5480 = vadd.f32 %v5478, %v5479
  %v5481 = vsel %vm22, %v5441, 0.0
  %v5482 = vadd.f32 %v5480, %v5481
  %v5483 = vsel %vm22, %v5442, 0.0
  %v5484 = vadd.f32 %v5482, %v5483
  %v5485 = vsel %vm22, %v5443, 0.0
  %v5486 = vadd.f32 %v5484, %v5485
  %v5487 = vsel %vm22, %v5444, 0.0
  %v5488 = vadd.f32 %v5486, %v5487
  %v5489 = vsel %vm22, %v5445, 0.0
  %v5490 = vadd.f32 %v5488, %v5489
  %v5491 = vsel %vm22, %v5446, 0.0
  %v5492 = vadd.f32 %v5490, %v5491
  %v5493 = vsel %vm22, %v5447, 0.0
  %v5494 = vadd.f32 %v5492, %v5493
  %v5495 = vsel %vm22, %v5448, 0.0
  %v5496 = vadd.f32 %v5494, %v5495
  %v5497 = vsel %vm22, %v5449, 0.0
  %v5498 = vadd.f32 %v5496, %v5497
  %v5499 = vsel %vm22, %v5450, 0.0
  %v5500 = vadd.f32 %v5498, %v5499
  %v5501 = vsel %vm22, %v5451, 0.0
  %v5502 = vadd.f32 %v5500, %v5501
  %v5503 = vsel %vm22, %v5452, 0.0
  %v5504 = vadd.f32 %v5502, %v5503
  %v5505 = vsel %vm22, %v5453, 0.0
  %v5506 = vadd.f32 %v5504, %v5505
  %v5507 = vsel %vm22, %v5454, 0.0
  %v5508 = vadd.f32 %v5506, %v5507
  %v5509 = vsel %vm22, %v5455, 0.0
  %v5510 = vadd.f32 %v5508, %v5509
  %v5511 = vsel %vm22, %v5456, 0.0
  %v5512 = vadd.f32 %v5510, %v5511
  %v5513 = vsel %vm22, %v5457, 0.0
  %v5514 = vadd.f32 %v5512, %v5513
  %v5515 = vsel %vm22, %v5458, 0.0
  %v5516 = vadd.f32 %v5514, %v5515
  %v5517 = vsel %vm22, %v5459, 0.0
  %v5518 = vadd.f32 %v5516, %v5517
  %v5519 = vsel %vm22, %v5460, 0.0
  %v5520 = vadd.f32 %v5518, %v5519
  %v5521 = vsel %vm22, %v5461, 0.0
  %v5522 = vadd.f32 %v5520, %v5521
  %v5523 = vsel %vm22, %v5462, 0.0
  %v5524 = vadd.f32 %v5522, %v5523
  %v5525 = vsel %vm22, %v5463, 0.0
  %v5526 = vadd.f32 %v5524, %v5525
  %v5527 = vrot.slane %v5526, 4
  %v5528 = vadd.f32 %v5526, %v5527
  %v5529 = vrot.slane %v5528, 2
  %v5530 = vadd.f32 %v5528, %v5529
  %v5531 = vrot.slane %v5530, 1
  %v5532 = vadd.f32 %v5530, %v5531
  %v5533 = vadd.f32 %v2739, %v5532
  %v5534 = vmul.f32 %v5432, %v5432
  %v5535 = vmul.f32 %v5433, %v5433
  %v5536 = vmul.f32 %v5434, %v5434
  %v5537 = vmul.f32 %v5435, %v5435
  %v5538 = vmul.f32 %v5436, %v5436
  %v5539 = vmul.f32 %v5437, %v5437
  %v5540 = vmul.f32 %v5438, %v5438
  %v5541 = vmul.f32 %v5439, %v5439
  %v5542 = vmul.f32 %v5440, %v5440
  %v5543 = vmul.f32 %v5441, %v5441
  %v5544 = vmul.f32 %v5442, %v5442
  %v5545 = vmul.f32 %v5443, %v5443
  %v5546 = vmul.f32 %v5444, %v5444
  %v5547 = vmul.f32 %v5445, %v5445
  %v5548 = vmul.f32 %v5446, %v5446
  %v5549 = vmul.f32 %v5447, %v5447
  %v5550 = vmul.f32 %v5448, %v5448
  %v5551 = vmul.f32 %v5449, %v5449
  %v5552 = vmul.f32 %v5450, %v5450
  %v5553 = vmul.f32 %v5451, %v5451
  %v5554 = vmul.f32 %v5452, %v5452
  %v5555 = vmul.f32 %v5453, %v5453
  %v5556 = vmul.f32 %v5454, %v5454
  %v5557 = vmul.f32 %v5455, %v5455
  %v5558 = vmul.f32 %v5456, %v5456
  %v5559 = vmul.f32 %v5457, %v5457
  %v5560 = vmul.f32 %v5458, %v5458
  %v5561 = vmul.f32 %v5459, %v5459
  %v5562 = vmul.f32 %v5460, %v5460
  %v5563 = vmul.f32 %v5461, %v5461
  %v5564 = vmul.f32 %v5462, %v5462
  %v5565 = vmul.f32 %v5463, %v5463
  %v5566 = vsel %vm22, %v5534, 0.0
  %v5567 = vsel %vm22, %v5535, 0.0
  %v5568 = vadd.f32 %v5566, %v5567
  %v5569 = vsel %vm22, %v5536, 0.0
  %v5570 = vadd.f32 %v5568, %v5569
  %v5571 = vsel %vm22, %v5537, 0.0
  %v5572 = vadd.f32 %v5570, %v5571
  %v5573 = vsel %vm22, %v5538, 0.0
  %v5574 = vadd.f32 %v5572, %v5573
  %v5575 = vsel %vm22, %v5539, 0.0
  %v5576 = vadd.f32 %v5574, %v5575
  %v5577 = vsel %vm22, %v5540, 0.0
  %v5578 = vadd.f32 %v5576, %v5577
  %v5579 = vsel %vm22, %v5541, 0.0
  %v5580 = vadd.f32 %v5578, %v5579
  %v5581 = vsel %vm22, %v5542, 0.0
  %v5582 = vadd.f32 %v5580, %v5581
  %v5583 = vsel %vm22, %v5543, 0.0
  %v5584 = vadd.f32 %v5582, %v5583
  %v5585 = vsel %vm22, %v5544, 0.0
  %v5586 = vadd.f32 %v5584, %v5585
  %v5587 = vsel %vm22, %v5545, 0.0
  %v5588 = vadd.f32 %v5586, %v5587
  %v5589 = vsel %vm22, %v5546, 0.0
  %v5590 = vadd.f32 %v5588, %v5589
  %v5591 = vsel %vm22, %v5547, 0.0
  %v5592 = vadd.f32 %v5590, %v5591
  %v5593 = vsel %vm22, %v5548, 0.0
  %v5594 = vadd.f32 %v5592, %v5593
  %v5595 = vsel %vm22, %v5549, 0.0
  %v5596 = vadd.f32 %v5594, %v5595
  %v5597 = vsel %vm22, %v5550, 0.0
  %v5598 = vadd.f32 %v5596, %v5597
  %v5599 = vsel %vm22, %v5551, 0.0
  %v5600 = vadd.f32 %v5598, %v5599
  %v5601 = vsel %vm22, %v5552, 0.0
  %v5602 = vadd.f32 %v5600, %v5601
  %v5603 = vsel %vm22, %v5553, 0.0
  %v5604 = vadd.f32 %v5602, %v5603
  %v5605 = vsel %vm22, %v5554, 0.0
  %v5606 = vadd.f32 %v5604, %v5605
  %v5607 = vsel %vm22, %v5555, 0.0
  %v5608 = vadd.f32 %v5606, %v5607
  %v5609 = vsel %vm22, %v5556, 0.0
  %v5610 = vadd.f32 %v5608, %v5609
  %v5611 = vsel %vm22, %v5557, 0.0
  %v5612 = vadd.f32 %v5610, %v5611
  %v5613 = vsel %vm22, %v5558, 0.0
  %v5614 = vadd.f32 %v5612, %v5613
  %v5615 = vsel %vm22, %v5559, 0.0
  %v5616 = vadd.f32 %v5614, %v5615
  %v5617 = vsel %vm22, %v5560, 0.0
  %v5618 = vadd.f32 %v5616, %v5617
  %v5619 = vsel %vm22, %v5561, 0.0
  %v5620 = vadd.f32 %v5618, %v5619
  %v5621 = vsel %vm22, %v5562, 0.0
  %v5622 = vadd.f32 %v5620, %v5621
  %v5623 = vsel %vm22, %v5563, 0.0
  %v5624 = vadd.f32 %v5622, %v5623
  %v5625 = vsel %vm22, %v5564, 0.0
  %v5626 = vadd.f32 %v5624, %v5625
  %v5627 = vsel %vm22, %v5565, 0.0
  %v5628 = vadd.f32 %v5626, %v5627
  %v5629 = vrot.slane %v5628, 4
  %v5630 = vadd.f32 %v5628, %v5629
  %v5631 = vrot.slane %v5630, 2
  %v5632 = vadd.f32 %v5630, %v5631
  %v5633 = vrot.slane %v5632, 1
  %v5634 = vadd.f32 %v5632, %v5633
  %v5635 = vadd.f32 %v2841, %v5634
  %s5636 = scalar_lea.vmem %s4, 256
  %5637 = vst.msk [vmem:[%s5636] sm:$0xff] %vm22, %v5432
  %5638 = vst.msk [vmem:[%s5636 + $0x8] sm:$0xff] %vm22, %v5433
  %5639 = vst.msk [vmem:[%s5636 + $0x10] sm:$0xff] %vm22, %v5434
  %5640 = vst.msk [vmem:[%s5636 + $0x18] sm:$0xff] %vm22, %v5435
  %5641 = vst.msk [vmem:[%s5636 + $0x20] sm:$0xff] %vm22, %v5436
  %5642 = vst.msk [vmem:[%s5636 + $0x28] sm:$0xff] %vm22, %v5437
  %5643 = vst.msk [vmem:[%s5636 + $0x30] sm:$0xff] %vm22, %v5438
  %5644 = vst.msk [vmem:[%s5636 + $0x38] sm:$0xff] %vm22, %v5439
  %5645 = vst.msk [vmem:[%s5636 + $0x40] sm:$0xff] %vm22, %v5440
  %5646 = vst.msk [vmem:[%s5636 + $0x48] sm:$0xff] %vm22, %v5441
  %5647 = vst.msk [vmem:[%s5636 + $0x50] sm:$0xff] %vm22, %v5442
  %5648 = vst.msk [vmem:[%s5636 + $0x58] sm:$0xff] %vm22, %v5443
  %5649 = vst.msk [vmem:[%s5636 + $0x60] sm:$0xff] %vm22, %v5444
  %5650 = vst.msk [vmem:[%s5636 + $0x68] sm:$0xff] %vm22, %v5445
  %5651 = vst.msk [vmem:[%s5636 + $0x70] sm:$0xff] %vm22, %v5446
  %5652 = vst.msk [vmem:[%s5636 + $0x78] sm:$0xff] %vm22, %v5447
  %5653 = vst.msk [vmem:[%s5636 + $0x80] sm:$0xff] %vm22, %v5448
  %5654 = vst.msk [vmem:[%s5636 + $0x88] sm:$0xff] %vm22, %v5449
  %5655 = vst.msk [vmem:[%s5636 + $0x90] sm:$0xff] %vm22, %v5450
  %5656 = vst.msk [vmem:[%s5636 + $0x98] sm:$0xff] %vm22, %v5451
  %5657 = vst.msk [vmem:[%s5636 + $0xa0] sm:$0xff] %vm22, %v5452
  %5658 = vst.msk [vmem:[%s5636 + $0xa8] sm:$0xff] %vm22, %v5453
  %5659 = vst.msk [vmem:[%s5636 + $0xb0] sm:$0xff] %vm22, %v5454
  %5660 = vst.msk [vmem:[%s5636 + $0xb8] sm:$0xff] %vm22, %v5455
  %5661 = vst.msk [vmem:[%s5636 + $0xc0] sm:$0xff] %vm22, %v5456
  %5662 = vst.msk [vmem:[%s5636 + $0xc8] sm:$0xff] %vm22, %v5457
  %5663 = vst.msk [vmem:[%s5636 + $0xd0] sm:$0xff] %vm22, %v5458
  %5664 = vst.msk [vmem:[%s5636 + $0xd8] sm:$0xff] %vm22, %v5459
  %5665 = vst.msk [vmem:[%s5636 + $0xe0] sm:$0xff] %vm22, %v5460
  %5666 = vst.msk [vmem:[%s5636 + $0xe8] sm:$0xff] %vm22, %v5461
  %5667 = vst.msk [vmem:[%s5636 + $0xf0] sm:$0xff] %vm22, %v5462
  %5668 = vst.msk [vmem:[%s5636 + $0xf8] sm:$0xff] %vm22, %v5463
  %5669 = vst.msk [vmem:[%s5] sm:$0x1] %vm32, %v5533
  %5670 = vst.msk [vmem:[%s6] sm:$0x1] %vm32, %v5635
  // Predicated region
  $region18: #{preact_block.2} parent=0 // pred_check
    _
  $region19: #{preact_block.2} parent=0 // pred_check_branch
    %5672 = sbr.rel (0) target = $region21
  $region20: #{preact_block.2} parent=0 // pred_region
    _
  $region21: #{preact_block.2} parent=0 // pred_fallthru
    _
  // Predicated region
  $region22: #{preact_block.2} parent=0 // pred_check
    _
  $region23: #{preact_block.2} parent=0 // pred_check_branch
    %5674 = sbr.rel (0) target = $region25
  $region24: #{preact_block.2} parent=0 // pred_region
    _
  $region25: #{preact_block.2} parent=0 // pred_fallthru
    _
  // Predicated region
  $region26: #{preact_block.2} parent=0 // pred_check
    _
  $region27: #{preact_block.2} parent=0 // pred_check_branch
    %5676 = sbr.rel (0) target = $region29
  $region28: #{preact_block.2} parent=0 // pred_region
    _
  $region29: #{preact_block.2} parent=0 // pred_fallthru
    _
  // Predicated region
  $region30: #{preact_block.2} parent=0 // pred_check
    _
  $region31: #{preact_block.2} parent=0 // pred_check_branch
    %5678 = sbr.rel (0) target = $region33
  $region32: #{preact_block.2} parent=0 // pred_region
    _
  $region33: #{preact_block.2} parent=0 // pred_fallthru
    _
  // Predicated region
  $region34: #{preact_block.2} parent=0 // pred_check
    _
  $region35: #{preact_block.2} parent=0 // pred_check_branch
    %5680 = sbr.rel (0) target = $region37
  $region36: #{preact_block.2} parent=0 // pred_region
    _
  $region37: #{preact_block.2} parent=0 // pred_fallthru
    _
  // Predicated region
  $region38: #{preact_block.2} parent=0 // pred_check
    _
  $region39: #{preact_block.2} parent=0 // pred_check_branch
    %5682 = sbr.rel (0) target = $region41
  $region40: #{preact_block.2} parent=0 // pred_region
    _
  $region41: #{preact_block.2} parent=0 // pred_fallthru
    _

</llo_original>
